<compile_context>
chip_gen: v7x
topology: tpu7x:2x2x1
jax: 0.10.0
libtpu: 0.0.40
codegen_flags: <defaults>
</compile_context>

<pallas_src>
import functools

import jax
import jax.numpy as jnp
from jax.experimental import pallas as pl
from jax.experimental.pallas import tpu as pltpu


def _round_up(x, m):
    return (x + m - 1) // m * m


def _pick_row_tile(total, cap=1024):
    """Largest power-of-two row tile (<= cap) that divides `total`."""
    for t in (1024, 512, 256, 128, 64, 32, 16, 8):
        if t <= cap and t <= total and total % t == 0:
            return t
    return total


# ----------------------------- Pallas kernels ------------------------------

def _deconv_matmul_kernel(*refs, act, with_stats, with_bias):
    """One (TR, Kd) @ (Kd, Cp) MXU tile; optional bias+act epilogue; optional
    fused per-column [sum, sum_sq] accumulation for BatchNorm statistics."""
    i = 0
    a_ref = refs[i]; i += 1                       # (TR, Kd)  bf16
    b_ref = refs[i]; i += 1                       # (Kd, Cp)  bf16
    bias_ref = None
    if with_bias:
        bias_ref = refs[i]; i += 1                # (1, Cp)   f32
    z_ref = refs[i]; i += 1                       # (TR, Cp)  f32
    stats_ref = refs[i] if with_stats else None   # (2, Cp)   f32

    z = jnp.dot(a_ref[...], b_ref[...], preferred_element_type=jnp.float32)
    if with_bias:
        z = z + bias_ref[...]
    if act == "tanh":
        z = jnp.tanh(z)
    elif act == "relu":
        z = jnp.maximum(z, 0.0)
    z_ref[...] = z.astype(z_ref.dtype)

    if with_stats:
        @pl.when(pl.program_id(1) == 0)
        def _():
            stats_ref[...] = jnp.zeros_like(stats_ref)
        s0 = jnp.sum(z, axis=0, keepdims=True)
        s1 = jnp.sum(z * z, axis=0, keepdims=True)
        stats_ref[...] += jnp.concatenate([s0, s1], axis=0)


def _affine_relu_kernel(z_ref, s_ref, t_ref, o_ref):
    o_ref[...] = jnp.maximum(z_ref[...] * s_ref[...] + t_ref[...],
                             0.0).astype(o_ref.dtype)


# ------------------------------ kernel wrappers -----------------------------

def pallas_deconv_matmul(A, B, bias=None, *, act="none", with_stats=False,
                         row_tile_cap=512):
    """Phase-batched matmul: A (P, R, Kd) bf16 @ B (P, Kd, Cp) bf16.

    Cp must be a multiple of 128 (lane-dense stores). Returns z (P, Rpad, Cp)
    f32, plus per-phase per-column [sum, sum_sq] stats (P, 2, Cp) if requested
    (zero-padded rows/columns contribute exactly 0 to the sums)."""
    P, R, Kd = A.shape
    Cp = B.shape[2]
    TR = _round_up(R, 8) if R <= row_tile_cap else row_tile_cap
    Rpad = _round_up(R, TR)
    if Rpad != R:
        A = jnp.pad(A, ((0, 0), (0, Rpad - R), (0, 0)))

    with_bias = bias is not None
    in_specs = [
        pl.BlockSpec((None, TR, Kd), lambda p, i: (p, i, 0)),
        pl.BlockSpec((None, Kd, Cp), lambda p, i: (p, 0, 0)),
    ]
    inputs = [A, B]
    if with_bias:
        in_specs.append(pl.BlockSpec((1, Cp), lambda p, i: (0, 0)))
        inputs.append(bias)

    z_shape = jax.ShapeDtypeStruct((P, Rpad, Cp), jnp.float32)
    z_spec = pl.BlockSpec((None, TR, Cp), lambda p, i: (p, i, 0))
    if with_stats:
        out_shape = (z_shape, jax.ShapeDtypeStruct((P, 2, Cp), jnp.float32))
        out_specs = (z_spec, pl.BlockSpec((None, 2, Cp), lambda p, i: (p, 0, 0)))
    else:
        out_shape = z_shape
        out_specs = z_spec

    kern = functools.partial(_deconv_matmul_kernel, act=act,
                             with_stats=with_stats, with_bias=with_bias)
    return pl.pallas_call(
        kern,
        out_shape=out_shape,
        grid=(P, Rpad // TR),
        in_specs=in_specs,
        out_specs=out_specs,
        compiler_params=pltpu.CompilerParams(
            # stats output is revisited along the row axis -> "arbitrary";
            # the 4-phase axis stays "parallel" (megacore work on v7x).
            dimension_semantics=("parallel", "arbitrary")),
    )(*inputs)


def pallas_affine_relu(z2d, scale_cols, shift_cols, out_dtype=jnp.bfloat16):
    """relu(z * scale + shift) per column on a lane-dense (R, Cp) layout."""
    R, Cp = z2d.shape
    TR = _pick_row_tile(R, cap=1024)
    return pl.pallas_call(
        _affine_relu_kernel,
        out_shape=jax.ShapeDtypeStruct((R, Cp), out_dtype),
        grid=(R // TR,),
        in_specs=[
            pl.BlockSpec((TR, Cp), lambda i: (i, 0)),
            pl.BlockSpec((1, Cp), lambda i: (0, 0)),
            pl.BlockSpec((1, Cp), lambda i: (0, 0)),
        ],
        out_specs=pl.BlockSpec((TR, Cp), lambda i: (i, 0)),
        compiler_params=pltpu.CompilerParams(dimension_semantics=("parallel",)),
    )(z2d, scale_cols.reshape(1, Cp).astype(jnp.float32),
      shift_cols.reshape(1, Cp).astype(jnp.float32))


def _bn_scale_shift(ssum, ssq, count, gamma, beta, eps=1e-5):
    mean = ssum / count
    var = jnp.maximum(ssq / count - mean * mean, 0.0)   # biased, train-mode BN
    scale = gamma / jnp.sqrt(var + eps)
    shift = beta - mean * scale
    return scale, shift


# ------------------------------- layer glue ---------------------------------

def deconv1_bn_relu(x2d, W, gamma, beta):
    """ConvTranspose2d(K, Cout, 4, stride=1, pad=0) on a 1x1 input + BN + ReLU.
    x2d: (N, K), W: (K, Cout, 4, 4). Returns (N, 4, 4, Cout) bf16.
    (Conv bias is dropped: it is exactly cancelled by train-mode BN.)"""
    N, K = x2d.shape
    Cout = W.shape[1]
    Ccols = 16 * Cout
    Cp = _round_up(Ccols, 128)
    Wmat = jnp.transpose(W, (0, 2, 3, 1)).reshape(K, Ccols)  # cols = (kh,kw,co)
    if Cp != Ccols:
        Wmat = jnp.pad(Wmat, ((0, 0), (0, Cp - Ccols)))
    A = x2d.astype(jnp.bfloat16)[None]            # (1, N, K)
    B = Wmat.astype(jnp.bfloat16)[None]           # (1, K, Cp)

    z, stats = pallas_deconv_matmul(A, B, act="none", with_stats=True)
    Rpad = z.shape[1]
    count = jnp.float32(N * 16)
    ssum = stats[0, 0, :Ccols].reshape(16, Cout).sum(axis=0)
    ssq = stats[0, 1, :Ccols].reshape(16, Cout).sum(axis=0)
    scale, shift = _bn_scale_shift(ssum, ssq, count, gamma, beta)
    scale_c = jnp.pad(jnp.tile(scale, 16), (0, Cp - Ccols))
    shift_c = jnp.pad(jnp.tile(shift, 16), (0, Cp - Ccols))

    h = pallas_affine_relu(z.reshape(Rpad, Cp), scale_c, shift_c)
    return h[:N, :Ccols].reshape(N, 4, 4, Cout)


# For output phase r (oh = 2*i + r), only kernel rows kh in {1,3} (r=0) /
# {0,2} (r=1) touch real input; (kh -> padded-input row offset) derived from
# kh = oh + pad - stride*ih with stride=2, pad=1 and a 1-pixel zero border.
_PHASE_TAPS = {0: ((1, 1), (3, 0)),
               1: ((0, 2), (2, 1))}


def deconv_s2(x, W, *, bias=None, gamma=None, beta=None, bn=True, act="relu"):
    """ConvTranspose2d(Cin, Cout, 4, stride=2, pad=1) via phase decomposition.
    x: (N, H, W, Cin) bf16, W: (Cin, Cout, 4, 4).
    bn=True : + train-mode BatchNorm + ReLU (bias dropped — BN cancels it).
    bn=False: + bias + `act` fused in the matmul epilogue (returns f32)."""
    N, H, Wsp, Cin = x.shape
    Cout = W.shape[1]
    Cp = _round_up(Cout, 128)
    R = N * H * Wsp

    # TODO(synk): the 4-tap per-phase patches are still materialized in HBM by
    # XLA (4x smaller than full im2col); streaming taps through the BlockSpec
    # index_map would remove that extra write+read entirely.
    xp = jnp.pad(x, ((0, 0), (1, 1), (1, 1), (0, 0)))
    A_list, B_list = [], []
    for r in (0, 1):
        for s in (0, 1):
            th, tw = _PHASE_TAPS[r], _PHASE_TAPS[s]
            cols = [xp[:, oh:oh + H, ow:ow + Wsp, :]
                    for (_, oh) in th for (_, ow) in tw]
            A_list.append(jnp.concatenate(cols, axis=-1).reshape(R, 4 * Cin))
            B_list.append(jnp.concatenate(
                [W[:, :, kh, kw] for (kh, _) in th for (kw, _) in tw], axis=0))
    A = jnp.stack(A_list, axis=0).astype(jnp.bfloat16)        # (4, R, 4*Cin)
    B = jnp.stack(B_list, axis=0)                              # (4, 4*Cin, Cout)
    if Cp != Cout:
        B = jnp.pad(B, ((0, 0), (0, 0), (0, Cp - Cout)))
    B = B.astype(jnp.bfloat16)

    if bn:
        z, stats = pallas_deconv_matmul(A, B, act="none", with_stats=True)
        Rpad = z.shape[1]
        count = jnp.float32(4 * R)                 # = N * (2H) * (2W)
        ssum = stats[:, 0, :Cout].sum(axis=0)
        ssq = stats[:, 1, :Cout].sum(axis=0)
        scale, shift = _bn_scale_shift(ssum, ssq, count, gamma, beta)
        scale_c = jnp.pad(scale, (0, Cp - Cout))
        shift_c = jnp.pad(shift, (0, Cp - Cout))
        h = pallas_affine_relu(z.reshape(4 * Rpad, Cp), scale_c, shift_c)
        out = h.reshape(4, Rpad, Cp)
    else:
        bias_p = jnp.pad(bias, (0, Cp - Cout)).reshape(1, Cp).astype(jnp.float32)
        out = pallas_deconv_matmul(A, B, bias_p, act=act, with_stats=False)
        Rpad = out.shape[1]

    ph = out[:, :R, :Cout].reshape(2, 2, N, H, Wsp, Cout)      # (r, s, n, i, j, c)
    return ph.transpose(2, 3, 0, 4, 1, 5).reshape(N, 2 * H, 2 * Wsp, Cout)


# ------------------------------ full generator ------------------------------

def init_params(key, K, d):
    ks = jax.random.split(key, 10)
    def w(k_, cin, cout):
        return 0.02 * jax.random.normal(k_, (cin, cout, 4, 4), jnp.float32)
    def bb(k_, cout):
        return 0.02 * jax.random.normal(k_, (cout,), jnp.float32)
    return {
        "W1": w(ks[0], K, d * 8), "b1": bb(ks[1], d * 8),
        "W2": w(ks[2], d * 8, d * 4), "b2": bb(ks[3], d * 4),
        "W3": w(ks[4], d * 4, d * 2), "b3": bb(ks[5], d * 2),
        "W4": w(ks[6], d * 2, d), "b4": bb(ks[7], d),
        "W5": w(ks[8], d, 3), "b5": bb(ks[9], 3),
        # BatchNorm2d default init: weight=1, bias=0
        "g1": jnp.ones((d * 8,), jnp.float32), "be1": jnp.zeros((d * 8,), jnp.float32),
        "g2": jnp.ones((d * 4,), jnp.float32), "be2": jnp.zeros((d * 4,), jnp.float32),
        "g3": jnp.ones((d * 2,), jnp.float32), "be3": jnp.zeros((d * 2,), jnp.float32),
        "g4": jnp.ones((d,), jnp.float32), "be4": jnp.zeros((d,), jnp.float32),
    }


def netg_dcgan_forward(x, params):
    """x: (N, K, 1, 1) NCHW -> (N, 3, 64, 64) NCHW."""
    N, K = x.shape[0], x.shape[1]
    x2d = x.reshape(N, K)
    # Conv biases b1..b4 are intentionally unused: a per-channel bias before a
    # train-mode BatchNorm is exactly cancelled by the mean subtraction.
    h = deconv1_bn_relu(x2d.astype(jnp.bfloat16), params["W1"],
                        params["g1"], params["be1"])                       # (N, 4, 4, 8d)
    h = deconv_s2(h, params["W2"], gamma=params["g2"], beta=params["be2"])  # (N, 8, 8, 4d)
    h = deconv_s2(h, params["W3"], gamma=params["g3"], beta=params["be3"])  # (N,16,16, 2d)
    h = deconv_s2(h, params["W4"], gamma=params["g4"], beta=params["be4"])  # (N,32,32,  d)
    h = deconv_s2(h, params["W5"], bias=params["b5"], bn=False, act="tanh")  # (N,64,64, 3)
    return h.transpose(0, 3, 1, 2).astype(jnp.float32)


if __name__ == "__main__":
    # Small shapes consistent with the module: batch=2, K=8 latent dims, d=16.
    N, K, d = 2, 8, 16
    key = jax.random.PRNGKey(0)
    k_param, k_x = jax.random.split(key)
    params = init_params(k_param, K, d)
    x = jax.random.normal(k_x, (N, K, 1, 1), jnp.float32)

    fwd = jax.jit(lambda xx: netg_dcgan_forward(xx, params))
    y = jax.block_until_ready(fwd(x))

    assert y.shape == (N, 3, 64, 64), y.shape
    assert bool(jnp.all(jnp.isfinite(y)))
    assert bool(jnp.all(jnp.abs(y) <= 1.0 + 1e-6))  # tanh range
    print("KERNEL_OK")
</pallas_src>

<mosaic_0001>
module attributes {stable_mosaic.version = 11 : i64} {
  func.func @_deconv_matmul_kernel(%arg0: i32, %arg1: i32, %arg2: memref<1x8x8xbf16, #tpu.memory_space<vmem>>, %arg3: memref<1x8x2048xbf16, #tpu.memory_space<vmem>>, %arg4: memref<1x8x2048xf32, #tpu.memory_space<vmem>>, %arg5: memref<1x2x2048xf32, #tpu.memory_space<vmem>>) attributes {dimension_semantics = [#tpu.dimension_semantics<parallel>, #tpu.dimension_semantics<arbitrary>], iteration_bounds = array<i64: 1, 1>, scalar_prefetch = 0 : i64, scratch_operands = 0 : i64, tpu.core_type = #tpu.core_type<tc>, window_params = [{transform_indices = @transform_0, window_bounds = array<i64: 1, 8, 8>}, {transform_indices = @transform_1, window_bounds = array<i64: 1, 8, 2048>}, {transform_indices = @transform_2, window_bounds = array<i64: 1, 8, 2048>}, {transform_indices = @transform_3, window_bounds = array<i64: 1, 2, 2048>}]} {
    %c0 = arith.constant 0 : index
    %c0_0 = arith.constant 0 : index
    %c0_1 = arith.constant 0 : index
    %0 = vector.load %arg2[%c0, %c0_0, %c0_1] : memref<1x8x8xbf16, #tpu.memory_space<vmem>>, vector<1x8x8xbf16>
    %1 = vector.shape_cast %0 : vector<1x8x8xbf16> to vector<8x8xbf16>
    %c0_2 = arith.constant 0 : index
    %c0_3 = arith.constant 0 : index
    %c0_4 = arith.constant 0 : index
    %2 = vector.load %arg3[%c0_2, %c0_3, %c0_4] : memref<1x8x2048xbf16, #tpu.memory_space<vmem>>, vector<1x8x2048xbf16>
    %3 = vector.shape_cast %2 : vector<1x8x2048xbf16> to vector<8x2048xbf16>
    %cst = arith.constant dense<0.000000e+00> : vector<8x2048xf32>
    %4 = tpu.matmul %1, %3, %cst {dimension_numbers = #tpu.dot_dimension_numbers<[1], [0], [0], [1], [0, 0, 1, 1], [], []>} : vector<8x8xbf16>, vector<8x2048xbf16>, vector<8x2048xf32> -> vector<8x2048xf32>
    %c0_5 = arith.constant 0 : index
    %c0_6 = arith.constant 0 : index
    %c0_7 = arith.constant 0 : index
    %5 = vector.load %arg4[%c0_5, %c0_6, %c0_7] : memref<1x8x2048xf32, #tpu.memory_space<vmem>>, vector<1x8x2048xf32>
    %6 = vector.shape_cast %5 : vector<1x8x2048xf32> to vector<8x2048xf32>
    %7 = vector.shape_cast %4 : vector<8x2048xf32> to vector<1x8x2048xf32>
    tpu.vector_store %arg4[%c0_5, %c0_6, %c0_7], %7 {strides = array<i32>} : memref<1x8x2048xf32, #tpu.memory_space<vmem>>, vector<1x8x2048xf32>,
    %c0_i32 = arith.constant 0 : i32
    %8 = arith.cmpi eq, %arg1, %c0_i32 : i32
    %9 = arith.extui %8 : i1 to i32
    %c0_i32_8 = arith.constant 0 : i32
    %10 = arith.cmpi ne, %9, %c0_i32_8 : i32
    scf.if %10 {
      %cst_17 = arith.constant 0.000000e+00 : f32
      %23 = vector.broadcast %cst_17 : f32 to vector<2x2048xf32>
      %c0_18 = arith.constant 0 : index
      %c0_19 = arith.constant 0 : index
      %c0_20 = arith.constant 0 : index
      %24 = vector.load %arg5[%c0_18, %c0_19, %c0_20] : memref<1x2x2048xf32, #tpu.memory_space<vmem>>, vector<1x2x2048xf32>
      %25 = vector.shape_cast %24 : vector<1x2x2048xf32> to vector<2x2048xf32>
      %26 = vector.shape_cast %23 : vector<2x2048xf32> to vector<1x2x2048xf32>
      tpu.vector_store %arg5[%c0_18, %c0_19, %c0_20], %26 {strides = array<i32>} : memref<1x2x2048xf32, #tpu.memory_space<vmem>>, vector<1x2x2048xf32>,
    } else {
    }
    %cst_9 = arith.constant dense<0.000000e+00> : vector<2048xf32>
    %11 = vector.multi_reduction <add>, %4, %cst_9 [0] : vector<8x2048xf32> to vector<2048xf32>
    %12 = vector.shape_cast %11 : vector<2048xf32> to vector<1x2048xf32>
    %13 = arith.mulf %4, %4 : vector<8x2048xf32>
    %cst_10 = arith.constant dense<0.000000e+00> : vector<2048xf32>
    %14 = vector.multi_reduction <add>, %13, %cst_10 [0] : vector<8x2048xf32> to vector<2048xf32>
    %15 = vector.shape_cast %14 : vector<2048xf32> to vector<1x2048xf32>
    %c0_11 = arith.constant 0 : index
    %c0_12 = arith.constant 0 : index
    %c0_13 = arith.constant 0 : index
    %16 = vector.load %arg5[%c0_11, %c0_12, %c0_13] : memref<1x2x2048xf32, #tpu.memory_space<vmem>>, vector<1x2x2048xf32>
    %17 = vector.shape_cast %16 : vector<1x2x2048xf32> to vector<2x2048xf32>
    %18 = tpu.concatenate %12, %15 in 0 : vector<1x2048xf32>, vector<1x2048xf32> -> vector<2x2048xf32>
    %19 = arith.addf %17, %18 : vector<2x2048xf32>
    %c0_14 = arith.constant 0 : index
    %c0_15 = arith.constant 0 : index
    %c0_16 = arith.constant 0 : index
    %20 = vector.load %arg5[%c0_14, %c0_15, %c0_16] : memref<1x2x2048xf32, #tpu.memory_space<vmem>>, vector<1x2x2048xf32>
    %21 = vector.shape_cast %20 : vector<1x2x2048xf32> to vector<2x2048xf32>
    %22 = vector.shape_cast %19 : vector<2x2048xf32> to vector<1x2x2048xf32>
    tpu.vector_store %arg5[%c0_14, %c0_15, %c0_16], %22 {strides = array<i32>} : memref<1x2x2048xf32, #tpu.memory_space<vmem>>, vector<1x2x2048xf32>,
    return
  }
  func.func @transform_0(%arg0: i32, %arg1: i32) -> (i32, i32, i32) {
    %c0_i32 = arith.constant 0 : i32
    %c0_i32_0 = arith.constant 0 : i32
    return %arg0, %arg1, %c0_i32 : i32, i32, i32
  }
  func.func @transform_1(%arg0: i32, %arg1: i32) -> (i32, i32, i32) {
    %c0_i32 = arith.constant 0 : i32
    %c0_i32_0 = arith.constant 0 : i32
    %c0_i32_1 = arith.constant 0 : i32
    return %arg0, %c0_i32, %c0_i32_0 : i32, i32, i32
  }
  func.func @transform_2(%arg0: i32, %arg1: i32) -> (i32, i32, i32) {
    %c0_i32 = arith.constant 0 : i32
    %c0_i32_0 = arith.constant 0 : i32
    return %arg0, %arg1, %c0_i32 : i32, i32, i32
  }
  func.func @transform_3(%arg0: i32, %arg1: i32) -> (i32, i32, i32) {
    %c0_i32 = arith.constant 0 : i32
    %c0_i32_0 = arith.constant 0 : i32
    %c0_i32_1 = arith.constant 0 : i32
    return %arg0, %c0_i32, %c0_i32_0 : i32, i32, i32
  }
}

module attributes {stable_mosaic.version = 11 : i64} {
  func.func @_affine_relu_kernel(%arg0: i32, %arg1: memref<8x2048xf32, #tpu.memory_space<vmem>>, %arg2: memref<1x2048xf32, #tpu.memory_space<vmem>>, %arg3: memref<1x2048xf32, #tpu.memory_space<vmem>>, %arg4: memref<8x2048xbf16, #tpu.memory_space<vmem>>) attributes {dimension_semantics = [#tpu.dimension_semantics<parallel>], iteration_bounds = array<i64: 1>, scalar_prefetch = 0 : i64, scratch_operands = 0 : i64, tpu.core_type = #tpu.core_type<tc>, window_params = [{transform_indices = @transform_0, window_bounds = array<i64: 8, 2048>}, {pipeline_mode = #tpu.pipeline_mode<synchronous>, transform_indices = @transform_1, window_bounds = array<i64: 1, 2048>}, {pipeline_mode = #tpu.pipeline_mode<synchronous>, transform_indices = @transform_2, window_bounds = array<i64: 1, 2048>}, {transform_indices = @transform_3, window_bounds = array<i64: 8, 2048>}]} {
    %c0 = arith.constant 0 : index
    %c0_0 = arith.constant 0 : index
    %0 = vector.load %arg1[%c0, %c0_0] : memref<8x2048xf32, #tpu.memory_space<vmem>>, vector<8x2048xf32>
    %c0_1 = arith.constant 0 : index
    %c0_2 = arith.constant 0 : index
    %1 = vector.load %arg2[%c0_1, %c0_2] : memref<1x2048xf32, #tpu.memory_space<vmem>>, vector<1x2048xf32>
    %2 = vector.broadcast %1 : vector<1x2048xf32> to vector<8x2048xf32>
    %3 = arith.mulf %0, %2 : vector<8x2048xf32>
    %c0_3 = arith.constant 0 : index
    %c0_4 = arith.constant 0 : index
    %4 = vector.load %arg3[%c0_3, %c0_4] : memref<1x2048xf32, #tpu.memory_space<vmem>>, vector<1x2048xf32>
    %5 = vector.broadcast %4 : vector<1x2048xf32> to vector<8x2048xf32>
    %6 = arith.addf %3, %5 : vector<8x2048xf32>
    %cst = arith.constant 0.000000e+00 : f32
    %7 = vector.broadcast %cst : f32 to vector<8x2048xf32>
    %8 = arith.maximumf %6, %7 : vector<8x2048xf32>
    %9 = arith.truncf %8 : vector<8x2048xf32> to vector<8x2048xbf16>
    %c0_5 = arith.constant 0 : index
    %c0_6 = arith.constant 0 : index
    %10 = vector.load %arg4[%c0_5, %c0_6] : memref<8x2048xbf16, #tpu.memory_space<vmem>>, vector<8x2048xbf16>
    tpu.vector_store %arg4[%c0_5, %c0_6], %9 {strides = array<i32>} : memref<8x2048xbf16, #tpu.memory_space<vmem>>, vector<8x2048xbf16>,
    return
  }
  func.func @transform_0(%arg0: i32) -> (i32, i32) {
    %c0_i32 = arith.constant 0 : i32
    %c0_i32_0 = arith.constant 0 : i32
    return %arg0, %c0_i32 : i32, i32
  }
  func.func @transform_1(%arg0: i32) -> (i32, i32) {
    %c0_i32 = arith.constant 0 : i32
    %c0_i32_0 = arith.constant 0 : i32
    %c0_i32_1 = arith.constant 0 : i32
    return %c0_i32, %c0_i32_0 : i32, i32
  }
  func.func @transform_2(%arg0: i32) -> (i32, i32) {
    %c0_i32 = arith.constant 0 : i32
    %c0_i32_0 = arith.constant 0 : i32
    %c0_i32_1 = arith.constant 0 : i32
    return %c0_i32, %c0_i32_0 : i32, i32
  }
  func.func @transform_3(%arg0: i32) -> (i32, i32) {
    %c0_i32 = arith.constant 0 : i32
    %c0_i32_0 = arith.constant 0 : i32
    return %arg0, %c0_i32 : i32, i32
  }
}

module attributes {stable_mosaic.version = 11 : i64} {
  func.func @_affine_relu_kernel(%arg0: i32, %arg1: memref<128x128xf32, #tpu.memory_space<vmem>>, %arg2: memref<1x128xf32, #tpu.memory_space<vmem>>, %arg3: memref<1x128xf32, #tpu.memory_space<vmem>>, %arg4: memref<128x128xbf16, #tpu.memory_space<vmem>>) attributes {dimension_semantics = [#tpu.dimension_semantics<parallel>], iteration_bounds = array<i64: 1>, scalar_prefetch = 0 : i64, scratch_operands = 0 : i64, tpu.core_type = #tpu.core_type<tc>, window_params = [{transform_indices = @transform_0, window_bounds = array<i64: 128, 128>}, {pipeline_mode = #tpu.pipeline_mode<synchronous>, transform_indices = @transform_1, window_bounds = array<i64: 1, 128>}, {pipeline_mode = #tpu.pipeline_mode<synchronous>, transform_indices = @transform_2, window_bounds = array<i64: 1, 128>}, {transform_indices = @transform_3, window_bounds = array<i64: 128, 128>}]} {
    %c0 = arith.constant 0 : index
    %c0_0 = arith.constant 0 : index
    %0 = vector.load %arg1[%c0, %c0_0] : memref<128x128xf32, #tpu.memory_space<vmem>>, vector<128x128xf32>
    %c0_1 = arith.constant 0 : index
    %c0_2 = arith.constant 0 : index
    %1 = vector.load %arg2[%c0_1, %c0_2] : memref<1x128xf32, #tpu.memory_space<vmem>>, vector<1x128xf32>
    %2 = vector.broadcast %1 : vector<1x128xf32> to vector<128x128xf32>
    %3 = arith.mulf %0, %2 : vector<128x128xf32>
    %c0_3 = arith.constant 0 : index
    %c0_4 = arith.constant 0 : index
    %4 = vector.load %arg3[%c0_3, %c0_4] : memref<1x128xf32, #tpu.memory_space<vmem>>, vector<1x128xf32>
    %5 = vector.broadcast %4 : vector<1x128xf32> to vector<128x128xf32>
    %6 = arith.addf %3, %5 : vector<128x128xf32>
    %cst = arith.constant 0.000000e+00 : f32
    %7 = vector.broadcast %cst : f32 to vector<128x128xf32>
    %8 = arith.maximumf %6, %7 : vector<128x128xf32>
    %9 = arith.truncf %8 : vector<128x128xf32> to vector<128x128xbf16>
    %c0_5 = arith.constant 0 : index
    %c0_6 = arith.constant 0 : index
    %10 = vector.load %arg4[%c0_5, %c0_6] : memref<128x128xbf16, #tpu.memory_space<vmem>>, vector<128x128xbf16>
    tpu.vector_store %arg4[%c0_5, %c0_6], %9 {strides = array<i32>} : memref<128x128xbf16, #tpu.memory_space<vmem>>, vector<128x128xbf16>,
    return
  }
  func.func @transform_0(%arg0: i32) -> (i32, i32) {
    %c0_i32 = arith.constant 0 : i32
    %c0_i32_0 = arith.constant 0 : i32
    return %arg0, %c0_i32 : i32, i32
  }
  func.func @transform_1(%arg0: i32) -> (i32, i32) {
    %c0_i32 = arith.constant 0 : i32
    %c0_i32_0 = arith.constant 0 : i32
    %c0_i32_1 = arith.constant 0 : i32
    return %c0_i32, %c0_i32_0 : i32, i32
  }
  func.func @transform_2(%arg0: i32) -> (i32, i32) {
    %c0_i32 = arith.constant 0 : i32
    %c0_i32_0 = arith.constant 0 : i32
    %c0_i32_1 = arith.constant 0 : i32
    return %c0_i32, %c0_i32_0 : i32, i32
  }
  func.func @transform_3(%arg0: i32) -> (i32, i32) {
    %c0_i32 = arith.constant 0 : i32
    %c0_i32_0 = arith.constant 0 : i32
    return %arg0, %c0_i32 : i32, i32
  }
}

module attributes {stable_mosaic.version = 11 : i64} {
  func.func @_deconv_matmul_kernel(%arg0: i32, %arg1: i32, %arg2: memref<1x32x512xbf16, #tpu.memory_space<vmem>>, %arg3: memref<1x512x128xbf16, #tpu.memory_space<vmem>>, %arg4: memref<1x32x128xf32, #tpu.memory_space<vmem>>, %arg5: memref<1x2x128xf32, #tpu.memory_space<vmem>>) attributes {dimension_semantics = [#tpu.dimension_semantics<parallel>, #tpu.dimension_semantics<arbitrary>], iteration_bounds = array<i64: 4, 1>, scalar_prefetch = 0 : i64, scratch_operands = 0 : i64, tpu.core_type = #tpu.core_type<tc>, window_params = [{transform_indices = @transform_0, window_bounds = array<i64: 1, 32, 512>}, {transform_indices = @transform_1, window_bounds = array<i64: 1, 512, 128>}, {transform_indices = @transform_2, window_bounds = array<i64: 1, 32, 128>}, {transform_indices = @transform_3, window_bounds = array<i64: 1, 2, 128>}]} {
    %c0 = arith.constant 0 : index
    %c0_0 = arith.constant 0 : index
    %c0_1 = arith.constant 0 : index
    %0 = vector.load %arg2[%c0, %c0_0, %c0_1] : memref<1x32x512xbf16, #tpu.memory_space<vmem>>, vector<1x32x512xbf16>
    %1 = vector.shape_cast %0 : vector<1x32x512xbf16> to vector<32x512xbf16>
    %c0_2 = arith.constant 0 : index
    %c0_3 = arith.constant 0 : index
    %c0_4 = arith.constant 0 : index
    %2 = vector.load %arg3[%c0_2, %c0_3, %c0_4] : memref<1x512x128xbf16, #tpu.memory_space<vmem>>, vector<1x512x128xbf16>
    %3 = vector.shape_cast %2 : vector<1x512x128xbf16> to vector<512x128xbf16>
    %cst = arith.constant dense<0.000000e+00> : vector<32x128xf32>
    %4 = tpu.matmul %1, %3, %cst {dimension_numbers = #tpu.dot_dimension_numbers<[1], [0], [0], [1], [0, 0, 1, 1], [], []>} : vector<32x512xbf16>, vector<512x128xbf16>, vector<32x128xf32> -> vector<32x128xf32>
    %c0_5 = arith.constant 0 : index
    %c0_6 = arith.constant 0 : index
    %c0_7 = arith.constant 0 : index
    %5 = vector.load %arg4[%c0_5, %c0_6, %c0_7] : memref<1x32x128xf32, #tpu.memory_space<vmem>>, vector<1x32x128xf32>
    %6 = vector.shape_cast %5 : vector<1x32x128xf32> to vector<32x128xf32>
    %7 = vector.shape_cast %4 : vector<32x128xf32> to vector<1x32x128xf32>
    tpu.vector_store %arg4[%c0_5, %c0_6, %c0_7], %7 {strides = array<i32>} : memref<1x32x128xf32, #tpu.memory_space<vmem>>, vector<1x32x128xf32>,
    %c0_i32 = arith.constant 0 : i32
    %8 = arith.cmpi eq, %arg1, %c0_i32 : i32
    %9 = arith.extui %8 : i1 to i32
    %c0_i32_8 = arith.constant 0 : i32
    %10 = arith.cmpi ne, %9, %c0_i32_8 : i32
    scf.if %10 {
      %cst_17 = arith.constant 0.000000e+00 : f32
      %23 = vector.broadcast %cst_17 : f32 to vector<2x128xf32>
      %c0_18 = arith.constant 0 : index
      %c0_19 = arith.constant 0 : index
      %c0_20 = arith.constant 0 : index
      %24 = vector.load %arg5[%c0_18, %c0_19, %c0_20] : memref<1x2x128xf32, #tpu.memory_space<vmem>>, vector<1x2x128xf32>
      %25 = vector.shape_cast %24 : vector<1x2x128xf32> to vector<2x128xf32>
      %26 = vector.shape_cast %23 : vector<2x128xf32> to vector<1x2x128xf32>
      tpu.vector_store %arg5[%c0_18, %c0_19, %c0_20], %26 {strides = array<i32>} : memref<1x2x128xf32, #tpu.memory_space<vmem>>, vector<1x2x128xf32>,
    } else {
    }
    %cst_9 = arith.constant dense<0.000000e+00> : vector<128xf32>
    %11 = vector.multi_reduction <add>, %4, %cst_9 [0] : vector<32x128xf32> to vector<128xf32>
    %12 = vector.shape_cast %11 : vector<128xf32> to vector<1x128xf32>
    %13 = arith.mulf %4, %4 : vector<32x128xf32>
    %cst_10 = arith.constant dense<0.000000e+00> : vector<128xf32>
    %14 = vector.multi_reduction <add>, %13, %cst_10 [0] : vector<32x128xf32> to vector<128xf32>
    %15 = vector.shape_cast %14 : vector<128xf32> to vector<1x128xf32>
    %c0_11 = arith.constant 0 : index
    %c0_12 = arith.constant 0 : index
    %c0_13 = arith.constant 0 : index
    %16 = vector.load %arg5[%c0_11, %c0_12, %c0_13] : memref<1x2x128xf32, #tpu.memory_space<vmem>>, vector<1x2x128xf32>
    %17 = vector.shape_cast %16 : vector<1x2x128xf32> to vector<2x128xf32>
    %18 = tpu.concatenate %12, %15 in 0 : vector<1x128xf32>, vector<1x128xf32> -> vector<2x128xf32>
    %19 = arith.addf %17, %18 : vector<2x128xf32>
    %c0_14 = arith.constant 0 : index
    %c0_15 = arith.constant 0 : index
    %c0_16 = arith.constant 0 : index
    %20 = vector.load %arg5[%c0_14, %c0_15, %c0_16] : memref<1x2x128xf32, #tpu.memory_space<vmem>>, vector<1x2x128xf32>
    %21 = vector.shape_cast %20 : vector<1x2x128xf32> to vector<2x128xf32>
    %22 = vector.shape_cast %19 : vector<2x128xf32> to vector<1x2x128xf32>
    tpu.vector_store %arg5[%c0_14, %c0_15, %c0_16], %22 {strides = array<i32>} : memref<1x2x128xf32, #tpu.memory_space<vmem>>, vector<1x2x128xf32>,
    return
  }
  func.func @transform_0(%arg0: i32, %arg1: i32) -> (i32, i32, i32) {
    %c0_i32 = arith.constant 0 : i32
    %c0_i32_0 = arith.constant 0 : i32
    return %arg0, %arg1, %c0_i32 : i32, i32, i32
  }
  func.func @transform_1(%arg0: i32, %arg1: i32) -> (i32, i32, i32) {
    %c0_i32 = arith.constant 0 : i32
    %c0_i32_0 = arith.constant 0 : i32
    %c0_i32_1 = arith.constant 0 : i32
    return %arg0, %c0_i32, %c0_i32_0 : i32, i32, i32
  }
  func.func @transform_2(%arg0: i32, %arg1: i32) -> (i32, i32, i32) {
    %c0_i32 = arith.constant 0 : i32
    %c0_i32_0 = arith.constant 0 : i32
    return %arg0, %arg1, %c0_i32 : i32, i32, i32
  }
  func.func @transform_3(%arg0: i32, %arg1: i32) -> (i32, i32, i32) {
    %c0_i32 = arith.constant 0 : i32
    %c0_i32_0 = arith.constant 0 : i32
    %c0_i32_1 = arith.constant 0 : i32
    return %arg0, %c0_i32, %c0_i32_0 : i32, i32, i32
  }
}

module attributes {stable_mosaic.version = 11 : i64} {
  func.func @_deconv_matmul_kernel(%arg0: i32, %arg1: i32, %arg2: memref<1x128x256xbf16, #tpu.memory_space<vmem>>, %arg3: memref<1x256x128xbf16, #tpu.memory_space<vmem>>, %arg4: memref<1x128x128xf32, #tpu.memory_space<vmem>>, %arg5: memref<1x2x128xf32, #tpu.memory_space<vmem>>) attributes {dimension_semantics = [#tpu.dimension_semantics<parallel>, #tpu.dimension_semantics<arbitrary>], iteration_bounds = array<i64: 4, 1>, scalar_prefetch = 0 : i64, scratch_operands = 0 : i64, tpu.core_type = #tpu.core_type<tc>, window_params = [{transform_indices = @transform_0, window_bounds = array<i64: 1, 128, 256>}, {transform_indices = @transform_1, window_bounds = array<i64: 1, 256, 128>}, {transform_indices = @transform_2, window_bounds = array<i64: 1, 128, 128>}, {transform_indices = @transform_3, window_bounds = array<i64: 1, 2, 128>}]} {
    %c0 = arith.constant 0 : index
    %c0_0 = arith.constant 0 : index
    %c0_1 = arith.constant 0 : index
    %0 = vector.load %arg2[%c0, %c0_0, %c0_1] : memref<1x128x256xbf16, #tpu.memory_space<vmem>>, vector<1x128x256xbf16>
    %1 = vector.shape_cast %0 : vector<1x128x256xbf16> to vector<128x256xbf16>
    %c0_2 = arith.constant 0 : index
    %c0_3 = arith.constant 0 : index
    %c0_4 = arith.constant 0 : index
    %2 = vector.load %arg3[%c0_2, %c0_3, %c0_4] : memref<1x256x128xbf16, #tpu.memory_space<vmem>>, vector<1x256x128xbf16>
    %3 = vector.shape_cast %2 : vector<1x256x128xbf16> to vector<256x128xbf16>
    %cst = arith.constant dense<0.000000e+00> : vector<128x128xf32>
    %4 = tpu.matmul %1, %3, %cst {dimension_numbers = #tpu.dot_dimension_numbers<[1], [0], [0], [1], [0, 0, 1, 1], [], []>} : vector<128x256xbf16>, vector<256x128xbf16>, vector<128x128xf32> -> vector<128x128xf32>
    %c0_5 = arith.constant 0 : index
    %c0_6 = arith.constant 0 : index
    %c0_7 = arith.constant 0 : index
    %5 = vector.load %arg4[%c0_5, %c0_6, %c0_7] : memref<1x128x128xf32, #tpu.memory_space<vmem>>, vector<1x128x128xf32>
    %6 = vector.shape_cast %5 : vector<1x128x128xf32> to vector<128x128xf32>
    %7 = vector.shape_cast %4 : vector<128x128xf32> to vector<1x128x128xf32>
    tpu.vector_store %arg4[%c0_5, %c0_6, %c0_7], %7 {strides = array<i32>} : memref<1x128x128xf32, #tpu.memory_space<vmem>>, vector<1x128x128xf32>,
    %c0_i32 = arith.constant 0 : i32
    %8 = arith.cmpi eq, %arg1, %c0_i32 : i32
    %9 = arith.extui %8 : i1 to i32
    %c0_i32_8 = arith.constant 0 : i32
    %10 = arith.cmpi ne, %9, %c0_i32_8 : i32
    scf.if %10 {
      %cst_17 = arith.constant 0.000000e+00 : f32
      %23 = vector.broadcast %cst_17 : f32 to vector<2x128xf32>
      %c0_18 = arith.constant 0 : index
      %c0_19 = arith.constant 0 : index
      %c0_20 = arith.constant 0 : index
      %24 = vector.load %arg5[%c0_18, %c0_19, %c0_20] : memref<1x2x128xf32, #tpu.memory_space<vmem>>, vector<1x2x128xf32>
      %25 = vector.shape_cast %24 : vector<1x2x128xf32> to vector<2x128xf32>
      %26 = vector.shape_cast %23 : vector<2x128xf32> to vector<1x2x128xf32>
      tpu.vector_store %arg5[%c0_18, %c0_19, %c0_20], %26 {strides = array<i32>} : memref<1x2x128xf32, #tpu.memory_space<vmem>>, vector<1x2x128xf32>,
    } else {
    }
    %cst_9 = arith.constant dense<0.000000e+00> : vector<128xf32>
    %11 = vector.multi_reduction <add>, %4, %cst_9 [0] : vector<128x128xf32> to vector<128xf32>
    %12 = vector.shape_cast %11 : vector<128xf32> to vector<1x128xf32>
    %13 = arith.mulf %4, %4 : vector<128x128xf32>
    %cst_10 = arith.constant dense<0.000000e+00> : vector<128xf32>
    %14 = vector.multi_reduction <add>, %13, %cst_10 [0] : vector<128x128xf32> to vector<128xf32>
    %15 = vector.shape_cast %14 : vector<128xf32> to vector<1x128xf32>
    %c0_11 = arith.constant 0 : index
    %c0_12 = arith.constant 0 : index
    %c0_13 = arith.constant 0 : index
    %16 = vector.load %arg5[%c0_11, %c0_12, %c0_13] : memref<1x2x128xf32, #tpu.memory_space<vmem>>, vector<1x2x128xf32>
    %17 = vector.shape_cast %16 : vector<1x2x128xf32> to vector<2x128xf32>
    %18 = tpu.concatenate %12, %15 in 0 : vector<1x128xf32>, vector<1x128xf32> -> vector<2x128xf32>
    %19 = arith.addf %17, %18 : vector<2x128xf32>
    %c0_14 = arith.constant 0 : index
    %c0_15 = arith.constant 0 : index
    %c0_16 = arith.constant 0 : index
    %20 = vector.load %arg5[%c0_14, %c0_15, %c0_16] : memref<1x2x128xf32, #tpu.memory_space<vmem>>, vector<1x2x128xf32>
    %21 = vector.shape_cast %20 : vector<1x2x128xf32> to vector<2x128xf32>
    %22 = vector.shape_cast %19 : vector<2x128xf32> to vector<1x2x128xf32>
    tpu.vector_store %arg5[%c0_14, %c0_15, %c0_16], %22 {strides = array<i32>} : memref<1x2x128xf32, #tpu.memory_space<vmem>>, vector<1x2x128xf32>,
    return
  }
  func.func @transform_0(%arg0: i32, %arg1: i32) -> (i32, i32, i32) {
    %c0_i32 = arith.constant 0 : i32
    %c0_i32_0 = arith.constant 0 : i32
    return %arg0, %arg1, %c0_i32 : i32, i32, i32
  }
  func.func @transform_1(%arg0: i32, %arg1: i32) -> (i32, i32, i32) {
    %c0_i32 = arith.constant 0 : i32
    %c0_i32_0 = arith.constant 0 : i32
    %c0_i32_1 = arith.constant 0 : i32
    return %arg0, %c0_i32, %c0_i32_0 : i32, i32, i32
  }
  func.func @transform_2(%arg0: i32, %arg1: i32) -> (i32, i32, i32) {
    %c0_i32 = arith.constant 0 : i32
    %c0_i32_0 = arith.constant 0 : i32
    return %arg0, %arg1, %c0_i32 : i32, i32, i32
  }
  func.func @transform_3(%arg0: i32, %arg1: i32) -> (i32, i32, i32) {
    %c0_i32 = arith.constant 0 : i32
    %c0_i32_0 = arith.constant 0 : i32
    %c0_i32_1 = arith.constant 0 : i32
    return %arg0, %c0_i32, %c0_i32_0 : i32, i32, i32
  }
}

module attributes {stable_mosaic.version = 11 : i64} {
  func.func @_affine_relu_kernel(%arg0: i32, %arg1: memref<512x128xf32, #tpu.memory_space<vmem>>, %arg2: memref<1x128xf32, #tpu.memory_space<vmem>>, %arg3: memref<1x128xf32, #tpu.memory_space<vmem>>, %arg4: memref<512x128xbf16, #tpu.memory_space<vmem>>) attributes {dimension_semantics = [#tpu.dimension_semantics<parallel>], iteration_bounds = array<i64: 1>, scalar_prefetch = 0 : i64, scratch_operands = 0 : i64, tpu.core_type = #tpu.core_type<tc>, window_params = [{transform_indices = @transform_0, window_bounds = array<i64: 512, 128>}, {pipeline_mode = #tpu.pipeline_mode<synchronous>, transform_indices = @transform_1, window_bounds = array<i64: 1, 128>}, {pipeline_mode = #tpu.pipeline_mode<synchronous>, transform_indices = @transform_2, window_bounds = array<i64: 1, 128>}, {transform_indices = @transform_3, window_bounds = array<i64: 512, 128>}]} {
    %c0 = arith.constant 0 : index
    %c0_0 = arith.constant 0 : index
    %0 = vector.load %arg1[%c0, %c0_0] : memref<512x128xf32, #tpu.memory_space<vmem>>, vector<512x128xf32>
    %c0_1 = arith.constant 0 : index
    %c0_2 = arith.constant 0 : index
    %1 = vector.load %arg2[%c0_1, %c0_2] : memref<1x128xf32, #tpu.memory_space<vmem>>, vector<1x128xf32>
    %2 = vector.broadcast %1 : vector<1x128xf32> to vector<512x128xf32>
    %3 = arith.mulf %0, %2 : vector<512x128xf32>
    %c0_3 = arith.constant 0 : index
    %c0_4 = arith.constant 0 : index
    %4 = vector.load %arg3[%c0_3, %c0_4] : memref<1x128xf32, #tpu.memory_space<vmem>>, vector<1x128xf32>
    %5 = vector.broadcast %4 : vector<1x128xf32> to vector<512x128xf32>
    %6 = arith.addf %3, %5 : vector<512x128xf32>
    %cst = arith.constant 0.000000e+00 : f32
    %7 = vector.broadcast %cst : f32 to vector<512x128xf32>
    %8 = arith.maximumf %6, %7 : vector<512x128xf32>
    %9 = arith.truncf %8 : vector<512x128xf32> to vector<512x128xbf16>
    %c0_5 = arith.constant 0 : index
    %c0_6 = arith.constant 0 : index
    %10 = vector.load %arg4[%c0_5, %c0_6] : memref<512x128xbf16, #tpu.memory_space<vmem>>, vector<512x128xbf16>
    tpu.vector_store %arg4[%c0_5, %c0_6], %9 {strides = array<i32>} : memref<512x128xbf16, #tpu.memory_space<vmem>>, vector<512x128xbf16>,
    return
  }
  func.func @transform_0(%arg0: i32) -> (i32, i32) {
    %c0_i32 = arith.constant 0 : i32
    %c0_i32_0 = arith.constant 0 : i32
    return %arg0, %c0_i32 : i32, i32
  }
  func.func @transform_1(%arg0: i32) -> (i32, i32) {
    %c0_i32 = arith.constant 0 : i32
    %c0_i32_0 = arith.constant 0 : i32
    %c0_i32_1 = arith.constant 0 : i32
    return %c0_i32, %c0_i32_0 : i32, i32
  }
  func.func @transform_2(%arg0: i32) -> (i32, i32) {
    %c0_i32 = arith.constant 0 : i32
    %c0_i32_0 = arith.constant 0 : i32
    %c0_i32_1 = arith.constant 0 : i32
    return %c0_i32, %c0_i32_0 : i32, i32
  }
  func.func @transform_3(%arg0: i32) -> (i32, i32) {
    %c0_i32 = arith.constant 0 : i32
    %c0_i32_0 = arith.constant 0 : i32
    return %arg0, %c0_i32 : i32, i32
  }
}

module attributes {stable_mosaic.version = 11 : i64} {
  func.func @_deconv_matmul_kernel(%arg0: i32, %arg1: i32, %arg2: memref<1x512x128xbf16, #tpu.memory_space<vmem>>, %arg3: memref<1x128x128xbf16, #tpu.memory_space<vmem>>, %arg4: memref<1x512x128xf32, #tpu.memory_space<vmem>>, %arg5: memref<1x2x128xf32, #tpu.memory_space<vmem>>) attributes {dimension_semantics = [#tpu.dimension_semantics<parallel>, #tpu.dimension_semantics<arbitrary>], iteration_bounds = array<i64: 4, 1>, scalar_prefetch = 0 : i64, scratch_operands = 0 : i64, tpu.core_type = #tpu.core_type<tc>, window_params = [{transform_indices = @transform_0, window_bounds = array<i64: 1, 512, 128>}, {transform_indices = @transform_1, window_bounds = array<i64: 1, 128, 128>}, {transform_indices = @transform_2, window_bounds = array<i64: 1, 512, 128>}, {transform_indices = @transform_3, window_bounds = array<i64: 1, 2, 128>}]} {
    %c0 = arith.constant 0 : index
    %c0_0 = arith.constant 0 : index
    %c0_1 = arith.constant 0 : index
    %0 = vector.load %arg2[%c0, %c0_0, %c0_1] : memref<1x512x128xbf16, #tpu.memory_space<vmem>>, vector<1x512x128xbf16>
    %1 = vector.shape_cast %0 : vector<1x512x128xbf16> to vector<512x128xbf16>
    %c0_2 = arith.constant 0 : index
    %c0_3 = arith.constant 0 : index
    %c0_4 = arith.constant 0 : index
    %2 = vector.load %arg3[%c0_2, %c0_3, %c0_4] : memref<1x128x128xbf16, #tpu.memory_space<vmem>>, vector<1x128x128xbf16>
    %3 = vector.shape_cast %2 : vector<1x128x128xbf16> to vector<128x128xbf16>
    %cst = arith.constant dense<0.000000e+00> : vector<512x128xf32>
    %4 = tpu.matmul %1, %3, %cst {dimension_numbers = #tpu.dot_dimension_numbers<[1], [0], [0], [1], [0, 0, 1, 1], [], []>} : vector<512x128xbf16>, vector<128x128xbf16>, vector<512x128xf32> -> vector<512x128xf32>
    %c0_5 = arith.constant 0 : index
    %c0_6 = arith.constant 0 : index
    %c0_7 = arith.constant 0 : index
    %5 = vector.load %arg4[%c0_5, %c0_6, %c0_7] : memref<1x512x128xf32, #tpu.memory_space<vmem>>, vector<1x512x128xf32>
    %6 = vector.shape_cast %5 : vector<1x512x128xf32> to vector<512x128xf32>
    %7 = vector.shape_cast %4 : vector<512x128xf32> to vector<1x512x128xf32>
    tpu.vector_store %arg4[%c0_5, %c0_6, %c0_7], %7 {strides = array<i32>} : memref<1x512x128xf32, #tpu.memory_space<vmem>>, vector<1x512x128xf32>,
    %c0_i32 = arith.constant 0 : i32
    %8 = arith.cmpi eq, %arg1, %c0_i32 : i32
    %9 = arith.extui %8 : i1 to i32
    %c0_i32_8 = arith.constant 0 : i32
    %10 = arith.cmpi ne, %9, %c0_i32_8 : i32
    scf.if %10 {
      %cst_17 = arith.constant 0.000000e+00 : f32
      %23 = vector.broadcast %cst_17 : f32 to vector<2x128xf32>
      %c0_18 = arith.constant 0 : index
      %c0_19 = arith.constant 0 : index
      %c0_20 = arith.constant 0 : index
      %24 = vector.load %arg5[%c0_18, %c0_19, %c0_20] : memref<1x2x128xf32, #tpu.memory_space<vmem>>, vector<1x2x128xf32>
      %25 = vector.shape_cast %24 : vector<1x2x128xf32> to vector<2x128xf32>
      %26 = vector.shape_cast %23 : vector<2x128xf32> to vector<1x2x128xf32>
      tpu.vector_store %arg5[%c0_18, %c0_19, %c0_20], %26 {strides = array<i32>} : memref<1x2x128xf32, #tpu.memory_space<vmem>>, vector<1x2x128xf32>,
    } else {
    }
    %cst_9 = arith.constant dense<0.000000e+00> : vector<128xf32>
    %11 = vector.multi_reduction <add>, %4, %cst_9 [0] : vector<512x128xf32> to vector<128xf32>
    %12 = vector.shape_cast %11 : vector<128xf32> to vector<1x128xf32>
    %13 = arith.mulf %4, %4 : vector<512x128xf32>
    %cst_10 = arith.constant dense<0.000000e+00> : vector<128xf32>
    %14 = vector.multi_reduction <add>, %13, %cst_10 [0] : vector<512x128xf32> to vector<128xf32>
    %15 = vector.shape_cast %14 : vector<128xf32> to vector<1x128xf32>
    %c0_11 = arith.constant 0 : index
    %c0_12 = arith.constant 0 : index
    %c0_13 = arith.constant 0 : index
    %16 = vector.load %arg5[%c0_11, %c0_12, %c0_13] : memref<1x2x128xf32, #tpu.memory_space<vmem>>, vector<1x2x128xf32>
    %17 = vector.shape_cast %16 : vector<1x2x128xf32> to vector<2x128xf32>
    %18 = tpu.concatenate %12, %15 in 0 : vector<1x128xf32>, vector<1x128xf32> -> vector<2x128xf32>
    %19 = arith.addf %17, %18 : vector<2x128xf32>
    %c0_14 = arith.constant 0 : index
    %c0_15 = arith.constant 0 : index
    %c0_16 = arith.constant 0 : index
    %20 = vector.load %arg5[%c0_14, %c0_15, %c0_16] : memref<1x2x128xf32, #tpu.memory_space<vmem>>, vector<1x2x128xf32>
    %21 = vector.shape_cast %20 : vector<1x2x128xf32> to vector<2x128xf32>
    %22 = vector.shape_cast %19 : vector<2x128xf32> to vector<1x2x128xf32>
    tpu.vector_store %arg5[%c0_14, %c0_15, %c0_16], %22 {strides = array<i32>} : memref<1x2x128xf32, #tpu.memory_space<vmem>>, vector<1x2x128xf32>,
    return
  }
  func.func @transform_0(%arg0: i32, %arg1: i32) -> (i32, i32, i32) {
    %c0_i32 = arith.constant 0 : i32
    %c0_i32_0 = arith.constant 0 : i32
    return %arg0, %arg1, %c0_i32 : i32, i32, i32
  }
  func.func @transform_1(%arg0: i32, %arg1: i32) -> (i32, i32, i32) {
    %c0_i32 = arith.constant 0 : i32
    %c0_i32_0 = arith.constant 0 : i32
    %c0_i32_1 = arith.constant 0 : i32
    return %arg0, %c0_i32, %c0_i32_0 : i32, i32, i32
  }
  func.func @transform_2(%arg0: i32, %arg1: i32) -> (i32, i32, i32) {
    %c0_i32 = arith.constant 0 : i32
    %c0_i32_0 = arith.constant 0 : i32
    return %arg0, %arg1, %c0_i32 : i32, i32, i32
  }
  func.func @transform_3(%arg0: i32, %arg1: i32) -> (i32, i32, i32) {
    %c0_i32 = arith.constant 0 : i32
    %c0_i32_0 = arith.constant 0 : i32
    %c0_i32_1 = arith.constant 0 : i32
    return %arg0, %c0_i32, %c0_i32_0 : i32, i32, i32
  }
}

module attributes {stable_mosaic.version = 11 : i64} {
  func.func @_affine_relu_kernel(%arg0: i32, %arg1: memref<1024x128xf32, #tpu.memory_space<vmem>>, %arg2: memref<1x128xf32, #tpu.memory_space<vmem>>, %arg3: memref<1x128xf32, #tpu.memory_space<vmem>>, %arg4: memref<1024x128xbf16, #tpu.memory_space<vmem>>) attributes {dimension_semantics = [#tpu.dimension_semantics<parallel>], iteration_bounds = array<i64: 2>, scalar_prefetch = 0 : i64, scratch_operands = 0 : i64, tpu.core_type = #tpu.core_type<tc>, window_params = [{transform_indices = @transform_0, window_bounds = array<i64: 1024, 128>}, {pipeline_mode = #tpu.pipeline_mode<synchronous>, transform_indices = @transform_1, window_bounds = array<i64: 1, 128>}, {pipeline_mode = #tpu.pipeline_mode<synchronous>, transform_indices = @transform_2, window_bounds = array<i64: 1, 128>}, {transform_indices = @transform_3, window_bounds = array<i64: 1024, 128>}]} {
    %c0 = arith.constant 0 : index
    %c0_0 = arith.constant 0 : index
    %0 = vector.load %arg1[%c0, %c0_0] : memref<1024x128xf32, #tpu.memory_space<vmem>>, vector<1024x128xf32>
    %c0_1 = arith.constant 0 : index
    %c0_2 = arith.constant 0 : index
    %1 = vector.load %arg2[%c0_1, %c0_2] : memref<1x128xf32, #tpu.memory_space<vmem>>, vector<1x128xf32>
    %2 = vector.broadcast %1 : vector<1x128xf32> to vector<1024x128xf32>
    %3 = arith.mulf %0, %2 : vector<1024x128xf32>
    %c0_3 = arith.constant 0 : index
    %c0_4 = arith.constant 0 : index
    %4 = vector.load %arg3[%c0_3, %c0_4] : memref<1x128xf32, #tpu.memory_space<vmem>>, vector<1x128xf32>
    %5 = vector.broadcast %4 : vector<1x128xf32> to vector<1024x128xf32>
    %6 = arith.addf %3, %5 : vector<1024x128xf32>
    %cst = arith.constant 0.000000e+00 : f32
    %7 = vector.broadcast %cst : f32 to vector<1024x128xf32>
    %8 = arith.maximumf %6, %7 : vector<1024x128xf32>
    %9 = arith.truncf %8 : vector<1024x128xf32> to vector<1024x128xbf16>
    %c0_5 = arith.constant 0 : index
    %c0_6 = arith.constant 0 : index
    %10 = vector.load %arg4[%c0_5, %c0_6] : memref<1024x128xbf16, #tpu.memory_space<vmem>>, vector<1024x128xbf16>
    tpu.vector_store %arg4[%c0_5, %c0_6], %9 {strides = array<i32>} : memref<1024x128xbf16, #tpu.memory_space<vmem>>, vector<1024x128xbf16>,
    return
  }
  func.func @transform_0(%arg0: i32) -> (i32, i32) {
    %c0_i32 = arith.constant 0 : i32
    %c0_i32_0 = arith.constant 0 : i32
    return %arg0, %c0_i32 : i32, i32
  }
  func.func @transform_1(%arg0: i32) -> (i32, i32) {
    %c0_i32 = arith.constant 0 : i32
    %c0_i32_0 = arith.constant 0 : i32
    %c0_i32_1 = arith.constant 0 : i32
    return %c0_i32, %c0_i32_0 : i32, i32
  }
  func.func @transform_2(%arg0: i32) -> (i32, i32) {
    %c0_i32 = arith.constant 0 : i32
    %c0_i32_0 = arith.constant 0 : i32
    %c0_i32_1 = arith.constant 0 : i32
    return %c0_i32, %c0_i32_0 : i32, i32
  }
  func.func @transform_3(%arg0: i32) -> (i32, i32) {
    %c0_i32 = arith.constant 0 : i32
    %c0_i32_0 = arith.constant 0 : i32
    return %arg0, %c0_i32 : i32, i32
  }
}

module attributes {stable_mosaic.version = 11 : i64} {
  func.func @_deconv_matmul_kernel(%arg0: i32, %arg1: i32, %arg2: memref<1x512x64xbf16, #tpu.memory_space<vmem>>, %arg3: memref<1x64x128xbf16, #tpu.memory_space<vmem>>, %arg4: memref<1x128xf32, #tpu.memory_space<vmem>>, %arg5: memref<1x512x128xf32, #tpu.memory_space<vmem>>) attributes {dimension_semantics = [#tpu.dimension_semantics<parallel>, #tpu.dimension_semantics<arbitrary>], iteration_bounds = array<i64: 4, 4>, scalar_prefetch = 0 : i64, scratch_operands = 0 : i64, tpu.core_type = #tpu.core_type<tc>, window_params = [{transform_indices = @transform_0, window_bounds = array<i64: 1, 512, 64>}, {transform_indices = @transform_1, window_bounds = array<i64: 1, 64, 128>}, {pipeline_mode = #tpu.pipeline_mode<synchronous>, transform_indices = @transform_2, window_bounds = array<i64: 1, 128>}, {transform_indices = @transform_3, window_bounds = array<i64: 1, 512, 128>}]} {
    %c0 = arith.constant 0 : index
    %c0_0 = arith.constant 0 : index
    %c0_1 = arith.constant 0 : index
    %0 = vector.load %arg2[%c0, %c0_0, %c0_1] : memref<1x512x64xbf16, #tpu.memory_space<vmem>>, vector<1x512x64xbf16>
    %1 = vector.shape_cast %0 : vector<1x512x64xbf16> to vector<512x64xbf16>
    %c0_2 = arith.constant 0 : index
    %c0_3 = arith.constant 0 : index
    %c0_4 = arith.constant 0 : index
    %2 = vector.load %arg3[%c0_2, %c0_3, %c0_4] : memref<1x64x128xbf16, #tpu.memory_space<vmem>>, vector<1x64x128xbf16>
    %3 = vector.shape_cast %2 : vector<1x64x128xbf16> to vector<64x128xbf16>
    %cst = arith.constant dense<0.000000e+00> : vector<512x128xf32>
    %4 = tpu.matmul %1, %3, %cst {dimension_numbers = #tpu.dot_dimension_numbers<[1], [0], [0], [1], [0, 0, 1, 1], [], []>} : vector<512x64xbf16>, vector<64x128xbf16>, vector<512x128xf32> -> vector<512x128xf32>
    %c0_5 = arith.constant 0 : index
    %c0_6 = arith.constant 0 : index
    %5 = vector.load %arg4[%c0_5, %c0_6] : memref<1x128xf32, #tpu.memory_space<vmem>>, vector<1x128xf32>
    %6 = vector.broadcast %5 : vector<1x128xf32> to vector<512x128xf32>
    %7 = arith.addf %4, %6 : vector<512x128xf32>
    %8 = math.tanh %7 : vector<512x128xf32>
    %c0_7 = arith.constant 0 : index
    %c0_8 = arith.constant 0 : index
    %c0_9 = arith.constant 0 : index
    %9 = vector.load %arg5[%c0_7, %c0_8, %c0_9] : memref<1x512x128xf32, #tpu.memory_space<vmem>>, vector<1x512x128xf32>
    %10 = vector.shape_cast %9 : vector<1x512x128xf32> to vector<512x128xf32>
    %11 = vector.shape_cast %8 : vector<512x128xf32> to vector<1x512x128xf32>
    tpu.vector_store %arg5[%c0_7, %c0_8, %c0_9], %11 {strides = array<i32>} : memref<1x512x128xf32, #tpu.memory_space<vmem>>, vector<1x512x128xf32>,
    return
  }
  func.func @transform_0(%arg0: i32, %arg1: i32) -> (i32, i32, i32) {
    %c0_i32 = arith.constant 0 : i32
    %c0_i32_0 = arith.constant 0 : i32
    return %arg0, %arg1, %c0_i32 : i32, i32, i32
  }
  func.func @transform_1(%arg0: i32, %arg1: i32) -> (i32, i32, i32) {
    %c0_i32 = arith.constant 0 : i32
    %c0_i32_0 = arith.constant 0 : i32
    %c0_i32_1 = arith.constant 0 : i32
    return %arg0, %c0_i32, %c0_i32_0 : i32, i32, i32
  }
  func.func @transform_2(%arg0: i32, %arg1: i32) -> (i32, i32) {
    %c0_i32 = arith.constant 0 : i32
    %c0_i32_0 = arith.constant 0 : i32
    %c0_i32_1 = arith.constant 0 : i32
    return %c0_i32, %c0_i32_0 : i32, i32
  }
  func.func @transform_3(%arg0: i32, %arg1: i32) -> (i32, i32, i32) {
    %c0_i32 = arith.constant 0 : i32
    %c0_i32_0 = arith.constant 0 : i32
    return %arg0, %arg1, %c0_i32 : i32, i32, i32
  }
}

</mosaic_0001>

<llo_original>
// kernel: tile.18
$region0: #{tile.18}
  #allocation0 [shape = 's32[1]{0}', space=sflag, size = 0x4, scoped, tag = 'scoped memory for tile.18']
  %s0 = inlined_call_operand.vmem [shape: f32[128], index: 0, kind: input, shape index: {}]
  %s1 = inlined_call_operand.vmem [shape: f32[16,128], index: 1, kind: output, shape index: {}]
  // Predicated region
  $region2: #{tile.18} parent=0 // pred_check
    _
  $region3: #{tile.18} parent=0 // pred_check_branch
    %3 = sbr.rel (0) target = $region5
  $region4: #{tile.18} parent=0 // pred_region
    _
  $region5: #{tile.18} parent=0 // pred_fallthru
    _
  %v4 = vld [vmem:[%s0] ss:$0 sm:$0xff]
  %5 = vst [vmem:[%s1] sm:$0xff] %v4
  %s6 = scalar_lea.vmem %s1, 8
  %7 = vst [vmem:[%s6] sm:$0xff] %v4

// kernel: _lambda_.10
$region0: #{_lambda_.10}
  #allocation0 [shape = 'u32[]', space=smem, size = 0x4, offset = 0x4, fixed_abs, tag = 'smem constant byte address 0x4 - core index']
  #allocation1 [shape = 'u32[144,128]{1,0:T(1,128)}', space=vmem, size = 0x12000, scoped, tag = 'internal scratch']
  %s0 = inlined_call_operand.vmem [shape: f32[8,2048], index: 0, kind: input, shape index: {}]
  %s1 = inlined_call_operand.vmem [shape: f32[1,2048], index: 1, kind: input, shape index: {}]
  %s2 = inlined_call_operand.vmem [shape: f32[1,2048], index: 2, kind: input, shape index: {}]
  %s3 = inlined_call_operand.vmem [shape: bf16[8,2048], index: 3, kind: output, shape index: {}]
  %s4 = sld [smem:[#allocation0]]
  $region22: #{_lambda_.10} parent=0
    _
  %s6 = ssub.s32 1, %s4
  %s7 = scalar_select 0, %s6, %s4
  // Predicated region
  $region2: #{_lambda_.10} parent=0 // pred_check
    _
  $region3: #{_lambda_.10} parent=0 // pred_check_branch
    %9 = sbr.rel (0) target = $region5
  $region4: #{_lambda_.10} parent=0 // pred_region
    _
  $region5: #{_lambda_.10} parent=0 // pred_fallthru
    _
  // Predicated region
  $region6: #{_lambda_.10} parent=0 // pred_check
    _
  $region7: #{_lambda_.10} parent=0 // pred_check_branch
    %11 = sbr.rel (0) target = $region9
  $region8: #{_lambda_.10} parent=0 // pred_region
    _
  $region9: #{_lambda_.10} parent=0 // pred_fallthru
    _
  // Predicated region
  $region10: #{_lambda_.10} parent=0 // pred_check
    _
  $region11: #{_lambda_.10} parent=0 // pred_check_branch
    %13 = sbr.rel (0) target = $region13
  $region12: #{_lambda_.10} parent=0 // pred_region
    _
  $region13: #{_lambda_.10} parent=0 // pred_fallthru
    _
  %v14 = vld [vmem:[%s0] sm:$0xff]
  %v15 = vld [vmem:[%s0 + $0x8] sm:$0xff]
  %v16 = vld [vmem:[%s0 + $0x10] sm:$0xff]
  %v17 = vld [vmem:[%s0 + $0x18] sm:$0xff]
  %v18 = vld [vmem:[%s0 + $0x20] sm:$0xff]
  %v19 = vld [vmem:[%s0 + $0x28] sm:$0xff]
  %v20 = vld [vmem:[%s0 + $0x30] sm:$0xff]
  %v21 = vld [vmem:[%s0 + $0x38] sm:$0xff]
  %v22 = vld [vmem:[%s0 + $0x40] sm:$0xff]
  %v23 = vld [vmem:[%s0 + $0x48] sm:$0xff]
  %v24 = vld [vmem:[%s0 + $0x50] sm:$0xff]
  %v25 = vld [vmem:[%s0 + $0x58] sm:$0xff]
  %v26 = vld [vmem:[%s0 + $0x60] sm:$0xff]
  %v27 = vld [vmem:[%s0 + $0x68] sm:$0xff]
  %v28 = vld [vmem:[%s0 + $0x70] sm:$0xff]
  %v29 = vld [vmem:[%s0 + $0x78] sm:$0xff]
  %v30 = vld [vmem:[%s1] sm:$0xff]
  %v31 = vld [vmem:[%s1 + $0x8] sm:$0xff]
  %v34 = vlaneseq
  %v35 = vshrl.u32 %v34, 7
  %v36 = vsub.s32 0, %v35
  %v37 = vrot.slane %v30, %v36
  %v38 = vlaneseq
  %v39 = vshrl.u32 %v38, 7
  %v40 = vsub.s32 1, %v39
  %v41 = vrot.slane %v30, %v40
  %v42 = vlaneseq
  %v43 = vshrl.u32 %v42, 7
  %v44 = vsub.s32 2, %v43
  %v45 = vrot.slane %v30, %v44
  %v46 = vlaneseq
  %v47 = vshrl.u32 %v46, 7
  %v48 = vsub.s32 3, %v47
  %v49 = vrot.slane %v30, %v48
  %v50 = vlaneseq
  %v51 = vshrl.u32 %v50, 7
  %v52 = vsub.s32 4, %v51
  %v53 = vrot.slane %v30, %v52
  %v54 = vlaneseq
  %v55 = vshrl.u32 %v54, 7
  %v56 = vsub.s32 5, %v55
  %v57 = vrot.slane %v30, %v56
  %v58 = vlaneseq
  %v59 = vshrl.u32 %v58, 7
  %v60 = vsub.s32 6, %v59
  %v61 = vrot.slane %v30, %v60
  %v62 = vlaneseq
  %v63 = vshrl.u32 %v62, 7
  %v64 = vsub.s32 7, %v63
  %v65 = vrot.slane %v30, %v64
  %v66 = vlaneseq
  %v67 = vshrl.u32 %v66, 7
  %v68 = vsub.s32 0, %v67
  %v69 = vrot.slane %v31, %v68
  %v70 = vlaneseq
  %v71 = vshrl.u32 %v70, 7
  %v72 = vsub.s32 1, %v71
  %v73 = vrot.slane %v31, %v72
  %v74 = vlaneseq
  %v75 = vshrl.u32 %v74, 7
  %v76 = vsub.s32 2, %v75
  %v77 = vrot.slane %v31, %v76
  %v78 = vlaneseq
  %v79 = vshrl.u32 %v78, 7
  %v80 = vsub.s32 3, %v79
  %v81 = vrot.slane %v31, %v80
  %v82 = vlaneseq
  %v83 = vshrl.u32 %v82, 7
  %v84 = vsub.s32 4, %v83
  %v85 = vrot.slane %v31, %v84
  %v86 = vlaneseq
  %v87 = vshrl.u32 %v86, 7
  %v88 = vsub.s32 5, %v87
  %v89 = vrot.slane %v31, %v88
  %v90 = vlaneseq
  %v91 = vshrl.u32 %v90, 7
  %v92 = vsub.s32 6, %v91
  %v93 = vrot.slane %v31, %v92
  %v94 = vlaneseq
  %v95 = vshrl.u32 %v94, 7
  %v96 = vsub.s32 7, %v95
  %v97 = vrot.slane %v31, %v96
  %v114 = vmul.f32 %v14, %v37
  %v115 = vmul.f32 %v15, %v41
  %v116 = vmul.f32 %v16, %v45
  %v117 = vmul.f32 %v17, %v49
  %v118 = vmul.f32 %v18, %v53
  %v119 = vmul.f32 %v19, %v57
  %v120 = vmul.f32 %v20, %v61
  %v121 = vmul.f32 %v21, %v65
  %v122 = vmul.f32 %v22, %v69
  %v123 = vmul.f32 %v23, %v73
  %v124 = vmul.f32 %v24, %v77
  %v125 = vmul.f32 %v25, %v81
  %v126 = vmul.f32 %v26, %v85
  %v127 = vmul.f32 %v27, %v89
  %v128 = vmul.f32 %v28, %v93
  %v129 = vmul.f32 %v29, %v97
  %v130 = vld [vmem:[%s2] sm:$0xff]
  %v131 = vld [vmem:[%s2 + $0x8] sm:$0xff]
  %v134 = vlaneseq
  %v135 = vshrl.u32 %v134, 7
  %v136 = vsub.s32 0, %v135
  %v137 = vrot.slane %v130, %v136
  %v138 = vlaneseq
  %v139 = vshrl.u32 %v138, 7
  %v140 = vsub.s32 1, %v139
  %v141 = vrot.slane %v130, %v140
  %v142 = vlaneseq
  %v143 = vshrl.u32 %v142, 7
  %v144 = vsub.s32 2, %v143
  %v145 = vrot.slane %v130, %v144
  %v146 = vlaneseq
  %v147 = vshrl.u32 %v146, 7
  %v148 = vsub.s32 3, %v147
  %v149 = vrot.slane %v130, %v148
  %v150 = vlaneseq
  %v151 = vshrl.u32 %v150, 7
  %v152 = vsub.s32 4, %v151
  %v153 = vrot.slane %v130, %v152
  %v154 = vlaneseq
  %v155 = vshrl.u32 %v154, 7
  %v156 = vsub.s32 5, %v155
  %v157 = vrot.slane %v130, %v156
  %v158 = vlaneseq
  %v159 = vshrl.u32 %v158, 7
  %v160 = vsub.s32 6, %v159
  %v161 = vrot.slane %v130, %v160
  %v162 = vlaneseq
  %v163 = vshrl.u32 %v162, 7
  %v164 = vsub.s32 7, %v163
  %v165 = vrot.slane %v130, %v164
  %v166 = vlaneseq
  %v167 = vshrl.u32 %v166, 7
  %v168 = vsub.s32 0, %v167
  %v169 = vrot.slane %v131, %v168
  %v170 = vlaneseq
  %v171 = vshrl.u32 %v170, 7
  %v172 = vsub.s32 1, %v171
  %v173 = vrot.slane %v131, %v172
  %v174 = vlaneseq
  %v175 = vshrl.u32 %v174, 7
  %v176 = vsub.s32 2, %v175
  %v177 = vrot.slane %v131, %v176
  %v178 = vlaneseq
  %v179 = vshrl.u32 %v178, 7
  %v180 = vsub.s32 3, %v179
  %v181 = vrot.slane %v131, %v180
  %v182 = vlaneseq
  %v183 = vshrl.u32 %v182, 7
  %v184 = vsub.s32 4, %v183
  %v185 = vrot.slane %v131, %v184
  %v186 = vlaneseq
  %v187 = vshrl.u32 %v186, 7
  %v188 = vsub.s32 5, %v187
  %v189 = vrot.slane %v131, %v188
  %v190 = vlaneseq
  %v191 = vshrl.u32 %v190, 7
  %v192 = vsub.s32 6, %v191
  %v193 = vrot.slane %v131, %v192
  %v194 = vlaneseq
  %v195 = vshrl.u32 %v194, 7
  %v196 = vsub.s32 7, %v195
  %v197 = vrot.slane %v131, %v196
  %v214 = vadd.f32 %v114, %v137
  %v215 = vadd.f32 %v115, %v141
  %v216 = vadd.f32 %v116, %v145
  %v217 = vadd.f32 %v117, %v149
  %v218 = vadd.f32 %v118, %v153
  %v219 = vadd.f32 %v119, %v157
  %v220 = vadd.f32 %v120, %v161
  %v221 = vadd.f32 %v121, %v165
  %v222 = vadd.f32 %v122, %v169
  %v223 = vadd.f32 %v123, %v173
  %v224 = vadd.f32 %v124, %v177
  %v225 = vadd.f32 %v125, %v181
  %v226 = vadd.f32 %v126, %v185
  %v227 = vadd.f32 %v127, %v189
  %v228 = vadd.f32 %v128, %v193
  %v229 = vadd.f32 %v129, %v197
  %v230 = vmax.f32 %v214, 0.0
  %v231 = vmax.f32 %v215, 0.0
  %v232 = vmax.f32 %v216, 0.0
  %v233 = vmax.f32 %v217, 0.0
  %v234 = vmax.f32 %v218, 0.0
  %v235 = vmax.f32 %v219, 0.0
  %v236 = vmax.f32 %v220, 0.0
  %v237 = vmax.f32 %v221, 0.0
  %v238 = vmax.f32 %v222, 0.0
  %v239 = vmax.f32 %v223, 0.0
  %v240 = vmax.f32 %v224, 0.0
  %v241 = vmax.f32 %v225, 0.0
  %v242 = vmax.f32 %v226, 0.0
  %v243 = vmax.f32 %v227, 0.0
  %v244 = vmax.f32 %v228, 0.0
  %v245 = vmax.f32 %v229, 0.0
  %v246 = vpack.c.bf16 %v230, %v230
  %v247 = vpack.c.bf16 %v231, %v231
  %v248 = vpack.c.bf16 %v232, %v232
  %v249 = vpack.c.bf16 %v233, %v233
  %v250 = vpack.c.bf16 %v234, %v234
  %v251 = vpack.c.bf16 %v235, %v235
  %v252 = vpack.c.bf16 %v236, %v236
  %v253 = vpack.c.bf16 %v237, %v237
  %v254 = vpack.c.bf16 %v238, %v238
  %v255 = vpack.c.bf16 %v239, %v239
  %v256 = vpack.c.bf16 %v240, %v240
  %v257 = vpack.c.bf16 %v241, %v241
  %v258 = vpack.c.bf16 %v242, %v242
  %v259 = vpack.c.bf16 %v243, %v243
  %v260 = vpack.c.bf16 %v244, %v244
  %v261 = vpack.c.bf16 %v245, %v245
  %v278 = vunpack.c.l.b16 %v246
  %v279 = vunpack.c.l.b16 %v247
  %v280 = vunpack.c.l.b16 %v248
  %v281 = vunpack.c.l.b16 %v249
  %v282 = vunpack.c.l.b16 %v250
  %v283 = vunpack.c.l.b16 %v251
  %v284 = vunpack.c.l.b16 %v252
  %v285 = vunpack.c.l.b16 %v253
  %v286 = vunpack.c.l.b16 %v254
  %v287 = vunpack.c.l.b16 %v255
  %v288 = vunpack.c.l.b16 %v256
  %v289 = vunpack.c.l.b16 %v257
  %v290 = vunpack.c.l.b16 %v258
  %v291 = vunpack.c.l.b16 %v259
  %v292 = vunpack.c.l.b16 %v260
  %v293 = vunpack.c.l.b16 %v261
  %v294 = vpack.c.b16 %v279, %v278
  %v295 = vpack.c.b16 %v281, %v280
  %v296 = vpack.c.b16 %v283, %v282
  %v297 = vpack.c.b16 %v285, %v284
  %v298 = vpack.c.b16 %v287, %v286
  %v299 = vpack.c.b16 %v289, %v288
  %v300 = vpack.c.b16 %v291, %v290
  %v301 = vpack.c.b16 %v293, %v292
  %310 = vst [vmem:[%s3] sm:$0xff] %v294
  %311 = vst [vmem:[%s3 + $0x8] sm:$0xff] %v295
  %312 = vst [vmem:[%s3 + $0x10] sm:$0xff] %v296
  %313 = vst [vmem:[%s3 + $0x18] sm:$0xff] %v297
  %314 = vst [vmem:[%s3 + $0x20] sm:$0xff] %v298
  %315 = vst [vmem:[%s3 + $0x28] sm:$0xff] %v299
  %316 = vst [vmem:[%s3 + $0x30] sm:$0xff] %v300
  %317 = vst [vmem:[%s3 + $0x38] sm:$0xff] %v301
  // Predicated region
  $region14: #{_lambda_.10} parent=0 // pred_check
    _
  $region15: #{_lambda_.10} parent=0 // pred_check_branch
    %319 = sbr.rel (0) target = $region17
  $region16: #{_lambda_.10} parent=0 // pred_region
    _
  $region17: #{_lambda_.10} parent=0 // pred_fallthru
    _
  // Predicated region
  $region18: #{_lambda_.10} parent=0 // pred_check
    _
  $region19: #{_lambda_.10} parent=0 // pred_check_branch
    %321 = sbr.rel (0) target = $region21
  $region20: #{_lambda_.10} parent=0 // pred_region
    _
  $region21: #{_lambda_.10} parent=0 // pred_fallthru
    _

// kernel: _lambda_.9
$region0: #{_lambda_.9}
  #allocation0 [shape = 'u32[]', space=smem, size = 0x4, offset = 0x4, fixed_abs, tag = 'smem constant byte address 0x4 - core index']
  #allocation1 [shape = 'u32[144,128]{1,0:T(1,128)}', space=vmem, size = 0x12000, scoped, tag = 'internal scratch']
  %s0 = inlined_call_operand.vmem [shape: bf16[1,8,8], index: 0, kind: input, shape index: {}]
  %s1 = inlined_call_operand.hbm [shape: bf16[1,8,2048], index: 1, kind: input, shape index: {}]
  %s2 = inlined_call_operand.vmem [shape: f32[1,8,2048], index: 2, kind: output, shape index: {0}]
  %s3 = inlined_call_operand.vmem [shape: f32[1,2,2048], index: 3, kind: output, shape index: {1}]
  %4 = xla_tuple %s2, %s3
  %s5 = sld [smem:[#allocation0]]
  $region34: #{_lambda_.9} parent=0
    _
  %s7 = ssub.s32 1, %s5
  %s8 = scalar_select 0, %s7, %s5
  $region1: #{_lambda_.9} parent=0
    #allocation2 [shape = 'u8[32768]{0}', space=vmem, size = 0x8000, scoped, tag = 'input window, operand 1, single buffered']
    #allocation3 [shape = 's32[1]{0}', space=sflag, size = 0x4, scoped, tag = 'scoped memory for _lambda_.9']
    %9 = vsyncpa [#allocation3], 0
    // Predicated region
    $region2: #{_lambda_.9} parent=1 // pred_check
      _
    $region3: #{_lambda_.9} parent=1 // pred_check_branch
      %11 = sbr.rel (0) target = $region5
    $region4: #{_lambda_.9} parent=1 // pred_region
      _
    $region5: #{_lambda_.9} parent=1 // pred_fallthru
      _
    // Predicated region
    $region6: #{_lambda_.9} parent=1 // pred_check
      _
    $region7: #{_lambda_.9} parent=1 // pred_check_branch
      %13 = sbr.rel (0) target = $region9
    $region8: #{_lambda_.9} parent=1 // pred_region
      %s15 = ssub.s32 1024, 1024
      %16 = vsyncadd [#allocation3], %s15
      %s18 = sshll.u32 [#allocation2], 4
      %s19 = int_to_ptr.vmem [resolvable:$true] %s18
      %21 = dma.hbm_to_vmem [thread:$0]  %s1, 1024, %s19, [#allocation3]
    $region9: #{_lambda_.9} parent=1 // pred_fallthru
      _
    // Predicated region
    $region10: #{_lambda_.9} parent=1 // pred_check
      _
    $region11: #{_lambda_.9} parent=1 // pred_check_branch
      %23 = sbr.rel (0) target = $region13
    $region12: #{_lambda_.9} parent=1 // pred_region
      %24 = dma.done [#allocation3], 1024
    $region13: #{_lambda_.9} parent=1 // pred_fallthru
      _
    %v26 = vld [vmem:[%s0] sm:$0xf]
    %v27 = vld [vmem:[#allocation2] sm:$0xff]
    %v28 = vld [vmem:[#allocation2 + $0x8] sm:$0xff]
    %v29 = vld [vmem:[#allocation2 + $0x10] sm:$0xff]
    %v30 = vld [vmem:[#allocation2 + $0x18] sm:$0xff]
    %v31 = vld [vmem:[#allocation2 + $0x20] sm:$0xff]
    %v32 = vld [vmem:[#allocation2 + $0x28] sm:$0xff]
    %v33 = vld [vmem:[#allocation2 + $0x30] sm:$0xff]
    %v34 = vld [vmem:[#allocation2 + $0x38] sm:$0xff]
    %v43 = vunpack.c.l.b16 %v27
    %v44 = vunpack.c.h.b16 %v27
    %v45 = vunpack.c.l.b16 %v28
    %v46 = vunpack.c.h.b16 %v28
    %v47 = vunpack.c.l.b16 %v29
    %v48 = vunpack.c.h.b16 %v29
    %v49 = vunpack.c.l.b16 %v30
    %v50 = vunpack.c.h.b16 %v30
    %v51 = vunpack.c.l.b16 %v31
    %v52 = vunpack.c.h.b16 %v31
    %v53 = vunpack.c.l.b16 %v32
    %v54 = vunpack.c.h.b16 %v32
    %v55 = vunpack.c.l.b16 %v33
    %v56 = vunpack.c.h.b16 %v33
    %v57 = vunpack.c.l.b16 %v34
    %v58 = vunpack.c.h.b16 %v34
    %v59 = vpack.c.b16 %v43, %v43
    %v60 = vpack.c.b16 %v44, %v44
    %v61 = vpack.c.b16 %v45, %v45
    %v62 = vpack.c.b16 %v46, %v46
    %v63 = vpack.c.b16 %v47, %v47
    %v64 = vpack.c.b16 %v48, %v48
    %v65 = vpack.c.b16 %v49, %v49
    %v66 = vpack.c.b16 %v50, %v50
    %v67 = vpack.c.b16 %v51, %v51
    %v68 = vpack.c.b16 %v52, %v52
    %v69 = vpack.c.b16 %v53, %v53
    %v70 = vpack.c.b16 %v54, %v54
    %v71 = vpack.c.b16 %v55, %v55
    %v72 = vpack.c.b16 %v56, %v56
    %v73 = vpack.c.b16 %v57, %v57
    %v74 = vpack.c.b16 %v58, %v58
    %vm75 = vcmask 64512
    %v77 = vsel %vm75, %v26, 0
    %vm79 = vcmask 1043456
    %v81 = vsel %vm79, %v59, 0
    %v84 = vsel %vm79, %v60, 0
    %v87 = vsel %vm79, %v61, 0
    %v90 = vsel %vm79, %v62, 0
    %v93 = vsel %vm79, %v63, 0
    %v96 = vsel %vm79, %v64, 0
    %v99 = vsel %vm79, %v65, 0
    %v102 = vsel %vm79, %v66, 0
    %v105 = vsel %vm79, %v67, 0
    %v108 = vsel %vm79, %v68, 0
    %v111 = vsel %vm79, %v69, 0
    %v114 = vsel %vm79, %v70, 0
    %v117 = vsel %vm79, %v71, 0
    %v120 = vsel %vm79, %v72, 0
    %v123 = vsel %vm79, %v73, 0
    %v126 = vsel %vm79, %v74, 0
    %128 = vmatprep.subr.bf16.mxu0 %v84
    %129 = vmatpush1.bf16.msra.mxu0 %v81
    %130 = vmatprep.subr.bf16.mxu0 0
    %131 = vmatpush1.bf16.msra.mxu0 0
    %132 = vmatprep.subr.bf16.mxu0 0
    %133 = vmatpush1.bf16.msra.mxu0 0
    %134 = vmatprep.subr.bf16.mxu0 0
    %135 = vmatpush1.bf16.msra.mxu0 0
    %136 = vmatprep.subr.bf16.mxu0 0
    %137 = vmatpush1.bf16.msra.mxu0 0
    %138 = vmatprep.subr.bf16.mxu0 0
    %139 = vmatpush1.bf16.msra.mxu0 0
    %140 = vmatprep.subr.bf16.mxu0 0
    %141 = vmatpush1.bf16.msra.mxu0 0
    %142 = vmatprep.subr.bf16.mxu0 0
    %143 = vmatpush1.bf16.msra.mxu0 0
    %144 = vmatprep.subr.bf16.mxu0 0
    %145 = vmatpush1.bf16.msra.mxu0 0
    %146 = vmatprep.subr.bf16.mxu0 0
    %147 = vmatpush1.bf16.msra.mxu0 0
    %148 = vmatprep.subr.bf16.mxu0 0
    %149 = vmatpush1.bf16.msra.mxu0 0
    %150 = vmatprep.subr.bf16.mxu0 0
    %151 = vmatpush1.bf16.msra.mxu0 0
    %152 = vmatprep.subr.bf16.mxu0 0
    %153 = vmatpush1.bf16.msra.mxu0 0
    %154 = vmatprep.subr.bf16.mxu0 0
    %155 = vmatpush1.bf16.msra.mxu0 0
    %156 = vmatprep.subr.bf16.mxu0 0
    %157 = vmatpush1.bf16.msra.mxu0 0
    %158 = vmatprep.subr.bf16.mxu0 0
    %159 = vmatpush1.bf16.msra.mxu0 0
    %160 = vmatprep.mubr.bf16.mxu0 0
    %161 = vmatmul.mubr.bf16.gmra.mrb[0].mxu0 %v77
    %v162 = vpop.f32.mrb[0].mxu0
    %v163 = vadd.f32 0.0, %v162
    %v164 = vpop.f32.mrb[0].mxu0
    %v165 = vadd.f32 0.0, %v164
    %v166 = vpop.f32.mrb[0].mxu0
    %v167 = vpop.f32.mrb[0].mxu0
    %168 = vdwg.mxu0
    %169 = vmatprep.subr.bf16.mxu0 %v90
    %170 = vmatpush1.bf16.msra.mxu0 %v87
    %171 = vmatprep.subr.bf16.mxu0 0
    %172 = vmatpush1.bf16.msra.mxu0 0
    %173 = vmatprep.subr.bf16.mxu0 0
    %174 = vmatpush1.bf16.msra.mxu0 0
    %175 = vmatprep.subr.bf16.mxu0 0
    %176 = vmatpush1.bf16.msra.mxu0 0
    %177 = vmatprep.subr.bf16.mxu0 0
    %178 = vmatpush1.bf16.msra.mxu0 0
    %179 = vmatprep.subr.bf16.mxu0 0
    %180 = vmatpush1.bf16.msra.mxu0 0
    %181 = vmatprep.subr.bf16.mxu0 0
    %182 = vmatpush1.bf16.msra.mxu0 0
    %183 = vmatprep.subr.bf16.mxu0 0
    %184 = vmatpush1.bf16.msra.mxu0 0
    %185 = vmatprep.subr.bf16.mxu0 0
    %186 = vmatpush1.bf16.msra.mxu0 0
    %187 = vmatprep.subr.bf16.mxu0 0
    %188 = vmatpush1.bf16.msra.mxu0 0
    %189 = vmatprep.subr.bf16.mxu0 0
    %190 = vmatpush1.bf16.msra.mxu0 0
    %191 = vmatprep.subr.bf16.mxu0 0
    %192 = vmatpush1.bf16.msra.mxu0 0
    %193 = vmatprep.subr.bf16.mxu0 0
    %194 = vmatpush1.bf16.msra.mxu0 0
    %195 = vmatprep.subr.bf16.mxu0 0
    %196 = vmatpush1.bf16.msra.mxu0 0
    %197 = vmatprep.subr.bf16.mxu0 0
    %198 = vmatpush1.bf16.msra.mxu0 0
    %199 = vmatprep.subr.bf16.mxu0 0
    %200 = vmatpush1.bf16.msra.mxu0 0
    %201 = vmatprep.mubr.bf16.mxu0 0
    %202 = vmatmul.mubr.bf16.gmra.mrb[0].mxu0 %v77
    %v203 = vpop.f32.mrb[0].mxu0
    %v204 = vadd.f32 0.0, %v203
    %v205 = vpop.f32.mrb[0].mxu0
    %v206 = vadd.f32 0.0, %v205
    %v207 = vpop.f32.mrb[0].mxu0
    %v208 = vpop.f32.mrb[0].mxu0
    %209 = vdwg.mxu0
    %210 = vmatprep.subr.bf16.mxu0 %v96
    %211 = vmatpush1.bf16.msra.mxu0 %v93
    %212 = vmatprep.subr.bf16.mxu0 0
    %213 = vmatpush1.bf16.msra.mxu0 0
    %214 = vmatprep.subr.bf16.mxu0 0
    %215 = vmatpush1.bf16.msra.mxu0 0
    %216 = vmatprep.subr.bf16.mxu0 0
    %217 = vmatpush1.bf16.msra.mxu0 0
    %218 = vmatprep.subr.bf16.mxu0 0
    %219 = vmatpush1.bf16.msra.mxu0 0
    %220 = vmatprep.subr.bf16.mxu0 0
    %221 = vmatpush1.bf16.msra.mxu0 0
    %222 = vmatprep.subr.bf16.mxu0 0
    %223 = vmatpush1.bf16.msra.mxu0 0
    %224 = vmatprep.subr.bf16.mxu0 0
    %225 = vmatpush1.bf16.msra.mxu0 0
    %226 = vmatprep.subr.bf16.mxu0 0
    %227 = vmatpush1.bf16.msra.mxu0 0
    %228 = vmatprep.subr.bf16.mxu0 0
    %229 = vmatpush1.bf16.msra.mxu0 0
    %230 = vmatprep.subr.bf16.mxu0 0
    %231 = vmatpush1.bf16.msra.mxu0 0
    %232 = vmatprep.subr.bf16.mxu0 0
    %233 = vmatpush1.bf16.msra.mxu0 0
    %234 = vmatprep.subr.bf16.mxu0 0
    %235 = vmatpush1.bf16.msra.mxu0 0
    %236 = vmatprep.subr.bf16.mxu0 0
    %237 = vmatpush1.bf16.msra.mxu0 0
    %238 = vmatprep.subr.bf16.mxu0 0
    %239 = vmatpush1.bf16.msra.mxu0 0
    %240 = vmatprep.subr.bf16.mxu0 0
    %241 = vmatpush1.bf16.msra.mxu0 0
    %242 = vmatprep.mubr.bf16.mxu0 0
    %243 = vmatmul.mubr.bf16.gmra.mrb[0].mxu0 %v77
    %v244 = vpop.f32.mrb[0].mxu0
    %v245 = vadd.f32 0.0, %v244
    %v246 = vpop.f32.mrb[0].mxu0
    %v247 = vadd.f32 0.0, %v246
    %v248 = vpop.f32.mrb[0].mxu0
    %v249 = vpop.f32.mrb[0].mxu0
    %250 = vdwg.mxu0
    %251 = vmatprep.subr.bf16.mxu0 %v102
    %252 = vmatpush1.bf16.msra.mxu0 %v99
    %253 = vmatprep.subr.bf16.mxu0 0
    %254 = vmatpush1.bf16.msra.mxu0 0
    %255 = vmatprep.subr.bf16.mxu0 0
    %256 = vmatpush1.bf16.msra.mxu0 0
    %257 = vmatprep.subr.bf16.mxu0 0
    %258 = vmatpush1.bf16.msra.mxu0 0
    %259 = vmatprep.subr.bf16.mxu0 0
    %260 = vmatpush1.bf16.msra.mxu0 0
    %261 = vmatprep.subr.bf16.mxu0 0
    %262 = vmatpush1.bf16.msra.mxu0 0
    %263 = vmatprep.subr.bf16.mxu0 0
    %264 = vmatpush1.bf16.msra.mxu0 0
    %265 = vmatprep.subr.bf16.mxu0 0
    %266 = vmatpush1.bf16.msra.mxu0 0
    %267 = vmatprep.subr.bf16.mxu0 0
    %268 = vmatpush1.bf16.msra.mxu0 0
    %269 = vmatprep.subr.bf16.mxu0 0
    %270 = vmatpush1.bf16.msra.mxu0 0
    %271 = vmatprep.subr.bf16.mxu0 0
    %272 = vmatpush1.bf16.msra.mxu0 0
    %273 = vmatprep.subr.bf16.mxu0 0
    %274 = vmatpush1.bf16.msra.mxu0 0
    %275 = vmatprep.subr.bf16.mxu0 0
    %276 = vmatpush1.bf16.msra.mxu0 0
    %277 = vmatprep.subr.bf16.mxu0 0
    %278 = vmatpush1.bf16.msra.mxu0 0
    %279 = vmatprep.subr.bf16.mxu0 0
    %280 = vmatpush1.bf16.msra.mxu0 0
    %281 = vmatprep.subr.bf16.mxu0 0
    %282 = vmatpush1.bf16.msra.mxu0 0
    %283 = vmatprep.mubr.bf16.mxu0 0
    %284 = vmatmul.mubr.bf16.gmra.mrb[0].mxu0 %v77
    %v285 = vpop.f32.mrb[0].mxu0
    %v286 = vadd.f32 0.0, %v285
    %v287 = vpop.f32.mrb[0].mxu0
    %v288 = vadd.f32 0.0, %v287
    %v289 = vpop.f32.mrb[0].mxu0
    %v290 = vpop.f32.mrb[0].mxu0
    %291 = vdwg.mxu0
    %292 = vmatprep.subr.bf16.mxu0 %v108
    %293 = vmatpush1.bf16.msra.mxu0 %v105
    %294 = vmatprep.subr.bf16.mxu0 0
    %295 = vmatpush1.bf16.msra.mxu0 0
    %296 = vmatprep.subr.bf16.mxu0 0
    %297 = vmatpush1.bf16.msra.mxu0 0
    %298 = vmatprep.subr.bf16.mxu0 0
    %299 = vmatpush1.bf16.msra.mxu0 0
    %300 = vmatprep.subr.bf16.mxu0 0
    %301 = vmatpush1.bf16.msra.mxu0 0
    %302 = vmatprep.subr.bf16.mxu0 0
    %303 = vmatpush1.bf16.msra.mxu0 0
    %304 = vmatprep.subr.bf16.mxu0 0
    %305 = vmatpush1.bf16.msra.mxu0 0
    %306 = vmatprep.subr.bf16.mxu0 0
    %307 = vmatpush1.bf16.msra.mxu0 0
    %308 = vmatprep.subr.bf16.mxu0 0
    %309 = vmatpush1.bf16.msra.mxu0 0
    %310 = vmatprep.subr.bf16.mxu0 0
    %311 = vmatpush1.bf16.msra.mxu0 0
    %312 = vmatprep.subr.bf16.mxu0 0
    %313 = vmatpush1.bf16.msra.mxu0 0
    %314 = vmatprep.subr.bf16.mxu0 0
    %315 = vmatpush1.bf16.msra.mxu0 0
    %316 = vmatprep.subr.bf16.mxu0 0
    %317 = vmatpush1.bf16.msra.mxu0 0
    %318 = vmatprep.subr.bf16.mxu0 0
    %319 = vmatpush1.bf16.msra.mxu0 0
    %320 = vmatprep.subr.bf16.mxu0 0
    %321 = vmatpush1.bf16.msra.mxu0 0
    %322 = vmatprep.subr.bf16.mxu0 0
    %323 = vmatpush1.bf16.msra.mxu0 0
    %324 = vmatprep.mubr.bf16.mxu0 0
    %325 = vmatmul.mubr.bf16.gmra.mrb[0].mxu0 %v77
    %v326 = vpop.f32.mrb[0].mxu0
    %v327 = vadd.f32 0.0, %v326
    %v328 = vpop.f32.mrb[0].mxu0
    %v329 = vadd.f32 0.0, %v328
    %v330 = vpop.f32.mrb[0].mxu0
    %v331 = vpop.f32.mrb[0].mxu0
    %332 = vdwg.mxu0
    %333 = vmatprep.subr.bf16.mxu0 %v114
    %334 = vmatpush1.bf16.msra.mxu0 %v111
    %335 = vmatprep.subr.bf16.mxu0 0
    %336 = vmatpush1.bf16.msra.mxu0 0
    %337 = vmatprep.subr.bf16.mxu0 0
    %338 = vmatpush1.bf16.msra.mxu0 0
    %339 = vmatprep.subr.bf16.mxu0 0
    %340 = vmatpush1.bf16.msra.mxu0 0
    %341 = vmatprep.subr.bf16.mxu0 0
    %342 = vmatpush1.bf16.msra.mxu0 0
    %343 = vmatprep.subr.bf16.mxu0 0
    %344 = vmatpush1.bf16.msra.mxu0 0
    %345 = vmatprep.subr.bf16.mxu0 0
    %346 = vmatpush1.bf16.msra.mxu0 0
    %347 = vmatprep.subr.bf16.mxu0 0
    %348 = vmatpush1.bf16.msra.mxu0 0
    %349 = vmatprep.subr.bf16.mxu0 0
    %350 = vmatpush1.bf16.msra.mxu0 0
    %351 = vmatprep.subr.bf16.mxu0 0
    %352 = vmatpush1.bf16.msra.mxu0 0
    %353 = vmatprep.subr.bf16.mxu0 0
    %354 = vmatpush1.bf16.msra.mxu0 0
    %355 = vmatprep.subr.bf16.mxu0 0
    %356 = vmatpush1.bf16.msra.mxu0 0
    %357 = vmatprep.subr.bf16.mxu0 0
    %358 = vmatpush1.bf16.msra.mxu0 0
    %359 = vmatprep.subr.bf16.mxu0 0
    %360 = vmatpush1.bf16.msra.mxu0 0
    %361 = vmatprep.subr.bf16.mxu0 0
    %362 = vmatpush1.bf16.msra.mxu0 0
    %363 = vmatprep.subr.bf16.mxu0 0
    %364 = vmatpush1.bf16.msra.mxu0 0
    %365 = vmatprep.mubr.bf16.mxu0 0
    %366 = vmatmul.mubr.bf16.gmra.mrb[0].mxu0 %v77
    %v367 = vpop.f32.mrb[0].mxu0
    %v368 = vadd.f32 0.0, %v367
    %v369 = vpop.f32.mrb[0].mxu0
    %v370 = vadd.f32 0.0, %v369
    %v371 = vpop.f32.mrb[0].mxu0
    %v372 = vpop.f32.mrb[0].mxu0
    %373 = vdwg.mxu0
    %374 = vmatprep.subr.bf16.mxu0 %v120
    %375 = vmatpush1.bf16.msra.mxu0 %v117
    %376 = vmatprep.subr.bf16.mxu0 0
    %377 = vmatpush1.bf16.msra.mxu0 0
    %378 = vmatprep.subr.bf16.mxu0 0
    %379 = vmatpush1.bf16.msra.mxu0 0
    %380 = vmatprep.subr.bf16.mxu0 0
    %381 = vmatpush1.bf16.msra.mxu0 0
    %382 = vmatprep.subr.bf16.mxu0 0
    %383 = vmatpush1.bf16.msra.mxu0 0
    %384 = vmatprep.subr.bf16.mxu0 0
    %385 = vmatpush1.bf16.msra.mxu0 0
    %386 = vmatprep.subr.bf16.mxu0 0
    %387 = vmatpush1.bf16.msra.mxu0 0
    %388 = vmatprep.subr.bf16.mxu0 0
    %389 = vmatpush1.bf16.msra.mxu0 0
    %390 = vmatprep.subr.bf16.mxu0 0
    %391 = vmatpush1.bf16.msra.mxu0 0
    %392 = vmatprep.subr.bf16.mxu0 0
    %393 = vmatpush1.bf16.msra.mxu0 0
    %394 = vmatprep.subr.bf16.mxu0 0
    %395 = vmatpush1.bf16.msra.mxu0 0
    %396 = vmatprep.subr.bf16.mxu0 0
    %397 = vmatpush1.bf16.msra.mxu0 0
    %398 = vmatprep.subr.bf16.mxu0 0
    %399 = vmatpush1.bf16.msra.mxu0 0
    %400 = vmatprep.subr.bf16.mxu0 0
    %401 = vmatpush1.bf16.msra.mxu0 0
    %402 = vmatprep.subr.bf16.mxu0 0
    %403 = vmatpush1.bf16.msra.mxu0 0
    %404 = vmatprep.subr.bf16.mxu0 0
    %405 = vmatpush1.bf16.msra.mxu0 0
    %406 = vmatprep.mubr.bf16.mxu0 0
    %407 = vmatmul.mubr.bf16.gmra.mrb[0].mxu0 %v77
    %v408 = vpop.f32.mrb[0].mxu0
    %v409 = vadd.f32 0.0, %v408
    %v410 = vpop.f32.mrb[0].mxu0
    %v411 = vadd.f32 0.0, %v410
    %v412 = vpop.f32.mrb[0].mxu0
    %v413 = vpop.f32.mrb[0].mxu0
    %414 = vdwg.mxu0
    %415 = vmatprep.subr.bf16.mxu0 %v126
    %416 = vmatpush1.bf16.msra.mxu0 %v123
    %417 = vmatprep.subr.bf16.mxu0 0
    %418 = vmatpush1.bf16.msra.mxu0 0
    %419 = vmatprep.subr.bf16.mxu0 0
    %420 = vmatpush1.bf16.msra.mxu0 0
    %421 = vmatprep.subr.bf16.mxu0 0
    %422 = vmatpush1.bf16.msra.mxu0 0
    %423 = vmatprep.subr.bf16.mxu0 0
    %424 = vmatpush1.bf16.msra.mxu0 0
    %425 = vmatprep.subr.bf16.mxu0 0
    %426 = vmatpush1.bf16.msra.mxu0 0
    %427 = vmatprep.subr.bf16.mxu0 0
    %428 = vmatpush1.bf16.msra.mxu0 0
    %429 = vmatprep.subr.bf16.mxu0 0
    %430 = vmatpush1.bf16.msra.mxu0 0
    %431 = vmatprep.subr.bf16.mxu0 0
    %432 = vmatpush1.bf16.msra.mxu0 0
    %433 = vmatprep.subr.bf16.mxu0 0
    %434 = vmatpush1.bf16.msra.mxu0 0
    %435 = vmatprep.subr.bf16.mxu0 0
    %436 = vmatpush1.bf16.msra.mxu0 0
    %437 = vmatprep.subr.bf16.mxu0 0
    %438 = vmatpush1.bf16.msra.mxu0 0
    %439 = vmatprep.subr.bf16.mxu0 0
    %440 = vmatpush1.bf16.msra.mxu0 0
    %441 = vmatprep.subr.bf16.mxu0 0
    %442 = vmatpush1.bf16.msra.mxu0 0
    %443 = vmatprep.subr.bf16.mxu0 0
    %444 = vmatpush1.bf16.msra.mxu0 0
    %445 = vmatprep.subr.bf16.mxu0 0
    %446 = vmatpush1.bf16.msra.mxu0 0
    %447 = vmatprep.mubr.bf16.mxu0 0
    %448 = vmatmul.mubr.bf16.gmra.mrb[0].mxu0 %v77
    %v449 = vpop.f32.mrb[0].mxu0
    %v450 = vadd.f32 0.0, %v449
    %v451 = vpop.f32.mrb[0].mxu0
    %v452 = vadd.f32 0.0, %v451
    %v453 = vpop.f32.mrb[0].mxu0
    %v454 = vpop.f32.mrb[0].mxu0
    %455 = vdwg.mxu0
    %456 = vst [vmem:[%s2] sm:$0xff] %v163
    %457 = vst [vmem:[%s2 + $0x8] sm:$0xff] %v165
    %458 = vst [vmem:[%s2 + $0x10] sm:$0xff] %v204
    %459 = vst [vmem:[%s2 + $0x18] sm:$0xff] %v206
    %460 = vst [vmem:[%s2 + $0x20] sm:$0xff] %v245
    %461 = vst [vmem:[%s2 + $0x28] sm:$0xff] %v247
    %462 = vst [vmem:[%s2 + $0x30] sm:$0xff] %v286
    %463 = vst [vmem:[%s2 + $0x38] sm:$0xff] %v288
    %464 = vst [vmem:[%s2 + $0x40] sm:$0xff] %v327
    %465 = vst [vmem:[%s2 + $0x48] sm:$0xff] %v329
    %466 = vst [vmem:[%s2 + $0x50] sm:$0xff] %v368
    %467 = vst [vmem:[%s2 + $0x58] sm:$0xff] %v370
    %468 = vst [vmem:[%s2 + $0x60] sm:$0xff] %v409
    %469 = vst [vmem:[%s2 + $0x68] sm:$0xff] %v411
    %470 = vst [vmem:[%s2 + $0x70] sm:$0xff] %v450
    %471 = vst [vmem:[%s2 + $0x78] sm:$0xff] %v452
    %p472 = scmp.eq.s32.totalorder 0, 0
    // Predicated region
    $region14: #{_lambda_.9} parent=1 // pred_check
      %p473 = pneg %p472
    $region15: #{_lambda_.9} parent=1 // pred_check_branch
      %475 = sbr.rel (%p473) target = $region17
    $region16: #{_lambda_.9} parent=1 // pred_region
      %476 = vst [vmem:[%s3] sm:$0xff] 0.0
      %477 = vst [vmem:[%s3 + $0x8] sm:$0xff] 0.0
      %478 = vst [vmem:[%s3 + $0x10] sm:$0xff] 0.0
      %479 = vst [vmem:[%s3 + $0x18] sm:$0xff] 0.0
    $region17: #{_lambda_.9} parent=1 // pred_fallthru
      _
    %v480 = vrot.slane %v163, 4
    %v481 = vadd.f32 %v163, %v480
    %v482 = vrot.slane %v481, 2
    %v483 = vadd.f32 %v481, %v482
    %v484 = vrot.slane %v483, 1
    %v485 = vadd.f32 %v483, %v484
    %v486 = vrot.slane %v165, 4
    %v487 = vadd.f32 %v165, %v486
    %v488 = vrot.slane %v487, 2
    %v489 = vadd.f32 %v487, %v488
    %v490 = vrot.slane %v489, 1
    %v491 = vadd.f32 %v489, %v490
    %v492 = vrot.slane %v204, 4
    %v493 = vadd.f32 %v204, %v492
    %v494 = vrot.slane %v493, 2
    %v495 = vadd.f32 %v493, %v494
    %v496 = vrot.slane %v495, 1
    %v497 = vadd.f32 %v495, %v496
    %v498 = vrot.slane %v206, 4
    %v499 = vadd.f32 %v206, %v498
    %v500 = vrot.slane %v499, 2
    %v501 = vadd.f32 %v499, %v500
    %v502 = vrot.slane %v501, 1
    %v503 = vadd.f32 %v501, %v502
    %v504 = vrot.slane %v245, 4
    %v505 = vadd.f32 %v245, %v504
    %v506 = vrot.slane %v505, 2
    %v507 = vadd.f32 %v505, %v506
    %v508 = vrot.slane %v507, 1
    %v509 = vadd.f32 %v507, %v508
    %v510 = vrot.slane %v247, 4
    %v511 = vadd.f32 %v247, %v510
    %v512 = vrot.slane %v511, 2
    %v513 = vadd.f32 %v511, %v512
    %v514 = vrot.slane %v513, 1
    %v515 = vadd.f32 %v513, %v514
    %v516 = vrot.slane %v286, 4
    %v517 = vadd.f32 %v286, %v516
    %v518 = vrot.slane %v517, 2
    %v519 = vadd.f32 %v517, %v518
    %v520 = vrot.slane %v519, 1
    %v521 = vadd.f32 %v519, %v520
    %v522 = vrot.slane %v288, 4
    %v523 = vadd.f32 %v288, %v522
    %v524 = vrot.slane %v523, 2
    %v525 = vadd.f32 %v523, %v524
    %v526 = vrot.slane %v525, 1
    %v527 = vadd.f32 %v525, %v526
    %v528 = vrot.slane %v327, 4
    %v529 = vadd.f32 %v327, %v528
    %v530 = vrot.slane %v529, 2
    %v531 = vadd.f32 %v529, %v530
    %v532 = vrot.slane %v531, 1
    %v533 = vadd.f32 %v531, %v532
    %v534 = vrot.slane %v329, 4
    %v535 = vadd.f32 %v329, %v534
    %v536 = vrot.slane %v535, 2
    %v537 = vadd.f32 %v535, %v536
    %v538 = vrot.slane %v537, 1
    %v539 = vadd.f32 %v537, %v538
    %v540 = vrot.slane %v368, 4
    %v541 = vadd.f32 %v368, %v540
    %v542 = vrot.slane %v541, 2
    %v543 = vadd.f32 %v541, %v542
    %v544 = vrot.slane %v543, 1
    %v545 = vadd.f32 %v543, %v544
    %v546 = vrot.slane %v370, 4
    %v547 = vadd.f32 %v370, %v546
    %v548 = vrot.slane %v547, 2
    %v549 = vadd.f32 %v547, %v548
    %v550 = vrot.slane %v549, 1
    %v551 = vadd.f32 %v549, %v550
    %v552 = vrot.slane %v409, 4
    %v553 = vadd.f32 %v409, %v552
    %v554 = vrot.slane %v553, 2
    %v555 = vadd.f32 %v553, %v554
    %v556 = vrot.slane %v555, 1
    %v557 = vadd.f32 %v555, %v556
    %v558 = vrot.slane %v411, 4
    %v559 = vadd.f32 %v411, %v558
    %v560 = vrot.slane %v559, 2
    %v561 = vadd.f32 %v559, %v560
    %v562 = vrot.slane %v561, 1
    %v563 = vadd.f32 %v561, %v562
    %v564 = vrot.slane %v450, 4
    %v565 = vadd.f32 %v450, %v564
    %v566 = vrot.slane %v565, 2
    %v567 = vadd.f32 %v565, %v566
    %v568 = vrot.slane %v567, 1
    %v569 = vadd.f32 %v567, %v568
    %v570 = vrot.slane %v452, 4
    %v571 = vadd.f32 %v452, %v570
    %v572 = vrot.slane %v571, 2
    %v573 = vadd.f32 %v571, %v572
    %v574 = vrot.slane %v573, 1
    %v575 = vadd.f32 %v573, %v574
    %v576 = vmul.f32 %v163, %v163
    %v577 = vmul.f32 %v165, %v165
    %v578 = vmul.f32 %v204, %v204
    %v579 = vmul.f32 %v206, %v206
    %v580 = vmul.f32 %v245, %v245
    %v581 = vmul.f32 %v247, %v247
    %v582 = vmul.f32 %v286, %v286
    %v583 = vmul.f32 %v288, %v288
    %v584 = vmul.f32 %v327, %v327
    %v585 = vmul.f32 %v329, %v329
    %v586 = vmul.f32 %v368, %v368
    %v587 = vmul.f32 %v370, %v370
    %v588 = vmul.f32 %v409, %v409
    %v589 = vmul.f32 %v411, %v411
    %v590 = vmul.f32 %v450, %v450
    %v591 = vmul.f32 %v452, %v452
    %v592 = vrot.slane %v576, 4
    %v593 = vadd.f32 %v576, %v592
    %v594 = vrot.slane %v593, 2
    %v595 = vadd.f32 %v593, %v594
    %v596 = vrot.slane %v595, 1
    %v597 = vadd.f32 %v595, %v596
    %v598 = vrot.slane %v577, 4
    %v599 = vadd.f32 %v577, %v598
    %v600 = vrot.slane %v599, 2
    %v601 = vadd.f32 %v599, %v600
    %v602 = vrot.slane %v601, 1
    %v603 = vadd.f32 %v601, %v602
    %v604 = vrot.slane %v578, 4
    %v605 = vadd.f32 %v578, %v604
    %v606 = vrot.slane %v605, 2
    %v607 = vadd.f32 %v605, %v606
    %v608 = vrot.slane %v607, 1
    %v609 = vadd.f32 %v607, %v608
    %v610 = vrot.slane %v579, 4
    %v611 = vadd.f32 %v579, %v610
    %v612 = vrot.slane %v611, 2
    %v613 = vadd.f32 %v611, %v612
    %v614 = vrot.slane %v613, 1
    %v615 = vadd.f32 %v613, %v614
    %v616 = vrot.slane %v580, 4
    %v617 = vadd.f32 %v580, %v616
    %v618 = vrot.slane %v617, 2
    %v619 = vadd.f32 %v617, %v618
    %v620 = vrot.slane %v619, 1
    %v621 = vadd.f32 %v619, %v620
    %v622 = vrot.slane %v581, 4
    %v623 = vadd.f32 %v581, %v622
    %v624 = vrot.slane %v623, 2
    %v625 = vadd.f32 %v623, %v624
    %v626 = vrot.slane %v625, 1
    %v627 = vadd.f32 %v625, %v626
    %v628 = vrot.slane %v582, 4
    %v629 = vadd.f32 %v582, %v628
    %v630 = vrot.slane %v629, 2
    %v631 = vadd.f32 %v629, %v630
    %v632 = vrot.slane %v631, 1
    %v633 = vadd.f32 %v631, %v632
    %v634 = vrot.slane %v583, 4
    %v635 = vadd.f32 %v583, %v634
    %v636 = vrot.slane %v635, 2
    %v637 = vadd.f32 %v635, %v636
    %v638 = vrot.slane %v637, 1
    %v639 = vadd.f32 %v637, %v638
    %v640 = vrot.slane %v584, 4
    %v641 = vadd.f32 %v584, %v640
    %v642 = vrot.slane %v641, 2
    %v643 = vadd.f32 %v641, %v642
    %v644 = vrot.slane %v643, 1
    %v645 = vadd.f32 %v643, %v644
    %v646 = vrot.slane %v585, 4
    %v647 = vadd.f32 %v585, %v646
    %v648 = vrot.slane %v647, 2
    %v649 = vadd.f32 %v647, %v648
    %v650 = vrot.slane %v649, 1
    %v651 = vadd.f32 %v649, %v650
    %v652 = vrot.slane %v586, 4
    %v653 = vadd.f32 %v586, %v652
    %v654 = vrot.slane %v653, 2
    %v655 = vadd.f32 %v653, %v654
    %v656 = vrot.slane %v655, 1
    %v657 = vadd.f32 %v655, %v656
    %v658 = vrot.slane %v587, 4
    %v659 = vadd.f32 %v587, %v658
    %v660 = vrot.slane %v659, 2
    %v661 = vadd.f32 %v659, %v660
    %v662 = vrot.slane %v661, 1
    %v663 = vadd.f32 %v661, %v662
    %v664 = vrot.slane %v588, 4
    %v665 = vadd.f32 %v588, %v664
    %v666 = vrot.slane %v665, 2
    %v667 = vadd.f32 %v665, %v666
    %v668 = vrot.slane %v667, 1
    %v669 = vadd.f32 %v667, %v668
    %v670 = vrot.slane %v589, 4
    %v671 = vadd.f32 %v589, %v670
    %v672 = vrot.slane %v671, 2
    %v673 = vadd.f32 %v671, %v672
    %v674 = vrot.slane %v673, 1
    %v675 = vadd.f32 %v673, %v674
    %v676 = vrot.slane %v590, 4
    %v677 = vadd.f32 %v590, %v676
    %v678 = vrot.slane %v677, 2
    %v679 = vadd.f32 %v677, %v678
    %v680 = vrot.slane %v679, 1
    %v681 = vadd.f32 %v679, %v680
    %v682 = vrot.slane %v591, 4
    %v683 = vadd.f32 %v591, %v682
    %v684 = vrot.slane %v683, 2
    %v685 = vadd.f32 %v683, %v684
    %v686 = vrot.slane %v685, 1
    %v687 = vadd.f32 %v685, %v686
    %v688 = vld [vmem:[%s3] sm:$0xff]
    %v689 = vld [vmem:[%s3 + $0x8] sm:$0xff]
    %v690 = vld [vmem:[%s3 + $0x10] sm:$0xff]
    %v691 = vld [vmem:[%s3 + $0x18] sm:$0xff]
    %vm692 = vcmask 1040384
    %v693 = vsel %vm692, %v485, %v597
    %v694 = vsel %vm692, %v491, %v603
    %v695 = vsel %vm692, %v497, %v609
    %v696 = vsel %vm692, %v503, %v615
    %v697 = vsel %vm692, %v509, %v621
    %v698 = vsel %vm692, %v515, %v627
    %v699 = vsel %vm692, %v521, %v633
    %v700 = vsel %vm692, %v527, %v639
    %v701 = vsel %vm692, %v533, %v645
    %v702 = vsel %vm692, %v539, %v651
    %v703 = vsel %vm692, %v545, %v657
    %v704 = vsel %vm692, %v551, %v663
    %v705 = vsel %vm692, %v557, %v669
    %v706 = vsel %vm692, %v563, %v675
    %v707 = vsel %vm692, %v569, %v681
    %v708 = vsel %vm692, %v575, %v687
    %v725 = vcombine.low %v693, %v694
    %v726 = vcombine.low %v695, %v696
    %v728 = vunpack.c.l.s4 1983009808
    %v729 = vunpack.c.0.s8 %v728
    %v730 = vlaneseq
    %v731 = vshrl.u32 %v730, 7
    %v732 = vsub.s32 %v729, %v731
    %v733 = vrot.slane %v725, %v732
    %v735 = vunpack.c.l.s4 1983009808
    %v736 = vunpack.c.0.s8 %v735
    %v737 = vlaneseq
    %v738 = vshrl.u32 %v737, 7
    %v739 = vsub.s32 %v736, %v738
    %v740 = vrot.slane %v726, %v739
    %v741 = vcombine.low %v733, %v740
    %v742 = vcombine.low %v697, %v698
    %v743 = vcombine.low %v699, %v700
    %v745 = vunpack.c.l.s4 1983009808
    %v746 = vunpack.c.0.s8 %v745
    %v747 = vlaneseq
    %v748 = vshrl.u32 %v747, 7
    %v749 = vsub.s32 %v746, %v748
    %v750 = vrot.slane %v742, %v749
    %v752 = vunpack.c.l.s4 1983009808
    %v753 = vunpack.c.0.s8 %v752
    %v754 = vlaneseq
    %v755 = vshrl.u32 %v754, 7
    %v756 = vsub.s32 %v753, %v755
    %v757 = vrot.slane %v743, %v756
    %v758 = vcombine.low %v750, %v757
    %v759 = vcombine.low %v701, %v702
    %v760 = vcombine.low %v703, %v704
    %v762 = vunpack.c.l.s4 1983009808
    %v763 = vunpack.c.0.s8 %v762
    %v764 = vlaneseq
    %v765 = vshrl.u32 %v764, 7
    %v766 = vsub.s32 %v763, %v765
    %v767 = vrot.slane %v759, %v766
    %v769 = vunpack.c.l.s4 1983009808
    %v770 = vunpack.c.0.s8 %v769
    %v771 = vlaneseq
    %v772 = vshrl.u32 %v771, 7
    %v773 = vsub.s32 %v770, %v772
    %v774 = vrot.slane %v760, %v773
    %v775 = vcombine.low %v767, %v774
    %v776 = vcombine.low %v705, %v706
    %v777 = vcombine.low %v707, %v708
    %v779 = vunpack.c.l.s4 1983009808
    %v780 = vunpack.c.0.s8 %v779
    %v781 = vlaneseq
    %v782 = vshrl.u32 %v781, 7
    %v783 = vsub.s32 %v780, %v782
    %v784 = vrot.slane %v776, %v783
    %v786 = vunpack.c.l.s4 1983009808
    %v787 = vunpack.c.0.s8 %v786
    %v788 = vlaneseq
    %v789 = vshrl.u32 %v788, 7
    %v790 = vsub.s32 %v787, %v789
    %v791 = vrot.slane %v777, %v790
    %v792 = vcombine.low %v784, %v791
    %v797 = vadd.f32 %v688, %v741
    %v798 = vadd.f32 %v689, %v758
    %v799 = vadd.f32 %v690, %v775
    %v800 = vadd.f32 %v691, %v792
    %801 = vst [vmem:[%s3] sm:$0xff] %v797
    %802 = vst [vmem:[%s3 + $0x8] sm:$0xff] %v798
    %803 = vst [vmem:[%s3 + $0x10] sm:$0xff] %v799
    %804 = vst [vmem:[%s3 + $0x18] sm:$0xff] %v800
    // Predicated region
    $region18: #{_lambda_.9} parent=1 // pred_check
      _
    $region19: #{_lambda_.9} parent=1 // pred_check_branch
      %806 = sbr.rel (0) target = $region21
    $region20: #{_lambda_.9} parent=1 // pred_region
      _
    $region21: #{_lambda_.9} parent=1 // pred_fallthru
      _
    // Predicated region
    $region22: #{_lambda_.9} parent=1 // pred_check
      _
    $region23: #{_lambda_.9} parent=1 // pred_check_branch
      %808 = sbr.rel (0) target = $region25
    $region24: #{_lambda_.9} parent=1 // pred_region
      _
    $region25: #{_lambda_.9} parent=1 // pred_fallthru
      _
    // Predicated region
    $region26: #{_lambda_.9} parent=1 // pred_check
      _
    $region27: #{_lambda_.9} parent=1 // pred_check_branch
      %810 = sbr.rel (0) target = $region29
    $region28: #{_lambda_.9} parent=1 // pred_region
      _
    $region29: #{_lambda_.9} parent=1 // pred_fallthru
      _
    // Predicated region
    $region30: #{_lambda_.9} parent=1 // pred_check
      _
    $region31: #{_lambda_.9} parent=1 // pred_check_branch
      %812 = sbr.rel (0) target = $region33
    $region32: #{_lambda_.9} parent=1 // pred_region
      _
    $region33: #{_lambda_.9} parent=1 // pred_fallthru
      _
    %813 = vsyncpa [#allocation3], 1

// kernel: _lambda_.12
$region0: #{_lambda_.12}
  #allocation0 [shape = 'u32[]', space=smem, size = 0x4, offset = 0x4, fixed_abs, tag = 'smem constant byte address 0x4 - core index']
  #allocation1 [shape = 'u32[144,128]{1,0:T(1,128)}', space=vmem, size = 0x12000, scoped, tag = 'internal scratch']
  %s0 = inlined_call_operand.vmem [shape: f32[128,128], index: 0, kind: input, shape index: {}]
  %s1 = inlined_call_operand.vmem [shape: f32[1,128], index: 1, kind: input, shape index: {}]
  %s2 = inlined_call_operand.vmem [shape: f32[1,128], index: 2, kind: input, shape index: {}]
  %s3 = inlined_call_operand.vmem [shape: bf16[128,128], index: 3, kind: output, shape index: {}]
  %s4 = sld [smem:[#allocation0]]
  $region22: #{_lambda_.12} parent=0
    _
  %s6 = ssub.s32 1, %s4
  %s7 = scalar_select 0, %s6, %s4
  // Predicated region
  $region2: #{_lambda_.12} parent=0 // pred_check
    _
  $region3: #{_lambda_.12} parent=0 // pred_check_branch
    %9 = sbr.rel (0) target = $region5
  $region4: #{_lambda_.12} parent=0 // pred_region
    _
  $region5: #{_lambda_.12} parent=0 // pred_fallthru
    _
  // Predicated region
  $region6: #{_lambda_.12} parent=0 // pred_check
    _
  $region7: #{_lambda_.12} parent=0 // pred_check_branch
    %11 = sbr.rel (0) target = $region9
  $region8: #{_lambda_.12} parent=0 // pred_region
    _
  $region9: #{_lambda_.12} parent=0 // pred_fallthru
    _
  // Predicated region
  $region10: #{_lambda_.12} parent=0 // pred_check
    _
  $region11: #{_lambda_.12} parent=0 // pred_check_branch
    %13 = sbr.rel (0) target = $region13
  $region12: #{_lambda_.12} parent=0 // pred_region
    _
  $region13: #{_lambda_.12} parent=0 // pred_fallthru
    _
  %v14 = vld [vmem:[%s0] sm:$0xff]
  %v15 = vld [vmem:[%s0 + $0x8] sm:$0xff]
  %v16 = vld [vmem:[%s0 + $0x10] sm:$0xff]
  %v17 = vld [vmem:[%s0 + $0x18] sm:$0xff]
  %v18 = vld [vmem:[%s0 + $0x20] sm:$0xff]
  %v19 = vld [vmem:[%s0 + $0x28] sm:$0xff]
  %v20 = vld [vmem:[%s0 + $0x30] sm:$0xff]
  %v21 = vld [vmem:[%s0 + $0x38] sm:$0xff]
  %v22 = vld [vmem:[%s0 + $0x40] sm:$0xff]
  %v23 = vld [vmem:[%s0 + $0x48] sm:$0xff]
  %v24 = vld [vmem:[%s0 + $0x50] sm:$0xff]
  %v25 = vld [vmem:[%s0 + $0x58] sm:$0xff]
  %v26 = vld [vmem:[%s0 + $0x60] sm:$0xff]
  %v27 = vld [vmem:[%s0 + $0x68] sm:$0xff]
  %v28 = vld [vmem:[%s0 + $0x70] sm:$0xff]
  %v29 = vld [vmem:[%s0 + $0x78] sm:$0xff]
  %v30 = vld [vmem:[%s1] sm:$0x1]
  %v32 = vlaneseq
  %v33 = vshrl.u32 %v32, 7
  %v34 = vsub.s32 0, %v33
  %v35 = vrot.slane %v30, %v34
  %v37 = vmul.f32 %v14, %v35
  %v38 = vmul.f32 %v15, %v35
  %v39 = vmul.f32 %v16, %v35
  %v40 = vmul.f32 %v17, %v35
  %v41 = vmul.f32 %v18, %v35
  %v42 = vmul.f32 %v19, %v35
  %v43 = vmul.f32 %v20, %v35
  %v44 = vmul.f32 %v21, %v35
  %v45 = vmul.f32 %v22, %v35
  %v46 = vmul.f32 %v23, %v35
  %v47 = vmul.f32 %v24, %v35
  %v48 = vmul.f32 %v25, %v35
  %v49 = vmul.f32 %v26, %v35
  %v50 = vmul.f32 %v27, %v35
  %v51 = vmul.f32 %v28, %v35
  %v52 = vmul.f32 %v29, %v35
  %v53 = vld [vmem:[%s2] sm:$0x1]
  %v55 = vlaneseq
  %v56 = vshrl.u32 %v55, 7
  %v57 = vsub.s32 0, %v56
  %v58 = vrot.slane %v53, %v57
  %v60 = vadd.f32 %v37, %v58
  %v61 = vadd.f32 %v38, %v58
  %v62 = vadd.f32 %v39, %v58
  %v63 = vadd.f32 %v40, %v58
  %v64 = vadd.f32 %v41, %v58
  %v65 = vadd.f32 %v42, %v58
  %v66 = vadd.f32 %v43, %v58
  %v67 = vadd.f32 %v44, %v58
  %v68 = vadd.f32 %v45, %v58
  %v69 = vadd.f32 %v46, %v58
  %v70 = vadd.f32 %v47, %v58
  %v71 = vadd.f32 %v48, %v58
  %v72 = vadd.f32 %v49, %v58
  %v73 = vadd.f32 %v50, %v58
  %v74 = vadd.f32 %v51, %v58
  %v75 = vadd.f32 %v52, %v58
  %v76 = vmax.f32 %v60, 0.0
  %v77 = vmax.f32 %v61, 0.0
  %v78 = vmax.f32 %v62, 0.0
  %v79 = vmax.f32 %v63, 0.0
  %v80 = vmax.f32 %v64, 0.0
  %v81 = vmax.f32 %v65, 0.0
  %v82 = vmax.f32 %v66, 0.0
  %v83 = vmax.f32 %v67, 0.0
  %v84 = vmax.f32 %v68, 0.0
  %v85 = vmax.f32 %v69, 0.0
  %v86 = vmax.f32 %v70, 0.0
  %v87 = vmax.f32 %v71, 0.0
  %v88 = vmax.f32 %v72, 0.0
  %v89 = vmax.f32 %v73, 0.0
  %v90 = vmax.f32 %v74, 0.0
  %v91 = vmax.f32 %v75, 0.0
  %v92 = vpack.c.bf16 %v77, %v76
  %v93 = vpack.c.bf16 %v79, %v78
  %v94 = vpack.c.bf16 %v81, %v80
  %v95 = vpack.c.bf16 %v83, %v82
  %v96 = vpack.c.bf16 %v85, %v84
  %v97 = vpack.c.bf16 %v87, %v86
  %v98 = vpack.c.bf16 %v89, %v88
  %v99 = vpack.c.bf16 %v91, %v90
  %v108 = vunpack.c.l.b16 %v92
  %v109 = vunpack.c.h.b16 %v92
  %v110 = vunpack.c.l.b16 %v93
  %v111 = vunpack.c.h.b16 %v93
  %v112 = vunpack.c.l.b16 %v94
  %v113 = vunpack.c.h.b16 %v94
  %v114 = vunpack.c.l.b16 %v95
  %v115 = vunpack.c.h.b16 %v95
  %v116 = vunpack.c.l.b16 %v96
  %v117 = vunpack.c.h.b16 %v96
  %v118 = vunpack.c.l.b16 %v97
  %v119 = vunpack.c.h.b16 %v97
  %v120 = vunpack.c.l.b16 %v98
  %v121 = vunpack.c.h.b16 %v98
  %v122 = vunpack.c.l.b16 %v99
  %v123 = vunpack.c.h.b16 %v99
  %v124 = vpack.c.b16 %v108, %v108
  %v125 = vpack.c.b16 %v109, %v109
  %v126 = vpack.c.b16 %v110, %v110
  %v127 = vpack.c.b16 %v111, %v111
  %v128 = vpack.c.b16 %v112, %v112
  %v129 = vpack.c.b16 %v113, %v113
  %v130 = vpack.c.b16 %v114, %v114
  %v131 = vpack.c.b16 %v115, %v115
  %v132 = vpack.c.b16 %v116, %v116
  %v133 = vpack.c.b16 %v117, %v117
  %v134 = vpack.c.b16 %v118, %v118
  %v135 = vpack.c.b16 %v119, %v119
  %v136 = vpack.c.b16 %v120, %v120
  %v137 = vpack.c.b16 %v121, %v121
  %v138 = vpack.c.b16 %v122, %v122
  %v139 = vpack.c.b16 %v123, %v123
  %156 = vst [vmem:[%s3] sm:$0xf] %v124
  %157 = vst [vmem:[%s3 + $0x4] sm:$0xf] %v125
  %158 = vst [vmem:[%s3 + $0x8] sm:$0xf] %v126
  %159 = vst [vmem:[%s3 + $0xc] sm:$0xf] %v127
  %160 = vst [vmem:[%s3 + $0x10] sm:$0xf] %v128
  %161 = vst [vmem:[%s3 + $0x14] sm:$0xf] %v129
  %162 = vst [vmem:[%s3 + $0x18] sm:$0xf] %v130
  %163 = vst [vmem:[%s3 + $0x1c] sm:$0xf] %v131
  %164 = vst [vmem:[%s3 + $0x20] sm:$0xf] %v132
  %165 = vst [vmem:[%s3 + $0x24] sm:$0xf] %v133
  %166 = vst [vmem:[%s3 + $0x28] sm:$0xf] %v134
  %167 = vst [vmem:[%s3 + $0x2c] sm:$0xf] %v135
  %168 = vst [vmem:[%s3 + $0x30] sm:$0xf] %v136
  %169 = vst [vmem:[%s3 + $0x34] sm:$0xf] %v137
  %170 = vst [vmem:[%s3 + $0x38] sm:$0xf] %v138
  %171 = vst [vmem:[%s3 + $0x3c] sm:$0xf] %v139
  // Predicated region
  $region14: #{_lambda_.12} parent=0 // pred_check
    _
  $region15: #{_lambda_.12} parent=0 // pred_check_branch
    %173 = sbr.rel (0) target = $region17
  $region16: #{_lambda_.12} parent=0 // pred_region
    _
  $region17: #{_lambda_.12} parent=0 // pred_fallthru
    _
  // Predicated region
  $region18: #{_lambda_.12} parent=0 // pred_check
    _
  $region19: #{_lambda_.12} parent=0 // pred_check_branch
    %175 = sbr.rel (0) target = $region21
  $region20: #{_lambda_.12} parent=0 // pred_region
    _
  $region21: #{_lambda_.12} parent=0 // pred_fallthru
    _

// kernel: _lambda_.11
$region0: #{_lambda_.11}
  #allocation0 [shape = 'u32[]', space=smem, size = 0x4, offset = 0x4, fixed_abs, tag = 'smem constant byte address 0x4 - core index']
  #allocation1 [shape = 'u32[144,128]{1,0:T(1,128)}', space=vmem, size = 0x12000, scoped, tag = 'internal scratch']
  %s0 = inlined_call_operand.vmem [shape: bf16[4,32,512], index: 0, kind: input, shape index: {}]
  %s1 = inlined_call_operand.hbm [shape: bf16[4,512,128], index: 1, kind: input, shape index: {}]
  %s2 = inlined_call_operand.vmem [shape: f32[4,32,128], index: 2, kind: output, shape index: {0}]
  %s3 = inlined_call_operand.vmem [shape: f32[4,2,128], index: 3, kind: output, shape index: {1}]
  %4 = xla_tuple %s2, %s3
  %s5 = sld [smem:[#allocation0]]
  $region57: #{_lambda_.11} parent=0
    _
  %s7 = ssub.s32 1, %s5
  %s8 = scalar_select 0, %s7, %s5
  $region1: #{_lambda_.11} parent=0
    #allocation2 [shape = 'u8[262144]{0}', space=vmem, size = 0x40000, scoped, tag = 'input window, operand 1']
    #allocation3 [shape = 's32[2]{0}', space=sflag, size = 0x8, scoped, tag = 'scoped memory for _lambda_.11']
    %9 = vsyncpa [#allocation3], 0
    %s10 = scalar_lea.sflag [#allocation3], 1
    %11 = vsyncpa %s10, 0
    loop: start=0, step=1, limit=6
    $region2: #{_lambda_.11} parent=1 // loop_pre_header
      _
    $region3: #{_lambda_.11} parent=1 // loop_header
      %s13 = sphi 0, %s17
      %p14 = scmp.ge.s32.totalorder %s13, 6
      %s20 = sphi 0, %s32
      %s21 = sphi 0, %s28
      %s22 = sphi 0, %s20
      %s23 = sphi 0, %s21
      %s24 = sphi 0, %s22
      %s25 = sphi 0, %s23
      %s37 = sphi 0, %s39
      %s40 = sphi 0, %s37
      %s41 = sphi 0, %s40
      %s57 = sphi 0, %s41
      %s63 = sphi 0, %s65
      %s66 = sphi 0, %s63
      %s67 = sphi 0, %s66
      %s83 = sphi 0, %s67
      %s91 = sphi 0, %s93
      %s94 = sphi 0, %s91
      %s95 = sphi 0, %s94
      %s111 = sphi 0, %s95
      %s117 = sphi 0, %s119
      %s120 = sphi 0, %s117
      %s121 = sphi 0, %s120
      %s137 = sphi 0, %s121
    $region4: #{_lambda_.11} parent=1 // loop_header_branch
      %16 = sbr.rel (%p14) target = $region8
    $region5: #{_lambda_.11} parent=1 // loop_body
      %s18 = ssub.s32 %s13, 1
      %s19 = ssub.s32 %s13, 2
      %s26 = sadd.s32 1, %s21
      %p27 = scmp.ge.s32.totalorder %s26, 1
      %s28 = scalar_select %p27, 0, %s26
      %s29 = sadd.s32 1, %s20
      %s30 = scalar_select %p27, %s29, %s20
      %p31 = scmp.ge.s32.totalorder %s30, 4
      %s32 = scalar_select %p31, 0, %s30
      %s33 = ssub.s32 %s20, %s32
      %s34 = ssub.s32 %s21, %s28
      %s35 = sor.u32 %s33, %s34
      %p36 = scmp.eq.s32.totalorder %s35, 0
      %s38 = sadd.s32 %s37, 1
      %s39 = scalar_select %p36, %s37, %s38
      %p42 = pneg %p36
      %p43 = scmp.eq.s32.totalorder %s13, 3
      %p44 = por %p42, %p43
      %p45 = scmp.ne.s32.totalorder %s37, %s40
      %p46 = scmp.eq.s32.totalorder %s13, 0
      %p47 = por %p45, %p46
      %p48 = scmp.ne.s32.totalorder %s37, %s40
      %p49 = scmp.eq.s32.totalorder %s18, 3
      %p50 = por %p48, %p49
      %p51 = scmp.ne.s32.totalorder %s40, %s41
      %p52 = scmp.eq.s32.totalorder %s18, 0
      %p53 = por %p51, %p52
      %p54 = scmp.ne.s32.totalorder %s40, %s41
      %p55 = scmp.eq.s32.totalorder %s19, 3
      %p56 = por %p54, %p55
      %p58 = scmp.ne.s32.totalorder %s41, %s57
      %p59 = scmp.eq.s32.totalorder %s19, 0
      %p60 = por %p58, %p59
      %s61 = ssub.s32 %s20, %s32
      %p62 = scmp.eq.s32.totalorder %s61, 0
      %s64 = sadd.s32 %s63, 1
      %s65 = scalar_select %p62, %s63, %s64
      %p68 = pneg %p62
      %p69 = scmp.eq.s32.totalorder %s13, 3
      %p70 = por %p68, %p69
      %p71 = scmp.ne.s32.totalorder %s63, %s66
      %p72 = scmp.eq.s32.totalorder %s13, 0
      %p73 = por %p71, %p72
      %p74 = scmp.ne.s32.totalorder %s63, %s66
      %p75 = scmp.eq.s32.totalorder %s18, 3
      %p76 = por %p74, %p75
      %p77 = scmp.ne.s32.totalorder %s66, %s67
      %p78 = scmp.eq.s32.totalorder %s18, 0
      %p79 = por %p77, %p78
      %p80 = scmp.ne.s32.totalorder %s66, %s67
      %p81 = scmp.eq.s32.totalorder %s19, 3
      %p82 = por %p80, %p81
      %p84 = scmp.ne.s32.totalorder %s67, %s83
      %p85 = scmp.eq.s32.totalorder %s19, 0
      %p86 = por %p84, %p85
      %s87 = ssub.s32 %s20, %s32
      %s88 = ssub.s32 %s21, %s28
      %s89 = sor.u32 %s87, %s88
      %p90 = scmp.eq.s32.totalorder %s89, 0
      %s92 = sadd.s32 %s91, 1
      %s93 = scalar_select %p90, %s91, %s92
      %p96 = pneg %p90
      %p97 = scmp.eq.s32.totalorder %s13, 3
      %p98 = por %p96, %p97
      %p99 = scmp.ne.s32.totalorder %s91, %s94
      %p100 = scmp.eq.s32.totalorder %s13, 0
      %p101 = por %p99, %p100
      %p102 = scmp.ne.s32.totalorder %s91, %s94
      %p103 = scmp.eq.s32.totalorder %s18, 3
      %p104 = por %p102, %p103
      %p105 = scmp.ne.s32.totalorder %s94, %s95
      %p106 = scmp.eq.s32.totalorder %s18, 0
      %p107 = por %p105, %p106
      %p108 = scmp.ne.s32.totalorder %s94, %s95
      %p109 = scmp.eq.s32.totalorder %s19, 3
      %p110 = por %p108, %p109
      %p112 = scmp.ne.s32.totalorder %s95, %s111
      %p113 = scmp.eq.s32.totalorder %s19, 0
      %p114 = por %p112, %p113
      %s115 = ssub.s32 %s20, %s32
      %p116 = scmp.eq.s32.totalorder %s115, 0
      %s118 = sadd.s32 %s117, 1
      %s119 = scalar_select %p116, %s117, %s118
      %p122 = pneg %p116
      %p123 = scmp.eq.s32.totalorder %s13, 3
      %p124 = por %p122, %p123
      %p125 = scmp.ne.s32.totalorder %s117, %s120
      %p126 = scmp.eq.s32.totalorder %s13, 0
      %p127 = por %p125, %p126
      %p128 = scmp.ne.s32.totalorder %s117, %s120
      %p129 = scmp.eq.s32.totalorder %s18, 3
      %p130 = por %p128, %p129
      %p131 = scmp.ne.s32.totalorder %s120, %s121
      %p132 = scmp.eq.s32.totalorder %s18, 0
      %p133 = por %p131, %p132
      %p134 = scmp.ne.s32.totalorder %s120, %s121
      %p135 = scmp.eq.s32.totalorder %s19, 3
      %p136 = por %p134, %p135
      %p138 = scmp.ne.s32.totalorder %s121, %s137
      %p139 = scmp.eq.s32.totalorder %s19, 0
      %p140 = por %p138, %p139
      %p141 = scmp.le.s32.totalorder 1, %s13
      %p142 = scmp.lt.s32.totalorder %s13, 5
      %p143 = pnand %p141, %p142
      %p144 = pneg %p143
      // Predicated region
      $region9: #{_lambda_.11} parent=5 // pred_check
        _
      $region10: #{_lambda_.11} parent=5 // pred_check_branch
        %146 = sbr.rel (%p143) target = $region12
      $region11: #{_lambda_.11} parent=5 // pred_region
        %s147 = ssub.s32 %s13, 1
      $region12: #{_lambda_.11} parent=5 // pred_fallthru
        _
      %p148 = scmp.lt.s32.totalorder %s13, 4
      // Predicated region
      $region13: #{_lambda_.11} parent=5 // pred_check
        %p149 = pneg %p148
      $region14: #{_lambda_.11} parent=5 // pred_check_branch
        %151 = sbr.rel (%p149) target = $region16
      $region15: #{_lambda_.11} parent=5 // pred_region
        // Predicated region
        $region17: #{_lambda_.11} parent=15 // pred_check
          %p152 = pneg %p47
        $region18: #{_lambda_.11} parent=15 // pred_check_branch
          %154 = sbr.rel (%p152) target = $region20
        $region19: #{_lambda_.11} parent=15 // pred_region
          %s155 = smul.u32 4, %s21
          %p156 = scmp.lt.s32.totalorder %s20, 3
          %s157 = scalar_select %p156, %s20, 3
          %p158 = scmp.lt.s32.totalorder %s155, 3
          %s159 = scalar_select %p158, %s155, 3
          %s160 = smul.addr %s159, 4
          %s161 = smul.addr %s157, 16
          %s162 = sadd.s32 %s160, %s161
          %s163 = smul.addr %s162, 4
          %s164 = scalar_lea.vmem %s0, %s163
          %s165 = smul.u32 4, %s21
        $region20: #{_lambda_.11} parent=15 // pred_fallthru
          _
        // Predicated region
        $region21: #{_lambda_.11} parent=15 // pred_check
          %p166 = pneg %p73
        $region22: #{_lambda_.11} parent=15 // pred_check_branch
          %168 = sbr.rel (%p166) target = $region24
        $region23: #{_lambda_.11} parent=15 // pred_region
          %s169 = sand.u32 %s63, 1
          %s170 = scalar_lea.sflag [#allocation3], %s169
          %s171 = sand.u32 %s63, 1
          %s172 = smul.addr %s171, 256
          %s173 = scalar_lea.vmem [#allocation2], %s172
          %s175 = ssub.s32 4096, 4096
          %176 = vsyncadd %s170, %s175
          %s177 = smul.addr %s20, 64
          %s178 = smul.addr %s177, 64
          %s179 = scalar_lea.hbm %s1, %s178
          %s180 = sshll.u32 %s173, 4
          %s181 = int_to_ptr.vmem [resolvable:$true] %s180
          %186 = dma.hbm_to_vmem [thread:$0]  %s179, 4096, %s181, %s170, 64, 64, 4
        $region24: #{_lambda_.11} parent=15 // pred_fallthru
          _
      $region16: #{_lambda_.11} parent=5 // pred_fallthru
        _
      %p187 = scmp.le.s32.totalorder 1, %s13
      %p188 = scmp.lt.s32.totalorder %s13, 5
      %p189 = pnand %p187, %p188
      %p190 = pneg %p189
      // Predicated region
      $region25: #{_lambda_.11} parent=5 // pred_check
        _
      $region26: #{_lambda_.11} parent=5 // pred_check_branch
        %192 = sbr.rel (%p189) target = $region28
      $region27: #{_lambda_.11} parent=5 // pred_region
        %s193 = ssub.s32 %s13, 1
        %s194 = sand.u32 %s66, 1
        %s195 = scalar_lea.sflag [#allocation3], %s194
        %s196 = sand.u32 %s66, 1
        %s197 = smul.addr %s196, 256
        %s198 = scalar_lea.vmem [#allocation2], %s197
        // Predicated region
        $region29: #{_lambda_.11} parent=27 // pred_check
          %p199 = pneg %p79
        $region30: #{_lambda_.11} parent=27 // pred_check_branch
          %201 = sbr.rel (%p199) target = $region32
        $region31: #{_lambda_.11} parent=27 // pred_region
          %202 = dma.done %s195, 4096
        $region32: #{_lambda_.11} parent=27 // pred_fallthru
          _
        %s203 = smul.u32 4, %s23
        %p204 = scmp.lt.s32.totalorder %s22, 3
        %s205 = scalar_select %p204, %s22, 3
        %p206 = scmp.lt.s32.totalorder %s203, 3
        %s207 = scalar_select %p206, %s203, 3
        %s208 = smul.addr %s207, 4
        %s209 = smul.addr %s205, 16
        %s210 = sadd.s32 %s208, %s209
        %s211 = smul.addr %s210, 4
        %s212 = scalar_lea.vmem %s0, %s211
        %p213 = pneg %p53
        %p214 = pneg %p50
        %s215 = sand.u32 %s66, 1
        %s216 = scalar_lea.sflag [#allocation3], %s215
        %s217 = sand.u32 %s66, 1
        %s218 = smul.addr %s217, 256
        %s219 = scalar_lea.vmem [#allocation2], %s218
        %p220 = pneg %p79
        %p221 = pneg %p76
        %p222 = pneg %p107
        %p223 = pneg %p104
        %s224 = smul.u32 4, %s23
        %p225 = scmp.lt.s32.totalorder %s22, 3
        %s226 = scalar_select %p225, %s22, 3
        %p227 = scmp.lt.s32.totalorder %s224, 3
        %s228 = scalar_select %p227, %s224, 3
        %s229 = smul.addr %s226, 4
        %s230 = sadd.s32 %s228, %s229
        %s231 = smul.addr %s230, 8
        %s232 = scalar_lea.vmem %s2, %s231
        %p233 = pneg %p133
        %p234 = pneg %p130
        %p235 = scmp.lt.s32.totalorder %s22, 3
        %s236 = scalar_select %p235, %s22, 3
        %s237 = smul.addr %s236, 2
        %s238 = scalar_lea.vmem %s3, %s237
        %s239 = smul.u32 4, %s23
        %p240 = scmp.lt.s32.totalorder %s22, 3
        %s241 = scalar_select %p240, %s22, 3
        %p242 = scmp.lt.s32.totalorder %s239, 3
        %s243 = scalar_select %p242, %s239, 3
        %s244 = smul.addr %s243, 4
        %s245 = smul.addr %s241, 16
        %s246 = sadd.s32 %s244, %s245
        %s247 = smul.addr %s246, 4
        %s248 = scalar_lea.vmem %s0, %s247
        %s249 = smul.u32 4, %s23
        %s250 = smul.u32 4, %s23
        %p251 = scmp.lt.s32.totalorder %s22, 3
        %s252 = scalar_select %p251, %s22, 3
        %p253 = scmp.lt.s32.totalorder %s250, 3
        %s254 = scalar_select %p253, %s250, 3
        %s255 = smul.addr %s252, 4
        %s256 = sadd.s32 %s254, %s255
        %s257 = smul.addr %s256, 8
        %s258 = scalar_lea.vmem %s2, %s257
        %s259 = smul.u32 4, %s23
        %p260 = scmp.lt.s32.totalorder %s22, 3
        %s261 = scalar_select %p260, %s22, 3
        %s262 = smul.addr %s261, 2
        %s263 = scalar_lea.vmem %s3, %s262
        %v265 = vld [vmem:[%s248] sm:$0xff]
        %v266 = vld [vmem:[%s248 + $0x8] sm:$0xff]
        %v267 = vld [vmem:[%s248 + $0x10] sm:$0xff]
        %v268 = vld [vmem:[%s248 + $0x18] sm:$0xff]
        %v269 = vld [vmem:[%s248 + $0x20] sm:$0xff]
        %v270 = vld [vmem:[%s248 + $0x28] sm:$0xff]
        %v271 = vld [vmem:[%s248 + $0x30] sm:$0xff]
        %v272 = vld [vmem:[%s248 + $0x38] sm:$0xff]
        %v273 = vld [vmem:[%s198] sm:$0xf]
        %v274 = vld [vmem:[%s198 + $0x4] sm:$0xf]
        %v275 = vld [vmem:[%s198 + $0x8] sm:$0xf]
        %v276 = vld [vmem:[%s198 + $0xc] sm:$0xf]
        %v277 = vld [vmem:[%s198 + $0x10] sm:$0xf]
        %v278 = vld [vmem:[%s198 + $0x14] sm:$0xf]
        %v279 = vld [vmem:[%s198 + $0x18] sm:$0xf]
        %v280 = vld [vmem:[%s198 + $0x1c] sm:$0xf]
        %v281 = vld [vmem:[%s198 + $0x20] sm:$0xf]
        %v282 = vld [vmem:[%s198 + $0x24] sm:$0xf]
        %v283 = vld [vmem:[%s198 + $0x28] sm:$0xf]
        %v284 = vld [vmem:[%s198 + $0x2c] sm:$0xf]
        %v285 = vld [vmem:[%s198 + $0x30] sm:$0xf]
        %v286 = vld [vmem:[%s198 + $0x34] sm:$0xf]
        %v287 = vld [vmem:[%s198 + $0x38] sm:$0xf]
        %v288 = vld [vmem:[%s198 + $0x3c] sm:$0xf]
        %v289 = vld [vmem:[%s198 + $0x40] sm:$0xf]
        %v290 = vld [vmem:[%s198 + $0x44] sm:$0xf]
        %v291 = vld [vmem:[%s198 + $0x48] sm:$0xf]
        %v292 = vld [vmem:[%s198 + $0x4c] sm:$0xf]
        %v293 = vld [vmem:[%s198 + $0x50] sm:$0xf]
        %v294 = vld [vmem:[%s198 + $0x54] sm:$0xf]
        %v295 = vld [vmem:[%s198 + $0x58] sm:$0xf]
        %v296 = vld [vmem:[%s198 + $0x5c] sm:$0xf]
        %v297 = vld [vmem:[%s198 + $0x60] sm:$0xf]
        %v298 = vld [vmem:[%s198 + $0x64] sm:$0xf]
        %v299 = vld [vmem:[%s198 + $0x68] sm:$0xf]
        %v300 = vld [vmem:[%s198 + $0x6c] sm:$0xf]
        %v301 = vld [vmem:[%s198 + $0x70] sm:$0xf]
        %v302 = vld [vmem:[%s198 + $0x74] sm:$0xf]
        %v303 = vld [vmem:[%s198 + $0x78] sm:$0xf]
        %v304 = vld [vmem:[%s198 + $0x7c] sm:$0xf]
        %v305 = vld [vmem:[%s198 + $0x80] sm:$0xf]
        %v306 = vld [vmem:[%s198 + $0x84] sm:$0xf]
        %v307 = vld [vmem:[%s198 + $0x88] sm:$0xf]
        %v308 = vld [vmem:[%s198 + $0x8c] sm:$0xf]
        %v309 = vld [vmem:[%s198 + $0x90] sm:$0xf]
        %v310 = vld [vmem:[%s198 + $0x94] sm:$0xf]
        %v311 = vld [vmem:[%s198 + $0x98] sm:$0xf]
        %v312 = vld [vmem:[%s198 + $0x9c] sm:$0xf]
        %v313 = vld [vmem:[%s198 + $0xa0] sm:$0xf]
        %v314 = vld [vmem:[%s198 + $0xa4] sm:$0xf]
        %v315 = vld [vmem:[%s198 + $0xa8] sm:$0xf]
        %v316 = vld [vmem:[%s198 + $0xac] sm:$0xf]
        %v317 = vld [vmem:[%s198 + $0xb0] sm:$0xf]
        %v318 = vld [vmem:[%s198 + $0xb4] sm:$0xf]
        %v319 = vld [vmem:[%s198 + $0xb8] sm:$0xf]
        %v320 = vld [vmem:[%s198 + $0xbc] sm:$0xf]
        %v321 = vld [vmem:[%s198 + $0xc0] sm:$0xf]
        %v322 = vld [vmem:[%s198 + $0xc4] sm:$0xf]
        %v323 = vld [vmem:[%s198 + $0xc8] sm:$0xf]
        %v324 = vld [vmem:[%s198 + $0xcc] sm:$0xf]
        %v325 = vld [vmem:[%s198 + $0xd0] sm:$0xf]
        %v326 = vld [vmem:[%s198 + $0xd4] sm:$0xf]
        %v327 = vld [vmem:[%s198 + $0xd8] sm:$0xf]
        %v328 = vld [vmem:[%s198 + $0xdc] sm:$0xf]
        %v329 = vld [vmem:[%s198 + $0xe0] sm:$0xf]
        %v330 = vld [vmem:[%s198 + $0xe4] sm:$0xf]
        %v331 = vld [vmem:[%s198 + $0xe8] sm:$0xf]
        %v332 = vld [vmem:[%s198 + $0xec] sm:$0xf]
        %v333 = vld [vmem:[%s198 + $0xf0] sm:$0xf]
        %v334 = vld [vmem:[%s198 + $0xf4] sm:$0xf]
        %v335 = vld [vmem:[%s198 + $0xf8] sm:$0xf]
        %v336 = vld [vmem:[%s198 + $0xfc] sm:$0xf]
        %v345 = vunpack.c.l.b16 %v265
        %v346 = vunpack.c.h.b16 %v265
        %v347 = vunpack.c.l.b16 %v266
        %v348 = vunpack.c.h.b16 %v266
        %v349 = vunpack.c.l.b16 %v267
        %v350 = vunpack.c.h.b16 %v267
        %v351 = vunpack.c.l.b16 %v268
        %v352 = vunpack.c.h.b16 %v268
        %v353 = vunpack.c.l.b16 %v269
        %v354 = vunpack.c.h.b16 %v269
        %v355 = vunpack.c.l.b16 %v270
        %v356 = vunpack.c.h.b16 %v270
        %v357 = vunpack.c.l.b16 %v271
        %v358 = vunpack.c.h.b16 %v271
        %v359 = vunpack.c.l.b16 %v272
        %v360 = vunpack.c.h.b16 %v272
        %v361 = vpack.c.b16 %v349, %v345
        %v362 = vpack.c.b16 %v350, %v346
        %v363 = vpack.c.b16 %v351, %v347
        %v364 = vpack.c.b16 %v352, %v348
        %v365 = vpack.c.b16 %v357, %v353
        %v366 = vpack.c.b16 %v358, %v354
        %v367 = vpack.c.b16 %v359, %v355
        %v368 = vpack.c.b16 %v360, %v356
        %v441 = vunpack.c.l.b16 %v273
        %v442 = vunpack.c.l.b16 %v274
        %v443 = vunpack.c.l.b16 %v275
        %v444 = vunpack.c.l.b16 %v276
        %v445 = vunpack.c.l.b16 %v277
        %v446 = vunpack.c.l.b16 %v278
        %v447 = vunpack.c.l.b16 %v279
        %v448 = vunpack.c.l.b16 %v280
        %v449 = vunpack.c.l.b16 %v281
        %v450 = vunpack.c.l.b16 %v282
        %v451 = vunpack.c.l.b16 %v283
        %v452 = vunpack.c.l.b16 %v284
        %v453 = vunpack.c.l.b16 %v285
        %v454 = vunpack.c.l.b16 %v286
        %v455 = vunpack.c.l.b16 %v287
        %v456 = vunpack.c.l.b16 %v288
        %v457 = vunpack.c.l.b16 %v289
        %v458 = vunpack.c.l.b16 %v290
        %v459 = vunpack.c.l.b16 %v291
        %v460 = vunpack.c.l.b16 %v292
        %v461 = vunpack.c.l.b16 %v293
        %v462 = vunpack.c.l.b16 %v294
        %v463 = vunpack.c.l.b16 %v295
        %v464 = vunpack.c.l.b16 %v296
        %v465 = vunpack.c.l.b16 %v297
        %v466 = vunpack.c.l.b16 %v298
        %v467 = vunpack.c.l.b16 %v299
        %v468 = vunpack.c.l.b16 %v300
        %v469 = vunpack.c.l.b16 %v301
        %v470 = vunpack.c.l.b16 %v302
        %v471 = vunpack.c.l.b16 %v303
        %v472 = vunpack.c.l.b16 %v304
        %v473 = vunpack.c.l.b16 %v305
        %v474 = vunpack.c.l.b16 %v306
        %v475 = vunpack.c.l.b16 %v307
        %v476 = vunpack.c.l.b16 %v308
        %v477 = vunpack.c.l.b16 %v309
        %v478 = vunpack.c.l.b16 %v310
        %v479 = vunpack.c.l.b16 %v311
        %v480 = vunpack.c.l.b16 %v312
        %v481 = vunpack.c.l.b16 %v313
        %v482 = vunpack.c.l.b16 %v314
        %v483 = vunpack.c.l.b16 %v315
        %v484 = vunpack.c.l.b16 %v316
        %v485 = vunpack.c.l.b16 %v317
        %v486 = vunpack.c.l.b16 %v318
        %v487 = vunpack.c.l.b16 %v319
        %v488 = vunpack.c.l.b16 %v320
        %v489 = vunpack.c.l.b16 %v321
        %v490 = vunpack.c.l.b16 %v322
        %v491 = vunpack.c.l.b16 %v323
        %v492 = vunpack.c.l.b16 %v324
        %v493 = vunpack.c.l.b16 %v325
        %v494 = vunpack.c.l.b16 %v326
        %v495 = vunpack.c.l.b16 %v327
        %v496 = vunpack.c.l.b16 %v328
        %v497 = vunpack.c.l.b16 %v329
        %v498 = vunpack.c.l.b16 %v330
        %v499 = vunpack.c.l.b16 %v331
        %v500 = vunpack.c.l.b16 %v332
        %v501 = vunpack.c.l.b16 %v333
        %v502 = vunpack.c.l.b16 %v334
        %v503 = vunpack.c.l.b16 %v335
        %v504 = vunpack.c.l.b16 %v336
        %v505 = vpack.c.b16 %v442, %v441
        %v506 = vpack.c.b16 %v444, %v443
        %v507 = vpack.c.b16 %v446, %v445
        %v508 = vpack.c.b16 %v448, %v447
        %v509 = vpack.c.b16 %v450, %v449
        %v510 = vpack.c.b16 %v452, %v451
        %v511 = vpack.c.b16 %v454, %v453
        %v512 = vpack.c.b16 %v456, %v455
        %v513 = vpack.c.b16 %v458, %v457
        %v514 = vpack.c.b16 %v460, %v459
        %v515 = vpack.c.b16 %v462, %v461
        %v516 = vpack.c.b16 %v464, %v463
        %v517 = vpack.c.b16 %v466, %v465
        %v518 = vpack.c.b16 %v468, %v467
        %v519 = vpack.c.b16 %v470, %v469
        %v520 = vpack.c.b16 %v472, %v471
        %v521 = vpack.c.b16 %v474, %v473
        %v522 = vpack.c.b16 %v476, %v475
        %v523 = vpack.c.b16 %v478, %v477
        %v524 = vpack.c.b16 %v480, %v479
        %v525 = vpack.c.b16 %v482, %v481
        %v526 = vpack.c.b16 %v484, %v483
        %v527 = vpack.c.b16 %v486, %v485
        %v528 = vpack.c.b16 %v488, %v487
        %v529 = vpack.c.b16 %v490, %v489
        %v530 = vpack.c.b16 %v492, %v491
        %v531 = vpack.c.b16 %v494, %v493
        %v532 = vpack.c.b16 %v496, %v495
        %v533 = vpack.c.b16 %v498, %v497
        %v534 = vpack.c.b16 %v500, %v499
        %v535 = vpack.c.b16 %v502, %v501
        %v536 = vpack.c.b16 %v504, %v503
        %569 = vmatprep.subr.bf16.mxu0 0
        %570 = vmatpush1.bf16.msra.mxu0 %v505
        %571 = vmatprep.subr.bf16.mxu0 0
        %572 = vmatpush1.bf16.msra.mxu0 %v506
        %573 = vmatprep.subr.bf16.mxu0 0
        %574 = vmatpush1.bf16.msra.mxu0 %v507
        %575 = vmatprep.subr.bf16.mxu0 0
        %576 = vmatpush1.bf16.msra.mxu0 %v508
        %577 = vmatprep.subr.bf16.mxu0 0
        %578 = vmatpush1.bf16.msra.mxu0 %v509
        %579 = vmatprep.subr.bf16.mxu0 0
        %580 = vmatpush1.bf16.msra.mxu0 %v510
        %581 = vmatprep.subr.bf16.mxu0 0
        %582 = vmatpush1.bf16.msra.mxu0 %v511
        %583 = vmatprep.subr.bf16.mxu0 0
        %584 = vmatpush1.bf16.msra.mxu0 %v512
        %585 = vmatprep.subr.bf16.mxu0 0
        %586 = vmatpush1.bf16.msra.mxu0 %v513
        %587 = vmatprep.subr.bf16.mxu0 0
        %588 = vmatpush1.bf16.msra.mxu0 %v514
        %589 = vmatprep.subr.bf16.mxu0 0
        %590 = vmatpush1.bf16.msra.mxu0 %v515
        %591 = vmatprep.subr.bf16.mxu0 0
        %592 = vmatpush1.bf16.msra.mxu0 %v516
        %593 = vmatprep.subr.bf16.mxu0 0
        %594 = vmatpush1.bf16.msra.mxu0 %v517
        %595 = vmatprep.subr.bf16.mxu0 0
        %596 = vmatpush1.bf16.msra.mxu0 %v518
        %597 = vmatprep.subr.bf16.mxu0 0
        %598 = vmatpush1.bf16.msra.mxu0 %v519
        %599 = vmatprep.subr.bf16.mxu0 0
        %600 = vmatpush1.bf16.msra.mxu0 %v520
        %601 = vmatprep.mubr.bf16.mxu0 %v362
        %602 = vmatmul.mubr.bf16.gmra.mrb[0].mxu0 %v361
        %v603 = vpop.f32.mrb[0].mxu0
        %v604 = vadd.f32 0.0, %v603
        %v605 = vpop.f32.mrb[0].mxu0
        %v606 = vpop.f32.mrb[0].mxu0
        %v607 = vadd.f32 0.0, %v606
        %v608 = vpop.f32.mrb[0].mxu0
        %609 = vmatprep.mubr.bf16.mxu0 %v366
        %610 = vmatmul.mubr.bf16.gmra.mrb[0].mxu0 %v365
        %v611 = vpop.f32.mrb[0].mxu0
        %v612 = vadd.f32 0.0, %v611
        %v613 = vpop.f32.mrb[0].mxu0
        %v614 = vpop.f32.mrb[0].mxu0
        %v615 = vadd.f32 0.0, %v614
        %v616 = vpop.f32.mrb[0].mxu0
        %617 = vdwg.mxu0
        %618 = vmatprep.subr.bf16.mxu0 0
        %619 = vmatpush1.bf16.msra.mxu0 %v521
        %620 = vmatprep.subr.bf16.mxu0 0
        %621 = vmatpush1.bf16.msra.mxu0 %v522
        %622 = vmatprep.subr.bf16.mxu0 0
        %623 = vmatpush1.bf16.msra.mxu0 %v523
        %624 = vmatprep.subr.bf16.mxu0 0
        %625 = vmatpush1.bf16.msra.mxu0 %v524
        %626 = vmatprep.subr.bf16.mxu0 0
        %627 = vmatpush1.bf16.msra.mxu0 %v525
        %628 = vmatprep.subr.bf16.mxu0 0
        %629 = vmatpush1.bf16.msra.mxu0 %v526
        %630 = vmatprep.subr.bf16.mxu0 0
        %631 = vmatpush1.bf16.msra.mxu0 %v527
        %632 = vmatprep.subr.bf16.mxu0 0
        %633 = vmatpush1.bf16.msra.mxu0 %v528
        %634 = vmatprep.subr.bf16.mxu0 0
        %635 = vmatpush1.bf16.msra.mxu0 %v529
        %636 = vmatprep.subr.bf16.mxu0 0
        %637 = vmatpush1.bf16.msra.mxu0 %v530
        %638 = vmatprep.subr.bf16.mxu0 0
        %639 = vmatpush1.bf16.msra.mxu0 %v531
        %640 = vmatprep.subr.bf16.mxu0 0
        %641 = vmatpush1.bf16.msra.mxu0 %v532
        %642 = vmatprep.subr.bf16.mxu0 0
        %643 = vmatpush1.bf16.msra.mxu0 %v533
        %644 = vmatprep.subr.bf16.mxu0 0
        %645 = vmatpush1.bf16.msra.mxu0 %v534
        %646 = vmatprep.subr.bf16.mxu0 0
        %647 = vmatpush1.bf16.msra.mxu0 %v535
        %648 = vmatprep.subr.bf16.mxu0 0
        %649 = vmatpush1.bf16.msra.mxu0 %v536
        %650 = vmatprep.mubr.bf16.mxu0 %v364
        %651 = vmatmul.mubr.bf16.gmra.mrb[0].mxu0 %v363
        %v652 = vpop.f32.mrb[0].mxu0
        %v653 = vadd.f32 %v604, %v652
        %v654 = vpop.f32.mrb[0].mxu0
        %v655 = vpop.f32.mrb[0].mxu0
        %v656 = vadd.f32 %v607, %v655
        %v657 = vpop.f32.mrb[0].mxu0
        %658 = vmatprep.mubr.bf16.mxu0 %v368
        %659 = vmatmul.mubr.bf16.gmra.mrb[0].mxu0 %v367
        %v660 = vpop.f32.mrb[0].mxu0
        %v661 = vadd.f32 %v612, %v660
        %v662 = vpop.f32.mrb[0].mxu0
        %v663 = vpop.f32.mrb[0].mxu0
        %v664 = vadd.f32 %v615, %v663
        %v665 = vpop.f32.mrb[0].mxu0
        %666 = vdwg.mxu0
        %667 = vst [vmem:[%s258] sm:$0xff] %v653
        %668 = vst [vmem:[%s258 + $0x8] sm:$0xff] %v656
        %669 = vst [vmem:[%s258 + $0x10] sm:$0xff] %v661
        %670 = vst [vmem:[%s258 + $0x18] sm:$0xff] %v664
        %p671 = scmp.eq.s32.totalorder %s23, 0
        // Predicated region
        $region33: #{_lambda_.11} parent=27 // pred_check
          %p672 = pneg %p671
        $region34: #{_lambda_.11} parent=27 // pred_check_branch
          %674 = sbr.rel (%p672) target = $region36
        $region35: #{_lambda_.11} parent=27 // pred_region
          %675 = vst [vmem:[%s263] sm:$0x3] 0.0
        $region36: #{_lambda_.11} parent=27 // pred_fallthru
          _
        %v676 = vadd.f32 %v653, %v656
        %v677 = vadd.f32 %v676, %v661
        %v678 = vadd.f32 %v677, %v664
        %v679 = vrot.slane %v678, 4
        %v680 = vadd.f32 %v678, %v679
        %v681 = vrot.slane %v680, 2
        %v682 = vadd.f32 %v680, %v681
        %v683 = vrot.slane %v682, 1
        %v684 = vadd.f32 %v682, %v683
        %v685 = vmul.f32 %v653, %v653
        %v686 = vmul.f32 %v656, %v656
        %v687 = vmul.f32 %v661, %v661
        %v688 = vmul.f32 %v664, %v664
        %v689 = vadd.f32 %v685, %v686
        %v690 = vadd.f32 %v689, %v687
        %v691 = vadd.f32 %v690, %v688
        %v692 = vrot.slane %v691, 4
        %v693 = vadd.f32 %v691, %v692
        %v694 = vrot.slane %v693, 2
        %v695 = vadd.f32 %v693, %v694
        %v696 = vrot.slane %v695, 1
        %v697 = vadd.f32 %v695, %v696
        %v698 = vld [vmem:[%s263] sm:$0x3]
        %vm699 = vcmask 1040384
        %v700 = vsel %vm699, %v684, %v697
        %v701 = vadd.f32 %v698, %v700
        %702 = vst [vmem:[%s263] sm:$0x3] %v701
        %s703 = smul.u32 4, %s23
        %p704 = scmp.lt.s32.totalorder %s22, 3
        %s705 = scalar_select %p704, %s22, 3
        %p706 = scmp.lt.s32.totalorder %s703, 3
        %s707 = scalar_select %p706, %s703, 3
        %s708 = smul.addr %s705, 4
        %s709 = sadd.s32 %s707, %s708
        %s710 = smul.addr %s709, 8
        %s711 = scalar_lea.vmem %s2, %s710
        %p712 = scmp.lt.s32.totalorder %s22, 3
        %s713 = scalar_select %p712, %s22, 3
        %s714 = smul.addr %s713, 2
        %s715 = scalar_lea.vmem %s3, %s714
        // Predicated region
        $region37: #{_lambda_.11} parent=27 // pred_check
          %p716 = pneg %p104
        $region38: #{_lambda_.11} parent=27 // pred_check_branch
          %718 = sbr.rel (%p716) target = $region40
        $region39: #{_lambda_.11} parent=27 // pred_region
          %s719 = smul.u32 4, %s23
        $region40: #{_lambda_.11} parent=27 // pred_fallthru
          _
        // Predicated region
        $region41: #{_lambda_.11} parent=27 // pred_check
          %p720 = pneg %p130
        $region42: #{_lambda_.11} parent=27 // pred_check_branch
          %722 = sbr.rel (%p720) target = $region44
        $region43: #{_lambda_.11} parent=27 // pred_region
          _
        $region44: #{_lambda_.11} parent=27 // pred_fallthru
          _
      $region28: #{_lambda_.11} parent=5 // pred_fallthru
        _
      %p723 = scmp.le.s32.totalorder 2, %s13
      // Predicated region
      $region45: #{_lambda_.11} parent=5 // pred_check
        %p724 = pneg %p723
      $region46: #{_lambda_.11} parent=5 // pred_check_branch
        %726 = sbr.rel (%p724) target = $region48
      $region47: #{_lambda_.11} parent=5 // pred_region
        %s727 = ssub.s32 %s13, 2
        // Predicated region
        $region49: #{_lambda_.11} parent=47 // pred_check
          %p728 = pneg %p110
        $region50: #{_lambda_.11} parent=47 // pred_check_branch
          %730 = sbr.rel (%p728) target = $region52
        $region51: #{_lambda_.11} parent=47 // pred_region
          %s731 = smul.u32 4, %s25
          %p732 = scmp.lt.s32.totalorder %s24, 3
          %s733 = scalar_select %p732, %s24, 3
          %p734 = scmp.lt.s32.totalorder %s731, 3
          %s735 = scalar_select %p734, %s731, 3
          %s736 = smul.addr %s733, 4
          %s737 = sadd.s32 %s735, %s736
          %s738 = smul.addr %s737, 8
          %s739 = scalar_lea.vmem %s2, %s738
        $region52: #{_lambda_.11} parent=47 // pred_fallthru
          _
        // Predicated region
        $region53: #{_lambda_.11} parent=47 // pred_check
          %p740 = pneg %p136
        $region54: #{_lambda_.11} parent=47 // pred_check_branch
          %742 = sbr.rel (%p740) target = $region56
        $region55: #{_lambda_.11} parent=47 // pred_region
          %p743 = scmp.lt.s32.totalorder %s24, 3
          %s744 = scalar_select %p743, %s24, 3
          %s745 = smul.addr %s744, 2
          %s746 = scalar_lea.vmem %s3, %s745
        $region56: #{_lambda_.11} parent=47 // pred_fallthru
          _
      $region48: #{_lambda_.11} parent=5 // pred_fallthru
        _
    $region6: #{_lambda_.11} parent=1 // loop_footer
      %s17 = sadd.s32 1, %s13
    $region7: #{_lambda_.11} parent=1 // loop_footer_branch
      %12 = sbr.rel target = $region3
    $region8: #{_lambda_.11} parent=1 // loop_exit
      _
    %747 = vsyncpa [#allocation3], 1
    %s748 = scalar_lea.sflag [#allocation3], 1
    %749 = vsyncpa %s748, 1

// kernel: _lambda_.13
$region0: #{_lambda_.13}
  #allocation0 [shape = 'u32[]', space=smem, size = 0x4, offset = 0x4, fixed_abs, tag = 'smem constant byte address 0x4 - core index']
  #allocation1 [shape = 'u32[144,128]{1,0:T(1,128)}', space=vmem, size = 0x12000, scoped, tag = 'internal scratch']
  %s0 = inlined_call_operand.vmem [shape: bf16[4,128,256], index: 0, kind: input, shape index: {}]
  %s1 = inlined_call_operand.vmem [shape: bf16[4,256,128], index: 1, kind: input, shape index: {}]
  %s2 = inlined_call_operand.vmem [shape: f32[4,128,128], index: 2, kind: output, shape index: {0}]
  %s3 = inlined_call_operand.vmem [shape: f32[4,2,128], index: 3, kind: output, shape index: {1}]
  %4 = xla_tuple %s2, %s3
  %s5 = sld [smem:[#allocation0]]
  $region53: #{_lambda_.13} parent=0
    _
  %s7 = ssub.s32 1, %s5
  %s8 = scalar_select 0, %s7, %s5
  loop: start=0, step=1, limit=6
  $region2: #{_lambda_.13} parent=0 // loop_pre_header
    _
  $region3: #{_lambda_.13} parent=0 // loop_header
    %s10 = sphi 0, %s14
    %p11 = scmp.ge.s32.totalorder %s10, 6
    %s17 = sphi 0, %s29
    %s18 = sphi 0, %s25
    %s19 = sphi 0, %s17
    %s20 = sphi 0, %s18
    %s21 = sphi 0, %s19
    %s22 = sphi 0, %s20
    %s34 = sphi 0, %s36
    %s37 = sphi 0, %s34
    %s38 = sphi 0, %s37
    %s54 = sphi 0, %s38
    %s60 = sphi 0, %s62
    %s63 = sphi 0, %s60
    %s64 = sphi 0, %s63
    %s80 = sphi 0, %s64
    %s88 = sphi 0, %s90
    %s91 = sphi 0, %s88
    %s92 = sphi 0, %s91
    %s108 = sphi 0, %s92
    %s114 = sphi 0, %s116
    %s117 = sphi 0, %s114
    %s118 = sphi 0, %s117
    %s134 = sphi 0, %s118
  $region4: #{_lambda_.13} parent=0 // loop_header_branch
    %13 = sbr.rel (%p11) target = $region8
  $region5: #{_lambda_.13} parent=0 // loop_body
    %s15 = ssub.s32 %s10, 1
    %s16 = ssub.s32 %s10, 2
    %s23 = sadd.s32 1, %s18
    %p24 = scmp.ge.s32.totalorder %s23, 1
    %s25 = scalar_select %p24, 0, %s23
    %s26 = sadd.s32 1, %s17
    %s27 = scalar_select %p24, %s26, %s17
    %p28 = scmp.ge.s32.totalorder %s27, 4
    %s29 = scalar_select %p28, 0, %s27
    %s30 = ssub.s32 %s17, %s29
    %s31 = ssub.s32 %s18, %s25
    %s32 = sor.u32 %s30, %s31
    %p33 = scmp.eq.s32.totalorder %s32, 0
    %s35 = sadd.s32 %s34, 1
    %s36 = scalar_select %p33, %s34, %s35
    %p39 = pneg %p33
    %p40 = scmp.eq.s32.totalorder %s10, 3
    %p41 = por %p39, %p40
    %p42 = scmp.ne.s32.totalorder %s34, %s37
    %p43 = scmp.eq.s32.totalorder %s10, 0
    %p44 = por %p42, %p43
    %p45 = scmp.ne.s32.totalorder %s34, %s37
    %p46 = scmp.eq.s32.totalorder %s15, 3
    %p47 = por %p45, %p46
    %p48 = scmp.ne.s32.totalorder %s37, %s38
    %p49 = scmp.eq.s32.totalorder %s15, 0
    %p50 = por %p48, %p49
    %p51 = scmp.ne.s32.totalorder %s37, %s38
    %p52 = scmp.eq.s32.totalorder %s16, 3
    %p53 = por %p51, %p52
    %p55 = scmp.ne.s32.totalorder %s38, %s54
    %p56 = scmp.eq.s32.totalorder %s16, 0
    %p57 = por %p55, %p56
    %s58 = ssub.s32 %s17, %s29
    %p59 = scmp.eq.s32.totalorder %s58, 0
    %s61 = sadd.s32 %s60, 1
    %s62 = scalar_select %p59, %s60, %s61
    %p65 = pneg %p59
    %p66 = scmp.eq.s32.totalorder %s10, 3
    %p67 = por %p65, %p66
    %p68 = scmp.ne.s32.totalorder %s60, %s63
    %p69 = scmp.eq.s32.totalorder %s10, 0
    %p70 = por %p68, %p69
    %p71 = scmp.ne.s32.totalorder %s60, %s63
    %p72 = scmp.eq.s32.totalorder %s15, 3
    %p73 = por %p71, %p72
    %p74 = scmp.ne.s32.totalorder %s63, %s64
    %p75 = scmp.eq.s32.totalorder %s15, 0
    %p76 = por %p74, %p75
    %p77 = scmp.ne.s32.totalorder %s63, %s64
    %p78 = scmp.eq.s32.totalorder %s16, 3
    %p79 = por %p77, %p78
    %p81 = scmp.ne.s32.totalorder %s64, %s80
    %p82 = scmp.eq.s32.totalorder %s16, 0
    %p83 = por %p81, %p82
    %s84 = ssub.s32 %s17, %s29
    %s85 = ssub.s32 %s18, %s25
    %s86 = sor.u32 %s84, %s85
    %p87 = scmp.eq.s32.totalorder %s86, 0
    %s89 = sadd.s32 %s88, 1
    %s90 = scalar_select %p87, %s88, %s89
    %p93 = pneg %p87
    %p94 = scmp.eq.s32.totalorder %s10, 3
    %p95 = por %p93, %p94
    %p96 = scmp.ne.s32.totalorder %s88, %s91
    %p97 = scmp.eq.s32.totalorder %s10, 0
    %p98 = por %p96, %p97
    %p99 = scmp.ne.s32.totalorder %s88, %s91
    %p100 = scmp.eq.s32.totalorder %s15, 3
    %p101 = por %p99, %p100
    %p102 = scmp.ne.s32.totalorder %s91, %s92
    %p103 = scmp.eq.s32.totalorder %s15, 0
    %p104 = por %p102, %p103
    %p105 = scmp.ne.s32.totalorder %s91, %s92
    %p106 = scmp.eq.s32.totalorder %s16, 3
    %p107 = por %p105, %p106
    %p109 = scmp.ne.s32.totalorder %s92, %s108
    %p110 = scmp.eq.s32.totalorder %s16, 0
    %p111 = por %p109, %p110
    %s112 = ssub.s32 %s17, %s29
    %p113 = scmp.eq.s32.totalorder %s112, 0
    %s115 = sadd.s32 %s114, 1
    %s116 = scalar_select %p113, %s114, %s115
    %p119 = pneg %p113
    %p120 = scmp.eq.s32.totalorder %s10, 3
    %p121 = por %p119, %p120
    %p122 = scmp.ne.s32.totalorder %s114, %s117
    %p123 = scmp.eq.s32.totalorder %s10, 0
    %p124 = por %p122, %p123
    %p125 = scmp.ne.s32.totalorder %s114, %s117
    %p126 = scmp.eq.s32.totalorder %s15, 3
    %p127 = por %p125, %p126
    %p128 = scmp.ne.s32.totalorder %s117, %s118
    %p129 = scmp.eq.s32.totalorder %s15, 0
    %p130 = por %p128, %p129
    %p131 = scmp.ne.s32.totalorder %s117, %s118
    %p132 = scmp.eq.s32.totalorder %s16, 3
    %p133 = por %p131, %p132
    %p135 = scmp.ne.s32.totalorder %s118, %s134
    %p136 = scmp.eq.s32.totalorder %s16, 0
    %p137 = por %p135, %p136
    %p138 = scmp.le.s32.totalorder 1, %s10
    %p139 = scmp.lt.s32.totalorder %s10, 5
    %p140 = pnand %p138, %p139
    %p141 = pneg %p140
    // Predicated region
    $region9: #{_lambda_.13} parent=5 // pred_check
      _
    $region10: #{_lambda_.13} parent=5 // pred_check_branch
      %143 = sbr.rel (%p140) target = $region12
    $region11: #{_lambda_.13} parent=5 // pred_region
      %s144 = ssub.s32 %s10, 1
    $region12: #{_lambda_.13} parent=5 // pred_fallthru
      _
    %p145 = scmp.lt.s32.totalorder %s10, 4
    // Predicated region
    $region13: #{_lambda_.13} parent=5 // pred_check
      %p146 = pneg %p145
    $region14: #{_lambda_.13} parent=5 // pred_check_branch
      %148 = sbr.rel (%p146) target = $region16
    $region15: #{_lambda_.13} parent=5 // pred_region
      // Predicated region
      $region17: #{_lambda_.13} parent=15 // pred_check
        %p149 = pneg %p44
      $region18: #{_lambda_.13} parent=15 // pred_check_branch
        %151 = sbr.rel (%p149) target = $region20
      $region19: #{_lambda_.13} parent=15 // pred_region
        %s152 = smul.u32 16, %s18
        %p153 = scmp.lt.s32.totalorder %s17, 3
        %s154 = scalar_select %p153, %s17, 3
        %p155 = scmp.lt.s32.totalorder %s152, 15
        %s156 = scalar_select %p155, %s152, 15
        %s157 = smul.addr %s156, 2
        %s158 = smul.addr %s154, 32
        %s159 = sadd.s32 %s157, %s158
        %s160 = smul.addr %s159, 4
        %s161 = scalar_lea.vmem %s0, %s160
        %s162 = smul.u32 16, %s18
      $region20: #{_lambda_.13} parent=15 // pred_fallthru
        _
      // Predicated region
      $region21: #{_lambda_.13} parent=15 // pred_check
        %p163 = pneg %p70
      $region22: #{_lambda_.13} parent=15 // pred_check_branch
        %165 = sbr.rel (%p163) target = $region24
      $region23: #{_lambda_.13} parent=15 // pred_region
        %p166 = scmp.lt.s32.totalorder %s17, 3
        %s167 = scalar_select %p166, %s17, 3
        %s168 = smul.addr %s167, 32
        %s169 = smul.addr %s168, 4
        %s170 = scalar_lea.vmem %s1, %s169
      $region24: #{_lambda_.13} parent=15 // pred_fallthru
        _
    $region16: #{_lambda_.13} parent=5 // pred_fallthru
      _
    %p171 = scmp.le.s32.totalorder 1, %s10
    %p172 = scmp.lt.s32.totalorder %s10, 5
    %p173 = pnand %p171, %p172
    %p174 = pneg %p173
    // Predicated region
    $region25: #{_lambda_.13} parent=5 // pred_check
      _
    $region26: #{_lambda_.13} parent=5 // pred_check_branch
      %176 = sbr.rel (%p173) target = $region28
    $region27: #{_lambda_.13} parent=5 // pred_region
      %s177 = ssub.s32 %s10, 1
      %s178 = smul.u32 16, %s20
      %p179 = scmp.lt.s32.totalorder %s19, 3
      %s180 = scalar_select %p179, %s19, 3
      %p181 = scmp.lt.s32.totalorder %s178, 15
      %s182 = scalar_select %p181, %s178, 15
      %s183 = smul.addr %s182, 2
      %s184 = smul.addr %s180, 32
      %s185 = sadd.s32 %s183, %s184
      %s186 = smul.addr %s185, 4
      %s187 = scalar_lea.vmem %s0, %s186
      %p188 = pneg %p50
      %p189 = pneg %p47
      %p190 = scmp.lt.s32.totalorder %s19, 3
      %s191 = scalar_select %p190, %s19, 3
      %s192 = smul.addr %s191, 32
      %s193 = smul.addr %s192, 4
      %s194 = scalar_lea.vmem %s1, %s193
      %p195 = pneg %p76
      %p196 = pneg %p73
      %p197 = pneg %p104
      %p198 = pneg %p101
      %s199 = smul.u32 16, %s20
      %p200 = scmp.lt.s32.totalorder %s19, 3
      %s201 = scalar_select %p200, %s19, 3
      %p202 = scmp.lt.s32.totalorder %s199, 15
      %s203 = scalar_select %p202, %s199, 15
      %s204 = smul.addr %s201, 16
      %s205 = sadd.s32 %s203, %s204
      %s206 = smul.addr %s205, 8
      %s207 = scalar_lea.vmem %s2, %s206
      %p208 = pneg %p130
      %p209 = pneg %p127
      %p210 = scmp.lt.s32.totalorder %s19, 3
      %s211 = scalar_select %p210, %s19, 3
      %s212 = smul.addr %s211, 2
      %s213 = scalar_lea.vmem %s3, %s212
      %s214 = smul.u32 16, %s20
      %p215 = scmp.lt.s32.totalorder %s19, 3
      %s216 = scalar_select %p215, %s19, 3
      %p217 = scmp.lt.s32.totalorder %s214, 15
      %s218 = scalar_select %p217, %s214, 15
      %s219 = smul.addr %s218, 2
      %s220 = smul.addr %s216, 32
      %s221 = sadd.s32 %s219, %s220
      %s222 = smul.addr %s221, 4
      %s223 = scalar_lea.vmem %s0, %s222
      %s224 = smul.u32 16, %s20
      %p225 = scmp.lt.s32.totalorder %s19, 3
      %s226 = scalar_select %p225, %s19, 3
      %s227 = smul.addr %s226, 32
      %s228 = smul.addr %s227, 4
      %s229 = scalar_lea.vmem %s1, %s228
      %s230 = smul.u32 16, %s20
      %p231 = scmp.lt.s32.totalorder %s19, 3
      %s232 = scalar_select %p231, %s19, 3
      %p233 = scmp.lt.s32.totalorder %s230, 15
      %s234 = scalar_select %p233, %s230, 15
      %s235 = smul.addr %s232, 16
      %s236 = sadd.s32 %s234, %s235
      %s237 = smul.addr %s236, 8
      %s238 = scalar_lea.vmem %s2, %s237
      %s239 = smul.u32 16, %s20
      %p240 = scmp.lt.s32.totalorder %s19, 3
      %s241 = scalar_select %p240, %s19, 3
      %s242 = smul.addr %s241, 2
      %s243 = scalar_lea.vmem %s3, %s242
      %v245 = vld [vmem:[%s223] sm:$0xff]
      %v246 = vld [vmem:[%s223 + $0x8] sm:$0xff]
      %v247 = vld [vmem:[%s223 + $0x10] sm:$0xff]
      %v248 = vld [vmem:[%s223 + $0x18] sm:$0xff]
      %v249 = vld [vmem:[%s223 + $0x20] sm:$0xff]
      %v250 = vld [vmem:[%s223 + $0x28] sm:$0xff]
      %v251 = vld [vmem:[%s223 + $0x30] sm:$0xff]
      %v252 = vld [vmem:[%s223 + $0x38] sm:$0xff]
      %v253 = vld [vmem:[%s223 + $0x40] sm:$0xff]
      %v254 = vld [vmem:[%s223 + $0x48] sm:$0xff]
      %v255 = vld [vmem:[%s223 + $0x50] sm:$0xff]
      %v256 = vld [vmem:[%s223 + $0x58] sm:$0xff]
      %v257 = vld [vmem:[%s223 + $0x60] sm:$0xff]
      %v258 = vld [vmem:[%s223 + $0x68] sm:$0xff]
      %v259 = vld [vmem:[%s223 + $0x70] sm:$0xff]
      %v260 = vld [vmem:[%s223 + $0x78] sm:$0xff]
      %v261 = vld [vmem:[%s229] sm:$0xf]
      %v262 = vld [vmem:[%s229 + $0x4] sm:$0xf]
      %v263 = vld [vmem:[%s229 + $0x8] sm:$0xf]
      %v264 = vld [vmem:[%s229 + $0xc] sm:$0xf]
      %v265 = vld [vmem:[%s229 + $0x10] sm:$0xf]
      %v266 = vld [vmem:[%s229 + $0x14] sm:$0xf]
      %v267 = vld [vmem:[%s229 + $0x18] sm:$0xf]
      %v268 = vld [vmem:[%s229 + $0x1c] sm:$0xf]
      %v269 = vld [vmem:[%s229 + $0x20] sm:$0xf]
      %v270 = vld [vmem:[%s229 + $0x24] sm:$0xf]
      %v271 = vld [vmem:[%s229 + $0x28] sm:$0xf]
      %v272 = vld [vmem:[%s229 + $0x2c] sm:$0xf]
      %v273 = vld [vmem:[%s229 + $0x30] sm:$0xf]
      %v274 = vld [vmem:[%s229 + $0x34] sm:$0xf]
      %v275 = vld [vmem:[%s229 + $0x38] sm:$0xf]
      %v276 = vld [vmem:[%s229 + $0x3c] sm:$0xf]
      %v277 = vld [vmem:[%s229 + $0x40] sm:$0xf]
      %v278 = vld [vmem:[%s229 + $0x44] sm:$0xf]
      %v279 = vld [vmem:[%s229 + $0x48] sm:$0xf]
      %v280 = vld [vmem:[%s229 + $0x4c] sm:$0xf]
      %v281 = vld [vmem:[%s229 + $0x50] sm:$0xf]
      %v282 = vld [vmem:[%s229 + $0x54] sm:$0xf]
      %v283 = vld [vmem:[%s229 + $0x58] sm:$0xf]
      %v284 = vld [vmem:[%s229 + $0x5c] sm:$0xf]
      %v285 = vld [vmem:[%s229 + $0x60] sm:$0xf]
      %v286 = vld [vmem:[%s229 + $0x64] sm:$0xf]
      %v287 = vld [vmem:[%s229 + $0x68] sm:$0xf]
      %v288 = vld [vmem:[%s229 + $0x6c] sm:$0xf]
      %v289 = vld [vmem:[%s229 + $0x70] sm:$0xf]
      %v290 = vld [vmem:[%s229 + $0x74] sm:$0xf]
      %v291 = vld [vmem:[%s229 + $0x78] sm:$0xf]
      %v292 = vld [vmem:[%s229 + $0x7c] sm:$0xf]
      %v309 = vunpack.c.l.b16 %v245
      %v310 = vunpack.c.h.b16 %v245
      %v311 = vunpack.c.l.b16 %v246
      %v312 = vunpack.c.h.b16 %v246
      %v313 = vunpack.c.l.b16 %v247
      %v314 = vunpack.c.h.b16 %v247
      %v315 = vunpack.c.l.b16 %v248
      %v316 = vunpack.c.h.b16 %v248
      %v317 = vunpack.c.l.b16 %v249
      %v318 = vunpack.c.h.b16 %v249
      %v319 = vunpack.c.l.b16 %v250
      %v320 = vunpack.c.h.b16 %v250
      %v321 = vunpack.c.l.b16 %v251
      %v322 = vunpack.c.h.b16 %v251
      %v323 = vunpack.c.l.b16 %v252
      %v324 = vunpack.c.h.b16 %v252
      %v325 = vunpack.c.l.b16 %v253
      %v326 = vunpack.c.h.b16 %v253
      %v327 = vunpack.c.l.b16 %v254
      %v328 = vunpack.c.h.b16 %v254
      %v329 = vunpack.c.l.b16 %v255
      %v330 = vunpack.c.h.b16 %v255
      %v331 = vunpack.c.l.b16 %v256
      %v332 = vunpack.c.h.b16 %v256
      %v333 = vunpack.c.l.b16 %v257
      %v334 = vunpack.c.h.b16 %v257
      %v335 = vunpack.c.l.b16 %v258
      %v336 = vunpack.c.h.b16 %v258
      %v337 = vunpack.c.l.b16 %v259
      %v338 = vunpack.c.h.b16 %v259
      %v339 = vunpack.c.l.b16 %v260
      %v340 = vunpack.c.h.b16 %v260
      %v341 = vpack.c.b16 %v311, %v309
      %v342 = vpack.c.b16 %v312, %v310
      %v343 = vpack.c.b16 %v315, %v313
      %v344 = vpack.c.b16 %v316, %v314
      %v345 = vpack.c.b16 %v319, %v317
      %v346 = vpack.c.b16 %v320, %v318
      %v347 = vpack.c.b16 %v323, %v321
      %v348 = vpack.c.b16 %v324, %v322
      %v349 = vpack.c.b16 %v327, %v325
      %v350 = vpack.c.b16 %v328, %v326
      %v351 = vpack.c.b16 %v331, %v329
      %v352 = vpack.c.b16 %v332, %v330
      %v353 = vpack.c.b16 %v335, %v333
      %v354 = vpack.c.b16 %v336, %v334
      %v355 = vpack.c.b16 %v339, %v337
      %v356 = vpack.c.b16 %v340, %v338
      %v405 = vunpack.c.l.b16 %v261
      %v406 = vunpack.c.l.b16 %v262
      %v407 = vunpack.c.l.b16 %v263
      %v408 = vunpack.c.l.b16 %v264
      %v409 = vunpack.c.l.b16 %v265
      %v410 = vunpack.c.l.b16 %v266
      %v411 = vunpack.c.l.b16 %v267
      %v412 = vunpack.c.l.b16 %v268
      %v413 = vunpack.c.l.b16 %v269
      %v414 = vunpack.c.l.b16 %v270
      %v415 = vunpack.c.l.b16 %v271
      %v416 = vunpack.c.l.b16 %v272
      %v417 = vunpack.c.l.b16 %v273
      %v418 = vunpack.c.l.b16 %v274
      %v419 = vunpack.c.l.b16 %v275
      %v420 = vunpack.c.l.b16 %v276
      %v421 = vunpack.c.l.b16 %v277
      %v422 = vunpack.c.l.b16 %v278
      %v423 = vunpack.c.l.b16 %v279
      %v424 = vunpack.c.l.b16 %v280
      %v425 = vunpack.c.l.b16 %v281
      %v426 = vunpack.c.l.b16 %v282
      %v427 = vunpack.c.l.b16 %v283
      %v428 = vunpack.c.l.b16 %v284
      %v429 = vunpack.c.l.b16 %v285
      %v430 = vunpack.c.l.b16 %v286
      %v431 = vunpack.c.l.b16 %v287
      %v432 = vunpack.c.l.b16 %v288
      %v433 = vunpack.c.l.b16 %v289
      %v434 = vunpack.c.l.b16 %v290
      %v435 = vunpack.c.l.b16 %v291
      %v436 = vunpack.c.l.b16 %v292
      %v437 = vpack.c.b16 %v406, %v405
      %v438 = vpack.c.b16 %v408, %v407
      %v439 = vpack.c.b16 %v410, %v409
      %v440 = vpack.c.b16 %v412, %v411
      %v441 = vpack.c.b16 %v414, %v413
      %v442 = vpack.c.b16 %v416, %v415
      %v443 = vpack.c.b16 %v418, %v417
      %v444 = vpack.c.b16 %v420, %v419
      %v445 = vpack.c.b16 %v422, %v421
      %v446 = vpack.c.b16 %v424, %v423
      %v447 = vpack.c.b16 %v426, %v425
      %v448 = vpack.c.b16 %v428, %v427
      %v449 = vpack.c.b16 %v430, %v429
      %v450 = vpack.c.b16 %v432, %v431
      %v451 = vpack.c.b16 %v434, %v433
      %v452 = vpack.c.b16 %v436, %v435
      %469 = vmatprep.subr.bf16.mxu0 0
      %470 = vmatpush1.bf16.msra.mxu0 %v437
      %471 = vmatprep.subr.bf16.mxu0 0
      %472 = vmatpush1.bf16.msra.mxu0 %v438
      %473 = vmatprep.subr.bf16.mxu0 0
      %474 = vmatpush1.bf16.msra.mxu0 %v439
      %475 = vmatprep.subr.bf16.mxu0 0
      %476 = vmatpush1.bf16.msra.mxu0 %v440
      %477 = vmatprep.subr.bf16.mxu0 0
      %478 = vmatpush1.bf16.msra.mxu0 %v441
      %479 = vmatprep.subr.bf16.mxu0 0
      %480 = vmatpush1.bf16.msra.mxu0 %v442
      %481 = vmatprep.subr.bf16.mxu0 0
      %482 = vmatpush1.bf16.msra.mxu0 %v443
      %483 = vmatprep.subr.bf16.mxu0 0
      %484 = vmatpush1.bf16.msra.mxu0 %v444
      %485 = vmatprep.subr.bf16.mxu0 0
      %486 = vmatpush1.bf16.msra.mxu0 %v445
      %487 = vmatprep.subr.bf16.mxu0 0
      %488 = vmatpush1.bf16.msra.mxu0 %v446
      %489 = vmatprep.subr.bf16.mxu0 0
      %490 = vmatpush1.bf16.msra.mxu0 %v447
      %491 = vmatprep.subr.bf16.mxu0 0
      %492 = vmatpush1.bf16.msra.mxu0 %v448
      %493 = vmatprep.subr.bf16.mxu0 0
      %494 = vmatpush1.bf16.msra.mxu0 %v449
      %495 = vmatprep.subr.bf16.mxu0 0
      %496 = vmatpush1.bf16.msra.mxu0 %v450
      %497 = vmatprep.subr.bf16.mxu0 0
      %498 = vmatpush1.bf16.msra.mxu0 %v451
      %499 = vmatprep.subr.bf16.mxu0 0
      %500 = vmatpush1.bf16.msra.mxu0 %v452
      %501 = vmatprep.mubr.bf16.mxu0 %v342
      %502 = vmatmul.mubr.bf16.gmra.mrb[0].mxu0 %v341
      %v503 = vpop.f32.mrb[0].mxu0
      %v504 = vadd.f32 0.0, %v503
      %v505 = vpop.f32.mrb[0].mxu0
      %v506 = vpop.f32.mrb[0].mxu0
      %v507 = vadd.f32 0.0, %v506
      %v508 = vpop.f32.mrb[0].mxu0
      %509 = vmatprep.mubr.bf16.mxu0 %v344
      %510 = vmatmul.mubr.bf16.gmra.mrb[0].mxu0 %v343
      %v511 = vpop.f32.mrb[0].mxu0
      %v512 = vadd.f32 0.0, %v511
      %v513 = vpop.f32.mrb[0].mxu0
      %v514 = vpop.f32.mrb[0].mxu0
      %v515 = vadd.f32 0.0, %v514
      %v516 = vpop.f32.mrb[0].mxu0
      %517 = vmatprep.mubr.bf16.mxu0 %v346
      %518 = vmatmul.mubr.bf16.gmra.mrb[0].mxu0 %v345
      %v519 = vpop.f32.mrb[0].mxu0
      %v520 = vadd.f32 0.0, %v519
      %v521 = vpop.f32.mrb[0].mxu0
      %v522 = vpop.f32.mrb[0].mxu0
      %v523 = vadd.f32 0.0, %v522
      %v524 = vpop.f32.mrb[0].mxu0
      %525 = vmatprep.mubr.bf16.mxu0 %v348
      %526 = vmatmul.mubr.bf16.gmra.mrb[0].mxu0 %v347
      %v527 = vpop.f32.mrb[0].mxu0
      %v528 = vadd.f32 0.0, %v527
      %v529 = vpop.f32.mrb[0].mxu0
      %v530 = vpop.f32.mrb[0].mxu0
      %v531 = vadd.f32 0.0, %v530
      %v532 = vpop.f32.mrb[0].mxu0
      %533 = vmatprep.mubr.bf16.mxu0 %v350
      %534 = vmatmul.mubr.bf16.gmra.mrb[0].mxu0 %v349
      %v535 = vpop.f32.mrb[0].mxu0
      %v536 = vadd.f32 0.0, %v535
      %v537 = vpop.f32.mrb[0].mxu0
      %v538 = vpop.f32.mrb[0].mxu0
      %v539 = vadd.f32 0.0, %v538
      %v540 = vpop.f32.mrb[0].mxu0
      %541 = vmatprep.mubr.bf16.mxu0 %v352
      %542 = vmatmul.mubr.bf16.gmra.mrb[0].mxu0 %v351
      %v543 = vpop.f32.mrb[0].mxu0
      %v544 = vadd.f32 0.0, %v543
      %v545 = vpop.f32.mrb[0].mxu0
      %v546 = vpop.f32.mrb[0].mxu0
      %v547 = vadd.f32 0.0, %v546
      %v548 = vpop.f32.mrb[0].mxu0
      %549 = vmatprep.mubr.bf16.mxu0 %v354
      %550 = vmatmul.mubr.bf16.gmra.mrb[0].mxu0 %v353
      %v551 = vpop.f32.mrb[0].mxu0
      %v552 = vadd.f32 0.0, %v551
      %v553 = vpop.f32.mrb[0].mxu0
      %v554 = vpop.f32.mrb[0].mxu0
      %v555 = vadd.f32 0.0, %v554
      %v556 = vpop.f32.mrb[0].mxu0
      %557 = vmatprep.mubr.bf16.mxu0 %v356
      %558 = vmatmul.mubr.bf16.gmra.mrb[0].mxu0 %v355
      %v559 = vpop.f32.mrb[0].mxu0
      %v560 = vadd.f32 0.0, %v559
      %v561 = vpop.f32.mrb[0].mxu0
      %v562 = vpop.f32.mrb[0].mxu0
      %v563 = vadd.f32 0.0, %v562
      %v564 = vpop.f32.mrb[0].mxu0
      %565 = vdwg.mxu0
      %566 = vst [vmem:[%s238] sm:$0xff] %v504
      %567 = vst [vmem:[%s238 + $0x8] sm:$0xff] %v507
      %568 = vst [vmem:[%s238 + $0x10] sm:$0xff] %v512
      %569 = vst [vmem:[%s238 + $0x18] sm:$0xff] %v515
      %570 = vst [vmem:[%s238 + $0x20] sm:$0xff] %v520
      %571 = vst [vmem:[%s238 + $0x28] sm:$0xff] %v523
      %572 = vst [vmem:[%s238 + $0x30] sm:$0xff] %v528
      %573 = vst [vmem:[%s238 + $0x38] sm:$0xff] %v531
      %574 = vst [vmem:[%s238 + $0x40] sm:$0xff] %v536
      %575 = vst [vmem:[%s238 + $0x48] sm:$0xff] %v539
      %576 = vst [vmem:[%s238 + $0x50] sm:$0xff] %v544
      %577 = vst [vmem:[%s238 + $0x58] sm:$0xff] %v547
      %578 = vst [vmem:[%s238 + $0x60] sm:$0xff] %v552
      %579 = vst [vmem:[%s238 + $0x68] sm:$0xff] %v555
      %580 = vst [vmem:[%s238 + $0x70] sm:$0xff] %v560
      %581 = vst [vmem:[%s238 + $0x78] sm:$0xff] %v563
      %p582 = scmp.eq.s32.totalorder %s20, 0
      // Predicated region
      $region29: #{_lambda_.13} parent=27 // pred_check
        %p583 = pneg %p582
      $region30: #{_lambda_.13} parent=27 // pred_check_branch
        %585 = sbr.rel (%p583) target = $region32
      $region31: #{_lambda_.13} parent=27 // pred_region
        %586 = vst [vmem:[%s243] sm:$0x3] 0.0
      $region32: #{_lambda_.13} parent=27 // pred_fallthru
        _
      %v587 = vadd.f32 %v504, %v507
      %v588 = vadd.f32 %v587, %v512
      %v589 = vadd.f32 %v588, %v515
      %v590 = vadd.f32 %v589, %v520
      %v591 = vadd.f32 %v590, %v523
      %v592 = vadd.f32 %v591, %v528
      %v593 = vadd.f32 %v592, %v531
      %v594 = vadd.f32 %v593, %v536
      %v595 = vadd.f32 %v594, %v539
      %v596 = vadd.f32 %v595, %v544
      %v597 = vadd.f32 %v596, %v547
      %v598 = vadd.f32 %v597, %v552
      %v599 = vadd.f32 %v598, %v555
      %v600 = vadd.f32 %v599, %v560
      %v601 = vadd.f32 %v600, %v563
      %v602 = vrot.slane %v601, 4
      %v603 = vadd.f32 %v601, %v602
      %v604 = vrot.slane %v603, 2
      %v605 = vadd.f32 %v603, %v604
      %v606 = vrot.slane %v605, 1
      %v607 = vadd.f32 %v605, %v606
      %v608 = vmul.f32 %v504, %v504
      %v609 = vmul.f32 %v507, %v507
      %v610 = vmul.f32 %v512, %v512
      %v611 = vmul.f32 %v515, %v515
      %v612 = vmul.f32 %v520, %v520
      %v613 = vmul.f32 %v523, %v523
      %v614 = vmul.f32 %v528, %v528
      %v615 = vmul.f32 %v531, %v531
      %v616 = vmul.f32 %v536, %v536
      %v617 = vmul.f32 %v539, %v539
      %v618 = vmul.f32 %v544, %v544
      %v619 = vmul.f32 %v547, %v547
      %v620 = vmul.f32 %v552, %v552
      %v621 = vmul.f32 %v555, %v555
      %v622 = vmul.f32 %v560, %v560
      %v623 = vmul.f32 %v563, %v563
      %v624 = vadd.f32 %v608, %v609
      %v625 = vadd.f32 %v624, %v610
      %v626 = vadd.f32 %v625, %v611
      %v627 = vadd.f32 %v626, %v612
      %v628 = vadd.f32 %v627, %v613
      %v629 = vadd.f32 %v628, %v614
      %v630 = vadd.f32 %v629, %v615
      %v631 = vadd.f32 %v630, %v616
      %v632 = vadd.f32 %v631, %v617
      %v633 = vadd.f32 %v632, %v618
      %v634 = vadd.f32 %v633, %v619
      %v635 = vadd.f32 %v634, %v620
      %v636 = vadd.f32 %v635, %v621
      %v637 = vadd.f32 %v636, %v622
      %v638 = vadd.f32 %v637, %v623
      %v639 = vrot.slane %v638, 4
      %v640 = vadd.f32 %v638, %v639
      %v641 = vrot.slane %v640, 2
      %v642 = vadd.f32 %v640, %v641
      %v643 = vrot.slane %v642, 1
      %v644 = vadd.f32 %v642, %v643
      %v645 = vld [vmem:[%s243] sm:$0x3]
      %vm646 = vcmask 1040384
      %v647 = vsel %vm646, %v607, %v644
      %v648 = vadd.f32 %v645, %v647
      %649 = vst [vmem:[%s243] sm:$0x3] %v648
      %s650 = smul.u32 16, %s20
      %p651 = scmp.lt.s32.totalorder %s19, 3
      %s652 = scalar_select %p651, %s19, 3
      %p653 = scmp.lt.s32.totalorder %s650, 15
      %s654 = scalar_select %p653, %s650, 15
      %s655 = smul.addr %s652, 16
      %s656 = sadd.s32 %s654, %s655
      %s657 = smul.addr %s656, 8
      %s658 = scalar_lea.vmem %s2, %s657
      %p659 = scmp.lt.s32.totalorder %s19, 3
      %s660 = scalar_select %p659, %s19, 3
      %s661 = smul.addr %s660, 2
      %s662 = scalar_lea.vmem %s3, %s661
      // Predicated region
      $region33: #{_lambda_.13} parent=27 // pred_check
        %p663 = pneg %p101
      $region34: #{_lambda_.13} parent=27 // pred_check_branch
        %665 = sbr.rel (%p663) target = $region36
      $region35: #{_lambda_.13} parent=27 // pred_region
        %s666 = smul.u32 16, %s20
      $region36: #{_lambda_.13} parent=27 // pred_fallthru
        _
      // Predicated region
      $region37: #{_lambda_.13} parent=27 // pred_check
        %p667 = pneg %p127
      $region38: #{_lambda_.13} parent=27 // pred_check_branch
        %669 = sbr.rel (%p667) target = $region40
      $region39: #{_lambda_.13} parent=27 // pred_region
        _
      $region40: #{_lambda_.13} parent=27 // pred_fallthru
        _
    $region28: #{_lambda_.13} parent=5 // pred_fallthru
      _
    %p670 = scmp.le.s32.totalorder 2, %s10
    // Predicated region
    $region41: #{_lambda_.13} parent=5 // pred_check
      %p671 = pneg %p670
    $region42: #{_lambda_.13} parent=5 // pred_check_branch
      %673 = sbr.rel (%p671) target = $region44
    $region43: #{_lambda_.13} parent=5 // pred_region
      %s674 = ssub.s32 %s10, 2
      // Predicated region
      $region45: #{_lambda_.13} parent=43 // pred_check
        %p675 = pneg %p107
      $region46: #{_lambda_.13} parent=43 // pred_check_branch
        %677 = sbr.rel (%p675) target = $region48
      $region47: #{_lambda_.13} parent=43 // pred_region
        %s678 = smul.u32 16, %s22
        %p679 = scmp.lt.s32.totalorder %s21, 3
        %s680 = scalar_select %p679, %s21, 3
        %p681 = scmp.lt.s32.totalorder %s678, 15
        %s682 = scalar_select %p681, %s678, 15
        %s683 = smul.addr %s680, 16
        %s684 = sadd.s32 %s682, %s683
        %s685 = smul.addr %s684, 8
        %s686 = scalar_lea.vmem %s2, %s685
      $region48: #{_lambda_.13} parent=43 // pred_fallthru
        _
      // Predicated region
      $region49: #{_lambda_.13} parent=43 // pred_check
        %p687 = pneg %p133
      $region50: #{_lambda_.13} parent=43 // pred_check_branch
        %689 = sbr.rel (%p687) target = $region52
      $region51: #{_lambda_.13} parent=43 // pred_region
        %p690 = scmp.lt.s32.totalorder %s21, 3
        %s691 = scalar_select %p690, %s21, 3
        %s692 = smul.addr %s691, 2
        %s693 = scalar_lea.vmem %s3, %s692
      $region52: #{_lambda_.13} parent=43 // pred_fallthru
        _
    $region44: #{_lambda_.13} parent=5 // pred_fallthru
      _
  $region6: #{_lambda_.13} parent=0 // loop_footer
    %s14 = sadd.s32 1, %s10
  $region7: #{_lambda_.13} parent=0 // loop_footer_branch
    %9 = sbr.rel target = $region3
  $region8: #{_lambda_.13} parent=0 // loop_exit
    _

// kernel: _lambda_.14
$region0: #{_lambda_.14}
  #allocation0 [shape = 'u32[]', space=smem, size = 0x4, offset = 0x4, fixed_abs, tag = 'smem constant byte address 0x4 - core index']
  #allocation1 [shape = 'u32[144,128]{1,0:T(1,128)}', space=vmem, size = 0x12000, scoped, tag = 'internal scratch']
  %s0 = inlined_call_operand.vmem [shape: f32[512,128], index: 0, kind: input, shape index: {}]
  %s1 = inlined_call_operand.vmem [shape: f32[1,128], index: 1, kind: input, shape index: {}]
  %s2 = inlined_call_operand.vmem [shape: f32[1,128], index: 2, kind: input, shape index: {}]
  %s3 = inlined_call_operand.vmem [shape: bf16[512,128], index: 3, kind: output, shape index: {}]
  %s4 = sld [smem:[#allocation0]]
  $region22: #{_lambda_.14} parent=0
    _
  %s6 = ssub.s32 1, %s4
  %s7 = scalar_select 0, %s6, %s4
  // Predicated region
  $region2: #{_lambda_.14} parent=0 // pred_check
    _
  $region3: #{_lambda_.14} parent=0 // pred_check_branch
    %9 = sbr.rel (0) target = $region5
  $region4: #{_lambda_.14} parent=0 // pred_region
    _
  $region5: #{_lambda_.14} parent=0 // pred_fallthru
    _
  // Predicated region
  $region6: #{_lambda_.14} parent=0 // pred_check
    _
  $region7: #{_lambda_.14} parent=0 // pred_check_branch
    %11 = sbr.rel (0) target = $region9
  $region8: #{_lambda_.14} parent=0 // pred_region
    _
  $region9: #{_lambda_.14} parent=0 // pred_fallthru
    _
  // Predicated region
  $region10: #{_lambda_.14} parent=0 // pred_check
    _
  $region11: #{_lambda_.14} parent=0 // pred_check_branch
    %13 = sbr.rel (0) target = $region13
  $region12: #{_lambda_.14} parent=0 // pred_region
    _
  $region13: #{_lambda_.14} parent=0 // pred_fallthru
    _
  %v14 = vld [vmem:[%s0] sm:$0xff]
  %v15 = vld [vmem:[%s0 + $0x8] sm:$0xff]
  %v16 = vld [vmem:[%s0 + $0x10] sm:$0xff]
  %v17 = vld [vmem:[%s0 + $0x18] sm:$0xff]
  %v18 = vld [vmem:[%s0 + $0x20] sm:$0xff]
  %v19 = vld [vmem:[%s0 + $0x28] sm:$0xff]
  %v20 = vld [vmem:[%s0 + $0x30] sm:$0xff]
  %v21 = vld [vmem:[%s0 + $0x38] sm:$0xff]
  %v22 = vld [vmem:[%s0 + $0x40] sm:$0xff]
  %v23 = vld [vmem:[%s0 + $0x48] sm:$0xff]
  %v24 = vld [vmem:[%s0 + $0x50] sm:$0xff]
  %v25 = vld [vmem:[%s0 + $0x58] sm:$0xff]
  %v26 = vld [vmem:[%s0 + $0x60] sm:$0xff]
  %v27 = vld [vmem:[%s0 + $0x68] sm:$0xff]
  %v28 = vld [vmem:[%s0 + $0x70] sm:$0xff]
  %v29 = vld [vmem:[%s0 + $0x78] sm:$0xff]
  %v30 = vld [vmem:[%s0 + $0x80] sm:$0xff]
  %v31 = vld [vmem:[%s0 + $0x88] sm:$0xff]
  %v32 = vld [vmem:[%s0 + $0x90] sm:$0xff]
  %v33 = vld [vmem:[%s0 + $0x98] sm:$0xff]
  %v34 = vld [vmem:[%s0 + $0xa0] sm:$0xff]
  %v35 = vld [vmem:[%s0 + $0xa8] sm:$0xff]
  %v36 = vld [vmem:[%s0 + $0xb0] sm:$0xff]
  %v37 = vld [vmem:[%s0 + $0xb8] sm:$0xff]
  %v38 = vld [vmem:[%s0 + $0xc0] sm:$0xff]
  %v39 = vld [vmem:[%s0 + $0xc8] sm:$0xff]
  %v40 = vld [vmem:[%s0 + $0xd0] sm:$0xff]
  %v41 = vld [vmem:[%s0 + $0xd8] sm:$0xff]
  %v42 = vld [vmem:[%s0 + $0xe0] sm:$0xff]
  %v43 = vld [vmem:[%s0 + $0xe8] sm:$0xff]
  %v44 = vld [vmem:[%s0 + $0xf0] sm:$0xff]
  %v45 = vld [vmem:[%s0 + $0xf8] sm:$0xff]
  %v46 = vld [vmem:[%s0 + $0x100] sm:$0xff]
  %v47 = vld [vmem:[%s0 + $0x108] sm:$0xff]
  %v48 = vld [vmem:[%s0 + $0x110] sm:$0xff]
  %v49 = vld [vmem:[%s0 + $0x118] sm:$0xff]
  %v50 = vld [vmem:[%s0 + $0x120] sm:$0xff]
  %v51 = vld [vmem:[%s0 + $0x128] sm:$0xff]
  %v52 = vld [vmem:[%s0 + $0x130] sm:$0xff]
  %v53 = vld [vmem:[%s0 + $0x138] sm:$0xff]
  %v54 = vld [vmem:[%s0 + $0x140] sm:$0xff]
  %v55 = vld [vmem:[%s0 + $0x148] sm:$0xff]
  %v56 = vld [vmem:[%s0 + $0x150] sm:$0xff]
  %v57 = vld [vmem:[%s0 + $0x158] sm:$0xff]
  %v58 = vld [vmem:[%s0 + $0x160] sm:$0xff]
  %v59 = vld [vmem:[%s0 + $0x168] sm:$0xff]
  %v60 = vld [vmem:[%s0 + $0x170] sm:$0xff]
  %v61 = vld [vmem:[%s0 + $0x178] sm:$0xff]
  %v62 = vld [vmem:[%s0 + $0x180] sm:$0xff]
  %v63 = vld [vmem:[%s0 + $0x188] sm:$0xff]
  %v64 = vld [vmem:[%s0 + $0x190] sm:$0xff]
  %v65 = vld [vmem:[%s0 + $0x198] sm:$0xff]
  %v66 = vld [vmem:[%s0 + $0x1a0] sm:$0xff]
  %v67 = vld [vmem:[%s0 + $0x1a8] sm:$0xff]
  %v68 = vld [vmem:[%s0 + $0x1b0] sm:$0xff]
  %v69 = vld [vmem:[%s0 + $0x1b8] sm:$0xff]
  %v70 = vld [vmem:[%s0 + $0x1c0] sm:$0xff]
  %v71 = vld [vmem:[%s0 + $0x1c8] sm:$0xff]
  %v72 = vld [vmem:[%s0 + $0x1d0] sm:$0xff]
  %v73 = vld [vmem:[%s0 + $0x1d8] sm:$0xff]
  %v74 = vld [vmem:[%s0 + $0x1e0] sm:$0xff]
  %v75 = vld [vmem:[%s0 + $0x1e8] sm:$0xff]
  %v76 = vld [vmem:[%s0 + $0x1f0] sm:$0xff]
  %v77 = vld [vmem:[%s0 + $0x1f8] sm:$0xff]
  %v78 = vld [vmem:[%s1] sm:$0x1]
  %v80 = vlaneseq
  %v81 = vshrl.u32 %v80, 7
  %v82 = vsub.s32 0, %v81
  %v83 = vrot.slane %v78, %v82
  %v85 = vmul.f32 %v14, %v83
  %v86 = vmul.f32 %v15, %v83
  %v87 = vmul.f32 %v16, %v83
  %v88 = vmul.f32 %v17, %v83
  %v89 = vmul.f32 %v18, %v83
  %v90 = vmul.f32 %v19, %v83
  %v91 = vmul.f32 %v20, %v83
  %v92 = vmul.f32 %v21, %v83
  %v93 = vmul.f32 %v22, %v83
  %v94 = vmul.f32 %v23, %v83
  %v95 = vmul.f32 %v24, %v83
  %v96 = vmul.f32 %v25, %v83
  %v97 = vmul.f32 %v26, %v83
  %v98 = vmul.f32 %v27, %v83
  %v99 = vmul.f32 %v28, %v83
  %v100 = vmul.f32 %v29, %v83
  %v101 = vmul.f32 %v30, %v83
  %v102 = vmul.f32 %v31, %v83
  %v103 = vmul.f32 %v32, %v83
  %v104 = vmul.f32 %v33, %v83
  %v105 = vmul.f32 %v34, %v83
  %v106 = vmul.f32 %v35, %v83
  %v107 = vmul.f32 %v36, %v83
  %v108 = vmul.f32 %v37, %v83
  %v109 = vmul.f32 %v38, %v83
  %v110 = vmul.f32 %v39, %v83
  %v111 = vmul.f32 %v40, %v83
  %v112 = vmul.f32 %v41, %v83
  %v113 = vmul.f32 %v42, %v83
  %v114 = vmul.f32 %v43, %v83
  %v115 = vmul.f32 %v44, %v83
  %v116 = vmul.f32 %v45, %v83
  %v117 = vmul.f32 %v46, %v83
  %v118 = vmul.f32 %v47, %v83
  %v119 = vmul.f32 %v48, %v83
  %v120 = vmul.f32 %v49, %v83
  %v121 = vmul.f32 %v50, %v83
  %v122 = vmul.f32 %v51, %v83
  %v123 = vmul.f32 %v52, %v83
  %v124 = vmul.f32 %v53, %v83
  %v125 = vmul.f32 %v54, %v83
  %v126 = vmul.f32 %v55, %v83
  %v127 = vmul.f32 %v56, %v83
  %v128 = vmul.f32 %v57, %v83
  %v129 = vmul.f32 %v58, %v83
  %v130 = vmul.f32 %v59, %v83
  %v131 = vmul.f32 %v60, %v83
  %v132 = vmul.f32 %v61, %v83
  %v133 = vmul.f32 %v62, %v83
  %v134 = vmul.f32 %v63, %v83
  %v135 = vmul.f32 %v64, %v83
  %v136 = vmul.f32 %v65, %v83
  %v137 = vmul.f32 %v66, %v83
  %v138 = vmul.f32 %v67, %v83
  %v139 = vmul.f32 %v68, %v83
  %v140 = vmul.f32 %v69, %v83
  %v141 = vmul.f32 %v70, %v83
  %v142 = vmul.f32 %v71, %v83
  %v143 = vmul.f32 %v72, %v83
  %v144 = vmul.f32 %v73, %v83
  %v145 = vmul.f32 %v74, %v83
  %v146 = vmul.f32 %v75, %v83
  %v147 = vmul.f32 %v76, %v83
  %v148 = vmul.f32 %v77, %v83
  %v149 = vld [vmem:[%s2] sm:$0x1]
  %v151 = vlaneseq
  %v152 = vshrl.u32 %v151, 7
  %v153 = vsub.s32 0, %v152
  %v154 = vrot.slane %v149, %v153
  %v156 = vadd.f32 %v85, %v154
  %v157 = vadd.f32 %v86, %v154
  %v158 = vadd.f32 %v87, %v154
  %v159 = vadd.f32 %v88, %v154
  %v160 = vadd.f32 %v89, %v154
  %v161 = vadd.f32 %v90, %v154
  %v162 = vadd.f32 %v91, %v154
  %v163 = vadd.f32 %v92, %v154
  %v164 = vadd.f32 %v93, %v154
  %v165 = vadd.f32 %v94, %v154
  %v166 = vadd.f32 %v95, %v154
  %v167 = vadd.f32 %v96, %v154
  %v168 = vadd.f32 %v97, %v154
  %v169 = vadd.f32 %v98, %v154
  %v170 = vadd.f32 %v99, %v154
  %v171 = vadd.f32 %v100, %v154
  %v172 = vadd.f32 %v101, %v154
  %v173 = vadd.f32 %v102, %v154
  %v174 = vadd.f32 %v103, %v154
  %v175 = vadd.f32 %v104, %v154
  %v176 = vadd.f32 %v105, %v154
  %v177 = vadd.f32 %v106, %v154
  %v178 = vadd.f32 %v107, %v154
  %v179 = vadd.f32 %v108, %v154
  %v180 = vadd.f32 %v109, %v154
  %v181 = vadd.f32 %v110, %v154
  %v182 = vadd.f32 %v111, %v154
  %v183 = vadd.f32 %v112, %v154
  %v184 = vadd.f32 %v113, %v154
  %v185 = vadd.f32 %v114, %v154
  %v186 = vadd.f32 %v115, %v154
  %v187 = vadd.f32 %v116, %v154
  %v188 = vadd.f32 %v117, %v154
  %v189 = vadd.f32 %v118, %v154
  %v190 = vadd.f32 %v119, %v154
  %v191 = vadd.f32 %v120, %v154
  %v192 = vadd.f32 %v121, %v154
  %v193 = vadd.f32 %v122, %v154
  %v194 = vadd.f32 %v123, %v154
  %v195 = vadd.f32 %v124, %v154
  %v196 = vadd.f32 %v125, %v154
  %v197 = vadd.f32 %v126, %v154
  %v198 = vadd.f32 %v127, %v154
  %v199 = vadd.f32 %v128, %v154
  %v200 = vadd.f32 %v129, %v154
  %v201 = vadd.f32 %v130, %v154
  %v202 = vadd.f32 %v131, %v154
  %v203 = vadd.f32 %v132, %v154
  %v204 = vadd.f32 %v133, %v154
  %v205 = vadd.f32 %v134, %v154
  %v206 = vadd.f32 %v135, %v154
  %v207 = vadd.f32 %v136, %v154
  %v208 = vadd.f32 %v137, %v154
  %v209 = vadd.f32 %v138, %v154
  %v210 = vadd.f32 %v139, %v154
  %v211 = vadd.f32 %v140, %v154
  %v212 = vadd.f32 %v141, %v154
  %v213 = vadd.f32 %v142, %v154
  %v214 = vadd.f32 %v143, %v154
  %v215 = vadd.f32 %v144, %v154
  %v216 = vadd.f32 %v145, %v154
  %v217 = vadd.f32 %v146, %v154
  %v218 = vadd.f32 %v147, %v154
  %v219 = vadd.f32 %v148, %v154
  %v220 = vmax.f32 %v156, 0.0
  %v221 = vmax.f32 %v157, 0.0
  %v222 = vmax.f32 %v158, 0.0
  %v223 = vmax.f32 %v159, 0.0
  %v224 = vmax.f32 %v160, 0.0
  %v225 = vmax.f32 %v161, 0.0
  %v226 = vmax.f32 %v162, 0.0
  %v227 = vmax.f32 %v163, 0.0
  %v228 = vmax.f32 %v164, 0.0
  %v229 = vmax.f32 %v165, 0.0
  %v230 = vmax.f32 %v166, 0.0
  %v231 = vmax.f32 %v167, 0.0
  %v232 = vmax.f32 %v168, 0.0
  %v233 = vmax.f32 %v169, 0.0
  %v234 = vmax.f32 %v170, 0.0
  %v235 = vmax.f32 %v171, 0.0
  %v236 = vmax.f32 %v172, 0.0
  %v237 = vmax.f32 %v173, 0.0
  %v238 = vmax.f32 %v174, 0.0
  %v239 = vmax.f32 %v175, 0.0
  %v240 = vmax.f32 %v176, 0.0
  %v241 = vmax.f32 %v177, 0.0
  %v242 = vmax.f32 %v178, 0.0
  %v243 = vmax.f32 %v179, 0.0
  %v244 = vmax.f32 %v180, 0.0
  %v245 = vmax.f32 %v181, 0.0
  %v246 = vmax.f32 %v182, 0.0
  %v247 = vmax.f32 %v183, 0.0
  %v248 = vmax.f32 %v184, 0.0
  %v249 = vmax.f32 %v185, 0.0
  %v250 = vmax.f32 %v186, 0.0
  %v251 = vmax.f32 %v187, 0.0
  %v252 = vmax.f32 %v188, 0.0
  %v253 = vmax.f32 %v189, 0.0
  %v254 = vmax.f32 %v190, 0.0
  %v255 = vmax.f32 %v191, 0.0
  %v256 = vmax.f32 %v192, 0.0
  %v257 = vmax.f32 %v193, 0.0
  %v258 = vmax.f32 %v194, 0.0
  %v259 = vmax.f32 %v195, 0.0
  %v260 = vmax.f32 %v196, 0.0
  %v261 = vmax.f32 %v197, 0.0
  %v262 = vmax.f32 %v198, 0.0
  %v263 = vmax.f32 %v199, 0.0
  %v264 = vmax.f32 %v200, 0.0
  %v265 = vmax.f32 %v201, 0.0
  %v266 = vmax.f32 %v202, 0.0
  %v267 = vmax.f32 %v203, 0.0
  %v268 = vmax.f32 %v204, 0.0
  %v269 = vmax.f32 %v205, 0.0
  %v270 = vmax.f32 %v206, 0.0
  %v271 = vmax.f32 %v207, 0.0
  %v272 = vmax.f32 %v208, 0.0
  %v273 = vmax.f32 %v209, 0.0
  %v274 = vmax.f32 %v210, 0.0
  %v275 = vmax.f32 %v211, 0.0
  %v276 = vmax.f32 %v212, 0.0
  %v277 = vmax.f32 %v213, 0.0
  %v278 = vmax.f32 %v214, 0.0
  %v279 = vmax.f32 %v215, 0.0
  %v280 = vmax.f32 %v216, 0.0
  %v281 = vmax.f32 %v217, 0.0
  %v282 = vmax.f32 %v218, 0.0
  %v283 = vmax.f32 %v219, 0.0
  %v284 = vpack.c.bf16 %v221, %v220
  %v285 = vpack.c.bf16 %v223, %v222
  %v286 = vpack.c.bf16 %v225, %v224
  %v287 = vpack.c.bf16 %v227, %v226
  %v288 = vpack.c.bf16 %v229, %v228
  %v289 = vpack.c.bf16 %v231, %v230
  %v290 = vpack.c.bf16 %v233, %v232
  %v291 = vpack.c.bf16 %v235, %v234
  %v292 = vpack.c.bf16 %v237, %v236
  %v293 = vpack.c.bf16 %v239, %v238
  %v294 = vpack.c.bf16 %v241, %v240
  %v295 = vpack.c.bf16 %v243, %v242
  %v296 = vpack.c.bf16 %v245, %v244
  %v297 = vpack.c.bf16 %v247, %v246
  %v298 = vpack.c.bf16 %v249, %v248
  %v299 = vpack.c.bf16 %v251, %v250
  %v300 = vpack.c.bf16 %v253, %v252
  %v301 = vpack.c.bf16 %v255, %v254
  %v302 = vpack.c.bf16 %v257, %v256
  %v303 = vpack.c.bf16 %v259, %v258
  %v304 = vpack.c.bf16 %v261, %v260
  %v305 = vpack.c.bf16 %v263, %v262
  %v306 = vpack.c.bf16 %v265, %v264
  %v307 = vpack.c.bf16 %v267, %v266
  %v308 = vpack.c.bf16 %v269, %v268
  %v309 = vpack.c.bf16 %v271, %v270
  %v310 = vpack.c.bf16 %v273, %v272
  %v311 = vpack.c.bf16 %v275, %v274
  %v312 = vpack.c.bf16 %v277, %v276
  %v313 = vpack.c.bf16 %v279, %v278
  %v314 = vpack.c.bf16 %v281, %v280
  %v315 = vpack.c.bf16 %v283, %v282
  %v348 = vunpack.c.l.b16 %v284
  %v349 = vunpack.c.h.b16 %v284
  %v350 = vunpack.c.l.b16 %v285
  %v351 = vunpack.c.h.b16 %v285
  %v352 = vunpack.c.l.b16 %v286
  %v353 = vunpack.c.h.b16 %v286
  %v354 = vunpack.c.l.b16 %v287
  %v355 = vunpack.c.h.b16 %v287
  %v356 = vunpack.c.l.b16 %v288
  %v357 = vunpack.c.h.b16 %v288
  %v358 = vunpack.c.l.b16 %v289
  %v359 = vunpack.c.h.b16 %v289
  %v360 = vunpack.c.l.b16 %v290
  %v361 = vunpack.c.h.b16 %v290
  %v362 = vunpack.c.l.b16 %v291
  %v363 = vunpack.c.h.b16 %v291
  %v364 = vunpack.c.l.b16 %v292
  %v365 = vunpack.c.h.b16 %v292
  %v366 = vunpack.c.l.b16 %v293
  %v367 = vunpack.c.h.b16 %v293
  %v368 = vunpack.c.l.b16 %v294
  %v369 = vunpack.c.h.b16 %v294
  %v370 = vunpack.c.l.b16 %v295
  %v371 = vunpack.c.h.b16 %v295
  %v372 = vunpack.c.l.b16 %v296
  %v373 = vunpack.c.h.b16 %v296
  %v374 = vunpack.c.l.b16 %v297
  %v375 = vunpack.c.h.b16 %v297
  %v376 = vunpack.c.l.b16 %v298
  %v377 = vunpack.c.h.b16 %v298
  %v378 = vunpack.c.l.b16 %v299
  %v379 = vunpack.c.h.b16 %v299
  %v380 = vunpack.c.l.b16 %v300
  %v381 = vunpack.c.h.b16 %v300
  %v382 = vunpack.c.l.b16 %v301
  %v383 = vunpack.c.h.b16 %v301
  %v384 = vunpack.c.l.b16 %v302
  %v385 = vunpack.c.h.b16 %v302
  %v386 = vunpack.c.l.b16 %v303
  %v387 = vunpack.c.h.b16 %v303
  %v388 = vunpack.c.l.b16 %v304
  %v389 = vunpack.c.h.b16 %v304
  %v390 = vunpack.c.l.b16 %v305
  %v391 = vunpack.c.h.b16 %v305
  %v392 = vunpack.c.l.b16 %v306
  %v393 = vunpack.c.h.b16 %v306
  %v394 = vunpack.c.l.b16 %v307
  %v395 = vunpack.c.h.b16 %v307
  %v396 = vunpack.c.l.b16 %v308
  %v397 = vunpack.c.h.b16 %v308
  %v398 = vunpack.c.l.b16 %v309
  %v399 = vunpack.c.h.b16 %v309
  %v400 = vunpack.c.l.b16 %v310
  %v401 = vunpack.c.h.b16 %v310
  %v402 = vunpack.c.l.b16 %v311
  %v403 = vunpack.c.h.b16 %v311
  %v404 = vunpack.c.l.b16 %v312
  %v405 = vunpack.c.h.b16 %v312
  %v406 = vunpack.c.l.b16 %v313
  %v407 = vunpack.c.h.b16 %v313
  %v408 = vunpack.c.l.b16 %v314
  %v409 = vunpack.c.h.b16 %v314
  %v410 = vunpack.c.l.b16 %v315
  %v411 = vunpack.c.h.b16 %v315
  %v412 = vpack.c.b16 %v348, %v348
  %v413 = vpack.c.b16 %v349, %v349
  %v414 = vpack.c.b16 %v350, %v350
  %v415 = vpack.c.b16 %v351, %v351
  %v416 = vpack.c.b16 %v352, %v352
  %v417 = vpack.c.b16 %v353, %v353
  %v418 = vpack.c.b16 %v354, %v354
  %v419 = vpack.c.b16 %v355, %v355
  %v420 = vpack.c.b16 %v356, %v356
  %v421 = vpack.c.b16 %v357, %v357
  %v422 = vpack.c.b16 %v358, %v358
  %v423 = vpack.c.b16 %v359, %v359
  %v424 = vpack.c.b16 %v360, %v360
  %v425 = vpack.c.b16 %v361, %v361
  %v426 = vpack.c.b16 %v362, %v362
  %v427 = vpack.c.b16 %v363, %v363
  %v428 = vpack.c.b16 %v364, %v364
  %v429 = vpack.c.b16 %v365, %v365
  %v430 = vpack.c.b16 %v366, %v366
  %v431 = vpack.c.b16 %v367, %v367
  %v432 = vpack.c.b16 %v368, %v368
  %v433 = vpack.c.b16 %v369, %v369
  %v434 = vpack.c.b16 %v370, %v370
  %v435 = vpack.c.b16 %v371, %v371
  %v436 = vpack.c.b16 %v372, %v372
  %v437 = vpack.c.b16 %v373, %v373
  %v438 = vpack.c.b16 %v374, %v374
  %v439 = vpack.c.b16 %v375, %v375
  %v440 = vpack.c.b16 %v376, %v376
  %v441 = vpack.c.b16 %v377, %v377
  %v442 = vpack.c.b16 %v378, %v378
  %v443 = vpack.c.b16 %v379, %v379
  %v444 = vpack.c.b16 %v380, %v380
  %v445 = vpack.c.b16 %v381, %v381
  %v446 = vpack.c.b16 %v382, %v382
  %v447 = vpack.c.b16 %v383, %v383
  %v448 = vpack.c.b16 %v384, %v384
  %v449 = vpack.c.b16 %v385, %v385
  %v450 = vpack.c.b16 %v386, %v386
  %v451 = vpack.c.b16 %v387, %v387
  %v452 = vpack.c.b16 %v388, %v388
  %v453 = vpack.c.b16 %v389, %v389
  %v454 = vpack.c.b16 %v390, %v390
  %v455 = vpack.c.b16 %v391, %v391
  %v456 = vpack.c.b16 %v392, %v392
  %v457 = vpack.c.b16 %v393, %v393
  %v458 = vpack.c.b16 %v394, %v394
  %v459 = vpack.c.b16 %v395, %v395
  %v460 = vpack.c.b16 %v396, %v396
  %v461 = vpack.c.b16 %v397, %v397
  %v462 = vpack.c.b16 %v398, %v398
  %v463 = vpack.c.b16 %v399, %v399
  %v464 = vpack.c.b16 %v400, %v400
  %v465 = vpack.c.b16 %v401, %v401
  %v466 = vpack.c.b16 %v402, %v402
  %v467 = vpack.c.b16 %v403, %v403
  %v468 = vpack.c.b16 %v404, %v404
  %v469 = vpack.c.b16 %v405, %v405
  %v470 = vpack.c.b16 %v406, %v406
  %v471 = vpack.c.b16 %v407, %v407
  %v472 = vpack.c.b16 %v408, %v408
  %v473 = vpack.c.b16 %v409, %v409
  %v474 = vpack.c.b16 %v410, %v410
  %v475 = vpack.c.b16 %v411, %v411
  %540 = vst [vmem:[%s3] sm:$0xf] %v412
  %541 = vst [vmem:[%s3 + $0x4] sm:$0xf] %v413
  %542 = vst [vmem:[%s3 + $0x8] sm:$0xf] %v414
  %543 = vst [vmem:[%s3 + $0xc] sm:$0xf] %v415
  %544 = vst [vmem:[%s3 + $0x10] sm:$0xf] %v416
  %545 = vst [vmem:[%s3 + $0x14] sm:$0xf] %v417
  %546 = vst [vmem:[%s3 + $0x18] sm:$0xf] %v418
  %547 = vst [vmem:[%s3 + $0x1c] sm:$0xf] %v419
  %548 = vst [vmem:[%s3 + $0x20] sm:$0xf] %v420
  %549 = vst [vmem:[%s3 + $0x24] sm:$0xf] %v421
  %550 = vst [vmem:[%s3 + $0x28] sm:$0xf] %v422
  %551 = vst [vmem:[%s3 + $0x2c] sm:$0xf] %v423
  %552 = vst [vmem:[%s3 + $0x30] sm:$0xf] %v424
  %553 = vst [vmem:[%s3 + $0x34] sm:$0xf] %v425
  %554 = vst [vmem:[%s3 + $0x38] sm:$0xf] %v426
  %555 = vst [vmem:[%s3 + $0x3c] sm:$0xf] %v427
  %556 = vst [vmem:[%s3 + $0x40] sm:$0xf] %v428
  %557 = vst [vmem:[%s3 + $0x44] sm:$0xf] %v429
  %558 = vst [vmem:[%s3 + $0x48] sm:$0xf] %v430
  %559 = vst [vmem:[%s3 + $0x4c] sm:$0xf] %v431
  %560 = vst [vmem:[%s3 + $0x50] sm:$0xf] %v432
  %561 = vst [vmem:[%s3 + $0x54] sm:$0xf] %v433
  %562 = vst [vmem:[%s3 + $0x58] sm:$0xf] %v434
  %563 = vst [vmem:[%s3 + $0x5c] sm:$0xf] %v435
  %564 = vst [vmem:[%s3 + $0x60] sm:$0xf] %v436
  %565 = vst [vmem:[%s3 + $0x64] sm:$0xf] %v437
  %566 = vst [vmem:[%s3 + $0x68] sm:$0xf] %v438
  %567 = vst [vmem:[%s3 + $0x6c] sm:$0xf] %v439
  %568 = vst [vmem:[%s3 + $0x70] sm:$0xf] %v440
  %569 = vst [vmem:[%s3 + $0x74] sm:$0xf] %v441
  %570 = vst [vmem:[%s3 + $0x78] sm:$0xf] %v442
  %571 = vst [vmem:[%s3 + $0x7c] sm:$0xf] %v443
  %572 = vst [vmem:[%s3 + $0x80] sm:$0xf] %v444
  %573 = vst [vmem:[%s3 + $0x84] sm:$0xf] %v445
  %574 = vst [vmem:[%s3 + $0x88] sm:$0xf] %v446
  %575 = vst [vmem:[%s3 + $0x8c] sm:$0xf] %v447
  %576 = vst [vmem:[%s3 + $0x90] sm:$0xf] %v448
  %577 = vst [vmem:[%s3 + $0x94] sm:$0xf] %v449
  %578 = vst [vmem:[%s3 + $0x98] sm:$0xf] %v450
  %579 = vst [vmem:[%s3 + $0x9c] sm:$0xf] %v451
  %580 = vst [vmem:[%s3 + $0xa0] sm:$0xf] %v452
  %581 = vst [vmem:[%s3 + $0xa4] sm:$0xf] %v453
  %582 = vst [vmem:[%s3 + $0xa8] sm:$0xf] %v454
  %583 = vst [vmem:[%s3 + $0xac] sm:$0xf] %v455
  %584 = vst [vmem:[%s3 + $0xb0] sm:$0xf] %v456
  %585 = vst [vmem:[%s3 + $0xb4] sm:$0xf] %v457
  %586 = vst [vmem:[%s3 + $0xb8] sm:$0xf] %v458
  %587 = vst [vmem:[%s3 + $0xbc] sm:$0xf] %v459
  %588 = vst [vmem:[%s3 + $0xc0] sm:$0xf] %v460
  %589 = vst [vmem:[%s3 + $0xc4] sm:$0xf] %v461
  %590 = vst [vmem:[%s3 + $0xc8] sm:$0xf] %v462
  %591 = vst [vmem:[%s3 + $0xcc] sm:$0xf] %v463
  %592 = vst [vmem:[%s3 + $0xd0] sm:$0xf] %v464
  %593 = vst [vmem:[%s3 + $0xd4] sm:$0xf] %v465
  %594 = vst [vmem:[%s3 + $0xd8] sm:$0xf] %v466
  %595 = vst [vmem:[%s3 + $0xdc] sm:$0xf] %v467
  %596 = vst [vmem:[%s3 + $0xe0] sm:$0xf] %v468
  %597 = vst [vmem:[%s3 + $0xe4] sm:$0xf] %v469
  %598 = vst [vmem:[%s3 + $0xe8] sm:$0xf] %v470
  %599 = vst [vmem:[%s3 + $0xec] sm:$0xf] %v471
  %600 = vst [vmem:[%s3 + $0xf0] sm:$0xf] %v472
  %601 = vst [vmem:[%s3 + $0xf4] sm:$0xf] %v473
  %602 = vst [vmem:[%s3 + $0xf8] sm:$0xf] %v474
  %603 = vst [vmem:[%s3 + $0xfc] sm:$0xf] %v475
  // Predicated region
  $region14: #{_lambda_.14} parent=0 // pred_check
    _
  $region15: #{_lambda_.14} parent=0 // pred_check_branch
    %605 = sbr.rel (0) target = $region17
  $region16: #{_lambda_.14} parent=0 // pred_region
    _
  $region17: #{_lambda_.14} parent=0 // pred_fallthru
    _
  // Predicated region
  $region18: #{_lambda_.14} parent=0 // pred_check
    _
  $region19: #{_lambda_.14} parent=0 // pred_check_branch
    %607 = sbr.rel (0) target = $region21
  $region20: #{_lambda_.14} parent=0 // pred_region
    _
  $region21: #{_lambda_.14} parent=0 // pred_fallthru
    _

// kernel: _lambda_.15
$region0: #{_lambda_.15}
  #allocation0 [shape = 'u32[]', space=smem, size = 0x4, offset = 0x4, fixed_abs, tag = 'smem constant byte address 0x4 - core index']
  #allocation1 [shape = 'u32[144,128]{1,0:T(1,128)}', space=vmem, size = 0x12000, scoped, tag = 'internal scratch']
  %s0 = inlined_call_operand.vmem [shape: bf16[4,512,128], index: 0, kind: input, shape index: {}]
  %s1 = inlined_call_operand.vmem [shape: bf16[4,128,128], index: 1, kind: input, shape index: {}]
  %s2 = inlined_call_operand.vmem [shape: f32[4,512,128], index: 2, kind: output, shape index: {0}]
  %s3 = inlined_call_operand.vmem [shape: f32[4,2,128], index: 3, kind: output, shape index: {1}]
  %4 = xla_tuple %s2, %s3
  %s5 = sld [smem:[#allocation0]]
  $region53: #{_lambda_.15} parent=0
    _
  %s7 = ssub.s32 1, %s5
  %s8 = scalar_select 0, %s7, %s5
  loop: start=0, step=1, limit=6
  $region2: #{_lambda_.15} parent=0 // loop_pre_header
    _
  $region3: #{_lambda_.15} parent=0 // loop_header
    %s10 = sphi 0, %s14
    %p11 = scmp.ge.s32.totalorder %s10, 6
    %s17 = sphi 0, %s29
    %s18 = sphi 0, %s25
    %s19 = sphi 0, %s17
    %s20 = sphi 0, %s18
    %s21 = sphi 0, %s19
    %s22 = sphi 0, %s20
    %s34 = sphi 0, %s36
    %s37 = sphi 0, %s34
    %s38 = sphi 0, %s37
    %s54 = sphi 0, %s38
    %s60 = sphi 0, %s62
    %s63 = sphi 0, %s60
    %s64 = sphi 0, %s63
    %s80 = sphi 0, %s64
    %s88 = sphi 0, %s90
    %s91 = sphi 0, %s88
    %s92 = sphi 0, %s91
    %s108 = sphi 0, %s92
    %s114 = sphi 0, %s116
    %s117 = sphi 0, %s114
    %s118 = sphi 0, %s117
    %s134 = sphi 0, %s118
  $region4: #{_lambda_.15} parent=0 // loop_header_branch
    %13 = sbr.rel (%p11) target = $region8
  $region5: #{_lambda_.15} parent=0 // loop_body
    %s15 = ssub.s32 %s10, 1
    %s16 = ssub.s32 %s10, 2
    %s23 = sadd.s32 1, %s18
    %p24 = scmp.ge.s32.totalorder %s23, 1
    %s25 = scalar_select %p24, 0, %s23
    %s26 = sadd.s32 1, %s17
    %s27 = scalar_select %p24, %s26, %s17
    %p28 = scmp.ge.s32.totalorder %s27, 4
    %s29 = scalar_select %p28, 0, %s27
    %s30 = ssub.s32 %s17, %s29
    %s31 = ssub.s32 %s18, %s25
    %s32 = sor.u32 %s30, %s31
    %p33 = scmp.eq.s32.totalorder %s32, 0
    %s35 = sadd.s32 %s34, 1
    %s36 = scalar_select %p33, %s34, %s35
    %p39 = pneg %p33
    %p40 = scmp.eq.s32.totalorder %s10, 3
    %p41 = por %p39, %p40
    %p42 = scmp.ne.s32.totalorder %s34, %s37
    %p43 = scmp.eq.s32.totalorder %s10, 0
    %p44 = por %p42, %p43
    %p45 = scmp.ne.s32.totalorder %s34, %s37
    %p46 = scmp.eq.s32.totalorder %s15, 3
    %p47 = por %p45, %p46
    %p48 = scmp.ne.s32.totalorder %s37, %s38
    %p49 = scmp.eq.s32.totalorder %s15, 0
    %p50 = por %p48, %p49
    %p51 = scmp.ne.s32.totalorder %s37, %s38
    %p52 = scmp.eq.s32.totalorder %s16, 3
    %p53 = por %p51, %p52
    %p55 = scmp.ne.s32.totalorder %s38, %s54
    %p56 = scmp.eq.s32.totalorder %s16, 0
    %p57 = por %p55, %p56
    %s58 = ssub.s32 %s17, %s29
    %p59 = scmp.eq.s32.totalorder %s58, 0
    %s61 = sadd.s32 %s60, 1
    %s62 = scalar_select %p59, %s60, %s61
    %p65 = pneg %p59
    %p66 = scmp.eq.s32.totalorder %s10, 3
    %p67 = por %p65, %p66
    %p68 = scmp.ne.s32.totalorder %s60, %s63
    %p69 = scmp.eq.s32.totalorder %s10, 0
    %p70 = por %p68, %p69
    %p71 = scmp.ne.s32.totalorder %s60, %s63
    %p72 = scmp.eq.s32.totalorder %s15, 3
    %p73 = por %p71, %p72
    %p74 = scmp.ne.s32.totalorder %s63, %s64
    %p75 = scmp.eq.s32.totalorder %s15, 0
    %p76 = por %p74, %p75
    %p77 = scmp.ne.s32.totalorder %s63, %s64
    %p78 = scmp.eq.s32.totalorder %s16, 3
    %p79 = por %p77, %p78
    %p81 = scmp.ne.s32.totalorder %s64, %s80
    %p82 = scmp.eq.s32.totalorder %s16, 0
    %p83 = por %p81, %p82
    %s84 = ssub.s32 %s17, %s29
    %s85 = ssub.s32 %s18, %s25
    %s86 = sor.u32 %s84, %s85
    %p87 = scmp.eq.s32.totalorder %s86, 0
    %s89 = sadd.s32 %s88, 1
    %s90 = scalar_select %p87, %s88, %s89
    %p93 = pneg %p87
    %p94 = scmp.eq.s32.totalorder %s10, 3
    %p95 = por %p93, %p94
    %p96 = scmp.ne.s32.totalorder %s88, %s91
    %p97 = scmp.eq.s32.totalorder %s10, 0
    %p98 = por %p96, %p97
    %p99 = scmp.ne.s32.totalorder %s88, %s91
    %p100 = scmp.eq.s32.totalorder %s15, 3
    %p101 = por %p99, %p100
    %p102 = scmp.ne.s32.totalorder %s91, %s92
    %p103 = scmp.eq.s32.totalorder %s15, 0
    %p104 = por %p102, %p103
    %p105 = scmp.ne.s32.totalorder %s91, %s92
    %p106 = scmp.eq.s32.totalorder %s16, 3
    %p107 = por %p105, %p106
    %p109 = scmp.ne.s32.totalorder %s92, %s108
    %p110 = scmp.eq.s32.totalorder %s16, 0
    %p111 = por %p109, %p110
    %s112 = ssub.s32 %s17, %s29
    %p113 = scmp.eq.s32.totalorder %s112, 0
    %s115 = sadd.s32 %s114, 1
    %s116 = scalar_select %p113, %s114, %s115
    %p119 = pneg %p113
    %p120 = scmp.eq.s32.totalorder %s10, 3
    %p121 = por %p119, %p120
    %p122 = scmp.ne.s32.totalorder %s114, %s117
    %p123 = scmp.eq.s32.totalorder %s10, 0
    %p124 = por %p122, %p123
    %p125 = scmp.ne.s32.totalorder %s114, %s117
    %p126 = scmp.eq.s32.totalorder %s15, 3
    %p127 = por %p125, %p126
    %p128 = scmp.ne.s32.totalorder %s117, %s118
    %p129 = scmp.eq.s32.totalorder %s15, 0
    %p130 = por %p128, %p129
    %p131 = scmp.ne.s32.totalorder %s117, %s118
    %p132 = scmp.eq.s32.totalorder %s16, 3
    %p133 = por %p131, %p132
    %p135 = scmp.ne.s32.totalorder %s118, %s134
    %p136 = scmp.eq.s32.totalorder %s16, 0
    %p137 = por %p135, %p136
    %p138 = scmp.le.s32.totalorder 1, %s10
    %p139 = scmp.lt.s32.totalorder %s10, 5
    %p140 = pnand %p138, %p139
    %p141 = pneg %p140
    // Predicated region
    $region9: #{_lambda_.15} parent=5 // pred_check
      _
    $region10: #{_lambda_.15} parent=5 // pred_check_branch
      %143 = sbr.rel (%p140) target = $region12
    $region11: #{_lambda_.15} parent=5 // pred_region
      %s144 = ssub.s32 %s10, 1
    $region12: #{_lambda_.15} parent=5 // pred_fallthru
      _
    %p145 = scmp.lt.s32.totalorder %s10, 4
    // Predicated region
    $region13: #{_lambda_.15} parent=5 // pred_check
      %p146 = pneg %p145
    $region14: #{_lambda_.15} parent=5 // pred_check_branch
      %148 = sbr.rel (%p146) target = $region16
    $region15: #{_lambda_.15} parent=5 // pred_region
      // Predicated region
      $region17: #{_lambda_.15} parent=15 // pred_check
        %p149 = pneg %p44
      $region18: #{_lambda_.15} parent=15 // pred_check_branch
        %151 = sbr.rel (%p149) target = $region20
      $region19: #{_lambda_.15} parent=15 // pred_region
        %s152 = smul.u32 64, %s18
        %p153 = scmp.lt.s32.totalorder %s17, 3
        %s154 = scalar_select %p153, %s17, 3
        %p155 = scmp.lt.s32.totalorder %s152, 63
        %s156 = scalar_select %p155, %s152, 63
        %s157 = smul.addr %s154, 64
        %s158 = sadd.s32 %s156, %s157
        %s159 = smul.addr %s158, 4
        %s160 = scalar_lea.vmem %s0, %s159
        %s161 = smul.u32 64, %s18
      $region20: #{_lambda_.15} parent=15 // pred_fallthru
        _
      // Predicated region
      $region21: #{_lambda_.15} parent=15 // pred_check
        %p162 = pneg %p70
      $region22: #{_lambda_.15} parent=15 // pred_check_branch
        %164 = sbr.rel (%p162) target = $region24
      $region23: #{_lambda_.15} parent=15 // pred_region
        %p165 = scmp.lt.s32.totalorder %s17, 3
        %s166 = scalar_select %p165, %s17, 3
        %s167 = smul.addr %s166, 16
        %s168 = smul.addr %s167, 4
        %s169 = scalar_lea.vmem %s1, %s168
      $region24: #{_lambda_.15} parent=15 // pred_fallthru
        _
    $region16: #{_lambda_.15} parent=5 // pred_fallthru
      _
    %p170 = scmp.le.s32.totalorder 1, %s10
    %p171 = scmp.lt.s32.totalorder %s10, 5
    %p172 = pnand %p170, %p171
    %p173 = pneg %p172
    // Predicated region
    $region25: #{_lambda_.15} parent=5 // pred_check
      _
    $region26: #{_lambda_.15} parent=5 // pred_check_branch
      %175 = sbr.rel (%p172) target = $region28
    $region27: #{_lambda_.15} parent=5 // pred_region
      %s176 = ssub.s32 %s10, 1
      %s177 = smul.u32 64, %s20
      %p178 = scmp.lt.s32.totalorder %s19, 3
      %s179 = scalar_select %p178, %s19, 3
      %p180 = scmp.lt.s32.totalorder %s177, 63
      %s181 = scalar_select %p180, %s177, 63
      %s182 = smul.addr %s179, 64
      %s183 = sadd.s32 %s181, %s182
      %s184 = smul.addr %s183, 4
      %s185 = scalar_lea.vmem %s0, %s184
      %p186 = pneg %p50
      %p187 = pneg %p47
      %p188 = scmp.lt.s32.totalorder %s19, 3
      %s189 = scalar_select %p188, %s19, 3
      %s190 = smul.addr %s189, 16
      %s191 = smul.addr %s190, 4
      %s192 = scalar_lea.vmem %s1, %s191
      %p193 = pneg %p76
      %p194 = pneg %p73
      %p195 = pneg %p104
      %p196 = pneg %p101
      %s197 = smul.u32 64, %s20
      %p198 = scmp.lt.s32.totalorder %s19, 3
      %s199 = scalar_select %p198, %s19, 3
      %p200 = scmp.lt.s32.totalorder %s197, 63
      %s201 = scalar_select %p200, %s197, 63
      %s202 = smul.addr %s199, 64
      %s203 = sadd.s32 %s201, %s202
      %s204 = smul.addr %s203, 8
      %s205 = scalar_lea.vmem %s2, %s204
      %p206 = pneg %p130
      %p207 = pneg %p127
      %p208 = scmp.lt.s32.totalorder %s19, 3
      %s209 = scalar_select %p208, %s19, 3
      %s210 = smul.addr %s209, 2
      %s211 = scalar_lea.vmem %s3, %s210
      %s212 = smul.u32 64, %s20
      %p213 = scmp.lt.s32.totalorder %s19, 3
      %s214 = scalar_select %p213, %s19, 3
      %p215 = scmp.lt.s32.totalorder %s212, 63
      %s216 = scalar_select %p215, %s212, 63
      %s217 = smul.addr %s214, 64
      %s218 = sadd.s32 %s216, %s217
      %s219 = smul.addr %s218, 4
      %s220 = scalar_lea.vmem %s0, %s219
      %s221 = smul.u32 64, %s20
      %p222 = scmp.lt.s32.totalorder %s19, 3
      %s223 = scalar_select %p222, %s19, 3
      %s224 = smul.addr %s223, 16
      %s225 = smul.addr %s224, 4
      %s226 = scalar_lea.vmem %s1, %s225
      %s227 = smul.u32 64, %s20
      %p228 = scmp.lt.s32.totalorder %s19, 3
      %s229 = scalar_select %p228, %s19, 3
      %p230 = scmp.lt.s32.totalorder %s227, 63
      %s231 = scalar_select %p230, %s227, 63
      %s232 = smul.addr %s229, 64
      %s233 = sadd.s32 %s231, %s232
      %s234 = smul.addr %s233, 8
      %s235 = scalar_lea.vmem %s2, %s234
      %s236 = smul.u32 64, %s20
      %p237 = scmp.lt.s32.totalorder %s19, 3
      %s238 = scalar_select %p237, %s19, 3
      %s239 = smul.addr %s238, 2
      %s240 = scalar_lea.vmem %s3, %s239
      %v242 = vld [vmem:[%s220] sm:$0xf]
      %v243 = vld [vmem:[%s220 + $0x4] sm:$0xf]
      %v244 = vld [vmem:[%s220 + $0x8] sm:$0xf]
      %v245 = vld [vmem:[%s220 + $0xc] sm:$0xf]
      %v246 = vld [vmem:[%s220 + $0x10] sm:$0xf]
      %v247 = vld [vmem:[%s220 + $0x14] sm:$0xf]
      %v248 = vld [vmem:[%s220 + $0x18] sm:$0xf]
      %v249 = vld [vmem:[%s220 + $0x1c] sm:$0xf]
      %v250 = vld [vmem:[%s220 + $0x20] sm:$0xf]
      %v251 = vld [vmem:[%s220 + $0x24] sm:$0xf]
      %v252 = vld [vmem:[%s220 + $0x28] sm:$0xf]
      %v253 = vld [vmem:[%s220 + $0x2c] sm:$0xf]
      %v254 = vld [vmem:[%s220 + $0x30] sm:$0xf]
      %v255 = vld [vmem:[%s220 + $0x34] sm:$0xf]
      %v256 = vld [vmem:[%s220 + $0x38] sm:$0xf]
      %v257 = vld [vmem:[%s220 + $0x3c] sm:$0xf]
      %v258 = vld [vmem:[%s220 + $0x40] sm:$0xf]
      %v259 = vld [vmem:[%s220 + $0x44] sm:$0xf]
      %v260 = vld [vmem:[%s220 + $0x48] sm:$0xf]
      %v261 = vld [vmem:[%s220 + $0x4c] sm:$0xf]
      %v262 = vld [vmem:[%s220 + $0x50] sm:$0xf]
      %v263 = vld [vmem:[%s220 + $0x54] sm:$0xf]
      %v264 = vld [vmem:[%s220 + $0x58] sm:$0xf]
      %v265 = vld [vmem:[%s220 + $0x5c] sm:$0xf]
      %v266 = vld [vmem:[%s220 + $0x60] sm:$0xf]
      %v267 = vld [vmem:[%s220 + $0x64] sm:$0xf]
      %v268 = vld [vmem:[%s220 + $0x68] sm:$0xf]
      %v269 = vld [vmem:[%s220 + $0x6c] sm:$0xf]
      %v270 = vld [vmem:[%s220 + $0x70] sm:$0xf]
      %v271 = vld [vmem:[%s220 + $0x74] sm:$0xf]
      %v272 = vld [vmem:[%s220 + $0x78] sm:$0xf]
      %v273 = vld [vmem:[%s220 + $0x7c] sm:$0xf]
      %v274 = vld [vmem:[%s220 + $0x80] sm:$0xf]
      %v275 = vld [vmem:[%s220 + $0x84] sm:$0xf]
      %v276 = vld [vmem:[%s220 + $0x88] sm:$0xf]
      %v277 = vld [vmem:[%s220 + $0x8c] sm:$0xf]
      %v278 = vld [vmem:[%s220 + $0x90] sm:$0xf]
      %v279 = vld [vmem:[%s220 + $0x94] sm:$0xf]
      %v280 = vld [vmem:[%s220 + $0x98] sm:$0xf]
      %v281 = vld [vmem:[%s220 + $0x9c] sm:$0xf]
      %v282 = vld [vmem:[%s220 + $0xa0] sm:$0xf]
      %v283 = vld [vmem:[%s220 + $0xa4] sm:$0xf]
      %v284 = vld [vmem:[%s220 + $0xa8] sm:$0xf]
      %v285 = vld [vmem:[%s220 + $0xac] sm:$0xf]
      %v286 = vld [vmem:[%s220 + $0xb0] sm:$0xf]
      %v287 = vld [vmem:[%s220 + $0xb4] sm:$0xf]
      %v288 = vld [vmem:[%s220 + $0xb8] sm:$0xf]
      %v289 = vld [vmem:[%s220 + $0xbc] sm:$0xf]
      %v290 = vld [vmem:[%s220 + $0xc0] sm:$0xf]
      %v291 = vld [vmem:[%s220 + $0xc4] sm:$0xf]
      %v292 = vld [vmem:[%s220 + $0xc8] sm:$0xf]
      %v293 = vld [vmem:[%s220 + $0xcc] sm:$0xf]
      %v294 = vld [vmem:[%s220 + $0xd0] sm:$0xf]
      %v295 = vld [vmem:[%s220 + $0xd4] sm:$0xf]
      %v296 = vld [vmem:[%s220 + $0xd8] sm:$0xf]
      %v297 = vld [vmem:[%s220 + $0xdc] sm:$0xf]
      %v298 = vld [vmem:[%s220 + $0xe0] sm:$0xf]
      %v299 = vld [vmem:[%s220 + $0xe4] sm:$0xf]
      %v300 = vld [vmem:[%s220 + $0xe8] sm:$0xf]
      %v301 = vld [vmem:[%s220 + $0xec] sm:$0xf]
      %v302 = vld [vmem:[%s220 + $0xf0] sm:$0xf]
      %v303 = vld [vmem:[%s220 + $0xf4] sm:$0xf]
      %v304 = vld [vmem:[%s220 + $0xf8] sm:$0xf]
      %v305 = vld [vmem:[%s220 + $0xfc] sm:$0xf]
      %v306 = vld [vmem:[%s226] sm:$0xf]
      %v307 = vld [vmem:[%s226 + $0x4] sm:$0xf]
      %v308 = vld [vmem:[%s226 + $0x8] sm:$0xf]
      %v309 = vld [vmem:[%s226 + $0xc] sm:$0xf]
      %v310 = vld [vmem:[%s226 + $0x10] sm:$0xf]
      %v311 = vld [vmem:[%s226 + $0x14] sm:$0xf]
      %v312 = vld [vmem:[%s226 + $0x18] sm:$0xf]
      %v313 = vld [vmem:[%s226 + $0x1c] sm:$0xf]
      %v314 = vld [vmem:[%s226 + $0x20] sm:$0xf]
      %v315 = vld [vmem:[%s226 + $0x24] sm:$0xf]
      %v316 = vld [vmem:[%s226 + $0x28] sm:$0xf]
      %v317 = vld [vmem:[%s226 + $0x2c] sm:$0xf]
      %v318 = vld [vmem:[%s226 + $0x30] sm:$0xf]
      %v319 = vld [vmem:[%s226 + $0x34] sm:$0xf]
      %v320 = vld [vmem:[%s226 + $0x38] sm:$0xf]
      %v321 = vld [vmem:[%s226 + $0x3c] sm:$0xf]
      %v386 = vunpack.c.l.b16 %v242
      %v387 = vunpack.c.l.b16 %v243
      %v388 = vunpack.c.l.b16 %v244
      %v389 = vunpack.c.l.b16 %v245
      %v390 = vunpack.c.l.b16 %v246
      %v391 = vunpack.c.l.b16 %v247
      %v392 = vunpack.c.l.b16 %v248
      %v393 = vunpack.c.l.b16 %v249
      %v394 = vunpack.c.l.b16 %v250
      %v395 = vunpack.c.l.b16 %v251
      %v396 = vunpack.c.l.b16 %v252
      %v397 = vunpack.c.l.b16 %v253
      %v398 = vunpack.c.l.b16 %v254
      %v399 = vunpack.c.l.b16 %v255
      %v400 = vunpack.c.l.b16 %v256
      %v401 = vunpack.c.l.b16 %v257
      %v402 = vunpack.c.l.b16 %v258
      %v403 = vunpack.c.l.b16 %v259
      %v404 = vunpack.c.l.b16 %v260
      %v405 = vunpack.c.l.b16 %v261
      %v406 = vunpack.c.l.b16 %v262
      %v407 = vunpack.c.l.b16 %v263
      %v408 = vunpack.c.l.b16 %v264
      %v409 = vunpack.c.l.b16 %v265
      %v410 = vunpack.c.l.b16 %v266
      %v411 = vunpack.c.l.b16 %v267
      %v412 = vunpack.c.l.b16 %v268
      %v413 = vunpack.c.l.b16 %v269
      %v414 = vunpack.c.l.b16 %v270
      %v415 = vunpack.c.l.b16 %v271
      %v416 = vunpack.c.l.b16 %v272
      %v417 = vunpack.c.l.b16 %v273
      %v418 = vunpack.c.l.b16 %v274
      %v419 = vunpack.c.l.b16 %v275
      %v420 = vunpack.c.l.b16 %v276
      %v421 = vunpack.c.l.b16 %v277
      %v422 = vunpack.c.l.b16 %v278
      %v423 = vunpack.c.l.b16 %v279
      %v424 = vunpack.c.l.b16 %v280
      %v425 = vunpack.c.l.b16 %v281
      %v426 = vunpack.c.l.b16 %v282
      %v427 = vunpack.c.l.b16 %v283
      %v428 = vunpack.c.l.b16 %v284
      %v429 = vunpack.c.l.b16 %v285
      %v430 = vunpack.c.l.b16 %v286
      %v431 = vunpack.c.l.b16 %v287
      %v432 = vunpack.c.l.b16 %v288
      %v433 = vunpack.c.l.b16 %v289
      %v434 = vunpack.c.l.b16 %v290
      %v435 = vunpack.c.l.b16 %v291
      %v436 = vunpack.c.l.b16 %v292
      %v437 = vunpack.c.l.b16 %v293
      %v438 = vunpack.c.l.b16 %v294
      %v439 = vunpack.c.l.b16 %v295
      %v440 = vunpack.c.l.b16 %v296
      %v441 = vunpack.c.l.b16 %v297
      %v442 = vunpack.c.l.b16 %v298
      %v443 = vunpack.c.l.b16 %v299
      %v444 = vunpack.c.l.b16 %v300
      %v445 = vunpack.c.l.b16 %v301
      %v446 = vunpack.c.l.b16 %v302
      %v447 = vunpack.c.l.b16 %v303
      %v448 = vunpack.c.l.b16 %v304
      %v449 = vunpack.c.l.b16 %v305
      %v450 = vpack.c.b16 %v387, %v386
      %v451 = vpack.c.b16 %v389, %v388
      %v452 = vpack.c.b16 %v391, %v390
      %v453 = vpack.c.b16 %v393, %v392
      %v454 = vpack.c.b16 %v395, %v394
      %v455 = vpack.c.b16 %v397, %v396
      %v456 = vpack.c.b16 %v399, %v398
      %v457 = vpack.c.b16 %v401, %v400
      %v458 = vpack.c.b16 %v403, %v402
      %v459 = vpack.c.b16 %v405, %v404
      %v460 = vpack.c.b16 %v407, %v406
      %v461 = vpack.c.b16 %v409, %v408
      %v462 = vpack.c.b16 %v411, %v410
      %v463 = vpack.c.b16 %v413, %v412
      %v464 = vpack.c.b16 %v415, %v414
      %v465 = vpack.c.b16 %v417, %v416
      %v466 = vpack.c.b16 %v419, %v418
      %v467 = vpack.c.b16 %v421, %v420
      %v468 = vpack.c.b16 %v423, %v422
      %v469 = vpack.c.b16 %v425, %v424
      %v470 = vpack.c.b16 %v427, %v426
      %v471 = vpack.c.b16 %v429, %v428
      %v472 = vpack.c.b16 %v431, %v430
      %v473 = vpack.c.b16 %v433, %v432
      %v474 = vpack.c.b16 %v435, %v434
      %v475 = vpack.c.b16 %v437, %v436
      %v476 = vpack.c.b16 %v439, %v438
      %v477 = vpack.c.b16 %v441, %v440
      %v478 = vpack.c.b16 %v443, %v442
      %v479 = vpack.c.b16 %v445, %v444
      %v480 = vpack.c.b16 %v447, %v446
      %v481 = vpack.c.b16 %v449, %v448
      %v530 = vunpack.c.l.b16 %v306
      %v531 = vunpack.c.l.b16 %v307
      %v532 = vunpack.c.l.b16 %v308
      %v533 = vunpack.c.l.b16 %v309
      %v534 = vunpack.c.l.b16 %v310
      %v535 = vunpack.c.l.b16 %v311
      %v536 = vunpack.c.l.b16 %v312
      %v537 = vunpack.c.l.b16 %v313
      %v538 = vunpack.c.l.b16 %v314
      %v539 = vunpack.c.l.b16 %v315
      %v540 = vunpack.c.l.b16 %v316
      %v541 = vunpack.c.l.b16 %v317
      %v542 = vunpack.c.l.b16 %v318
      %v543 = vunpack.c.l.b16 %v319
      %v544 = vunpack.c.l.b16 %v320
      %v545 = vunpack.c.l.b16 %v321
      %v546 = vpack.c.b16 %v531, %v530
      %v547 = vpack.c.b16 %v533, %v532
      %v548 = vpack.c.b16 %v535, %v534
      %v549 = vpack.c.b16 %v537, %v536
      %v550 = vpack.c.b16 %v539, %v538
      %v551 = vpack.c.b16 %v541, %v540
      %v552 = vpack.c.b16 %v543, %v542
      %v553 = vpack.c.b16 %v545, %v544
      %562 = vmatprep.subr.bf16.mxu0 0
      %563 = vmatpush1.bf16.msra.mxu0 %v546
      %564 = vmatprep.subr.bf16.mxu0 0
      %565 = vmatpush1.bf16.msra.mxu0 %v547
      %566 = vmatprep.subr.bf16.mxu0 0
      %567 = vmatpush1.bf16.msra.mxu0 %v548
      %568 = vmatprep.subr.bf16.mxu0 0
      %569 = vmatpush1.bf16.msra.mxu0 %v549
      %570 = vmatprep.subr.bf16.mxu0 0
      %571 = vmatpush1.bf16.msra.mxu0 %v550
      %572 = vmatprep.subr.bf16.mxu0 0
      %573 = vmatpush1.bf16.msra.mxu0 %v551
      %574 = vmatprep.subr.bf16.mxu0 0
      %575 = vmatpush1.bf16.msra.mxu0 %v552
      %576 = vmatprep.subr.bf16.mxu0 0
      %577 = vmatpush1.bf16.msra.mxu0 %v553
      %578 = vmatprep.subr.bf16.mxu0 0
      %579 = vmatpush1.bf16.msra.mxu0 0
      %580 = vmatprep.subr.bf16.mxu0 0
      %581 = vmatpush1.bf16.msra.mxu0 0
      %582 = vmatprep.subr.bf16.mxu0 0
      %583 = vmatpush1.bf16.msra.mxu0 0
      %584 = vmatprep.subr.bf16.mxu0 0
      %585 = vmatpush1.bf16.msra.mxu0 0
      %586 = vmatprep.subr.bf16.mxu0 0
      %587 = vmatpush1.bf16.msra.mxu0 0
      %588 = vmatprep.subr.bf16.mxu0 0
      %589 = vmatpush1.bf16.msra.mxu0 0
      %590 = vmatprep.subr.bf16.mxu0 0
      %591 = vmatpush1.bf16.msra.mxu0 0
      %592 = vmatprep.subr.bf16.mxu0 0
      %593 = vmatpush1.bf16.msra.mxu0 0
      %594 = vmatprep.mubr.bf16.mxu0 0
      %595 = vmatmul.mubr.bf16.gmra.mrb[0].mxu0 %v450
      %v596 = vpop.f32.mrb[0].mxu0
      %v597 = vadd.f32 0.0, %v596
      %v598 = vpop.f32.mrb[0].mxu0
      %v599 = vpop.f32.mrb[0].mxu0
      %v600 = vadd.f32 0.0, %v599
      %v601 = vpop.f32.mrb[0].mxu0
      %602 = vmatprep.mubr.bf16.mxu0 0
      %603 = vmatmul.mubr.bf16.gmra.mrb[0].mxu0 %v451
      %v604 = vpop.f32.mrb[0].mxu0
      %v605 = vadd.f32 0.0, %v604
      %v606 = vpop.f32.mrb[0].mxu0
      %v607 = vpop.f32.mrb[0].mxu0
      %v608 = vadd.f32 0.0, %v607
      %v609 = vpop.f32.mrb[0].mxu0
      %610 = vmatprep.mubr.bf16.mxu0 0
      %611 = vmatmul.mubr.bf16.gmra.mrb[0].mxu0 %v452
      %v612 = vpop.f32.mrb[0].mxu0
      %v613 = vadd.f32 0.0, %v612
      %v614 = vpop.f32.mrb[0].mxu0
      %v615 = vpop.f32.mrb[0].mxu0
      %v616 = vadd.f32 0.0, %v615
      %v617 = vpop.f32.mrb[0].mxu0
      %618 = vmatprep.mubr.bf16.mxu0 0
      %619 = vmatmul.mubr.bf16.gmra.mrb[0].mxu0 %v453
      %v620 = vpop.f32.mrb[0].mxu0
      %v621 = vadd.f32 0.0, %v620
      %v622 = vpop.f32.mrb[0].mxu0
      %v623 = vpop.f32.mrb[0].mxu0
      %v624 = vadd.f32 0.0, %v623
      %v625 = vpop.f32.mrb[0].mxu0
      %626 = vmatprep.mubr.bf16.mxu0 0
      %627 = vmatmul.mubr.bf16.gmra.mrb[0].mxu0 %v454
      %v628 = vpop.f32.mrb[0].mxu0
      %v629 = vadd.f32 0.0, %v628
      %v630 = vpop.f32.mrb[0].mxu0
      %v631 = vpop.f32.mrb[0].mxu0
      %v632 = vadd.f32 0.0, %v631
      %v633 = vpop.f32.mrb[0].mxu0
      %634 = vmatprep.mubr.bf16.mxu0 0
      %635 = vmatmul.mubr.bf16.gmra.mrb[0].mxu0 %v455
      %v636 = vpop.f32.mrb[0].mxu0
      %v637 = vadd.f32 0.0, %v636
      %v638 = vpop.f32.mrb[0].mxu0
      %v639 = vpop.f32.mrb[0].mxu0
      %v640 = vadd.f32 0.0, %v639
      %v641 = vpop.f32.mrb[0].mxu0
      %642 = vmatprep.mubr.bf16.mxu0 0
      %643 = vmatmul.mubr.bf16.gmra.mrb[0].mxu0 %v456
      %v644 = vpop.f32.mrb[0].mxu0
      %v645 = vadd.f32 0.0, %v644
      %v646 = vpop.f32.mrb[0].mxu0
      %v647 = vpop.f32.mrb[0].mxu0
      %v648 = vadd.f32 0.0, %v647
      %v649 = vpop.f32.mrb[0].mxu0
      %650 = vmatprep.mubr.bf16.mxu0 0
      %651 = vmatmul.mubr.bf16.gmra.mrb[0].mxu0 %v457
      %v652 = vpop.f32.mrb[0].mxu0
      %v653 = vadd.f32 0.0, %v652
      %v654 = vpop.f32.mrb[0].mxu0
      %v655 = vpop.f32.mrb[0].mxu0
      %v656 = vadd.f32 0.0, %v655
      %v657 = vpop.f32.mrb[0].mxu0
      %658 = vmatprep.mubr.bf16.mxu0 0
      %659 = vmatmul.mubr.bf16.gmra.mrb[0].mxu0 %v458
      %v660 = vpop.f32.mrb[0].mxu0
      %v661 = vadd.f32 0.0, %v660
      %v662 = vpop.f32.mrb[0].mxu0
      %v663 = vpop.f32.mrb[0].mxu0
      %v664 = vadd.f32 0.0, %v663
      %v665 = vpop.f32.mrb[0].mxu0
      %666 = vmatprep.mubr.bf16.mxu0 0
      %667 = vmatmul.mubr.bf16.gmra.mrb[0].mxu0 %v459
      %v668 = vpop.f32.mrb[0].mxu0
      %v669 = vadd.f32 0.0, %v668
      %v670 = vpop.f32.mrb[0].mxu0
      %v671 = vpop.f32.mrb[0].mxu0
      %v672 = vadd.f32 0.0, %v671
      %v673 = vpop.f32.mrb[0].mxu0
      %674 = vmatprep.mubr.bf16.mxu0 0
      %675 = vmatmul.mubr.bf16.gmra.mrb[0].mxu0 %v460
      %v676 = vpop.f32.mrb[0].mxu0
      %v677 = vadd.f32 0.0, %v676
      %v678 = vpop.f32.mrb[0].mxu0
      %v679 = vpop.f32.mrb[0].mxu0
      %v680 = vadd.f32 0.0, %v679
      %v681 = vpop.f32.mrb[0].mxu0
      %682 = vmatprep.mubr.bf16.mxu0 0
      %683 = vmatmul.mubr.bf16.gmra.mrb[0].mxu0 %v461
      %v684 = vpop.f32.mrb[0].mxu0
      %v685 = vadd.f32 0.0, %v684
      %v686 = vpop.f32.mrb[0].mxu0
      %v687 = vpop.f32.mrb[0].mxu0
      %v688 = vadd.f32 0.0, %v687
      %v689 = vpop.f32.mrb[0].mxu0
      %690 = vmatprep.mubr.bf16.mxu0 0
      %691 = vmatmul.mubr.bf16.gmra.mrb[0].mxu0 %v462
      %v692 = vpop.f32.mrb[0].mxu0
      %v693 = vadd.f32 0.0, %v692
      %v694 = vpop.f32.mrb[0].mxu0
      %v695 = vpop.f32.mrb[0].mxu0
      %v696 = vadd.f32 0.0, %v695
      %v697 = vpop.f32.mrb[0].mxu0
      %698 = vmatprep.mubr.bf16.mxu0 0
      %699 = vmatmul.mubr.bf16.gmra.mrb[0].mxu0 %v463
      %v700 = vpop.f32.mrb[0].mxu0
      %v701 = vadd.f32 0.0, %v700
      %v702 = vpop.f32.mrb[0].mxu0
      %v703 = vpop.f32.mrb[0].mxu0
      %v704 = vadd.f32 0.0, %v703
      %v705 = vpop.f32.mrb[0].mxu0
      %706 = vmatprep.mubr.bf16.mxu0 0
      %707 = vmatmul.mubr.bf16.gmra.mrb[0].mxu0 %v464
      %v708 = vpop.f32.mrb[0].mxu0
      %v709 = vadd.f32 0.0, %v708
      %v710 = vpop.f32.mrb[0].mxu0
      %v711 = vpop.f32.mrb[0].mxu0
      %v712 = vadd.f32 0.0, %v711
      %v713 = vpop.f32.mrb[0].mxu0
      %714 = vmatprep.mubr.bf16.mxu0 0
      %715 = vmatmul.mubr.bf16.gmra.mrb[0].mxu0 %v465
      %v716 = vpop.f32.mrb[0].mxu0
      %v717 = vadd.f32 0.0, %v716
      %v718 = vpop.f32.mrb[0].mxu0
      %v719 = vpop.f32.mrb[0].mxu0
      %v720 = vadd.f32 0.0, %v719
      %v721 = vpop.f32.mrb[0].mxu0
      %722 = vmatprep.mubr.bf16.mxu0 0
      %723 = vmatmul.mubr.bf16.gmra.mrb[0].mxu0 %v466
      %v724 = vpop.f32.mrb[0].mxu0
      %v725 = vadd.f32 0.0, %v724
      %v726 = vpop.f32.mrb[0].mxu0
      %v727 = vpop.f32.mrb[0].mxu0
      %v728 = vadd.f32 0.0, %v727
      %v729 = vpop.f32.mrb[0].mxu0
      %730 = vmatprep.mubr.bf16.mxu0 0
      %731 = vmatmul.mubr.bf16.gmra.mrb[0].mxu0 %v467
      %v732 = vpop.f32.mrb[0].mxu0
      %v733 = vadd.f32 0.0, %v732
      %v734 = vpop.f32.mrb[0].mxu0
      %v735 = vpop.f32.mrb[0].mxu0
      %v736 = vadd.f32 0.0, %v735
      %v737 = vpop.f32.mrb[0].mxu0
      %738 = vmatprep.mubr.bf16.mxu0 0
      %739 = vmatmul.mubr.bf16.gmra.mrb[0].mxu0 %v468
      %v740 = vpop.f32.mrb[0].mxu0
      %v741 = vadd.f32 0.0, %v740
      %v742 = vpop.f32.mrb[0].mxu0
      %v743 = vpop.f32.mrb[0].mxu0
      %v744 = vadd.f32 0.0, %v743
      %v745 = vpop.f32.mrb[0].mxu0
      %746 = vmatprep.mubr.bf16.mxu0 0
      %747 = vmatmul.mubr.bf16.gmra.mrb[0].mxu0 %v469
      %v748 = vpop.f32.mrb[0].mxu0
      %v749 = vadd.f32 0.0, %v748
      %v750 = vpop.f32.mrb[0].mxu0
      %v751 = vpop.f32.mrb[0].mxu0
      %v752 = vadd.f32 0.0, %v751
      %v753 = vpop.f32.mrb[0].mxu0
      %754 = vmatprep.mubr.bf16.mxu0 0
      %755 = vmatmul.mubr.bf16.gmra.mrb[0].mxu0 %v470
      %v756 = vpop.f32.mrb[0].mxu0
      %v757 = vadd.f32 0.0, %v756
      %v758 = vpop.f32.mrb[0].mxu0
      %v759 = vpop.f32.mrb[0].mxu0
      %v760 = vadd.f32 0.0, %v759
      %v761 = vpop.f32.mrb[0].mxu0
      %762 = vmatprep.mubr.bf16.mxu0 0
      %763 = vmatmul.mubr.bf16.gmra.mrb[0].mxu0 %v471
      %v764 = vpop.f32.mrb[0].mxu0
      %v765 = vadd.f32 0.0, %v764
      %v766 = vpop.f32.mrb[0].mxu0
      %v767 = vpop.f32.mrb[0].mxu0
      %v768 = vadd.f32 0.0, %v767
      %v769 = vpop.f32.mrb[0].mxu0
      %770 = vmatprep.mubr.bf16.mxu0 0
      %771 = vmatmul.mubr.bf16.gmra.mrb[0].mxu0 %v472
      %v772 = vpop.f32.mrb[0].mxu0
      %v773 = vadd.f32 0.0, %v772
      %v774 = vpop.f32.mrb[0].mxu0
      %v775 = vpop.f32.mrb[0].mxu0
      %v776 = vadd.f32 0.0, %v775
      %v777 = vpop.f32.mrb[0].mxu0
      %778 = vmatprep.mubr.bf16.mxu0 0
      %779 = vmatmul.mubr.bf16.gmra.mrb[0].mxu0 %v473
      %v780 = vpop.f32.mrb[0].mxu0
      %v781 = vadd.f32 0.0, %v780
      %v782 = vpop.f32.mrb[0].mxu0
      %v783 = vpop.f32.mrb[0].mxu0
      %v784 = vadd.f32 0.0, %v783
      %v785 = vpop.f32.mrb[0].mxu0
      %786 = vmatprep.mubr.bf16.mxu0 0
      %787 = vmatmul.mubr.bf16.gmra.mrb[0].mxu0 %v474
      %v788 = vpop.f32.mrb[0].mxu0
      %v789 = vadd.f32 0.0, %v788
      %v790 = vpop.f32.mrb[0].mxu0
      %v791 = vpop.f32.mrb[0].mxu0
      %v792 = vadd.f32 0.0, %v791
      %v793 = vpop.f32.mrb[0].mxu0
      %794 = vmatprep.mubr.bf16.mxu0 0
      %795 = vmatmul.mubr.bf16.gmra.mrb[0].mxu0 %v475
      %v796 = vpop.f32.mrb[0].mxu0
      %v797 = vadd.f32 0.0, %v796
      %v798 = vpop.f32.mrb[0].mxu0
      %v799 = vpop.f32.mrb[0].mxu0
      %v800 = vadd.f32 0.0, %v799
      %v801 = vpop.f32.mrb[0].mxu0
      %802 = vmatprep.mubr.bf16.mxu0 0
      %803 = vmatmul.mubr.bf16.gmra.mrb[0].mxu0 %v476
      %v804 = vpop.f32.mrb[0].mxu0
      %v805 = vadd.f32 0.0, %v804
      %v806 = vpop.f32.mrb[0].mxu0
      %v807 = vpop.f32.mrb[0].mxu0
      %v808 = vadd.f32 0.0, %v807
      %v809 = vpop.f32.mrb[0].mxu0
      %810 = vmatprep.mubr.bf16.mxu0 0
      %811 = vmatmul.mubr.bf16.gmra.mrb[0].mxu0 %v477
      %v812 = vpop.f32.mrb[0].mxu0
      %v813 = vadd.f32 0.0, %v812
      %v814 = vpop.f32.mrb[0].mxu0
      %v815 = vpop.f32.mrb[0].mxu0
      %v816 = vadd.f32 0.0, %v815
      %v817 = vpop.f32.mrb[0].mxu0
      %818 = vmatprep.mubr.bf16.mxu0 0
      %819 = vmatmul.mubr.bf16.gmra.mrb[0].mxu0 %v478
      %v820 = vpop.f32.mrb[0].mxu0
      %v821 = vadd.f32 0.0, %v820
      %v822 = vpop.f32.mrb[0].mxu0
      %v823 = vpop.f32.mrb[0].mxu0
      %v824 = vadd.f32 0.0, %v823
      %v825 = vpop.f32.mrb[0].mxu0
      %826 = vmatprep.mubr.bf16.mxu0 0
      %827 = vmatmul.mubr.bf16.gmra.mrb[0].mxu0 %v479
      %v828 = vpop.f32.mrb[0].mxu0
      %v829 = vadd.f32 0.0, %v828
      %v830 = vpop.f32.mrb[0].mxu0
      %v831 = vpop.f32.mrb[0].mxu0
      %v832 = vadd.f32 0.0, %v831
      %v833 = vpop.f32.mrb[0].mxu0
      %834 = vmatprep.mubr.bf16.mxu0 0
      %835 = vmatmul.mubr.bf16.gmra.mrb[0].mxu0 %v480
      %v836 = vpop.f32.mrb[0].mxu0
      %v837 = vadd.f32 0.0, %v836
      %v838 = vpop.f32.mrb[0].mxu0
      %v839 = vpop.f32.mrb[0].mxu0
      %v840 = vadd.f32 0.0, %v839
      %v841 = vpop.f32.mrb[0].mxu0
      %842 = vmatprep.mubr.bf16.mxu0 0
      %843 = vmatmul.mubr.bf16.gmra.mrb[0].mxu0 %v481
      %v844 = vpop.f32.mrb[0].mxu0
      %v845 = vadd.f32 0.0, %v844
      %v846 = vpop.f32.mrb[0].mxu0
      %v847 = vpop.f32.mrb[0].mxu0
      %v848 = vadd.f32 0.0, %v847
      %v849 = vpop.f32.mrb[0].mxu0
      %850 = vdwg.mxu0
      %851 = vst [vmem:[%s235] sm:$0xff] %v597
      %852 = vst [vmem:[%s235 + $0x8] sm:$0xff] %v600
      %853 = vst [vmem:[%s235 + $0x10] sm:$0xff] %v605
      %854 = vst [vmem:[%s235 + $0x18] sm:$0xff] %v608
      %855 = vst [vmem:[%s235 + $0x20] sm:$0xff] %v613
      %856 = vst [vmem:[%s235 + $0x28] sm:$0xff] %v616
      %857 = vst [vmem:[%s235 + $0x30] sm:$0xff] %v621
      %858 = vst [vmem:[%s235 + $0x38] sm:$0xff] %v624
      %859 = vst [vmem:[%s235 + $0x40] sm:$0xff] %v629
      %860 = vst [vmem:[%s235 + $0x48] sm:$0xff] %v632
      %861 = vst [vmem:[%s235 + $0x50] sm:$0xff] %v637
      %862 = vst [vmem:[%s235 + $0x58] sm:$0xff] %v640
      %863 = vst [vmem:[%s235 + $0x60] sm:$0xff] %v645
      %864 = vst [vmem:[%s235 + $0x68] sm:$0xff] %v648
      %865 = vst [vmem:[%s235 + $0x70] sm:$0xff] %v653
      %866 = vst [vmem:[%s235 + $0x78] sm:$0xff] %v656
      %867 = vst [vmem:[%s235 + $0x80] sm:$0xff] %v661
      %868 = vst [vmem:[%s235 + $0x88] sm:$0xff] %v664
      %869 = vst [vmem:[%s235 + $0x90] sm:$0xff] %v669
      %870 = vst [vmem:[%s235 + $0x98] sm:$0xff] %v672
      %871 = vst [vmem:[%s235 + $0xa0] sm:$0xff] %v677
      %872 = vst [vmem:[%s235 + $0xa8] sm:$0xff] %v680
      %873 = vst [vmem:[%s235 + $0xb0] sm:$0xff] %v685
      %874 = vst [vmem:[%s235 + $0xb8] sm:$0xff] %v688
      %875 = vst [vmem:[%s235 + $0xc0] sm:$0xff] %v693
      %876 = vst [vmem:[%s235 + $0xc8] sm:$0xff] %v696
      %877 = vst [vmem:[%s235 + $0xd0] sm:$0xff] %v701
      %878 = vst [vmem:[%s235 + $0xd8] sm:$0xff] %v704
      %879 = vst [vmem:[%s235 + $0xe0] sm:$0xff] %v709
      %880 = vst [vmem:[%s235 + $0xe8] sm:$0xff] %v712
      %881 = vst [vmem:[%s235 + $0xf0] sm:$0xff] %v717
      %882 = vst [vmem:[%s235 + $0xf8] sm:$0xff] %v720
      %883 = vst [vmem:[%s235 + $0x100] sm:$0xff] %v725
      %884 = vst [vmem:[%s235 + $0x108] sm:$0xff] %v728
      %885 = vst [vmem:[%s235 + $0x110] sm:$0xff] %v733
      %886 = vst [vmem:[%s235 + $0x118] sm:$0xff] %v736
      %887 = vst [vmem:[%s235 + $0x120] sm:$0xff] %v741
      %888 = vst [vmem:[%s235 + $0x128] sm:$0xff] %v744
      %889 = vst [vmem:[%s235 + $0x130] sm:$0xff] %v749
      %890 = vst [vmem:[%s235 + $0x138] sm:$0xff] %v752
      %891 = vst [vmem:[%s235 + $0x140] sm:$0xff] %v757
      %892 = vst [vmem:[%s235 + $0x148] sm:$0xff] %v760
      %893 = vst [vmem:[%s235 + $0x150] sm:$0xff] %v765
      %894 = vst [vmem:[%s235 + $0x158] sm:$0xff] %v768
      %895 = vst [vmem:[%s235 + $0x160] sm:$0xff] %v773
      %896 = vst [vmem:[%s235 + $0x168] sm:$0xff] %v776
      %897 = vst [vmem:[%s235 + $0x170] sm:$0xff] %v781
      %898 = vst [vmem:[%s235 + $0x178] sm:$0xff] %v784
      %899 = vst [vmem:[%s235 + $0x180] sm:$0xff] %v789
      %900 = vst [vmem:[%s235 + $0x188] sm:$0xff] %v792
      %901 = vst [vmem:[%s235 + $0x190] sm:$0xff] %v797
      %902 = vst [vmem:[%s235 + $0x198] sm:$0xff] %v800
      %903 = vst [vmem:[%s235 + $0x1a0] sm:$0xff] %v805
      %904 = vst [vmem:[%s235 + $0x1a8] sm:$0xff] %v808
      %905 = vst [vmem:[%s235 + $0x1b0] sm:$0xff] %v813
      %906 = vst [vmem:[%s235 + $0x1b8] sm:$0xff] %v816
      %907 = vst [vmem:[%s235 + $0x1c0] sm:$0xff] %v821
      %908 = vst [vmem:[%s235 + $0x1c8] sm:$0xff] %v824
      %909 = vst [vmem:[%s235 + $0x1d0] sm:$0xff] %v829
      %910 = vst [vmem:[%s235 + $0x1d8] sm:$0xff] %v832
      %911 = vst [vmem:[%s235 + $0x1e0] sm:$0xff] %v837
      %912 = vst [vmem:[%s235 + $0x1e8] sm:$0xff] %v840
      %913 = vst [vmem:[%s235 + $0x1f0] sm:$0xff] %v845
      %914 = vst [vmem:[%s235 + $0x1f8] sm:$0xff] %v848
      %p915 = scmp.eq.s32.totalorder %s20, 0
      // Predicated region
      $region29: #{_lambda_.15} parent=27 // pred_check
        %p916 = pneg %p915
      $region30: #{_lambda_.15} parent=27 // pred_check_branch
        %918 = sbr.rel (%p916) target = $region32
      $region31: #{_lambda_.15} parent=27 // pred_region
        %919 = vst [vmem:[%s240] sm:$0x3] 0.0
      $region32: #{_lambda_.15} parent=27 // pred_fallthru
        _
      %v920 = vadd.f32 %v597, %v600
      %v921 = vadd.f32 %v920, %v605
      %v922 = vadd.f32 %v921, %v608
      %v923 = vadd.f32 %v922, %v613
      %v924 = vadd.f32 %v923, %v616
      %v925 = vadd.f32 %v924, %v621
      %v926 = vadd.f32 %v925, %v624
      %v927 = vadd.f32 %v926, %v629
      %v928 = vadd.f32 %v927, %v632
      %v929 = vadd.f32 %v928, %v637
      %v930 = vadd.f32 %v929, %v640
      %v931 = vadd.f32 %v930, %v645
      %v932 = vadd.f32 %v931, %v648
      %v933 = vadd.f32 %v932, %v653
      %v934 = vadd.f32 %v933, %v656
      %v935 = vadd.f32 %v934, %v661
      %v936 = vadd.f32 %v935, %v664
      %v937 = vadd.f32 %v936, %v669
      %v938 = vadd.f32 %v937, %v672
      %v939 = vadd.f32 %v938, %v677
      %v940 = vadd.f32 %v939, %v680
      %v941 = vadd.f32 %v940, %v685
      %v942 = vadd.f32 %v941, %v688
      %v943 = vadd.f32 %v942, %v693
      %v944 = vadd.f32 %v943, %v696
      %v945 = vadd.f32 %v944, %v701
      %v946 = vadd.f32 %v945, %v704
      %v947 = vadd.f32 %v946, %v709
      %v948 = vadd.f32 %v947, %v712
      %v949 = vadd.f32 %v948, %v717
      %v950 = vadd.f32 %v949, %v720
      %v951 = vadd.f32 %v950, %v725
      %v952 = vadd.f32 %v951, %v728
      %v953 = vadd.f32 %v952, %v733
      %v954 = vadd.f32 %v953, %v736
      %v955 = vadd.f32 %v954, %v741
      %v956 = vadd.f32 %v955, %v744
      %v957 = vadd.f32 %v956, %v749
      %v958 = vadd.f32 %v957, %v752
      %v959 = vadd.f32 %v958, %v757
      %v960 = vadd.f32 %v959, %v760
      %v961 = vadd.f32 %v960, %v765
      %v962 = vadd.f32 %v961, %v768
      %v963 = vadd.f32 %v962, %v773
      %v964 = vadd.f32 %v963, %v776
      %v965 = vadd.f32 %v964, %v781
      %v966 = vadd.f32 %v965, %v784
      %v967 = vadd.f32 %v966, %v789
      %v968 = vadd.f32 %v967, %v792
      %v969 = vadd.f32 %v968, %v797
      %v970 = vadd.f32 %v969, %v800
      %v971 = vadd.f32 %v970, %v805
      %v972 = vadd.f32 %v971, %v808
      %v973 = vadd.f32 %v972, %v813
      %v974 = vadd.f32 %v973, %v816
      %v975 = vadd.f32 %v974, %v821
      %v976 = vadd.f32 %v975, %v824
      %v977 = vadd.f32 %v976, %v829
      %v978 = vadd.f32 %v977, %v832
      %v979 = vadd.f32 %v978, %v837
      %v980 = vadd.f32 %v979, %v840
      %v981 = vadd.f32 %v980, %v845
      %v982 = vadd.f32 %v981, %v848
      %v983 = vrot.slane %v982, 4
      %v984 = vadd.f32 %v982, %v983
      %v985 = vrot.slane %v984, 2
      %v986 = vadd.f32 %v984, %v985
      %v987 = vrot.slane %v986, 1
      %v988 = vadd.f32 %v986, %v987
      %v989 = vmul.f32 %v597, %v597
      %v990 = vmul.f32 %v600, %v600
      %v991 = vmul.f32 %v605, %v605
      %v992 = vmul.f32 %v608, %v608
      %v993 = vmul.f32 %v613, %v613
      %v994 = vmul.f32 %v616, %v616
      %v995 = vmul.f32 %v621, %v621
      %v996 = vmul.f32 %v624, %v624
      %v997 = vmul.f32 %v629, %v629
      %v998 = vmul.f32 %v632, %v632
      %v999 = vmul.f32 %v637, %v637
      %v1000 = vmul.f32 %v640, %v640
      %v1001 = vmul.f32 %v645, %v645
      %v1002 = vmul.f32 %v648, %v648
      %v1003 = vmul.f32 %v653, %v653
      %v1004 = vmul.f32 %v656, %v656
      %v1005 = vmul.f32 %v661, %v661
      %v1006 = vmul.f32 %v664, %v664
      %v1007 = vmul.f32 %v669, %v669
      %v1008 = vmul.f32 %v672, %v672
      %v1009 = vmul.f32 %v677, %v677
      %v1010 = vmul.f32 %v680, %v680
      %v1011 = vmul.f32 %v685, %v685
      %v1012 = vmul.f32 %v688, %v688
      %v1013 = vmul.f32 %v693, %v693
      %v1014 = vmul.f32 %v696, %v696
      %v1015 = vmul.f32 %v701, %v701
      %v1016 = vmul.f32 %v704, %v704
      %v1017 = vmul.f32 %v709, %v709
      %v1018 = vmul.f32 %v712, %v712
      %v1019 = vmul.f32 %v717, %v717
      %v1020 = vmul.f32 %v720, %v720
      %v1021 = vmul.f32 %v725, %v725
      %v1022 = vmul.f32 %v728, %v728
      %v1023 = vmul.f32 %v733, %v733
      %v1024 = vmul.f32 %v736, %v736
      %v1025 = vmul.f32 %v741, %v741
      %v1026 = vmul.f32 %v744, %v744
      %v1027 = vmul.f32 %v749, %v749
      %v1028 = vmul.f32 %v752, %v752
      %v1029 = vmul.f32 %v757, %v757
      %v1030 = vmul.f32 %v760, %v760
      %v1031 = vmul.f32 %v765, %v765
      %v1032 = vmul.f32 %v768, %v768
      %v1033 = vmul.f32 %v773, %v773
      %v1034 = vmul.f32 %v776, %v776
      %v1035 = vmul.f32 %v781, %v781
      %v1036 = vmul.f32 %v784, %v784
      %v1037 = vmul.f32 %v789, %v789
      %v1038 = vmul.f32 %v792, %v792
      %v1039 = vmul.f32 %v797, %v797
      %v1040 = vmul.f32 %v800, %v800
      %v1041 = vmul.f32 %v805, %v805
      %v1042 = vmul.f32 %v808, %v808
      %v1043 = vmul.f32 %v813, %v813
      %v1044 = vmul.f32 %v816, %v816
      %v1045 = vmul.f32 %v821, %v821
      %v1046 = vmul.f32 %v824, %v824
      %v1047 = vmul.f32 %v829, %v829
      %v1048 = vmul.f32 %v832, %v832
      %v1049 = vmul.f32 %v837, %v837
      %v1050 = vmul.f32 %v840, %v840
      %v1051 = vmul.f32 %v845, %v845
      %v1052 = vmul.f32 %v848, %v848
      %v1053 = vadd.f32 %v989, %v990
      %v1054 = vadd.f32 %v1053, %v991
      %v1055 = vadd.f32 %v1054, %v992
      %v1056 = vadd.f32 %v1055, %v993
      %v1057 = vadd.f32 %v1056, %v994
      %v1058 = vadd.f32 %v1057, %v995
      %v1059 = vadd.f32 %v1058, %v996
      %v1060 = vadd.f32 %v1059, %v997
      %v1061 = vadd.f32 %v1060, %v998
      %v1062 = vadd.f32 %v1061, %v999
      %v1063 = vadd.f32 %v1062, %v1000
      %v1064 = vadd.f32 %v1063, %v1001
      %v1065 = vadd.f32 %v1064, %v1002
      %v1066 = vadd.f32 %v1065, %v1003
      %v1067 = vadd.f32 %v1066, %v1004
      %v1068 = vadd.f32 %v1067, %v1005
      %v1069 = vadd.f32 %v1068, %v1006
      %v1070 = vadd.f32 %v1069, %v1007
      %v1071 = vadd.f32 %v1070, %v1008
      %v1072 = vadd.f32 %v1071, %v1009
      %v1073 = vadd.f32 %v1072, %v1010
      %v1074 = vadd.f32 %v1073, %v1011
      %v1075 = vadd.f32 %v1074, %v1012
      %v1076 = vadd.f32 %v1075, %v1013
      %v1077 = vadd.f32 %v1076, %v1014
      %v1078 = vadd.f32 %v1077, %v1015
      %v1079 = vadd.f32 %v1078, %v1016
      %v1080 = vadd.f32 %v1079, %v1017
      %v1081 = vadd.f32 %v1080, %v1018
      %v1082 = vadd.f32 %v1081, %v1019
      %v1083 = vadd.f32 %v1082, %v1020
      %v1084 = vadd.f32 %v1083, %v1021
      %v1085 = vadd.f32 %v1084, %v1022
      %v1086 = vadd.f32 %v1085, %v1023
      %v1087 = vadd.f32 %v1086, %v1024
      %v1088 = vadd.f32 %v1087, %v1025
      %v1089 = vadd.f32 %v1088, %v1026
      %v1090 = vadd.f32 %v1089, %v1027
      %v1091 = vadd.f32 %v1090, %v1028
      %v1092 = vadd.f32 %v1091, %v1029
      %v1093 = vadd.f32 %v1092, %v1030
      %v1094 = vadd.f32 %v1093, %v1031
      %v1095 = vadd.f32 %v1094, %v1032
      %v1096 = vadd.f32 %v1095, %v1033
      %v1097 = vadd.f32 %v1096, %v1034
      %v1098 = vadd.f32 %v1097, %v1035
      %v1099 = vadd.f32 %v1098, %v1036
      %v1100 = vadd.f32 %v1099, %v1037
      %v1101 = vadd.f32 %v1100, %v1038
      %v1102 = vadd.f32 %v1101, %v1039
      %v1103 = vadd.f32 %v1102, %v1040
      %v1104 = vadd.f32 %v1103, %v1041
      %v1105 = vadd.f32 %v1104, %v1042
      %v1106 = vadd.f32 %v1105, %v1043
      %v1107 = vadd.f32 %v1106, %v1044
      %v1108 = vadd.f32 %v1107, %v1045
      %v1109 = vadd.f32 %v1108, %v1046
      %v1110 = vadd.f32 %v1109, %v1047
      %v1111 = vadd.f32 %v1110, %v1048
      %v1112 = vadd.f32 %v1111, %v1049
      %v1113 = vadd.f32 %v1112, %v1050
      %v1114 = vadd.f32 %v1113, %v1051
      %v1115 = vadd.f32 %v1114, %v1052
      %v1116 = vrot.slane %v1115, 4
      %v1117 = vadd.f32 %v1115, %v1116
      %v1118 = vrot.slane %v1117, 2
      %v1119 = vadd.f32 %v1117, %v1118
      %v1120 = vrot.slane %v1119, 1
      %v1121 = vadd.f32 %v1119, %v1120
      %v1122 = vld [vmem:[%s240] sm:$0x3]
      %vm1123 = vcmask 1040384
      %v1124 = vsel %vm1123, %v988, %v1121
      %v1125 = vadd.f32 %v1122, %v1124
      %1126 = vst [vmem:[%s240] sm:$0x3] %v1125
      %s1127 = smul.u32 64, %s20
      %p1128 = scmp.lt.s32.totalorder %s19, 3
      %s1129 = scalar_select %p1128, %s19, 3
      %p1130 = scmp.lt.s32.totalorder %s1127, 63
      %s1131 = scalar_select %p1130, %s1127, 63
      %s1132 = smul.addr %s1129, 64
      %s1133 = sadd.s32 %s1131, %s1132
      %s1134 = smul.addr %s1133, 8
      %s1135 = scalar_lea.vmem %s2, %s1134
      %p1136 = scmp.lt.s32.totalorder %s19, 3
      %s1137 = scalar_select %p1136, %s19, 3
      %s1138 = smul.addr %s1137, 2
      %s1139 = scalar_lea.vmem %s3, %s1138
      // Predicated region
      $region33: #{_lambda_.15} parent=27 // pred_check
        %p1140 = pneg %p101
      $region34: #{_lambda_.15} parent=27 // pred_check_branch
        %1142 = sbr.rel (%p1140) target = $region36
      $region35: #{_lambda_.15} parent=27 // pred_region
        %s1143 = smul.u32 64, %s20
      $region36: #{_lambda_.15} parent=27 // pred_fallthru
        _
      // Predicated region
      $region37: #{_lambda_.15} parent=27 // pred_check
        %p1144 = pneg %p127
      $region38: #{_lambda_.15} parent=27 // pred_check_branch
        %1146 = sbr.rel (%p1144) target = $region40
      $region39: #{_lambda_.15} parent=27 // pred_region
        _
      $region40: #{_lambda_.15} parent=27 // pred_fallthru
        _
    $region28: #{_lambda_.15} parent=5 // pred_fallthru
      _
    %p1147 = scmp.le.s32.totalorder 2, %s10
    // Predicated region
    $region41: #{_lambda_.15} parent=5 // pred_check
      %p1148 = pneg %p1147
    $region42: #{_lambda_.15} parent=5 // pred_check_branch
      %1150 = sbr.rel (%p1148) target = $region44
    $region43: #{_lambda_.15} parent=5 // pred_region
      %s1151 = ssub.s32 %s10, 2
      // Predicated region
      $region45: #{_lambda_.15} parent=43 // pred_check
        %p1152 = pneg %p107
      $region46: #{_lambda_.15} parent=43 // pred_check_branch
        %1154 = sbr.rel (%p1152) target = $region48
      $region47: #{_lambda_.15} parent=43 // pred_region
        %s1155 = smul.u32 64, %s22
        %p1156 = scmp.lt.s32.totalorder %s21, 3
        %s1157 = scalar_select %p1156, %s21, 3
        %p1158 = scmp.lt.s32.totalorder %s1155, 63
        %s1159 = scalar_select %p1158, %s1155, 63
        %s1160 = smul.addr %s1157, 64
        %s1161 = sadd.s32 %s1159, %s1160
        %s1162 = smul.addr %s1161, 8
        %s1163 = scalar_lea.vmem %s2, %s1162
      $region48: #{_lambda_.15} parent=43 // pred_fallthru
        _
      // Predicated region
      $region49: #{_lambda_.15} parent=43 // pred_check
        %p1164 = pneg %p133
      $region50: #{_lambda_.15} parent=43 // pred_check_branch
        %1166 = sbr.rel (%p1164) target = $region52
      $region51: #{_lambda_.15} parent=43 // pred_region
        %p1167 = scmp.lt.s32.totalorder %s21, 3
        %s1168 = scalar_select %p1167, %s21, 3
        %s1169 = smul.addr %s1168, 2
        %s1170 = scalar_lea.vmem %s3, %s1169
      $region52: #{_lambda_.15} parent=43 // pred_fallthru
        _
    $region44: #{_lambda_.15} parent=5 // pred_fallthru
      _
  $region6: #{_lambda_.15} parent=0 // loop_footer
    %s14 = sadd.s32 1, %s10
  $region7: #{_lambda_.15} parent=0 // loop_footer_branch
    %9 = sbr.rel target = $region3
  $region8: #{_lambda_.15} parent=0 // loop_exit
    _

// kernel: _lambda_.16
$region0: #{_lambda_.16}
  #allocation0 [shape = 'u32[]', space=smem, size = 0x4, offset = 0x4, fixed_abs, tag = 'smem constant byte address 0x4 - core index']
  #allocation1 [shape = 'u32[144,128]{1,0:T(1,128)}', space=vmem, size = 0x12000, scoped, tag = 'internal scratch']
  %s0 = inlined_call_operand.vmem [shape: f32[2048,128], index: 0, kind: input, shape index: {}]
  %s1 = inlined_call_operand.vmem [shape: f32[1,128], index: 1, kind: input, shape index: {}]
  %s2 = inlined_call_operand.vmem [shape: f32[1,128], index: 2, kind: input, shape index: {}]
  %s3 = inlined_call_operand.vmem [shape: bf16[2048,128], index: 3, kind: output, shape index: {}]
  %s4 = sld [smem:[#allocation0]]
  $region45: #{_lambda_.16} parent=0
    _
  %s6 = ssub.s32 1, %s4
  %s7 = scalar_select 0, %s6, %s4
  loop: start=0, step=1, limit=4
  $region2: #{_lambda_.16} parent=0 // loop_pre_header
    _
  $region3: #{_lambda_.16} parent=0 // loop_header
    %s9 = sphi 0, %s13
    %p10 = scmp.ge.s32.totalorder %s9, 4
    %s19 = sphi 0, %s21
    %s22 = sphi 0, %s19
    %s23 = sphi 0, %s22
    %s39 = sphi 0, %s23
    %s43 = sphi 0, %s43
    %s45 = sphi 0, %s43
    %s46 = sphi 0, %s45
    %s60 = sphi 0, %s46
    %s64 = sphi 0, %s64
    %s66 = sphi 0, %s64
    %s67 = sphi 0, %s66
    %s81 = sphi 0, %s67
    %s87 = sphi 0, %s89
    %s90 = sphi 0, %s87
    %s91 = sphi 0, %s90
    %s107 = sphi 0, %s91
  $region4: #{_lambda_.16} parent=0 // loop_header_branch
    %12 = sbr.rel (%p10) target = $region8
  $region5: #{_lambda_.16} parent=0 // loop_body
    %s14 = ssub.s32 %s9, 1
    %s15 = ssub.s32 %s9, 2
    %s16 = sadd.s32 %s9, 1
    %s17 = ssub.s32 %s9, %s16
    %p18 = scmp.eq.s32.totalorder %s17, 0
    %s20 = sadd.s32 %s19, 1
    %s21 = scalar_select %p18, %s19, %s20
    %p24 = pneg %p18
    %p25 = scmp.eq.s32.totalorder %s9, 1
    %p26 = por %p24, %p25
    %p27 = scmp.ne.s32.totalorder %s19, %s22
    %p28 = scmp.eq.s32.totalorder %s9, 0
    %p29 = por %p27, %p28
    %p30 = scmp.ne.s32.totalorder %s19, %s22
    %p31 = scmp.eq.s32.totalorder %s14, 1
    %p32 = por %p30, %p31
    %p33 = scmp.ne.s32.totalorder %s22, %s23
    %p34 = scmp.eq.s32.totalorder %s14, 0
    %p35 = por %p33, %p34
    %p36 = scmp.ne.s32.totalorder %s22, %s23
    %p37 = scmp.eq.s32.totalorder %s15, 1
    %p38 = por %p36, %p37
    %p40 = scmp.ne.s32.totalorder %s23, %s39
    %p41 = scmp.eq.s32.totalorder %s15, 0
    %p42 = por %p40, %p41
    %s44 = sadd.s32 %s43, 1
    %p47 = scmp.eq.s32.totalorder %s9, 1
    %p48 = scmp.ne.s32.totalorder %s43, %s45
    %p49 = scmp.eq.s32.totalorder %s9, 0
    %p50 = por %p48, %p49
    %p51 = scmp.ne.s32.totalorder %s43, %s45
    %p52 = scmp.eq.s32.totalorder %s14, 1
    %p53 = por %p51, %p52
    %p54 = scmp.ne.s32.totalorder %s45, %s46
    %p55 = scmp.eq.s32.totalorder %s14, 0
    %p56 = por %p54, %p55
    %p57 = scmp.ne.s32.totalorder %s45, %s46
    %p58 = scmp.eq.s32.totalorder %s15, 1
    %p59 = por %p57, %p58
    %p61 = scmp.ne.s32.totalorder %s46, %s60
    %p62 = scmp.eq.s32.totalorder %s15, 0
    %p63 = por %p61, %p62
    %s65 = sadd.s32 %s64, 1
    %p68 = scmp.eq.s32.totalorder %s9, 1
    %p69 = scmp.ne.s32.totalorder %s64, %s66
    %p70 = scmp.eq.s32.totalorder %s9, 0
    %p71 = por %p69, %p70
    %p72 = scmp.ne.s32.totalorder %s64, %s66
    %p73 = scmp.eq.s32.totalorder %s14, 1
    %p74 = por %p72, %p73
    %p75 = scmp.ne.s32.totalorder %s66, %s67
    %p76 = scmp.eq.s32.totalorder %s14, 0
    %p77 = por %p75, %p76
    %p78 = scmp.ne.s32.totalorder %s66, %s67
    %p79 = scmp.eq.s32.totalorder %s15, 1
    %p80 = por %p78, %p79
    %p82 = scmp.ne.s32.totalorder %s67, %s81
    %p83 = scmp.eq.s32.totalorder %s15, 0
    %p84 = por %p82, %p83
    %s85 = ssub.s32 %s9, %s16
    %p86 = scmp.eq.s32.totalorder %s85, 0
    %s88 = sadd.s32 %s87, 1
    %s89 = scalar_select %p86, %s87, %s88
    %p92 = pneg %p86
    %p93 = scmp.eq.s32.totalorder %s9, 1
    %p94 = por %p92, %p93
    %p95 = scmp.ne.s32.totalorder %s87, %s90
    %p96 = scmp.eq.s32.totalorder %s9, 0
    %p97 = por %p95, %p96
    %p98 = scmp.ne.s32.totalorder %s87, %s90
    %p99 = scmp.eq.s32.totalorder %s14, 1
    %p100 = por %p98, %p99
    %p101 = scmp.ne.s32.totalorder %s90, %s91
    %p102 = scmp.eq.s32.totalorder %s14, 0
    %p103 = por %p101, %p102
    %p104 = scmp.ne.s32.totalorder %s90, %s91
    %p105 = scmp.eq.s32.totalorder %s15, 1
    %p106 = por %p104, %p105
    %p108 = scmp.ne.s32.totalorder %s91, %s107
    %p109 = scmp.eq.s32.totalorder %s15, 0
    %p110 = por %p108, %p109
    %p111 = scmp.le.s32.totalorder 1, %s9
    %p112 = scmp.lt.s32.totalorder %s9, 3
    %p113 = pnand %p111, %p112
    %p114 = pneg %p113
    // Predicated region
    $region9: #{_lambda_.16} parent=5 // pred_check
      _
    $region10: #{_lambda_.16} parent=5 // pred_check_branch
      %116 = sbr.rel (%p113) target = $region12
    $region11: #{_lambda_.16} parent=5 // pred_region
      %s117 = ssub.s32 %s9, 1
      // Predicated region
      $region13: #{_lambda_.16} parent=11 // pred_check
        %p118 = pneg %p56
      $region14: #{_lambda_.16} parent=11 // pred_check_branch
        %120 = sbr.rel (%p118) target = $region16
      $region15: #{_lambda_.16} parent=11 // pred_region
        _
      $region16: #{_lambda_.16} parent=11 // pred_fallthru
        _
      // Predicated region
      $region17: #{_lambda_.16} parent=11 // pred_check
        %p121 = pneg %p77
      $region18: #{_lambda_.16} parent=11 // pred_check_branch
        %123 = sbr.rel (%p121) target = $region20
      $region19: #{_lambda_.16} parent=11 // pred_region
        _
      $region20: #{_lambda_.16} parent=11 // pred_fallthru
        _
    $region12: #{_lambda_.16} parent=5 // pred_fallthru
      _
    %p124 = scmp.lt.s32.totalorder %s9, 2
    // Predicated region
    $region21: #{_lambda_.16} parent=5 // pred_check
      %p125 = pneg %p124
    $region22: #{_lambda_.16} parent=5 // pred_check_branch
      %127 = sbr.rel (%p125) target = $region24
    $region23: #{_lambda_.16} parent=5 // pred_region
      // Predicated region
      $region25: #{_lambda_.16} parent=23 // pred_check
        %p128 = pneg %p29
      $region26: #{_lambda_.16} parent=23 // pred_check_branch
        %130 = sbr.rel (%p128) target = $region28
      $region27: #{_lambda_.16} parent=23 // pred_region
        %s131 = smul.u32 128, %s9
        %p132 = scmp.lt.s32.totalorder %s131, 255
        %s133 = scalar_select %p132, %s131, 255
        %s134 = smul.addr %s133, 8
        %s135 = scalar_lea.vmem %s0, %s134
        %s136 = smul.u32 128, %s9
      $region28: #{_lambda_.16} parent=23 // pred_fallthru
        _
    $region24: #{_lambda_.16} parent=5 // pred_fallthru
      _
    %p137 = scmp.le.s32.totalorder 1, %s9
    %p138 = scmp.lt.s32.totalorder %s9, 3
    %p139 = pnand %p137, %p138
    %p140 = pneg %p139
    // Predicated region
    $region29: #{_lambda_.16} parent=5 // pred_check
      _
    $region30: #{_lambda_.16} parent=5 // pred_check_branch
      %142 = sbr.rel (%p139) target = $region32
    $region31: #{_lambda_.16} parent=5 // pred_region
      %s143 = ssub.s32 %s9, 1
      %s144 = smul.u32 128, %s14
      %p145 = scmp.lt.s32.totalorder %s144, 255
      %s146 = scalar_select %p145, %s144, 255
      %s147 = smul.addr %s146, 8
      %s148 = scalar_lea.vmem %s0, %s147
      %p149 = pneg %p35
      %p150 = pneg %p32
      %p151 = pneg %p56
      %p152 = pneg %p53
      %p153 = pneg %p77
      %p154 = pneg %p74
      %p155 = pneg %p103
      %p156 = pneg %p100
      %s157 = smul.u32 128, %s14
      %p158 = scmp.lt.s32.totalorder %s157, 255
      %s159 = scalar_select %p158, %s157, 255
      %s160 = smul.addr %s159, 4
      %s161 = scalar_lea.vmem %s3, %s160
      %s162 = smul.u32 128, %s14
      %p163 = scmp.lt.s32.totalorder %s162, 255
      %s164 = scalar_select %p163, %s162, 255
      %s165 = smul.addr %s164, 8
      %s166 = scalar_lea.vmem %s0, %s165
      %s167 = smul.u32 128, %s14
      %s168 = smul.u32 128, %s14
      %p169 = scmp.lt.s32.totalorder %s168, 255
      %s170 = scalar_select %p169, %s168, 255
      %s171 = smul.addr %s170, 4
      %s172 = scalar_lea.vmem %s3, %s171
      %s173 = smul.u32 128, %s14
      %v174 = vld [vmem:[%s166] sm:$0xff]
      %v175 = vld [vmem:[%s166 + $0x8] sm:$0xff]
      %v176 = vld [vmem:[%s166 + $0x10] sm:$0xff]
      %v177 = vld [vmem:[%s166 + $0x18] sm:$0xff]
      %v178 = vld [vmem:[%s166 + $0x20] sm:$0xff]
      %v179 = vld [vmem:[%s166 + $0x28] sm:$0xff]
      %v180 = vld [vmem:[%s166 + $0x30] sm:$0xff]
      %v181 = vld [vmem:[%s166 + $0x38] sm:$0xff]
      %v182 = vld [vmem:[%s166 + $0x40] sm:$0xff]
      %v183 = vld [vmem:[%s166 + $0x48] sm:$0xff]
      %v184 = vld [vmem:[%s166 + $0x50] sm:$0xff]
      %v185 = vld [vmem:[%s166 + $0x58] sm:$0xff]
      %v186 = vld [vmem:[%s166 + $0x60] sm:$0xff]
      %v187 = vld [vmem:[%s166 + $0x68] sm:$0xff]
      %v188 = vld [vmem:[%s166 + $0x70] sm:$0xff]
      %v189 = vld [vmem:[%s166 + $0x78] sm:$0xff]
      %v190 = vld [vmem:[%s166 + $0x80] sm:$0xff]
      %v191 = vld [vmem:[%s166 + $0x88] sm:$0xff]
      %v192 = vld [vmem:[%s166 + $0x90] sm:$0xff]
      %v193 = vld [vmem:[%s166 + $0x98] sm:$0xff]
      %v194 = vld [vmem:[%s166 + $0xa0] sm:$0xff]
      %v195 = vld [vmem:[%s166 + $0xa8] sm:$0xff]
      %v196 = vld [vmem:[%s166 + $0xb0] sm:$0xff]
      %v197 = vld [vmem:[%s166 + $0xb8] sm:$0xff]
      %v198 = vld [vmem:[%s166 + $0xc0] sm:$0xff]
      %v199 = vld [vmem:[%s166 + $0xc8] sm:$0xff]
      %v200 = vld [vmem:[%s166 + $0xd0] sm:$0xff]
      %v201 = vld [vmem:[%s166 + $0xd8] sm:$0xff]
      %v202 = vld [vmem:[%s166 + $0xe0] sm:$0xff]
      %v203 = vld [vmem:[%s166 + $0xe8] sm:$0xff]
      %v204 = vld [vmem:[%s166 + $0xf0] sm:$0xff]
      %v205 = vld [vmem:[%s166 + $0xf8] sm:$0xff]
      %v206 = vld [vmem:[%s166 + $0x100] sm:$0xff]
      %v207 = vld [vmem:[%s166 + $0x108] sm:$0xff]
      %v208 = vld [vmem:[%s166 + $0x110] sm:$0xff]
      %v209 = vld [vmem:[%s166 + $0x118] sm:$0xff]
      %v210 = vld [vmem:[%s166 + $0x120] sm:$0xff]
      %v211 = vld [vmem:[%s166 + $0x128] sm:$0xff]
      %v212 = vld [vmem:[%s166 + $0x130] sm:$0xff]
      %v213 = vld [vmem:[%s166 + $0x138] sm:$0xff]
      %v214 = vld [vmem:[%s166 + $0x140] sm:$0xff]
      %v215 = vld [vmem:[%s166 + $0x148] sm:$0xff]
      %v216 = vld [vmem:[%s166 + $0x150] sm:$0xff]
      %v217 = vld [vmem:[%s166 + $0x158] sm:$0xff]
      %v218 = vld [vmem:[%s166 + $0x160] sm:$0xff]
      %v219 = vld [vmem:[%s166 + $0x168] sm:$0xff]
      %v220 = vld [vmem:[%s166 + $0x170] sm:$0xff]
      %v221 = vld [vmem:[%s166 + $0x178] sm:$0xff]
      %v222 = vld [vmem:[%s166 + $0x180] sm:$0xff]
      %v223 = vld [vmem:[%s166 + $0x188] sm:$0xff]
      %v224 = vld [vmem:[%s166 + $0x190] sm:$0xff]
      %v225 = vld [vmem:[%s166 + $0x198] sm:$0xff]
      %v226 = vld [vmem:[%s166 + $0x1a0] sm:$0xff]
      %v227 = vld [vmem:[%s166 + $0x1a8] sm:$0xff]
      %v228 = vld [vmem:[%s166 + $0x1b0] sm:$0xff]
      %v229 = vld [vmem:[%s166 + $0x1b8] sm:$0xff]
      %v230 = vld [vmem:[%s166 + $0x1c0] sm:$0xff]
      %v231 = vld [vmem:[%s166 + $0x1c8] sm:$0xff]
      %v232 = vld [vmem:[%s166 + $0x1d0] sm:$0xff]
      %v233 = vld [vmem:[%s166 + $0x1d8] sm:$0xff]
      %v234 = vld [vmem:[%s166 + $0x1e0] sm:$0xff]
      %v235 = vld [vmem:[%s166 + $0x1e8] sm:$0xff]
      %v236 = vld [vmem:[%s166 + $0x1f0] sm:$0xff]
      %v237 = vld [vmem:[%s166 + $0x1f8] sm:$0xff]
      %v238 = vld [vmem:[%s166 + $0x200] sm:$0xff]
      %v239 = vld [vmem:[%s166 + $0x208] sm:$0xff]
      %v240 = vld [vmem:[%s166 + $0x210] sm:$0xff]
      %v241 = vld [vmem:[%s166 + $0x218] sm:$0xff]
      %v242 = vld [vmem:[%s166 + $0x220] sm:$0xff]
      %v243 = vld [vmem:[%s166 + $0x228] sm:$0xff]
      %v244 = vld [vmem:[%s166 + $0x230] sm:$0xff]
      %v245 = vld [vmem:[%s166 + $0x238] sm:$0xff]
      %v246 = vld [vmem:[%s166 + $0x240] sm:$0xff]
      %v247 = vld [vmem:[%s166 + $0x248] sm:$0xff]
      %v248 = vld [vmem:[%s166 + $0x250] sm:$0xff]
      %v249 = vld [vmem:[%s166 + $0x258] sm:$0xff]
      %v250 = vld [vmem:[%s166 + $0x260] sm:$0xff]
      %v251 = vld [vmem:[%s166 + $0x268] sm:$0xff]
      %v252 = vld [vmem:[%s166 + $0x270] sm:$0xff]
      %v253 = vld [vmem:[%s166 + $0x278] sm:$0xff]
      %v254 = vld [vmem:[%s166 + $0x280] sm:$0xff]
      %v255 = vld [vmem:[%s166 + $0x288] sm:$0xff]
      %v256 = vld [vmem:[%s166 + $0x290] sm:$0xff]
      %v257 = vld [vmem:[%s166 + $0x298] sm:$0xff]
      %v258 = vld [vmem:[%s166 + $0x2a0] sm:$0xff]
      %v259 = vld [vmem:[%s166 + $0x2a8] sm:$0xff]
      %v260 = vld [vmem:[%s166 + $0x2b0] sm:$0xff]
      %v261 = vld [vmem:[%s166 + $0x2b8] sm:$0xff]
      %v262 = vld [vmem:[%s166 + $0x2c0] sm:$0xff]
      %v263 = vld [vmem:[%s166 + $0x2c8] sm:$0xff]
      %v264 = vld [vmem:[%s166 + $0x2d0] sm:$0xff]
      %v265 = vld [vmem:[%s166 + $0x2d8] sm:$0xff]
      %v266 = vld [vmem:[%s166 + $0x2e0] sm:$0xff]
      %v267 = vld [vmem:[%s166 + $0x2e8] sm:$0xff]
      %v268 = vld [vmem:[%s166 + $0x2f0] sm:$0xff]
      %v269 = vld [vmem:[%s166 + $0x2f8] sm:$0xff]
      %v270 = vld [vmem:[%s166 + $0x300] sm:$0xff]
      %v271 = vld [vmem:[%s166 + $0x308] sm:$0xff]
      %v272 = vld [vmem:[%s166 + $0x310] sm:$0xff]
      %v273 = vld [vmem:[%s166 + $0x318] sm:$0xff]
      %v274 = vld [vmem:[%s166 + $0x320] sm:$0xff]
      %v275 = vld [vmem:[%s166 + $0x328] sm:$0xff]
      %v276 = vld [vmem:[%s166 + $0x330] sm:$0xff]
      %v277 = vld [vmem:[%s166 + $0x338] sm:$0xff]
      %v278 = vld [vmem:[%s166 + $0x340] sm:$0xff]
      %v279 = vld [vmem:[%s166 + $0x348] sm:$0xff]
      %v280 = vld [vmem:[%s166 + $0x350] sm:$0xff]
      %v281 = vld [vmem:[%s166 + $0x358] sm:$0xff]
      %v282 = vld [vmem:[%s166 + $0x360] sm:$0xff]
      %v283 = vld [vmem:[%s166 + $0x368] sm:$0xff]
      %v284 = vld [vmem:[%s166 + $0x370] sm:$0xff]
      %v285 = vld [vmem:[%s166 + $0x378] sm:$0xff]
      %v286 = vld [vmem:[%s166 + $0x380] sm:$0xff]
      %v287 = vld [vmem:[%s166 + $0x388] sm:$0xff]
      %v288 = vld [vmem:[%s166 + $0x390] sm:$0xff]
      %v289 = vld [vmem:[%s166 + $0x398] sm:$0xff]
      %v290 = vld [vmem:[%s166 + $0x3a0] sm:$0xff]
      %v291 = vld [vmem:[%s166 + $0x3a8] sm:$0xff]
      %v292 = vld [vmem:[%s166 + $0x3b0] sm:$0xff]
      %v293 = vld [vmem:[%s166 + $0x3b8] sm:$0xff]
      %v294 = vld [vmem:[%s166 + $0x3c0] sm:$0xff]
      %v295 = vld [vmem:[%s166 + $0x3c8] sm:$0xff]
      %v296 = vld [vmem:[%s166 + $0x3d0] sm:$0xff]
      %v297 = vld [vmem:[%s166 + $0x3d8] sm:$0xff]
      %v298 = vld [vmem:[%s166 + $0x3e0] sm:$0xff]
      %v299 = vld [vmem:[%s166 + $0x3e8] sm:$0xff]
      %v300 = vld [vmem:[%s166 + $0x3f0] sm:$0xff]
      %v301 = vld [vmem:[%s166 + $0x3f8] sm:$0xff]
      %v302 = vld [vmem:[%s1] sm:$0x1]
      %v304 = vlaneseq
      %v305 = vshrl.u32 %v304, 7
      %v306 = vsub.s32 0, %v305
      %v307 = vrot.slane %v302, %v306
      %v309 = vmul.f32 %v174, %v307
      %v310 = vmul.f32 %v175, %v307
      %v311 = vmul.f32 %v176, %v307
      %v312 = vmul.f32 %v177, %v307
      %v313 = vmul.f32 %v178, %v307
      %v314 = vmul.f32 %v179, %v307
      %v315 = vmul.f32 %v180, %v307
      %v316 = vmul.f32 %v181, %v307
      %v317 = vmul.f32 %v182, %v307
      %v318 = vmul.f32 %v183, %v307
      %v319 = vmul.f32 %v184, %v307
      %v320 = vmul.f32 %v185, %v307
      %v321 = vmul.f32 %v186, %v307
      %v322 = vmul.f32 %v187, %v307
      %v323 = vmul.f32 %v188, %v307
      %v324 = vmul.f32 %v189, %v307
      %v325 = vmul.f32 %v190, %v307
      %v326 = vmul.f32 %v191, %v307
      %v327 = vmul.f32 %v192, %v307
      %v328 = vmul.f32 %v193, %v307
      %v329 = vmul.f32 %v194, %v307
      %v330 = vmul.f32 %v195, %v307
      %v331 = vmul.f32 %v196, %v307
      %v332 = vmul.f32 %v197, %v307
      %v333 = vmul.f32 %v198, %v307
      %v334 = vmul.f32 %v199, %v307
      %v335 = vmul.f32 %v200, %v307
      %v336 = vmul.f32 %v201, %v307
      %v337 = vmul.f32 %v202, %v307
      %v338 = vmul.f32 %v203, %v307
      %v339 = vmul.f32 %v204, %v307
      %v340 = vmul.f32 %v205, %v307
      %v341 = vmul.f32 %v206, %v307
      %v342 = vmul.f32 %v207, %v307
      %v343 = vmul.f32 %v208, %v307
      %v344 = vmul.f32 %v209, %v307
      %v345 = vmul.f32 %v210, %v307
      %v346 = vmul.f32 %v211, %v307
      %v347 = vmul.f32 %v212, %v307
      %v348 = vmul.f32 %v213, %v307
      %v349 = vmul.f32 %v214, %v307
      %v350 = vmul.f32 %v215, %v307
      %v351 = vmul.f32 %v216, %v307
      %v352 = vmul.f32 %v217, %v307
      %v353 = vmul.f32 %v218, %v307
      %v354 = vmul.f32 %v219, %v307
      %v355 = vmul.f32 %v220, %v307
      %v356 = vmul.f32 %v221, %v307
      %v357 = vmul.f32 %v222, %v307
      %v358 = vmul.f32 %v223, %v307
      %v359 = vmul.f32 %v224, %v307
      %v360 = vmul.f32 %v225, %v307
      %v361 = vmul.f32 %v226, %v307
      %v362 = vmul.f32 %v227, %v307
      %v363 = vmul.f32 %v228, %v307
      %v364 = vmul.f32 %v229, %v307
      %v365 = vmul.f32 %v230, %v307
      %v366 = vmul.f32 %v231, %v307
      %v367 = vmul.f32 %v232, %v307
      %v368 = vmul.f32 %v233, %v307
      %v369 = vmul.f32 %v234, %v307
      %v370 = vmul.f32 %v235, %v307
      %v371 = vmul.f32 %v236, %v307
      %v372 = vmul.f32 %v237, %v307
      %v373 = vmul.f32 %v238, %v307
      %v374 = vmul.f32 %v239, %v307
      %v375 = vmul.f32 %v240, %v307
      %v376 = vmul.f32 %v241, %v307
      %v377 = vmul.f32 %v242, %v307
      %v378 = vmul.f32 %v243, %v307
      %v379 = vmul.f32 %v244, %v307
      %v380 = vmul.f32 %v245, %v307
      %v381 = vmul.f32 %v246, %v307
      %v382 = vmul.f32 %v247, %v307
      %v383 = vmul.f32 %v248, %v307
      %v384 = vmul.f32 %v249, %v307
      %v385 = vmul.f32 %v250, %v307
      %v386 = vmul.f32 %v251, %v307
      %v387 = vmul.f32 %v252, %v307
      %v388 = vmul.f32 %v253, %v307
      %v389 = vmul.f32 %v254, %v307
      %v390 = vmul.f32 %v255, %v307
      %v391 = vmul.f32 %v256, %v307
      %v392 = vmul.f32 %v257, %v307
      %v393 = vmul.f32 %v258, %v307
      %v394 = vmul.f32 %v259, %v307
      %v395 = vmul.f32 %v260, %v307
      %v396 = vmul.f32 %v261, %v307
      %v397 = vmul.f32 %v262, %v307
      %v398 = vmul.f32 %v263, %v307
      %v399 = vmul.f32 %v264, %v307
      %v400 = vmul.f32 %v265, %v307
      %v401 = vmul.f32 %v266, %v307
      %v402 = vmul.f32 %v267, %v307
      %v403 = vmul.f32 %v268, %v307
      %v404 = vmul.f32 %v269, %v307
      %v405 = vmul.f32 %v270, %v307
      %v406 = vmul.f32 %v271, %v307
      %v407 = vmul.f32 %v272, %v307
      %v408 = vmul.f32 %v273, %v307
      %v409 = vmul.f32 %v274, %v307
      %v410 = vmul.f32 %v275, %v307
      %v411 = vmul.f32 %v276, %v307
      %v412 = vmul.f32 %v277, %v307
      %v413 = vmul.f32 %v278, %v307
      %v414 = vmul.f32 %v279, %v307
      %v415 = vmul.f32 %v280, %v307
      %v416 = vmul.f32 %v281, %v307
      %v417 = vmul.f32 %v282, %v307
      %v418 = vmul.f32 %v283, %v307
      %v419 = vmul.f32 %v284, %v307
      %v420 = vmul.f32 %v285, %v307
      %v421 = vmul.f32 %v286, %v307
      %v422 = vmul.f32 %v287, %v307
      %v423 = vmul.f32 %v288, %v307
      %v424 = vmul.f32 %v289, %v307
      %v425 = vmul.f32 %v290, %v307
      %v426 = vmul.f32 %v291, %v307
      %v427 = vmul.f32 %v292, %v307
      %v428 = vmul.f32 %v293, %v307
      %v429 = vmul.f32 %v294, %v307
      %v430 = vmul.f32 %v295, %v307
      %v431 = vmul.f32 %v296, %v307
      %v432 = vmul.f32 %v297, %v307
      %v433 = vmul.f32 %v298, %v307
      %v434 = vmul.f32 %v299, %v307
      %v435 = vmul.f32 %v300, %v307
      %v436 = vmul.f32 %v301, %v307
      %v437 = vld [vmem:[%s2] sm:$0x1]
      %v439 = vlaneseq
      %v440 = vshrl.u32 %v439, 7
      %v441 = vsub.s32 0, %v440
      %v442 = vrot.slane %v437, %v441
      %v444 = vadd.f32 %v309, %v442
      %v445 = vadd.f32 %v310, %v442
      %v446 = vadd.f32 %v311, %v442
      %v447 = vadd.f32 %v312, %v442
      %v448 = vadd.f32 %v313, %v442
      %v449 = vadd.f32 %v314, %v442
      %v450 = vadd.f32 %v315, %v442
      %v451 = vadd.f32 %v316, %v442
      %v452 = vadd.f32 %v317, %v442
      %v453 = vadd.f32 %v318, %v442
      %v454 = vadd.f32 %v319, %v442
      %v455 = vadd.f32 %v320, %v442
      %v456 = vadd.f32 %v321, %v442
      %v457 = vadd.f32 %v322, %v442
      %v458 = vadd.f32 %v323, %v442
      %v459 = vadd.f32 %v324, %v442
      %v460 = vadd.f32 %v325, %v442
      %v461 = vadd.f32 %v326, %v442
      %v462 = vadd.f32 %v327, %v442
      %v463 = vadd.f32 %v328, %v442
      %v464 = vadd.f32 %v329, %v442
      %v465 = vadd.f32 %v330, %v442
      %v466 = vadd.f32 %v331, %v442
      %v467 = vadd.f32 %v332, %v442
      %v468 = vadd.f32 %v333, %v442
      %v469 = vadd.f32 %v334, %v442
      %v470 = vadd.f32 %v335, %v442
      %v471 = vadd.f32 %v336, %v442
      %v472 = vadd.f32 %v337, %v442
      %v473 = vadd.f32 %v338, %v442
      %v474 = vadd.f32 %v339, %v442
      %v475 = vadd.f32 %v340, %v442
      %v476 = vadd.f32 %v341, %v442
      %v477 = vadd.f32 %v342, %v442
      %v478 = vadd.f32 %v343, %v442
      %v479 = vadd.f32 %v344, %v442
      %v480 = vadd.f32 %v345, %v442
      %v481 = vadd.f32 %v346, %v442
      %v482 = vadd.f32 %v347, %v442
      %v483 = vadd.f32 %v348, %v442
      %v484 = vadd.f32 %v349, %v442
      %v485 = vadd.f32 %v350, %v442
      %v486 = vadd.f32 %v351, %v442
      %v487 = vadd.f32 %v352, %v442
      %v488 = vadd.f32 %v353, %v442
      %v489 = vadd.f32 %v354, %v442
      %v490 = vadd.f32 %v355, %v442
      %v491 = vadd.f32 %v356, %v442
      %v492 = vadd.f32 %v357, %v442
      %v493 = vadd.f32 %v358, %v442
      %v494 = vadd.f32 %v359, %v442
      %v495 = vadd.f32 %v360, %v442
      %v496 = vadd.f32 %v361, %v442
      %v497 = vadd.f32 %v362, %v442
      %v498 = vadd.f32 %v363, %v442
      %v499 = vadd.f32 %v364, %v442
      %v500 = vadd.f32 %v365, %v442
      %v501 = vadd.f32 %v366, %v442
      %v502 = vadd.f32 %v367, %v442
      %v503 = vadd.f32 %v368, %v442
      %v504 = vadd.f32 %v369, %v442
      %v505 = vadd.f32 %v370, %v442
      %v506 = vadd.f32 %v371, %v442
      %v507 = vadd.f32 %v372, %v442
      %v508 = vadd.f32 %v373, %v442
      %v509 = vadd.f32 %v374, %v442
      %v510 = vadd.f32 %v375, %v442
      %v511 = vadd.f32 %v376, %v442
      %v512 = vadd.f32 %v377, %v442
      %v513 = vadd.f32 %v378, %v442
      %v514 = vadd.f32 %v379, %v442
      %v515 = vadd.f32 %v380, %v442
      %v516 = vadd.f32 %v381, %v442
      %v517 = vadd.f32 %v382, %v442
      %v518 = vadd.f32 %v383, %v442
      %v519 = vadd.f32 %v384, %v442
      %v520 = vadd.f32 %v385, %v442
      %v521 = vadd.f32 %v386, %v442
      %v522 = vadd.f32 %v387, %v442
      %v523 = vadd.f32 %v388, %v442
      %v524 = vadd.f32 %v389, %v442
      %v525 = vadd.f32 %v390, %v442
      %v526 = vadd.f32 %v391, %v442
      %v527 = vadd.f32 %v392, %v442
      %v528 = vadd.f32 %v393, %v442
      %v529 = vadd.f32 %v394, %v442
      %v530 = vadd.f32 %v395, %v442
      %v531 = vadd.f32 %v396, %v442
      %v532 = vadd.f32 %v397, %v442
      %v533 = vadd.f32 %v398, %v442
      %v534 = vadd.f32 %v399, %v442
      %v535 = vadd.f32 %v400, %v442
      %v536 = vadd.f32 %v401, %v442
      %v537 = vadd.f32 %v402, %v442
      %v538 = vadd.f32 %v403, %v442
      %v539 = vadd.f32 %v404, %v442
      %v540 = vadd.f32 %v405, %v442
      %v541 = vadd.f32 %v406, %v442
      %v542 = vadd.f32 %v407, %v442
      %v543 = vadd.f32 %v408, %v442
      %v544 = vadd.f32 %v409, %v442
      %v545 = vadd.f32 %v410, %v442
      %v546 = vadd.f32 %v411, %v442
      %v547 = vadd.f32 %v412, %v442
      %v548 = vadd.f32 %v413, %v442
      %v549 = vadd.f32 %v414, %v442
      %v550 = vadd.f32 %v415, %v442
      %v551 = vadd.f32 %v416, %v442
      %v552 = vadd.f32 %v417, %v442
      %v553 = vadd.f32 %v418, %v442
      %v554 = vadd.f32 %v419, %v442
      %v555 = vadd.f32 %v420, %v442
      %v556 = vadd.f32 %v421, %v442
      %v557 = vadd.f32 %v422, %v442
      %v558 = vadd.f32 %v423, %v442
      %v559 = vadd.f32 %v424, %v442
      %v560 = vadd.f32 %v425, %v442
      %v561 = vadd.f32 %v426, %v442
      %v562 = vadd.f32 %v427, %v442
      %v563 = vadd.f32 %v428, %v442
      %v564 = vadd.f32 %v429, %v442
      %v565 = vadd.f32 %v430, %v442
      %v566 = vadd.f32 %v431, %v442
      %v567 = vadd.f32 %v432, %v442
      %v568 = vadd.f32 %v433, %v442
      %v569 = vadd.f32 %v434, %v442
      %v570 = vadd.f32 %v435, %v442
      %v571 = vadd.f32 %v436, %v442
      %v572 = vmax.f32 %v444, 0.0
      %v573 = vmax.f32 %v445, 0.0
      %v574 = vmax.f32 %v446, 0.0
      %v575 = vmax.f32 %v447, 0.0
      %v576 = vmax.f32 %v448, 0.0
      %v577 = vmax.f32 %v449, 0.0
      %v578 = vmax.f32 %v450, 0.0
      %v579 = vmax.f32 %v451, 0.0
      %v580 = vmax.f32 %v452, 0.0
      %v581 = vmax.f32 %v453, 0.0
      %v582 = vmax.f32 %v454, 0.0
      %v583 = vmax.f32 %v455, 0.0
      %v584 = vmax.f32 %v456, 0.0
      %v585 = vmax.f32 %v457, 0.0
      %v586 = vmax.f32 %v458, 0.0
      %v587 = vmax.f32 %v459, 0.0
      %v588 = vmax.f32 %v460, 0.0
      %v589 = vmax.f32 %v461, 0.0
      %v590 = vmax.f32 %v462, 0.0
      %v591 = vmax.f32 %v463, 0.0
      %v592 = vmax.f32 %v464, 0.0
      %v593 = vmax.f32 %v465, 0.0
      %v594 = vmax.f32 %v466, 0.0
      %v595 = vmax.f32 %v467, 0.0
      %v596 = vmax.f32 %v468, 0.0
      %v597 = vmax.f32 %v469, 0.0
      %v598 = vmax.f32 %v470, 0.0
      %v599 = vmax.f32 %v471, 0.0
      %v600 = vmax.f32 %v472, 0.0
      %v601 = vmax.f32 %v473, 0.0
      %v602 = vmax.f32 %v474, 0.0
      %v603 = vmax.f32 %v475, 0.0
      %v604 = vmax.f32 %v476, 0.0
      %v605 = vmax.f32 %v477, 0.0
      %v606 = vmax.f32 %v478, 0.0
      %v607 = vmax.f32 %v479, 0.0
      %v608 = vmax.f32 %v480, 0.0
      %v609 = vmax.f32 %v481, 0.0
      %v610 = vmax.f32 %v482, 0.0
      %v611 = vmax.f32 %v483, 0.0
      %v612 = vmax.f32 %v484, 0.0
      %v613 = vmax.f32 %v485, 0.0
      %v614 = vmax.f32 %v486, 0.0
      %v615 = vmax.f32 %v487, 0.0
      %v616 = vmax.f32 %v488, 0.0
      %v617 = vmax.f32 %v489, 0.0
      %v618 = vmax.f32 %v490, 0.0
      %v619 = vmax.f32 %v491, 0.0
      %v620 = vmax.f32 %v492, 0.0
      %v621 = vmax.f32 %v493, 0.0
      %v622 = vmax.f32 %v494, 0.0
      %v623 = vmax.f32 %v495, 0.0
      %v624 = vmax.f32 %v496, 0.0
      %v625 = vmax.f32 %v497, 0.0
      %v626 = vmax.f32 %v498, 0.0
      %v627 = vmax.f32 %v499, 0.0
      %v628 = vmax.f32 %v500, 0.0
      %v629 = vmax.f32 %v501, 0.0
      %v630 = vmax.f32 %v502, 0.0
      %v631 = vmax.f32 %v503, 0.0
      %v632 = vmax.f32 %v504, 0.0
      %v633 = vmax.f32 %v505, 0.0
      %v634 = vmax.f32 %v506, 0.0
      %v635 = vmax.f32 %v507, 0.0
      %v636 = vmax.f32 %v508, 0.0
      %v637 = vmax.f32 %v509, 0.0
      %v638 = vmax.f32 %v510, 0.0
      %v639 = vmax.f32 %v511, 0.0
      %v640 = vmax.f32 %v512, 0.0
      %v641 = vmax.f32 %v513, 0.0
      %v642 = vmax.f32 %v514, 0.0
      %v643 = vmax.f32 %v515, 0.0
      %v644 = vmax.f32 %v516, 0.0
      %v645 = vmax.f32 %v517, 0.0
      %v646 = vmax.f32 %v518, 0.0
      %v647 = vmax.f32 %v519, 0.0
      %v648 = vmax.f32 %v520, 0.0
      %v649 = vmax.f32 %v521, 0.0
      %v650 = vmax.f32 %v522, 0.0
      %v651 = vmax.f32 %v523, 0.0
      %v652 = vmax.f32 %v524, 0.0
      %v653 = vmax.f32 %v525, 0.0
      %v654 = vmax.f32 %v526, 0.0
      %v655 = vmax.f32 %v527, 0.0
      %v656 = vmax.f32 %v528, 0.0
      %v657 = vmax.f32 %v529, 0.0
      %v658 = vmax.f32 %v530, 0.0
      %v659 = vmax.f32 %v531, 0.0
      %v660 = vmax.f32 %v532, 0.0
      %v661 = vmax.f32 %v533, 0.0
      %v662 = vmax.f32 %v534, 0.0
      %v663 = vmax.f32 %v535, 0.0
      %v664 = vmax.f32 %v536, 0.0
      %v665 = vmax.f32 %v537, 0.0
      %v666 = vmax.f32 %v538, 0.0
      %v667 = vmax.f32 %v539, 0.0
      %v668 = vmax.f32 %v540, 0.0
      %v669 = vmax.f32 %v541, 0.0
      %v670 = vmax.f32 %v542, 0.0
      %v671 = vmax.f32 %v543, 0.0
      %v672 = vmax.f32 %v544, 0.0
      %v673 = vmax.f32 %v545, 0.0
      %v674 = vmax.f32 %v546, 0.0
      %v675 = vmax.f32 %v547, 0.0
      %v676 = vmax.f32 %v548, 0.0
      %v677 = vmax.f32 %v549, 0.0
      %v678 = vmax.f32 %v550, 0.0
      %v679 = vmax.f32 %v551, 0.0
      %v680 = vmax.f32 %v552, 0.0
      %v681 = vmax.f32 %v553, 0.0
      %v682 = vmax.f32 %v554, 0.0
      %v683 = vmax.f32 %v555, 0.0
      %v684 = vmax.f32 %v556, 0.0
      %v685 = vmax.f32 %v557, 0.0
      %v686 = vmax.f32 %v558, 0.0
      %v687 = vmax.f32 %v559, 0.0
      %v688 = vmax.f32 %v560, 0.0
      %v689 = vmax.f32 %v561, 0.0
      %v690 = vmax.f32 %v562, 0.0
      %v691 = vmax.f32 %v563, 0.0
      %v692 = vmax.f32 %v564, 0.0
      %v693 = vmax.f32 %v565, 0.0
      %v694 = vmax.f32 %v566, 0.0
      %v695 = vmax.f32 %v567, 0.0
      %v696 = vmax.f32 %v568, 0.0
      %v697 = vmax.f32 %v569, 0.0
      %v698 = vmax.f32 %v570, 0.0
      %v699 = vmax.f32 %v571, 0.0
      %v700 = vpack.c.bf16 %v573, %v572
      %v701 = vpack.c.bf16 %v575, %v574
      %v702 = vpack.c.bf16 %v577, %v576
      %v703 = vpack.c.bf16 %v579, %v578
      %v704 = vpack.c.bf16 %v581, %v580
      %v705 = vpack.c.bf16 %v583, %v582
      %v706 = vpack.c.bf16 %v585, %v584
      %v707 = vpack.c.bf16 %v587, %v586
      %v708 = vpack.c.bf16 %v589, %v588
      %v709 = vpack.c.bf16 %v591, %v590
      %v710 = vpack.c.bf16 %v593, %v592
      %v711 = vpack.c.bf16 %v595, %v594
      %v712 = vpack.c.bf16 %v597, %v596
      %v713 = vpack.c.bf16 %v599, %v598
      %v714 = vpack.c.bf16 %v601, %v600
      %v715 = vpack.c.bf16 %v603, %v602
      %v716 = vpack.c.bf16 %v605, %v604
      %v717 = vpack.c.bf16 %v607, %v606
      %v718 = vpack.c.bf16 %v609, %v608
      %v719 = vpack.c.bf16 %v611, %v610
      %v720 = vpack.c.bf16 %v613, %v612
      %v721 = vpack.c.bf16 %v615, %v614
      %v722 = vpack.c.bf16 %v617, %v616
      %v723 = vpack.c.bf16 %v619, %v618
      %v724 = vpack.c.bf16 %v621, %v620
      %v725 = vpack.c.bf16 %v623, %v622
      %v726 = vpack.c.bf16 %v625, %v624
      %v727 = vpack.c.bf16 %v627, %v626
      %v728 = vpack.c.bf16 %v629, %v628
      %v729 = vpack.c.bf16 %v631, %v630
      %v730 = vpack.c.bf16 %v633, %v632
      %v731 = vpack.c.bf16 %v635, %v634
      %v732 = vpack.c.bf16 %v637, %v636
      %v733 = vpack.c.bf16 %v639, %v638
      %v734 = vpack.c.bf16 %v641, %v640
      %v735 = vpack.c.bf16 %v643, %v642
      %v736 = vpack.c.bf16 %v645, %v644
      %v737 = vpack.c.bf16 %v647, %v646
      %v738 = vpack.c.bf16 %v649, %v648
      %v739 = vpack.c.bf16 %v651, %v650
      %v740 = vpack.c.bf16 %v653, %v652
      %v741 = vpack.c.bf16 %v655, %v654
      %v742 = vpack.c.bf16 %v657, %v656
      %v743 = vpack.c.bf16 %v659, %v658
      %v744 = vpack.c.bf16 %v661, %v660
      %v745 = vpack.c.bf16 %v663, %v662
      %v746 = vpack.c.bf16 %v665, %v664
      %v747 = vpack.c.bf16 %v667, %v666
      %v748 = vpack.c.bf16 %v669, %v668
      %v749 = vpack.c.bf16 %v671, %v670
      %v750 = vpack.c.bf16 %v673, %v672
      %v751 = vpack.c.bf16 %v675, %v674
      %v752 = vpack.c.bf16 %v677, %v676
      %v753 = vpack.c.bf16 %v679, %v678
      %v754 = vpack.c.bf16 %v681, %v680
      %v755 = vpack.c.bf16 %v683, %v682
      %v756 = vpack.c.bf16 %v685, %v684
      %v757 = vpack.c.bf16 %v687, %v686
      %v758 = vpack.c.bf16 %v689, %v688
      %v759 = vpack.c.bf16 %v691, %v690
      %v760 = vpack.c.bf16 %v693, %v692
      %v761 = vpack.c.bf16 %v695, %v694
      %v762 = vpack.c.bf16 %v697, %v696
      %v763 = vpack.c.bf16 %v699, %v698
      %v828 = vunpack.c.l.b16 %v700
      %v829 = vunpack.c.h.b16 %v700
      %v830 = vunpack.c.l.b16 %v701
      %v831 = vunpack.c.h.b16 %v701
      %v832 = vunpack.c.l.b16 %v702
      %v833 = vunpack.c.h.b16 %v702
      %v834 = vunpack.c.l.b16 %v703
      %v835 = vunpack.c.h.b16 %v703
      %v836 = vunpack.c.l.b16 %v704
      %v837 = vunpack.c.h.b16 %v704
      %v838 = vunpack.c.l.b16 %v705
      %v839 = vunpack.c.h.b16 %v705
      %v840 = vunpack.c.l.b16 %v706
      %v841 = vunpack.c.h.b16 %v706
      %v842 = vunpack.c.l.b16 %v707
      %v843 = vunpack.c.h.b16 %v707
      %v844 = vunpack.c.l.b16 %v708
      %v845 = vunpack.c.h.b16 %v708
      %v846 = vunpack.c.l.b16 %v709
      %v847 = vunpack.c.h.b16 %v709
      %v848 = vunpack.c.l.b16 %v710
      %v849 = vunpack.c.h.b16 %v710
      %v850 = vunpack.c.l.b16 %v711
      %v851 = vunpack.c.h.b16 %v711
      %v852 = vunpack.c.l.b16 %v712
      %v853 = vunpack.c.h.b16 %v712
      %v854 = vunpack.c.l.b16 %v713
      %v855 = vunpack.c.h.b16 %v713
      %v856 = vunpack.c.l.b16 %v714
      %v857 = vunpack.c.h.b16 %v714
      %v858 = vunpack.c.l.b16 %v715
      %v859 = vunpack.c.h.b16 %v715
      %v860 = vunpack.c.l.b16 %v716
      %v861 = vunpack.c.h.b16 %v716
      %v862 = vunpack.c.l.b16 %v717
      %v863 = vunpack.c.h.b16 %v717
      %v864 = vunpack.c.l.b16 %v718
      %v865 = vunpack.c.h.b16 %v718
      %v866 = vunpack.c.l.b16 %v719
      %v867 = vunpack.c.h.b16 %v719
      %v868 = vunpack.c.l.b16 %v720
      %v869 = vunpack.c.h.b16 %v720
      %v870 = vunpack.c.l.b16 %v721
      %v871 = vunpack.c.h.b16 %v721
      %v872 = vunpack.c.l.b16 %v722
      %v873 = vunpack.c.h.b16 %v722
      %v874 = vunpack.c.l.b16 %v723
      %v875 = vunpack.c.h.b16 %v723
      %v876 = vunpack.c.l.b16 %v724
      %v877 = vunpack.c.h.b16 %v724
      %v878 = vunpack.c.l.b16 %v725
      %v879 = vunpack.c.h.b16 %v725
      %v880 = vunpack.c.l.b16 %v726
      %v881 = vunpack.c.h.b16 %v726
      %v882 = vunpack.c.l.b16 %v727
      %v883 = vunpack.c.h.b16 %v727
      %v884 = vunpack.c.l.b16 %v728
      %v885 = vunpack.c.h.b16 %v728
      %v886 = vunpack.c.l.b16 %v729
      %v887 = vunpack.c.h.b16 %v729
      %v888 = vunpack.c.l.b16 %v730
      %v889 = vunpack.c.h.b16 %v730
      %v890 = vunpack.c.l.b16 %v731
      %v891 = vunpack.c.h.b16 %v731
      %v892 = vunpack.c.l.b16 %v732
      %v893 = vunpack.c.h.b16 %v732
      %v894 = vunpack.c.l.b16 %v733
      %v895 = vunpack.c.h.b16 %v733
      %v896 = vunpack.c.l.b16 %v734
      %v897 = vunpack.c.h.b16 %v734
      %v898 = vunpack.c.l.b16 %v735
      %v899 = vunpack.c.h.b16 %v735
      %v900 = vunpack.c.l.b16 %v736
      %v901 = vunpack.c.h.b16 %v736
      %v902 = vunpack.c.l.b16 %v737
      %v903 = vunpack.c.h.b16 %v737
      %v904 = vunpack.c.l.b16 %v738
      %v905 = vunpack.c.h.b16 %v738
      %v906 = vunpack.c.l.b16 %v739
      %v907 = vunpack.c.h.b16 %v739
      %v908 = vunpack.c.l.b16 %v740
      %v909 = vunpack.c.h.b16 %v740
      %v910 = vunpack.c.l.b16 %v741
      %v911 = vunpack.c.h.b16 %v741
      %v912 = vunpack.c.l.b16 %v742
      %v913 = vunpack.c.h.b16 %v742
      %v914 = vunpack.c.l.b16 %v743
      %v915 = vunpack.c.h.b16 %v743
      %v916 = vunpack.c.l.b16 %v744
      %v917 = vunpack.c.h.b16 %v744
      %v918 = vunpack.c.l.b16 %v745
      %v919 = vunpack.c.h.b16 %v745
      %v920 = vunpack.c.l.b16 %v746
      %v921 = vunpack.c.h.b16 %v746
      %v922 = vunpack.c.l.b16 %v747
      %v923 = vunpack.c.h.b16 %v747
      %v924 = vunpack.c.l.b16 %v748
      %v925 = vunpack.c.h.b16 %v748
      %v926 = vunpack.c.l.b16 %v749
      %v927 = vunpack.c.h.b16 %v749
      %v928 = vunpack.c.l.b16 %v750
      %v929 = vunpack.c.h.b16 %v750
      %v930 = vunpack.c.l.b16 %v751
      %v931 = vunpack.c.h.b16 %v751
      %v932 = vunpack.c.l.b16 %v752
      %v933 = vunpack.c.h.b16 %v752
      %v934 = vunpack.c.l.b16 %v753
      %v935 = vunpack.c.h.b16 %v753
      %v936 = vunpack.c.l.b16 %v754
      %v937 = vunpack.c.h.b16 %v754
      %v938 = vunpack.c.l.b16 %v755
      %v939 = vunpack.c.h.b16 %v755
      %v940 = vunpack.c.l.b16 %v756
      %v941 = vunpack.c.h.b16 %v756
      %v942 = vunpack.c.l.b16 %v757
      %v943 = vunpack.c.h.b16 %v757
      %v944 = vunpack.c.l.b16 %v758
      %v945 = vunpack.c.h.b16 %v758
      %v946 = vunpack.c.l.b16 %v759
      %v947 = vunpack.c.h.b16 %v759
      %v948 = vunpack.c.l.b16 %v760
      %v949 = vunpack.c.h.b16 %v760
      %v950 = vunpack.c.l.b16 %v761
      %v951 = vunpack.c.h.b16 %v761
      %v952 = vunpack.c.l.b16 %v762
      %v953 = vunpack.c.h.b16 %v762
      %v954 = vunpack.c.l.b16 %v763
      %v955 = vunpack.c.h.b16 %v763
      %v956 = vpack.c.b16 %v828, %v828
      %v957 = vpack.c.b16 %v829, %v829
      %v958 = vpack.c.b16 %v830, %v830
      %v959 = vpack.c.b16 %v831, %v831
      %v960 = vpack.c.b16 %v832, %v832
      %v961 = vpack.c.b16 %v833, %v833
      %v962 = vpack.c.b16 %v834, %v834
      %v963 = vpack.c.b16 %v835, %v835
      %v964 = vpack.c.b16 %v836, %v836
      %v965 = vpack.c.b16 %v837, %v837
      %v966 = vpack.c.b16 %v838, %v838
      %v967 = vpack.c.b16 %v839, %v839
      %v968 = vpack.c.b16 %v840, %v840
      %v969 = vpack.c.b16 %v841, %v841
      %v970 = vpack.c.b16 %v842, %v842
      %v971 = vpack.c.b16 %v843, %v843
      %v972 = vpack.c.b16 %v844, %v844
      %v973 = vpack.c.b16 %v845, %v845
      %v974 = vpack.c.b16 %v846, %v846
      %v975 = vpack.c.b16 %v847, %v847
      %v976 = vpack.c.b16 %v848, %v848
      %v977 = vpack.c.b16 %v849, %v849
      %v978 = vpack.c.b16 %v850, %v850
      %v979 = vpack.c.b16 %v851, %v851
      %v980 = vpack.c.b16 %v852, %v852
      %v981 = vpack.c.b16 %v853, %v853
      %v982 = vpack.c.b16 %v854, %v854
      %v983 = vpack.c.b16 %v855, %v855
      %v984 = vpack.c.b16 %v856, %v856
      %v985 = vpack.c.b16 %v857, %v857
      %v986 = vpack.c.b16 %v858, %v858
      %v987 = vpack.c.b16 %v859, %v859
      %v988 = vpack.c.b16 %v860, %v860
      %v989 = vpack.c.b16 %v861, %v861
      %v990 = vpack.c.b16 %v862, %v862
      %v991 = vpack.c.b16 %v863, %v863
      %v992 = vpack.c.b16 %v864, %v864
      %v993 = vpack.c.b16 %v865, %v865
      %v994 = vpack.c.b16 %v866, %v866
      %v995 = vpack.c.b16 %v867, %v867
      %v996 = vpack.c.b16 %v868, %v868
      %v997 = vpack.c.b16 %v869, %v869
      %v998 = vpack.c.b16 %v870, %v870
      %v999 = vpack.c.b16 %v871, %v871
      %v1000 = vpack.c.b16 %v872, %v872
      %v1001 = vpack.c.b16 %v873, %v873
      %v1002 = vpack.c.b16 %v874, %v874
      %v1003 = vpack.c.b16 %v875, %v875
      %v1004 = vpack.c.b16 %v876, %v876
      %v1005 = vpack.c.b16 %v877, %v877
      %v1006 = vpack.c.b16 %v878, %v878
      %v1007 = vpack.c.b16 %v879, %v879
      %v1008 = vpack.c.b16 %v880, %v880
      %v1009 = vpack.c.b16 %v881, %v881
      %v1010 = vpack.c.b16 %v882, %v882
      %v1011 = vpack.c.b16 %v883, %v883
      %v1012 = vpack.c.b16 %v884, %v884
      %v1013 = vpack.c.b16 %v885, %v885
      %v1014 = vpack.c.b16 %v886, %v886
      %v1015 = vpack.c.b16 %v887, %v887
      %v1016 = vpack.c.b16 %v888, %v888
      %v1017 = vpack.c.b16 %v889, %v889
      %v1018 = vpack.c.b16 %v890, %v890
      %v1019 = vpack.c.b16 %v891, %v891
      %v1020 = vpack.c.b16 %v892, %v892
      %v1021 = vpack.c.b16 %v893, %v893
      %v1022 = vpack.c.b16 %v894, %v894
      %v1023 = vpack.c.b16 %v895, %v895
      %v1024 = vpack.c.b16 %v896, %v896
      %v1025 = vpack.c.b16 %v897, %v897
      %v1026 = vpack.c.b16 %v898, %v898
      %v1027 = vpack.c.b16 %v899, %v899
      %v1028 = vpack.c.b16 %v900, %v900
      %v1029 = vpack.c.b16 %v901, %v901
      %v1030 = vpack.c.b16 %v902, %v902
      %v1031 = vpack.c.b16 %v903, %v903
      %v1032 = vpack.c.b16 %v904, %v904
      %v1033 = vpack.c.b16 %v905, %v905
      %v1034 = vpack.c.b16 %v906, %v906
      %v1035 = vpack.c.b16 %v907, %v907
      %v1036 = vpack.c.b16 %v908, %v908
      %v1037 = vpack.c.b16 %v909, %v909
      %v1038 = vpack.c.b16 %v910, %v910
      %v1039 = vpack.c.b16 %v911, %v911
      %v1040 = vpack.c.b16 %v912, %v912
      %v1041 = vpack.c.b16 %v913, %v913
      %v1042 = vpack.c.b16 %v914, %v914
      %v1043 = vpack.c.b16 %v915, %v915
      %v1044 = vpack.c.b16 %v916, %v916
      %v1045 = vpack.c.b16 %v917, %v917
      %v1046 = vpack.c.b16 %v918, %v918
      %v1047 = vpack.c.b16 %v919, %v919
      %v1048 = vpack.c.b16 %v920, %v920
      %v1049 = vpack.c.b16 %v921, %v921
      %v1050 = vpack.c.b16 %v922, %v922
      %v1051 = vpack.c.b16 %v923, %v923
      %v1052 = vpack.c.b16 %v924, %v924
      %v1053 = vpack.c.b16 %v925, %v925
      %v1054 = vpack.c.b16 %v926, %v926
      %v1055 = vpack.c.b16 %v927, %v927
      %v1056 = vpack.c.b16 %v928, %v928
      %v1057 = vpack.c.b16 %v929, %v929
      %v1058 = vpack.c.b16 %v930, %v930
      %v1059 = vpack.c.b16 %v931, %v931
      %v1060 = vpack.c.b16 %v932, %v932
      %v1061 = vpack.c.b16 %v933, %v933
      %v1062 = vpack.c.b16 %v934, %v934
      %v1063 = vpack.c.b16 %v935, %v935
      %v1064 = vpack.c.b16 %v936, %v936
      %v1065 = vpack.c.b16 %v937, %v937
      %v1066 = vpack.c.b16 %v938, %v938
      %v1067 = vpack.c.b16 %v939, %v939
      %v1068 = vpack.c.b16 %v940, %v940
      %v1069 = vpack.c.b16 %v941, %v941
      %v1070 = vpack.c.b16 %v942, %v942
      %v1071 = vpack.c.b16 %v943, %v943
      %v1072 = vpack.c.b16 %v944, %v944
      %v1073 = vpack.c.b16 %v945, %v945
      %v1074 = vpack.c.b16 %v946, %v946
      %v1075 = vpack.c.b16 %v947, %v947
      %v1076 = vpack.c.b16 %v948, %v948
      %v1077 = vpack.c.b16 %v949, %v949
      %v1078 = vpack.c.b16 %v950, %v950
      %v1079 = vpack.c.b16 %v951, %v951
      %v1080 = vpack.c.b16 %v952, %v952
      %v1081 = vpack.c.b16 %v953, %v953
      %v1082 = vpack.c.b16 %v954, %v954
      %v1083 = vpack.c.b16 %v955, %v955
      %1212 = vst [vmem:[%s172] sm:$0xf] %v956
      %1213 = vst [vmem:[%s172 + $0x4] sm:$0xf] %v957
      %1214 = vst [vmem:[%s172 + $0x8] sm:$0xf] %v958
      %1215 = vst [vmem:[%s172 + $0xc] sm:$0xf] %v959
      %1216 = vst [vmem:[%s172 + $0x10] sm:$0xf] %v960
      %1217 = vst [vmem:[%s172 + $0x14] sm:$0xf] %v961
      %1218 = vst [vmem:[%s172 + $0x18] sm:$0xf] %v962
      %1219 = vst [vmem:[%s172 + $0x1c] sm:$0xf] %v963
      %1220 = vst [vmem:[%s172 + $0x20] sm:$0xf] %v964
      %1221 = vst [vmem:[%s172 + $0x24] sm:$0xf] %v965
      %1222 = vst [vmem:[%s172 + $0x28] sm:$0xf] %v966
      %1223 = vst [vmem:[%s172 + $0x2c] sm:$0xf] %v967
      %1224 = vst [vmem:[%s172 + $0x30] sm:$0xf] %v968
      %1225 = vst [vmem:[%s172 + $0x34] sm:$0xf] %v969
      %1226 = vst [vmem:[%s172 + $0x38] sm:$0xf] %v970
      %1227 = vst [vmem:[%s172 + $0x3c] sm:$0xf] %v971
      %1228 = vst [vmem:[%s172 + $0x40] sm:$0xf] %v972
      %1229 = vst [vmem:[%s172 + $0x44] sm:$0xf] %v973
      %1230 = vst [vmem:[%s172 + $0x48] sm:$0xf] %v974
      %1231 = vst [vmem:[%s172 + $0x4c] sm:$0xf] %v975
      %1232 = vst [vmem:[%s172 + $0x50] sm:$0xf] %v976
      %1233 = vst [vmem:[%s172 + $0x54] sm:$0xf] %v977
      %1234 = vst [vmem:[%s172 + $0x58] sm:$0xf] %v978
      %1235 = vst [vmem:[%s172 + $0x5c] sm:$0xf] %v979
      %1236 = vst [vmem:[%s172 + $0x60] sm:$0xf] %v980
      %1237 = vst [vmem:[%s172 + $0x64] sm:$0xf] %v981
      %1238 = vst [vmem:[%s172 + $0x68] sm:$0xf] %v982
      %1239 = vst [vmem:[%s172 + $0x6c] sm:$0xf] %v983
      %1240 = vst [vmem:[%s172 + $0x70] sm:$0xf] %v984
      %1241 = vst [vmem:[%s172 + $0x74] sm:$0xf] %v985
      %1242 = vst [vmem:[%s172 + $0x78] sm:$0xf] %v986
      %1243 = vst [vmem:[%s172 + $0x7c] sm:$0xf] %v987
      %1244 = vst [vmem:[%s172 + $0x80] sm:$0xf] %v988
      %1245 = vst [vmem:[%s172 + $0x84] sm:$0xf] %v989
      %1246 = vst [vmem:[%s172 + $0x88] sm:$0xf] %v990
      %1247 = vst [vmem:[%s172 + $0x8c] sm:$0xf] %v991
      %1248 = vst [vmem:[%s172 + $0x90] sm:$0xf] %v992
      %1249 = vst [vmem:[%s172 + $0x94] sm:$0xf] %v993
      %1250 = vst [vmem:[%s172 + $0x98] sm:$0xf] %v994
      %1251 = vst [vmem:[%s172 + $0x9c] sm:$0xf] %v995
      %1252 = vst [vmem:[%s172 + $0xa0] sm:$0xf] %v996
      %1253 = vst [vmem:[%s172 + $0xa4] sm:$0xf] %v997
      %1254 = vst [vmem:[%s172 + $0xa8] sm:$0xf] %v998
      %1255 = vst [vmem:[%s172 + $0xac] sm:$0xf] %v999
      %1256 = vst [vmem:[%s172 + $0xb0] sm:$0xf] %v1000
      %1257 = vst [vmem:[%s172 + $0xb4] sm:$0xf] %v1001
      %1258 = vst [vmem:[%s172 + $0xb8] sm:$0xf] %v1002
      %1259 = vst [vmem:[%s172 + $0xbc] sm:$0xf] %v1003
      %1260 = vst [vmem:[%s172 + $0xc0] sm:$0xf] %v1004
      %1261 = vst [vmem:[%s172 + $0xc4] sm:$0xf] %v1005
      %1262 = vst [vmem:[%s172 + $0xc8] sm:$0xf] %v1006
      %1263 = vst [vmem:[%s172 + $0xcc] sm:$0xf] %v1007
      %1264 = vst [vmem:[%s172 + $0xd0] sm:$0xf] %v1008
      %1265 = vst [vmem:[%s172 + $0xd4] sm:$0xf] %v1009
      %1266 = vst [vmem:[%s172 + $0xd8] sm:$0xf] %v1010
      %1267 = vst [vmem:[%s172 + $0xdc] sm:$0xf] %v1011
      %1268 = vst [vmem:[%s172 + $0xe0] sm:$0xf] %v1012
      %1269 = vst [vmem:[%s172 + $0xe4] sm:$0xf] %v1013
      %1270 = vst [vmem:[%s172 + $0xe8] sm:$0xf] %v1014
      %1271 = vst [vmem:[%s172 + $0xec] sm:$0xf] %v1015
      %1272 = vst [vmem:[%s172 + $0xf0] sm:$0xf] %v1016
      %1273 = vst [vmem:[%s172 + $0xf4] sm:$0xf] %v1017
      %1274 = vst [vmem:[%s172 + $0xf8] sm:$0xf] %v1018
      %1275 = vst [vmem:[%s172 + $0xfc] sm:$0xf] %v1019
      %1276 = vst [vmem:[%s172 + $0x100] sm:$0xf] %v1020
      %1277 = vst [vmem:[%s172 + $0x104] sm:$0xf] %v1021
      %1278 = vst [vmem:[%s172 + $0x108] sm:$0xf] %v1022
      %1279 = vst [vmem:[%s172 + $0x10c] sm:$0xf] %v1023
      %1280 = vst [vmem:[%s172 + $0x110] sm:$0xf] %v1024
      %1281 = vst [vmem:[%s172 + $0x114] sm:$0xf] %v1025
      %1282 = vst [vmem:[%s172 + $0x118] sm:$0xf] %v1026
      %1283 = vst [vmem:[%s172 + $0x11c] sm:$0xf] %v1027
      %1284 = vst [vmem:[%s172 + $0x120] sm:$0xf] %v1028
      %1285 = vst [vmem:[%s172 + $0x124] sm:$0xf] %v1029
      %1286 = vst [vmem:[%s172 + $0x128] sm:$0xf] %v1030
      %1287 = vst [vmem:[%s172 + $0x12c] sm:$0xf] %v1031
      %1288 = vst [vmem:[%s172 + $0x130] sm:$0xf] %v1032
      %1289 = vst [vmem:[%s172 + $0x134] sm:$0xf] %v1033
      %1290 = vst [vmem:[%s172 + $0x138] sm:$0xf] %v1034
      %1291 = vst [vmem:[%s172 + $0x13c] sm:$0xf] %v1035
      %1292 = vst [vmem:[%s172 + $0x140] sm:$0xf] %v1036
      %1293 = vst [vmem:[%s172 + $0x144] sm:$0xf] %v1037
      %1294 = vst [vmem:[%s172 + $0x148] sm:$0xf] %v1038
      %1295 = vst [vmem:[%s172 + $0x14c] sm:$0xf] %v1039
      %1296 = vst [vmem:[%s172 + $0x150] sm:$0xf] %v1040
      %1297 = vst [vmem:[%s172 + $0x154] sm:$0xf] %v1041
      %1298 = vst [vmem:[%s172 + $0x158] sm:$0xf] %v1042
      %1299 = vst [vmem:[%s172 + $0x15c] sm:$0xf] %v1043
      %1300 = vst [vmem:[%s172 + $0x160] sm:$0xf] %v1044
      %1301 = vst [vmem:[%s172 + $0x164] sm:$0xf] %v1045
      %1302 = vst [vmem:[%s172 + $0x168] sm:$0xf] %v1046
      %1303 = vst [vmem:[%s172 + $0x16c] sm:$0xf] %v1047
      %1304 = vst [vmem:[%s172 + $0x170] sm:$0xf] %v1048
      %1305 = vst [vmem:[%s172 + $0x174] sm:$0xf] %v1049
      %1306 = vst [vmem:[%s172 + $0x178] sm:$0xf] %v1050
      %1307 = vst [vmem:[%s172 + $0x17c] sm:$0xf] %v1051
      %1308 = vst [vmem:[%s172 + $0x180] sm:$0xf] %v1052
      %1309 = vst [vmem:[%s172 + $0x184] sm:$0xf] %v1053
      %1310 = vst [vmem:[%s172 + $0x188] sm:$0xf] %v1054
      %1311 = vst [vmem:[%s172 + $0x18c] sm:$0xf] %v1055
      %1312 = vst [vmem:[%s172 + $0x190] sm:$0xf] %v1056
      %1313 = vst [vmem:[%s172 + $0x194] sm:$0xf] %v1057
      %1314 = vst [vmem:[%s172 + $0x198] sm:$0xf] %v1058
      %1315 = vst [vmem:[%s172 + $0x19c] sm:$0xf] %v1059
      %1316 = vst [vmem:[%s172 + $0x1a0] sm:$0xf] %v1060
      %1317 = vst [vmem:[%s172 + $0x1a4] sm:$0xf] %v1061
      %1318 = vst [vmem:[%s172 + $0x1a8] sm:$0xf] %v1062
      %1319 = vst [vmem:[%s172 + $0x1ac] sm:$0xf] %v1063
      %1320 = vst [vmem:[%s172 + $0x1b0] sm:$0xf] %v1064
      %1321 = vst [vmem:[%s172 + $0x1b4] sm:$0xf] %v1065
      %1322 = vst [vmem:[%s172 + $0x1b8] sm:$0xf] %v1066
      %1323 = vst [vmem:[%s172 + $0x1bc] sm:$0xf] %v1067
      %1324 = vst [vmem:[%s172 + $0x1c0] sm:$0xf] %v1068
      %1325 = vst [vmem:[%s172 + $0x1c4] sm:$0xf] %v1069
      %1326 = vst [vmem:[%s172 + $0x1c8] sm:$0xf] %v1070
      %1327 = vst [vmem:[%s172 + $0x1cc] sm:$0xf] %v1071
      %1328 = vst [vmem:[%s172 + $0x1d0] sm:$0xf] %v1072
      %1329 = vst [vmem:[%s172 + $0x1d4] sm:$0xf] %v1073
      %1330 = vst [vmem:[%s172 + $0x1d8] sm:$0xf] %v1074
      %1331 = vst [vmem:[%s172 + $0x1dc] sm:$0xf] %v1075
      %1332 = vst [vmem:[%s172 + $0x1e0] sm:$0xf] %v1076
      %1333 = vst [vmem:[%s172 + $0x1e4] sm:$0xf] %v1077
      %1334 = vst [vmem:[%s172 + $0x1e8] sm:$0xf] %v1078
      %1335 = vst [vmem:[%s172 + $0x1ec] sm:$0xf] %v1079
      %1336 = vst [vmem:[%s172 + $0x1f0] sm:$0xf] %v1080
      %1337 = vst [vmem:[%s172 + $0x1f4] sm:$0xf] %v1081
      %1338 = vst [vmem:[%s172 + $0x1f8] sm:$0xf] %v1082
      %1339 = vst [vmem:[%s172 + $0x1fc] sm:$0xf] %v1083
      %s1340 = smul.u32 128, %s14
      %p1341 = scmp.lt.s32.totalorder %s1340, 255
      %s1342 = scalar_select %p1341, %s1340, 255
      %s1343 = smul.addr %s1342, 4
      %s1344 = scalar_lea.vmem %s3, %s1343
      // Predicated region
      $region33: #{_lambda_.16} parent=31 // pred_check
        %p1345 = pneg %p100
      $region34: #{_lambda_.16} parent=31 // pred_check_branch
        %1347 = sbr.rel (%p1345) target = $region36
      $region35: #{_lambda_.16} parent=31 // pred_region
        %s1348 = smul.u32 128, %s14
      $region36: #{_lambda_.16} parent=31 // pred_fallthru
        _
    $region32: #{_lambda_.16} parent=5 // pred_fallthru
      _
    %p1349 = scmp.le.s32.totalorder 2, %s9
    // Predicated region
    $region37: #{_lambda_.16} parent=5 // pred_check
      %p1350 = pneg %p1349
    $region38: #{_lambda_.16} parent=5 // pred_check_branch
      %1352 = sbr.rel (%p1350) target = $region40
    $region39: #{_lambda_.16} parent=5 // pred_region
      %s1353 = ssub.s32 %s9, 2
      // Predicated region
      $region41: #{_lambda_.16} parent=39 // pred_check
        %p1354 = pneg %p106
      $region42: #{_lambda_.16} parent=39 // pred_check_branch
        %1356 = sbr.rel (%p1354) target = $region44
      $region43: #{_lambda_.16} parent=39 // pred_region
        %s1357 = smul.u32 128, %s15
        %p1358 = scmp.lt.s32.totalorder %s1357, 255
        %s1359 = scalar_select %p1358, %s1357, 255
        %s1360 = smul.addr %s1359, 4
        %s1361 = scalar_lea.vmem %s3, %s1360
      $region44: #{_lambda_.16} parent=39 // pred_fallthru
        _
    $region40: #{_lambda_.16} parent=5 // pred_fallthru
      _
  $region6: #{_lambda_.16} parent=0 // loop_footer
    %s13 = sadd.s32 1, %s9
  $region7: #{_lambda_.16} parent=0 // loop_footer_branch
    %8 = sbr.rel target = $region3
  $region8: #{_lambda_.16} parent=0 // loop_exit
    _

// kernel: _lambda_.17
$region0: #{_lambda_.17}
  #allocation0 [shape = 'u32[]', space=smem, size = 0x4, offset = 0x4, fixed_abs, tag = 'smem constant byte address 0x4 - core index']
  #allocation1 [shape = 'u32[144,128]{1,0:T(1,128)}', space=vmem, size = 0x12000, scoped, tag = 'internal scratch']
  %s0 = inlined_call_operand.vmem [shape: bf16[4,2048,64], index: 0, kind: input, shape index: {}]
  %s1 = inlined_call_operand.vmem [shape: bf16[4,64,128], index: 1, kind: input, shape index: {}]
  %s2 = inlined_call_operand.vmem [shape: f32[1,128], index: 2, kind: input, shape index: {}]
  %s3 = inlined_call_operand.vmem [shape: f32[4,2048,128], index: 3, kind: output, shape index: {}]
  %s4 = sld [smem:[#allocation0]]
  $region45: #{_lambda_.17} parent=0
    _
  %s6 = ssub.s32 1, %s4
  %s7 = scalar_select 0, %s6, %s4
  loop: start=0, step=1, limit=18
  $region2: #{_lambda_.17} parent=0 // loop_pre_header
    _
  $region3: #{_lambda_.17} parent=0 // loop_header
    %s9 = sphi 0, %s13
    %p10 = scmp.ge.s32.totalorder %s9, 18
    %s16 = sphi 0, %s28
    %s17 = sphi 0, %s24
    %s18 = sphi 0, %s16
    %s19 = sphi 0, %s17
    %s20 = sphi 0, %s18
    %s21 = sphi 0, %s19
    %s33 = sphi 0, %s35
    %s36 = sphi 0, %s33
    %s37 = sphi 0, %s36
    %s53 = sphi 0, %s37
    %s59 = sphi 0, %s61
    %s62 = sphi 0, %s59
    %s63 = sphi 0, %s62
    %s79 = sphi 0, %s63
    %s83 = sphi 0, %s83
    %s85 = sphi 0, %s83
    %s86 = sphi 0, %s85
    %s100 = sphi 0, %s86
    %s108 = sphi 0, %s110
    %s111 = sphi 0, %s108
    %s112 = sphi 0, %s111
    %s128 = sphi 0, %s112
  $region4: #{_lambda_.17} parent=0 // loop_header_branch
    %12 = sbr.rel (%p10) target = $region8
  $region5: #{_lambda_.17} parent=0 // loop_body
    %s14 = ssub.s32 %s9, 1
    %s15 = ssub.s32 %s9, 2
    %s22 = sadd.s32 1, %s17
    %p23 = scmp.ge.s32.totalorder %s22, 4
    %s24 = scalar_select %p23, 0, %s22
    %s25 = sadd.s32 1, %s16
    %s26 = scalar_select %p23, %s25, %s16
    %p27 = scmp.ge.s32.totalorder %s26, 4
    %s28 = scalar_select %p27, 0, %s26
    %s29 = ssub.s32 %s16, %s28
    %s30 = ssub.s32 %s17, %s24
    %s31 = sor.u32 %s29, %s30
    %p32 = scmp.eq.s32.totalorder %s31, 0
    %s34 = sadd.s32 %s33, 1
    %s35 = scalar_select %p32, %s33, %s34
    %p38 = pneg %p32
    %p39 = scmp.eq.s32.totalorder %s9, 15
    %p40 = por %p38, %p39
    %p41 = scmp.ne.s32.totalorder %s33, %s36
    %p42 = scmp.eq.s32.totalorder %s9, 0
    %p43 = por %p41, %p42
    %p44 = scmp.ne.s32.totalorder %s33, %s36
    %p45 = scmp.eq.s32.totalorder %s14, 15
    %p46 = por %p44, %p45
    %p47 = scmp.ne.s32.totalorder %s36, %s37
    %p48 = scmp.eq.s32.totalorder %s14, 0
    %p49 = por %p47, %p48
    %p50 = scmp.ne.s32.totalorder %s36, %s37
    %p51 = scmp.eq.s32.totalorder %s15, 15
    %p52 = por %p50, %p51
    %p54 = scmp.ne.s32.totalorder %s37, %s53
    %p55 = scmp.eq.s32.totalorder %s15, 0
    %p56 = por %p54, %p55
    %s57 = ssub.s32 %s16, %s28
    %p58 = scmp.eq.s32.totalorder %s57, 0
    %s60 = sadd.s32 %s59, 1
    %s61 = scalar_select %p58, %s59, %s60
    %p64 = pneg %p58
    %p65 = scmp.eq.s32.totalorder %s9, 15
    %p66 = por %p64, %p65
    %p67 = scmp.ne.s32.totalorder %s59, %s62
    %p68 = scmp.eq.s32.totalorder %s9, 0
    %p69 = por %p67, %p68
    %p70 = scmp.ne.s32.totalorder %s59, %s62
    %p71 = scmp.eq.s32.totalorder %s14, 15
    %p72 = por %p70, %p71
    %p73 = scmp.ne.s32.totalorder %s62, %s63
    %p74 = scmp.eq.s32.totalorder %s14, 0
    %p75 = por %p73, %p74
    %p76 = scmp.ne.s32.totalorder %s62, %s63
    %p77 = scmp.eq.s32.totalorder %s15, 15
    %p78 = por %p76, %p77
    %p80 = scmp.ne.s32.totalorder %s63, %s79
    %p81 = scmp.eq.s32.totalorder %s15, 0
    %p82 = por %p80, %p81
    %s84 = sadd.s32 %s83, 1
    %p87 = scmp.eq.s32.totalorder %s9, 15
    %p88 = scmp.ne.s32.totalorder %s83, %s85
    %p89 = scmp.eq.s32.totalorder %s9, 0
    %p90 = por %p88, %p89
    %p91 = scmp.ne.s32.totalorder %s83, %s85
    %p92 = scmp.eq.s32.totalorder %s14, 15
    %p93 = por %p91, %p92
    %p94 = scmp.ne.s32.totalorder %s85, %s86
    %p95 = scmp.eq.s32.totalorder %s14, 0
    %p96 = por %p94, %p95
    %p97 = scmp.ne.s32.totalorder %s85, %s86
    %p98 = scmp.eq.s32.totalorder %s15, 15
    %p99 = por %p97, %p98
    %p101 = scmp.ne.s32.totalorder %s86, %s100
    %p102 = scmp.eq.s32.totalorder %s15, 0
    %p103 = por %p101, %p102
    %s104 = ssub.s32 %s16, %s28
    %s105 = ssub.s32 %s17, %s24
    %s106 = sor.u32 %s104, %s105
    %p107 = scmp.eq.s32.totalorder %s106, 0
    %s109 = sadd.s32 %s108, 1
    %s110 = scalar_select %p107, %s108, %s109
    %p113 = pneg %p107
    %p114 = scmp.eq.s32.totalorder %s9, 15
    %p115 = por %p113, %p114
    %p116 = scmp.ne.s32.totalorder %s108, %s111
    %p117 = scmp.eq.s32.totalorder %s9, 0
    %p118 = por %p116, %p117
    %p119 = scmp.ne.s32.totalorder %s108, %s111
    %p120 = scmp.eq.s32.totalorder %s14, 15
    %p121 = por %p119, %p120
    %p122 = scmp.ne.s32.totalorder %s111, %s112
    %p123 = scmp.eq.s32.totalorder %s14, 0
    %p124 = por %p122, %p123
    %p125 = scmp.ne.s32.totalorder %s111, %s112
    %p126 = scmp.eq.s32.totalorder %s15, 15
    %p127 = por %p125, %p126
    %p129 = scmp.ne.s32.totalorder %s112, %s128
    %p130 = scmp.eq.s32.totalorder %s15, 0
    %p131 = por %p129, %p130
    %p132 = scmp.le.s32.totalorder 1, %s9
    %p133 = scmp.lt.s32.totalorder %s9, 17
    %p134 = pnand %p132, %p133
    %p135 = pneg %p134
    // Predicated region
    $region9: #{_lambda_.17} parent=5 // pred_check
      _
    $region10: #{_lambda_.17} parent=5 // pred_check_branch
      %137 = sbr.rel (%p134) target = $region12
    $region11: #{_lambda_.17} parent=5 // pred_region
      %s138 = ssub.s32 %s9, 1
      // Predicated region
      $region13: #{_lambda_.17} parent=11 // pred_check
        %p139 = pneg %p96
      $region14: #{_lambda_.17} parent=11 // pred_check_branch
        %141 = sbr.rel (%p139) target = $region16
      $region15: #{_lambda_.17} parent=11 // pred_region
        _
      $region16: #{_lambda_.17} parent=11 // pred_fallthru
        _
    $region12: #{_lambda_.17} parent=5 // pred_fallthru
      _
    %p142 = scmp.lt.s32.totalorder %s9, 16
    // Predicated region
    $region17: #{_lambda_.17} parent=5 // pred_check
      %p143 = pneg %p142
    $region18: #{_lambda_.17} parent=5 // pred_check_branch
      %145 = sbr.rel (%p143) target = $region20
    $region19: #{_lambda_.17} parent=5 // pred_region
      // Predicated region
      $region21: #{_lambda_.17} parent=19 // pred_check
        %p146 = pneg %p43
      $region22: #{_lambda_.17} parent=19 // pred_check_branch
        %148 = sbr.rel (%p146) target = $region24
      $region23: #{_lambda_.17} parent=19 // pred_region
        %s149 = smul.u32 64, %s17
        %p150 = scmp.lt.s32.totalorder %s16, 3
        %s151 = scalar_select %p150, %s16, 3
        %p152 = scmp.lt.s32.totalorder %s149, 255
        %s153 = scalar_select %p152, %s149, 255
        %s154 = smul.addr %s151, 256
        %s155 = sadd.s32 %s153, %s154
        %s156 = smul.addr %s155, 4
        %s157 = scalar_lea.vmem %s0, %s156
        %s158 = smul.u32 64, %s17
      $region24: #{_lambda_.17} parent=19 // pred_fallthru
        _
      // Predicated region
      $region25: #{_lambda_.17} parent=19 // pred_check
        %p159 = pneg %p69
      $region26: #{_lambda_.17} parent=19 // pred_check_branch
        %161 = sbr.rel (%p159) target = $region28
      $region27: #{_lambda_.17} parent=19 // pred_region
        %p162 = scmp.lt.s32.totalorder %s16, 3
        %s163 = scalar_select %p162, %s16, 3
        %s164 = smul.addr %s163, 8
        %s165 = smul.addr %s164, 4
        %s166 = scalar_lea.vmem %s1, %s165
      $region28: #{_lambda_.17} parent=19 // pred_fallthru
        _
    $region20: #{_lambda_.17} parent=5 // pred_fallthru
      _
    %p167 = scmp.le.s32.totalorder 1, %s9
    %p168 = scmp.lt.s32.totalorder %s9, 17
    %p169 = pnand %p167, %p168
    %p170 = pneg %p169
    // Predicated region
    $region29: #{_lambda_.17} parent=5 // pred_check
      _
    $region30: #{_lambda_.17} parent=5 // pred_check_branch
      %172 = sbr.rel (%p169) target = $region32
    $region31: #{_lambda_.17} parent=5 // pred_region
      %s173 = ssub.s32 %s9, 1
      %s174 = smul.u32 64, %s19
      %p175 = scmp.lt.s32.totalorder %s18, 3
      %s176 = scalar_select %p175, %s18, 3
      %p177 = scmp.lt.s32.totalorder %s174, 255
      %s178 = scalar_select %p177, %s174, 255
      %s179 = smul.addr %s176, 256
      %s180 = sadd.s32 %s178, %s179
      %s181 = smul.addr %s180, 4
      %s182 = scalar_lea.vmem %s0, %s181
      %p183 = pneg %p49
      %p184 = pneg %p46
      %p185 = scmp.lt.s32.totalorder %s18, 3
      %s186 = scalar_select %p185, %s18, 3
      %s187 = smul.addr %s186, 8
      %s188 = smul.addr %s187, 4
      %s189 = scalar_lea.vmem %s1, %s188
      %p190 = pneg %p75
      %p191 = pneg %p72
      %p192 = pneg %p96
      %p193 = pneg %p93
      %p194 = pneg %p124
      %p195 = pneg %p121
      %s196 = smul.u32 64, %s19
      %p197 = scmp.lt.s32.totalorder %s18, 3
      %s198 = scalar_select %p197, %s18, 3
      %p199 = scmp.lt.s32.totalorder %s196, 255
      %s200 = scalar_select %p199, %s196, 255
      %s201 = smul.addr %s198, 256
      %s202 = sadd.s32 %s200, %s201
      %s203 = smul.addr %s202, 8
      %s204 = scalar_lea.vmem %s3, %s203
      %s205 = smul.u32 64, %s19
      %p206 = scmp.lt.s32.totalorder %s18, 3
      %s207 = scalar_select %p206, %s18, 3
      %p208 = scmp.lt.s32.totalorder %s205, 255
      %s209 = scalar_select %p208, %s205, 255
      %s210 = smul.addr %s207, 256
      %s211 = sadd.s32 %s209, %s210
      %s212 = smul.addr %s211, 4
      %s213 = scalar_lea.vmem %s0, %s212
      %s214 = smul.u32 64, %s19
      %p215 = scmp.lt.s32.totalorder %s18, 3
      %s216 = scalar_select %p215, %s18, 3
      %s217 = smul.addr %s216, 8
      %s218 = smul.addr %s217, 4
      %s219 = scalar_lea.vmem %s1, %s218
      %s220 = smul.u32 64, %s19
      %p221 = scmp.lt.s32.totalorder %s18, 3
      %s222 = scalar_select %p221, %s18, 3
      %p223 = scmp.lt.s32.totalorder %s220, 255
      %s224 = scalar_select %p223, %s220, 255
      %s225 = smul.addr %s222, 256
      %s226 = sadd.s32 %s224, %s225
      %s227 = smul.addr %s226, 8
      %s228 = scalar_lea.vmem %s3, %s227
      %s229 = smul.u32 64, %s19
      %v231 = vld [vmem:[%s213] sm:$0xf]
      %v232 = vld [vmem:[%s213 + $0x4] sm:$0xf]
      %v233 = vld [vmem:[%s213 + $0x8] sm:$0xf]
      %v234 = vld [vmem:[%s213 + $0xc] sm:$0xf]
      %v235 = vld [vmem:[%s213 + $0x10] sm:$0xf]
      %v236 = vld [vmem:[%s213 + $0x14] sm:$0xf]
      %v237 = vld [vmem:[%s213 + $0x18] sm:$0xf]
      %v238 = vld [vmem:[%s213 + $0x1c] sm:$0xf]
      %v239 = vld [vmem:[%s213 + $0x20] sm:$0xf]
      %v240 = vld [vmem:[%s213 + $0x24] sm:$0xf]
      %v241 = vld [vmem:[%s213 + $0x28] sm:$0xf]
      %v242 = vld [vmem:[%s213 + $0x2c] sm:$0xf]
      %v243 = vld [vmem:[%s213 + $0x30] sm:$0xf]
      %v244 = vld [vmem:[%s213 + $0x34] sm:$0xf]
      %v245 = vld [vmem:[%s213 + $0x38] sm:$0xf]
      %v246 = vld [vmem:[%s213 + $0x3c] sm:$0xf]
      %v247 = vld [vmem:[%s213 + $0x40] sm:$0xf]
      %v248 = vld [vmem:[%s213 + $0x44] sm:$0xf]
      %v249 = vld [vmem:[%s213 + $0x48] sm:$0xf]
      %v250 = vld [vmem:[%s213 + $0x4c] sm:$0xf]
      %v251 = vld [vmem:[%s213 + $0x50] sm:$0xf]
      %v252 = vld [vmem:[%s213 + $0x54] sm:$0xf]
      %v253 = vld [vmem:[%s213 + $0x58] sm:$0xf]
      %v254 = vld [vmem:[%s213 + $0x5c] sm:$0xf]
      %v255 = vld [vmem:[%s213 + $0x60] sm:$0xf]
      %v256 = vld [vmem:[%s213 + $0x64] sm:$0xf]
      %v257 = vld [vmem:[%s213 + $0x68] sm:$0xf]
      %v258 = vld [vmem:[%s213 + $0x6c] sm:$0xf]
      %v259 = vld [vmem:[%s213 + $0x70] sm:$0xf]
      %v260 = vld [vmem:[%s213 + $0x74] sm:$0xf]
      %v261 = vld [vmem:[%s213 + $0x78] sm:$0xf]
      %v262 = vld [vmem:[%s213 + $0x7c] sm:$0xf]
      %v263 = vld [vmem:[%s213 + $0x80] sm:$0xf]
      %v264 = vld [vmem:[%s213 + $0x84] sm:$0xf]
      %v265 = vld [vmem:[%s213 + $0x88] sm:$0xf]
      %v266 = vld [vmem:[%s213 + $0x8c] sm:$0xf]
      %v267 = vld [vmem:[%s213 + $0x90] sm:$0xf]
      %v268 = vld [vmem:[%s213 + $0x94] sm:$0xf]
      %v269 = vld [vmem:[%s213 + $0x98] sm:$0xf]
      %v270 = vld [vmem:[%s213 + $0x9c] sm:$0xf]
      %v271 = vld [vmem:[%s213 + $0xa0] sm:$0xf]
      %v272 = vld [vmem:[%s213 + $0xa4] sm:$0xf]
      %v273 = vld [vmem:[%s213 + $0xa8] sm:$0xf]
      %v274 = vld [vmem:[%s213 + $0xac] sm:$0xf]
      %v275 = vld [vmem:[%s213 + $0xb0] sm:$0xf]
      %v276 = vld [vmem:[%s213 + $0xb4] sm:$0xf]
      %v277 = vld [vmem:[%s213 + $0xb8] sm:$0xf]
      %v278 = vld [vmem:[%s213 + $0xbc] sm:$0xf]
      %v279 = vld [vmem:[%s213 + $0xc0] sm:$0xf]
      %v280 = vld [vmem:[%s213 + $0xc4] sm:$0xf]
      %v281 = vld [vmem:[%s213 + $0xc8] sm:$0xf]
      %v282 = vld [vmem:[%s213 + $0xcc] sm:$0xf]
      %v283 = vld [vmem:[%s213 + $0xd0] sm:$0xf]
      %v284 = vld [vmem:[%s213 + $0xd4] sm:$0xf]
      %v285 = vld [vmem:[%s213 + $0xd8] sm:$0xf]
      %v286 = vld [vmem:[%s213 + $0xdc] sm:$0xf]
      %v287 = vld [vmem:[%s213 + $0xe0] sm:$0xf]
      %v288 = vld [vmem:[%s213 + $0xe4] sm:$0xf]
      %v289 = vld [vmem:[%s213 + $0xe8] sm:$0xf]
      %v290 = vld [vmem:[%s213 + $0xec] sm:$0xf]
      %v291 = vld [vmem:[%s213 + $0xf0] sm:$0xf]
      %v292 = vld [vmem:[%s213 + $0xf4] sm:$0xf]
      %v293 = vld [vmem:[%s213 + $0xf8] sm:$0xf]
      %v294 = vld [vmem:[%s213 + $0xfc] sm:$0xf]
      %v295 = vld [vmem:[%s219] sm:$0xf]
      %v296 = vld [vmem:[%s219 + $0x4] sm:$0xf]
      %v297 = vld [vmem:[%s219 + $0x8] sm:$0xf]
      %v298 = vld [vmem:[%s219 + $0xc] sm:$0xf]
      %v299 = vld [vmem:[%s219 + $0x10] sm:$0xf]
      %v300 = vld [vmem:[%s219 + $0x14] sm:$0xf]
      %v301 = vld [vmem:[%s219 + $0x18] sm:$0xf]
      %v302 = vld [vmem:[%s219 + $0x1c] sm:$0xf]
      %v303 = vld [vmem:[%s2] sm:$0x1]
      %v305 = vlaneseq
      %v306 = vshrl.u32 %v305, 7
      %v307 = vsub.s32 0, %v306
      %v308 = vrot.slane %v303, %v307
      %v374 = vunpack.c.l.b16 %v231
      %v375 = vunpack.c.l.b16 %v232
      %v376 = vunpack.c.l.b16 %v233
      %v377 = vunpack.c.l.b16 %v234
      %v378 = vunpack.c.l.b16 %v235
      %v379 = vunpack.c.l.b16 %v236
      %v380 = vunpack.c.l.b16 %v237
      %v381 = vunpack.c.l.b16 %v238
      %v382 = vunpack.c.l.b16 %v239
      %v383 = vunpack.c.l.b16 %v240
      %v384 = vunpack.c.l.b16 %v241
      %v385 = vunpack.c.l.b16 %v242
      %v386 = vunpack.c.l.b16 %v243
      %v387 = vunpack.c.l.b16 %v244
      %v388 = vunpack.c.l.b16 %v245
      %v389 = vunpack.c.l.b16 %v246
      %v390 = vunpack.c.l.b16 %v247
      %v391 = vunpack.c.l.b16 %v248
      %v392 = vunpack.c.l.b16 %v249
      %v393 = vunpack.c.l.b16 %v250
      %v394 = vunpack.c.l.b16 %v251
      %v395 = vunpack.c.l.b16 %v252
      %v396 = vunpack.c.l.b16 %v253
      %v397 = vunpack.c.l.b16 %v254
      %v398 = vunpack.c.l.b16 %v255
      %v399 = vunpack.c.l.b16 %v256
      %v400 = vunpack.c.l.b16 %v257
      %v401 = vunpack.c.l.b16 %v258
      %v402 = vunpack.c.l.b16 %v259
      %v403 = vunpack.c.l.b16 %v260
      %v404 = vunpack.c.l.b16 %v261
      %v405 = vunpack.c.l.b16 %v262
      %v406 = vunpack.c.l.b16 %v263
      %v407 = vunpack.c.l.b16 %v264
      %v408 = vunpack.c.l.b16 %v265
      %v409 = vunpack.c.l.b16 %v266
      %v410 = vunpack.c.l.b16 %v267
      %v411 = vunpack.c.l.b16 %v268
      %v412 = vunpack.c.l.b16 %v269
      %v413 = vunpack.c.l.b16 %v270
      %v414 = vunpack.c.l.b16 %v271
      %v415 = vunpack.c.l.b16 %v272
      %v416 = vunpack.c.l.b16 %v273
      %v417 = vunpack.c.l.b16 %v274
      %v418 = vunpack.c.l.b16 %v275
      %v419 = vunpack.c.l.b16 %v276
      %v420 = vunpack.c.l.b16 %v277
      %v421 = vunpack.c.l.b16 %v278
      %v422 = vunpack.c.l.b16 %v279
      %v423 = vunpack.c.l.b16 %v280
      %v424 = vunpack.c.l.b16 %v281
      %v425 = vunpack.c.l.b16 %v282
      %v426 = vunpack.c.l.b16 %v283
      %v427 = vunpack.c.l.b16 %v284
      %v428 = vunpack.c.l.b16 %v285
      %v429 = vunpack.c.l.b16 %v286
      %v430 = vunpack.c.l.b16 %v287
      %v431 = vunpack.c.l.b16 %v288
      %v432 = vunpack.c.l.b16 %v289
      %v433 = vunpack.c.l.b16 %v290
      %v434 = vunpack.c.l.b16 %v291
      %v435 = vunpack.c.l.b16 %v292
      %v436 = vunpack.c.l.b16 %v293
      %v437 = vunpack.c.l.b16 %v294
      %v438 = vpack.c.b16 %v375, %v374
      %v439 = vpack.c.b16 %v377, %v376
      %v440 = vpack.c.b16 %v379, %v378
      %v441 = vpack.c.b16 %v381, %v380
      %v442 = vpack.c.b16 %v383, %v382
      %v443 = vpack.c.b16 %v385, %v384
      %v444 = vpack.c.b16 %v387, %v386
      %v445 = vpack.c.b16 %v389, %v388
      %v446 = vpack.c.b16 %v391, %v390
      %v447 = vpack.c.b16 %v393, %v392
      %v448 = vpack.c.b16 %v395, %v394
      %v449 = vpack.c.b16 %v397, %v396
      %v450 = vpack.c.b16 %v399, %v398
      %v451 = vpack.c.b16 %v401, %v400
      %v452 = vpack.c.b16 %v403, %v402
      %v453 = vpack.c.b16 %v405, %v404
      %v454 = vpack.c.b16 %v407, %v406
      %v455 = vpack.c.b16 %v409, %v408
      %v456 = vpack.c.b16 %v411, %v410
      %v457 = vpack.c.b16 %v413, %v412
      %v458 = vpack.c.b16 %v415, %v414
      %v459 = vpack.c.b16 %v417, %v416
      %v460 = vpack.c.b16 %v419, %v418
      %v461 = vpack.c.b16 %v421, %v420
      %v462 = vpack.c.b16 %v423, %v422
      %v463 = vpack.c.b16 %v425, %v424
      %v464 = vpack.c.b16 %v427, %v426
      %v465 = vpack.c.b16 %v429, %v428
      %v466 = vpack.c.b16 %v431, %v430
      %v467 = vpack.c.b16 %v433, %v432
      %v468 = vpack.c.b16 %v435, %v434
      %v469 = vpack.c.b16 %v437, %v436
      %v478 = vunpack.c.l.b16 %v295
      %v479 = vunpack.c.l.b16 %v296
      %v480 = vunpack.c.l.b16 %v297
      %v481 = vunpack.c.l.b16 %v298
      %v482 = vunpack.c.l.b16 %v299
      %v483 = vunpack.c.l.b16 %v300
      %v484 = vunpack.c.l.b16 %v301
      %v485 = vunpack.c.l.b16 %v302
      %v486 = vpack.c.b16 %v479, %v478
      %v487 = vpack.c.b16 %v481, %v480
      %v488 = vpack.c.b16 %v483, %v482
      %v489 = vpack.c.b16 %v485, %v484
      %vm494 = vcmask 523264
      %v496 = vsel %vm494, %v438, 0
      %v499 = vsel %vm494, %v439, 0
      %v502 = vsel %vm494, %v440, 0
      %v505 = vsel %vm494, %v441, 0
      %v508 = vsel %vm494, %v442, 0
      %v511 = vsel %vm494, %v443, 0
      %v514 = vsel %vm494, %v444, 0
      %v517 = vsel %vm494, %v445, 0
      %v520 = vsel %vm494, %v446, 0
      %v523 = vsel %vm494, %v447, 0
      %v526 = vsel %vm494, %v448, 0
      %v529 = vsel %vm494, %v449, 0
      %v532 = vsel %vm494, %v450, 0
      %v535 = vsel %vm494, %v451, 0
      %v538 = vsel %vm494, %v452, 0
      %v541 = vsel %vm494, %v453, 0
      %v544 = vsel %vm494, %v454, 0
      %v547 = vsel %vm494, %v455, 0
      %v550 = vsel %vm494, %v456, 0
      %v553 = vsel %vm494, %v457, 0
      %v556 = vsel %vm494, %v458, 0
      %v559 = vsel %vm494, %v459, 0
      %v562 = vsel %vm494, %v460, 0
      %v565 = vsel %vm494, %v461, 0
      %v568 = vsel %vm494, %v462, 0
      %v571 = vsel %vm494, %v463, 0
      %v574 = vsel %vm494, %v464, 0
      %v577 = vsel %vm494, %v465, 0
      %v580 = vsel %vm494, %v466, 0
      %v583 = vsel %vm494, %v467, 0
      %v586 = vsel %vm494, %v468, 0
      %v589 = vsel %vm494, %v469, 0
      %591 = vmatprep.subr.bf16.mxu0 0
      %592 = vmatpush1.bf16.msra.mxu0 %v486
      %593 = vmatprep.subr.bf16.mxu0 0
      %594 = vmatpush1.bf16.msra.mxu0 %v487
      %595 = vmatprep.subr.bf16.mxu0 0
      %596 = vmatpush1.bf16.msra.mxu0 %v488
      %597 = vmatprep.subr.bf16.mxu0 0
      %598 = vmatpush1.bf16.msra.mxu0 %v489
      %599 = vmatprep.subr.bf16.mxu0 0
      %600 = vmatpush1.bf16.msra.mxu0 0
      %601 = vmatprep.subr.bf16.mxu0 0
      %602 = vmatpush1.bf16.msra.mxu0 0
      %603 = vmatprep.subr.bf16.mxu0 0
      %604 = vmatpush1.bf16.msra.mxu0 0
      %605 = vmatprep.subr.bf16.mxu0 0
      %606 = vmatpush1.bf16.msra.mxu0 0
      %607 = vmatprep.subr.bf16.mxu0 0
      %608 = vmatpush1.bf16.msra.mxu0 0
      %609 = vmatprep.subr.bf16.mxu0 0
      %610 = vmatpush1.bf16.msra.mxu0 0
      %611 = vmatprep.subr.bf16.mxu0 0
      %612 = vmatpush1.bf16.msra.mxu0 0
      %613 = vmatprep.subr.bf16.mxu0 0
      %614 = vmatpush1.bf16.msra.mxu0 0
      %615 = vmatprep.subr.bf16.mxu0 0
      %616 = vmatpush1.bf16.msra.mxu0 0
      %617 = vmatprep.subr.bf16.mxu0 0
      %618 = vmatpush1.bf16.msra.mxu0 0
      %619 = vmatprep.subr.bf16.mxu0 0
      %620 = vmatpush1.bf16.msra.mxu0 0
      %621 = vmatprep.subr.bf16.mxu0 0
      %622 = vmatpush1.bf16.msra.mxu0 0
      %623 = vmatprep.mubr.bf16.mxu0 0
      %624 = vmatmul.mubr.bf16.gmra.mrb[0].mxu0 %v496
      %v625 = vpop.f32.mrb[0].mxu0
      %v626 = vadd.f32 %v308, %v625
      %v627 = vpop.f32.mrb[0].mxu0
      %v628 = vpop.f32.mrb[0].mxu0
      %v629 = vadd.f32 %v308, %v628
      %v630 = vpop.f32.mrb[0].mxu0
      %631 = vmatprep.mubr.bf16.mxu0 0
      %632 = vmatmul.mubr.bf16.gmra.mrb[0].mxu0 %v499
      %v633 = vpop.f32.mrb[0].mxu0
      %v634 = vadd.f32 %v308, %v633
      %v635 = vpop.f32.mrb[0].mxu0
      %v636 = vpop.f32.mrb[0].mxu0
      %v637 = vadd.f32 %v308, %v636
      %v638 = vpop.f32.mrb[0].mxu0
      %639 = vmatprep.mubr.bf16.mxu0 0
      %640 = vmatmul.mubr.bf16.gmra.mrb[0].mxu0 %v502
      %v641 = vpop.f32.mrb[0].mxu0
      %v642 = vadd.f32 %v308, %v641
      %v643 = vpop.f32.mrb[0].mxu0
      %v644 = vpop.f32.mrb[0].mxu0
      %v645 = vadd.f32 %v308, %v644
      %v646 = vpop.f32.mrb[0].mxu0
      %647 = vmatprep.mubr.bf16.mxu0 0
      %648 = vmatmul.mubr.bf16.gmra.mrb[0].mxu0 %v505
      %v649 = vpop.f32.mrb[0].mxu0
      %v650 = vadd.f32 %v308, %v649
      %v651 = vpop.f32.mrb[0].mxu0
      %v652 = vpop.f32.mrb[0].mxu0
      %v653 = vadd.f32 %v308, %v652
      %v654 = vpop.f32.mrb[0].mxu0
      %655 = vmatprep.mubr.bf16.mxu0 0
      %656 = vmatmul.mubr.bf16.gmra.mrb[0].mxu0 %v508
      %v657 = vpop.f32.mrb[0].mxu0
      %v658 = vadd.f32 %v308, %v657
      %v659 = vpop.f32.mrb[0].mxu0
      %v660 = vpop.f32.mrb[0].mxu0
      %v661 = vadd.f32 %v308, %v660
      %v662 = vpop.f32.mrb[0].mxu0
      %663 = vmatprep.mubr.bf16.mxu0 0
      %664 = vmatmul.mubr.bf16.gmra.mrb[0].mxu0 %v511
      %v665 = vpop.f32.mrb[0].mxu0
      %v666 = vadd.f32 %v308, %v665
      %v667 = vpop.f32.mrb[0].mxu0
      %v668 = vpop.f32.mrb[0].mxu0
      %v669 = vadd.f32 %v308, %v668
      %v670 = vpop.f32.mrb[0].mxu0
      %671 = vmatprep.mubr.bf16.mxu0 0
      %672 = vmatmul.mubr.bf16.gmra.mrb[0].mxu0 %v514
      %v673 = vpop.f32.mrb[0].mxu0
      %v674 = vadd.f32 %v308, %v673
      %v675 = vpop.f32.mrb[0].mxu0
      %v676 = vpop.f32.mrb[0].mxu0
      %v677 = vadd.f32 %v308, %v676
      %v678 = vpop.f32.mrb[0].mxu0
      %679 = vmatprep.mubr.bf16.mxu0 0
      %680 = vmatmul.mubr.bf16.gmra.mrb[0].mxu0 %v517
      %v681 = vpop.f32.mrb[0].mxu0
      %v682 = vadd.f32 %v308, %v681
      %v683 = vpop.f32.mrb[0].mxu0
      %v684 = vpop.f32.mrb[0].mxu0
      %v685 = vadd.f32 %v308, %v684
      %v686 = vpop.f32.mrb[0].mxu0
      %687 = vmatprep.mubr.bf16.mxu0 0
      %688 = vmatmul.mubr.bf16.gmra.mrb[0].mxu0 %v520
      %v689 = vpop.f32.mrb[0].mxu0
      %v690 = vadd.f32 %v308, %v689
      %v691 = vpop.f32.mrb[0].mxu0
      %v692 = vpop.f32.mrb[0].mxu0
      %v693 = vadd.f32 %v308, %v692
      %v694 = vpop.f32.mrb[0].mxu0
      %695 = vmatprep.mubr.bf16.mxu0 0
      %696 = vmatmul.mubr.bf16.gmra.mrb[0].mxu0 %v523
      %v697 = vpop.f32.mrb[0].mxu0
      %v698 = vadd.f32 %v308, %v697
      %v699 = vpop.f32.mrb[0].mxu0
      %v700 = vpop.f32.mrb[0].mxu0
      %v701 = vadd.f32 %v308, %v700
      %v702 = vpop.f32.mrb[0].mxu0
      %703 = vmatprep.mubr.bf16.mxu0 0
      %704 = vmatmul.mubr.bf16.gmra.mrb[0].mxu0 %v526
      %v705 = vpop.f32.mrb[0].mxu0
      %v706 = vadd.f32 %v308, %v705
      %v707 = vpop.f32.mrb[0].mxu0
      %v708 = vpop.f32.mrb[0].mxu0
      %v709 = vadd.f32 %v308, %v708
      %v710 = vpop.f32.mrb[0].mxu0
      %711 = vmatprep.mubr.bf16.mxu0 0
      %712 = vmatmul.mubr.bf16.gmra.mrb[0].mxu0 %v529
      %v713 = vpop.f32.mrb[0].mxu0
      %v714 = vadd.f32 %v308, %v713
      %v715 = vpop.f32.mrb[0].mxu0
      %v716 = vpop.f32.mrb[0].mxu0
      %v717 = vadd.f32 %v308, %v716
      %v718 = vpop.f32.mrb[0].mxu0
      %719 = vmatprep.mubr.bf16.mxu0 0
      %720 = vmatmul.mubr.bf16.gmra.mrb[0].mxu0 %v532
      %v721 = vpop.f32.mrb[0].mxu0
      %v722 = vadd.f32 %v308, %v721
      %v723 = vpop.f32.mrb[0].mxu0
      %v724 = vpop.f32.mrb[0].mxu0
      %v725 = vadd.f32 %v308, %v724
      %v726 = vpop.f32.mrb[0].mxu0
      %727 = vmatprep.mubr.bf16.mxu0 0
      %728 = vmatmul.mubr.bf16.gmra.mrb[0].mxu0 %v535
      %v729 = vpop.f32.mrb[0].mxu0
      %v730 = vadd.f32 %v308, %v729
      %v731 = vpop.f32.mrb[0].mxu0
      %v732 = vpop.f32.mrb[0].mxu0
      %v733 = vadd.f32 %v308, %v732
      %v734 = vpop.f32.mrb[0].mxu0
      %735 = vmatprep.mubr.bf16.mxu0 0
      %736 = vmatmul.mubr.bf16.gmra.mrb[0].mxu0 %v538
      %v737 = vpop.f32.mrb[0].mxu0
      %v738 = vadd.f32 %v308, %v737
      %v739 = vpop.f32.mrb[0].mxu0
      %v740 = vpop.f32.mrb[0].mxu0
      %v741 = vadd.f32 %v308, %v740
      %v742 = vpop.f32.mrb[0].mxu0
      %743 = vmatprep.mubr.bf16.mxu0 0
      %744 = vmatmul.mubr.bf16.gmra.mrb[0].mxu0 %v541
      %v745 = vpop.f32.mrb[0].mxu0
      %v746 = vadd.f32 %v308, %v745
      %v747 = vpop.f32.mrb[0].mxu0
      %v748 = vpop.f32.mrb[0].mxu0
      %v749 = vadd.f32 %v308, %v748
      %v750 = vpop.f32.mrb[0].mxu0
      %751 = vmatprep.mubr.bf16.mxu0 0
      %752 = vmatmul.mubr.bf16.gmra.mrb[0].mxu0 %v544
      %v753 = vpop.f32.mrb[0].mxu0
      %v754 = vadd.f32 %v308, %v753
      %v755 = vpop.f32.mrb[0].mxu0
      %v756 = vpop.f32.mrb[0].mxu0
      %v757 = vadd.f32 %v308, %v756
      %v758 = vpop.f32.mrb[0].mxu0
      %759 = vmatprep.mubr.bf16.mxu0 0
      %760 = vmatmul.mubr.bf16.gmra.mrb[0].mxu0 %v547
      %v761 = vpop.f32.mrb[0].mxu0
      %v762 = vadd.f32 %v308, %v761
      %v763 = vpop.f32.mrb[0].mxu0
      %v764 = vpop.f32.mrb[0].mxu0
      %v765 = vadd.f32 %v308, %v764
      %v766 = vpop.f32.mrb[0].mxu0
      %767 = vmatprep.mubr.bf16.mxu0 0
      %768 = vmatmul.mubr.bf16.gmra.mrb[0].mxu0 %v550
      %v769 = vpop.f32.mrb[0].mxu0
      %v770 = vadd.f32 %v308, %v769
      %v771 = vpop.f32.mrb[0].mxu0
      %v772 = vpop.f32.mrb[0].mxu0
      %v773 = vadd.f32 %v308, %v772
      %v774 = vpop.f32.mrb[0].mxu0
      %775 = vmatprep.mubr.bf16.mxu0 0
      %776 = vmatmul.mubr.bf16.gmra.mrb[0].mxu0 %v553
      %v777 = vpop.f32.mrb[0].mxu0
      %v778 = vadd.f32 %v308, %v777
      %v779 = vpop.f32.mrb[0].mxu0
      %v780 = vpop.f32.mrb[0].mxu0
      %v781 = vadd.f32 %v308, %v780
      %v782 = vpop.f32.mrb[0].mxu0
      %783 = vmatprep.mubr.bf16.mxu0 0
      %784 = vmatmul.mubr.bf16.gmra.mrb[0].mxu0 %v556
      %v785 = vpop.f32.mrb[0].mxu0
      %v786 = vadd.f32 %v308, %v785
      %v787 = vpop.f32.mrb[0].mxu0
      %v788 = vpop.f32.mrb[0].mxu0
      %v789 = vadd.f32 %v308, %v788
      %v790 = vpop.f32.mrb[0].mxu0
      %791 = vmatprep.mubr.bf16.mxu0 0
      %792 = vmatmul.mubr.bf16.gmra.mrb[0].mxu0 %v559
      %v793 = vpop.f32.mrb[0].mxu0
      %v794 = vadd.f32 %v308, %v793
      %v795 = vpop.f32.mrb[0].mxu0
      %v796 = vpop.f32.mrb[0].mxu0
      %v797 = vadd.f32 %v308, %v796
      %v798 = vpop.f32.mrb[0].mxu0
      %799 = vmatprep.mubr.bf16.mxu0 0
      %800 = vmatmul.mubr.bf16.gmra.mrb[0].mxu0 %v562
      %v801 = vpop.f32.mrb[0].mxu0
      %v802 = vadd.f32 %v308, %v801
      %v803 = vpop.f32.mrb[0].mxu0
      %v804 = vpop.f32.mrb[0].mxu0
      %v805 = vadd.f32 %v308, %v804
      %v806 = vpop.f32.mrb[0].mxu0
      %807 = vmatprep.mubr.bf16.mxu0 0
      %808 = vmatmul.mubr.bf16.gmra.mrb[0].mxu0 %v565
      %v809 = vpop.f32.mrb[0].mxu0
      %v810 = vadd.f32 %v308, %v809
      %v811 = vpop.f32.mrb[0].mxu0
      %v812 = vpop.f32.mrb[0].mxu0
      %v813 = vadd.f32 %v308, %v812
      %v814 = vpop.f32.mrb[0].mxu0
      %815 = vmatprep.mubr.bf16.mxu0 0
      %816 = vmatmul.mubr.bf16.gmra.mrb[0].mxu0 %v568
      %v817 = vpop.f32.mrb[0].mxu0
      %v818 = vadd.f32 %v308, %v817
      %v819 = vpop.f32.mrb[0].mxu0
      %v820 = vpop.f32.mrb[0].mxu0
      %v821 = vadd.f32 %v308, %v820
      %v822 = vpop.f32.mrb[0].mxu0
      %823 = vmatprep.mubr.bf16.mxu0 0
      %824 = vmatmul.mubr.bf16.gmra.mrb[0].mxu0 %v571
      %v825 = vpop.f32.mrb[0].mxu0
      %v826 = vadd.f32 %v308, %v825
      %v827 = vpop.f32.mrb[0].mxu0
      %v828 = vpop.f32.mrb[0].mxu0
      %v829 = vadd.f32 %v308, %v828
      %v830 = vpop.f32.mrb[0].mxu0
      %831 = vmatprep.mubr.bf16.mxu0 0
      %832 = vmatmul.mubr.bf16.gmra.mrb[0].mxu0 %v574
      %v833 = vpop.f32.mrb[0].mxu0
      %v834 = vadd.f32 %v308, %v833
      %v835 = vpop.f32.mrb[0].mxu0
      %v836 = vpop.f32.mrb[0].mxu0
      %v837 = vadd.f32 %v308, %v836
      %v838 = vpop.f32.mrb[0].mxu0
      %839 = vmatprep.mubr.bf16.mxu0 0
      %840 = vmatmul.mubr.bf16.gmra.mrb[0].mxu0 %v577
      %v841 = vpop.f32.mrb[0].mxu0
      %v842 = vadd.f32 %v308, %v841
      %v843 = vpop.f32.mrb[0].mxu0
      %v844 = vpop.f32.mrb[0].mxu0
      %v845 = vadd.f32 %v308, %v844
      %v846 = vpop.f32.mrb[0].mxu0
      %847 = vmatprep.mubr.bf16.mxu0 0
      %848 = vmatmul.mubr.bf16.gmra.mrb[0].mxu0 %v580
      %v849 = vpop.f32.mrb[0].mxu0
      %v850 = vadd.f32 %v308, %v849
      %v851 = vpop.f32.mrb[0].mxu0
      %v852 = vpop.f32.mrb[0].mxu0
      %v853 = vadd.f32 %v308, %v852
      %v854 = vpop.f32.mrb[0].mxu0
      %855 = vmatprep.mubr.bf16.mxu0 0
      %856 = vmatmul.mubr.bf16.gmra.mrb[0].mxu0 %v583
      %v857 = vpop.f32.mrb[0].mxu0
      %v858 = vadd.f32 %v308, %v857
      %v859 = vpop.f32.mrb[0].mxu0
      %v860 = vpop.f32.mrb[0].mxu0
      %v861 = vadd.f32 %v308, %v860
      %v862 = vpop.f32.mrb[0].mxu0
      %863 = vmatprep.mubr.bf16.mxu0 0
      %864 = vmatmul.mubr.bf16.gmra.mrb[0].mxu0 %v586
      %v865 = vpop.f32.mrb[0].mxu0
      %v866 = vadd.f32 %v308, %v865
      %v867 = vpop.f32.mrb[0].mxu0
      %v868 = vpop.f32.mrb[0].mxu0
      %v869 = vadd.f32 %v308, %v868
      %v870 = vpop.f32.mrb[0].mxu0
      %871 = vmatprep.mubr.bf16.mxu0 0
      %872 = vmatmul.mubr.bf16.gmra.mrb[0].mxu0 %v589
      %v873 = vpop.f32.mrb[0].mxu0
      %v874 = vadd.f32 %v308, %v873
      %v875 = vpop.f32.mrb[0].mxu0
      %v876 = vpop.f32.mrb[0].mxu0
      %v877 = vadd.f32 %v308, %v876
      %v878 = vpop.f32.mrb[0].mxu0
      %879 = vdwg.mxu0
      %v880 = vtanh.pop %v626
      %v881 = vtanh.pop %v629
      %v882 = vtanh.pop %v634
      %v883 = vtanh.pop %v637
      %v884 = vtanh.pop %v642
      %v885 = vtanh.pop %v645
      %v886 = vtanh.pop %v650
      %v887 = vtanh.pop %v653
      %v888 = vtanh.pop %v658
      %v889 = vtanh.pop %v661
      %v890 = vtanh.pop %v666
      %v891 = vtanh.pop %v669
      %v892 = vtanh.pop %v674
      %v893 = vtanh.pop %v677
      %v894 = vtanh.pop %v682
      %v895 = vtanh.pop %v685
      %v896 = vtanh.pop %v690
      %v897 = vtanh.pop %v693
      %v898 = vtanh.pop %v698
      %v899 = vtanh.pop %v701
      %v900 = vtanh.pop %v706
      %v901 = vtanh.pop %v709
      %v902 = vtanh.pop %v714
      %v903 = vtanh.pop %v717
      %v904 = vtanh.pop %v722
      %v905 = vtanh.pop %v725
      %v906 = vtanh.pop %v730
      %v907 = vtanh.pop %v733
      %v908 = vtanh.pop %v738
      %v909 = vtanh.pop %v741
      %v910 = vtanh.pop %v746
      %v911 = vtanh.pop %v749
      %v912 = vtanh.pop %v754
      %v913 = vtanh.pop %v757
      %v914 = vtanh.pop %v762
      %v915 = vtanh.pop %v765
      %v916 = vtanh.pop %v770
      %v917 = vtanh.pop %v773
      %v918 = vtanh.pop %v778
      %v919 = vtanh.pop %v781
      %v920 = vtanh.pop %v786
      %v921 = vtanh.pop %v789
      %v922 = vtanh.pop %v794
      %v923 = vtanh.pop %v797
      %v924 = vtanh.pop %v802
      %v925 = vtanh.pop %v805
      %v926 = vtanh.pop %v810
      %v927 = vtanh.pop %v813
      %v928 = vtanh.pop %v818
      %v929 = vtanh.pop %v821
      %v930 = vtanh.pop %v826
      %v931 = vtanh.pop %v829
      %v932 = vtanh.pop %v834
      %v933 = vtanh.pop %v837
      %v934 = vtanh.pop %v842
      %v935 = vtanh.pop %v845
      %v936 = vtanh.pop %v850
      %v937 = vtanh.pop %v853
      %v938 = vtanh.pop %v858
      %v939 = vtanh.pop %v861
      %v940 = vtanh.pop %v866
      %v941 = vtanh.pop %v869
      %v942 = vtanh.pop %v874
      %v943 = vtanh.pop %v877
      %944 = vst [vmem:[%s228] sm:$0xff] %v880
      %945 = vst [vmem:[%s228 + $0x8] sm:$0xff] %v881
      %946 = vst [vmem:[%s228 + $0x10] sm:$0xff] %v882
      %947 = vst [vmem:[%s228 + $0x18] sm:$0xff] %v883
      %948 = vst [vmem:[%s228 + $0x20] sm:$0xff] %v884
      %949 = vst [vmem:[%s228 + $0x28] sm:$0xff] %v885
      %950 = vst [vmem:[%s228 + $0x30] sm:$0xff] %v886
      %951 = vst [vmem:[%s228 + $0x38] sm:$0xff] %v887
      %952 = vst [vmem:[%s228 + $0x40] sm:$0xff] %v888
      %953 = vst [vmem:[%s228 + $0x48] sm:$0xff] %v889
      %954 = vst [vmem:[%s228 + $0x50] sm:$0xff] %v890
      %955 = vst [vmem:[%s228 + $0x58] sm:$0xff] %v891
      %956 = vst [vmem:[%s228 + $0x60] sm:$0xff] %v892
      %957 = vst [vmem:[%s228 + $0x68] sm:$0xff] %v893
      %958 = vst [vmem:[%s228 + $0x70] sm:$0xff] %v894
      %959 = vst [vmem:[%s228 + $0x78] sm:$0xff] %v895
      %960 = vst [vmem:[%s228 + $0x80] sm:$0xff] %v896
      %961 = vst [vmem:[%s228 + $0x88] sm:$0xff] %v897
      %962 = vst [vmem:[%s228 + $0x90] sm:$0xff] %v898
      %963 = vst [vmem:[%s228 + $0x98] sm:$0xff] %v899
      %964 = vst [vmem:[%s228 + $0xa0] sm:$0xff] %v900
      %965 = vst [vmem:[%s228 + $0xa8] sm:$0xff] %v901
      %966 = vst [vmem:[%s228 + $0xb0] sm:$0xff] %v902
      %967 = vst [vmem:[%s228 + $0xb8] sm:$0xff] %v903
      %968 = vst [vmem:[%s228 + $0xc0] sm:$0xff] %v904
      %969 = vst [vmem:[%s228 + $0xc8] sm:$0xff] %v905
      %970 = vst [vmem:[%s228 + $0xd0] sm:$0xff] %v906
      %971 = vst [vmem:[%s228 + $0xd8] sm:$0xff] %v907
      %972 = vst [vmem:[%s228 + $0xe0] sm:$0xff] %v908
      %973 = vst [vmem:[%s228 + $0xe8] sm:$0xff] %v909
      %974 = vst [vmem:[%s228 + $0xf0] sm:$0xff] %v910
      %975 = vst [vmem:[%s228 + $0xf8] sm:$0xff] %v911
      %976 = vst [vmem:[%s228 + $0x100] sm:$0xff] %v912
      %977 = vst [vmem:[%s228 + $0x108] sm:$0xff] %v913
      %978 = vst [vmem:[%s228 + $0x110] sm:$0xff] %v914
      %979 = vst [vmem:[%s228 + $0x118] sm:$0xff] %v915
      %980 = vst [vmem:[%s228 + $0x120] sm:$0xff] %v916
      %981 = vst [vmem:[%s228 + $0x128] sm:$0xff] %v917
      %982 = vst [vmem:[%s228 + $0x130] sm:$0xff] %v918
      %983 = vst [vmem:[%s228 + $0x138] sm:$0xff] %v919
      %984 = vst [vmem:[%s228 + $0x140] sm:$0xff] %v920
      %985 = vst [vmem:[%s228 + $0x148] sm:$0xff] %v921
      %986 = vst [vmem:[%s228 + $0x150] sm:$0xff] %v922
      %987 = vst [vmem:[%s228 + $0x158] sm:$0xff] %v923
      %988 = vst [vmem:[%s228 + $0x160] sm:$0xff] %v924
      %989 = vst [vmem:[%s228 + $0x168] sm:$0xff] %v925
      %990 = vst [vmem:[%s228 + $0x170] sm:$0xff] %v926
      %991 = vst [vmem:[%s228 + $0x178] sm:$0xff] %v927
      %992 = vst [vmem:[%s228 + $0x180] sm:$0xff] %v928
      %993 = vst [vmem:[%s228 + $0x188] sm:$0xff] %v929
      %994 = vst [vmem:[%s228 + $0x190] sm:$0xff] %v930
      %995 = vst [vmem:[%s228 + $0x198] sm:$0xff] %v931
      %996 = vst [vmem:[%s228 + $0x1a0] sm:$0xff] %v932
      %997 = vst [vmem:[%s228 + $0x1a8] sm:$0xff] %v933
      %998 = vst [vmem:[%s228 + $0x1b0] sm:$0xff] %v934
      %999 = vst [vmem:[%s228 + $0x1b8] sm:$0xff] %v935
      %1000 = vst [vmem:[%s228 + $0x1c0] sm:$0xff] %v936
      %1001 = vst [vmem:[%s228 + $0x1c8] sm:$0xff] %v937
      %1002 = vst [vmem:[%s228 + $0x1d0] sm:$0xff] %v938
      %1003 = vst [vmem:[%s228 + $0x1d8] sm:$0xff] %v939
      %1004 = vst [vmem:[%s228 + $0x1e0] sm:$0xff] %v940
      %1005 = vst [vmem:[%s228 + $0x1e8] sm:$0xff] %v941
      %1006 = vst [vmem:[%s228 + $0x1f0] sm:$0xff] %v942
      %1007 = vst [vmem:[%s228 + $0x1f8] sm:$0xff] %v943
      %s1008 = smul.u32 64, %s19
      %p1009 = scmp.lt.s32.totalorder %s18, 3
      %s1010 = scalar_select %p1009, %s18, 3
      %p1011 = scmp.lt.s32.totalorder %s1008, 255
      %s1012 = scalar_select %p1011, %s1008, 255
      %s1013 = smul.addr %s1010, 256
      %s1014 = sadd.s32 %s1012, %s1013
      %s1015 = smul.addr %s1014, 8
      %s1016 = scalar_lea.vmem %s3, %s1015
      // Predicated region
      $region33: #{_lambda_.17} parent=31 // pred_check
        %p1017 = pneg %p121
      $region34: #{_lambda_.17} parent=31 // pred_check_branch
        %1019 = sbr.rel (%p1017) target = $region36
      $region35: #{_lambda_.17} parent=31 // pred_region
        %s1020 = smul.u32 64, %s19
      $region36: #{_lambda_.17} parent=31 // pred_fallthru
        _
    $region32: #{_lambda_.17} parent=5 // pred_fallthru
      _
    %p1021 = scmp.le.s32.totalorder 2, %s9
    // Predicated region
    $region37: #{_lambda_.17} parent=5 // pred_check
      %p1022 = pneg %p1021
    $region38: #{_lambda_.17} parent=5 // pred_check_branch
      %1024 = sbr.rel (%p1022) target = $region40
    $region39: #{_lambda_.17} parent=5 // pred_region
      %s1025 = ssub.s32 %s9, 2
      // Predicated region
      $region41: #{_lambda_.17} parent=39 // pred_check
        %p1026 = pneg %p127
      $region42: #{_lambda_.17} parent=39 // pred_check_branch
        %1028 = sbr.rel (%p1026) target = $region44
      $region43: #{_lambda_.17} parent=39 // pred_region
        %s1029 = smul.u32 64, %s21
        %p1030 = scmp.lt.s32.totalorder %s20, 3
        %s1031 = scalar_select %p1030, %s20, 3
        %p1032 = scmp.lt.s32.totalorder %s1029, 255
        %s1033 = scalar_select %p1032, %s1029, 255
        %s1034 = smul.addr %s1031, 256
        %s1035 = sadd.s32 %s1033, %s1034
        %s1036 = smul.addr %s1035, 8
        %s1037 = scalar_lea.vmem %s3, %s1036
      $region44: #{_lambda_.17} parent=39 // pred_fallthru
        _
    $region40: #{_lambda_.17} parent=5 // pred_fallthru
      _
  $region6: #{_lambda_.17} parent=0 // loop_footer
    %s13 = sadd.s32 1, %s9
  $region7: #{_lambda_.17} parent=0 // loop_footer_branch
    %8 = sbr.rel target = $region3
  $region8: #{_lambda_.17} parent=0 // loop_exit
    _

</llo_original>
